<compile_context>
chip_gen: v7x
topology: tpu7x:2x2x1
jax: 0.10.0
libtpu: 0.0.40
codegen_flags: <defaults>
</compile_context>

<pallas_src>
import functools

import jax
import jax.numpy as jnp
from jax import lax
from jax.experimental import pallas as pl
from jax.experimental.pallas import tpu as pltpu


_VMEM_LIMIT = 32 * 1024 * 1024   # guardrail: well under v7x's 64 MiB physical VMEM


def _round_up(n, m):
    return ((n + m - 1) // m) * m


# ----------------------------- Pallas kernels ------------------------------ #

def _conv_pool_kernel(p_ref, w_ref, scale_ref, shift_ref, *rest,
                      n_offsets, n_pad, masked):
    """Fused conv-as-matmul + affine (bias / eval BN) + ReLU + max over pool offsets.

    p_ref:     (K, Q*Npad)  bf16 im2col patches, one lane-aligned column group per
               pool offset (pad columns beyond the true N are discarded by the caller)
    w_ref:     (Cout, K)    bf16 conv weights
    scale_ref: (Cout, 1)    f32 per-channel scale (BN folded; ones if no BN)
    shift_ref: (Cout, 1)    f32 per-channel shift (bias / BN folded)
    mask_ref:  (1, Q*Npad)  f32 {0,1} pool-offset validity (present only if masked)
    o_ref:     (Cout, Npad) bf16 lane-dense output
    """
    o_ref = rest[-1]
    # Single MXU push over all pool offsets (merged Q tiny matmuls into one).
    y = jnp.dot(w_ref[...], p_ref[...], preferred_element_type=jnp.float32)
    y = jnp.maximum(y * scale_ref[...] + shift_ref[...], 0.0)
    if masked:
        # post-ReLU values >= 0, so zeroing an invalid pool offset == "-inf" padding
        y = y * rest[0][...]
    out = y[:, 0:n_pad]
    for q in range(1, n_offsets):
        out = jnp.maximum(out, y[:, q * n_pad:(q + 1) * n_pad])
    o_ref[...] = out.astype(o_ref.dtype)


def _bilstm_core(x2d, wih, whh, bias, seq_len, batch, hidden):
    """One bidirectional LSTM layer on VMEM-resident values.

    x2d:  (T*B, nIn) bf16     wih: (nIn, 8H) bf16 (per-gate [fwd | bwd] columns)
    whh:  (2H, 8H)   bf16 block-diagonal    bias: (1, 8H) f32 (b_ih + b_hh, both dirs)
    returns (T*B, 2H) f32 with columns [h_fwd | h_bwd] per timestep (t-major rows).
    """
    T, B, H = seq_len, batch, hidden
    f32 = jnp.float32

    # Hoisted input projection: one (T*B, nIn) @ (nIn, 8H) MXU matmul for both
    # directions and all timesteps (bias folded in), outside the recurrence.
    gx = jnp.dot(x2d, wih, preferred_element_type=f32) + bias          # (T*B, 8H)

    col = lax.broadcasted_iota(jnp.int32, (B, 8 * H), 1)
    is_fwd = (col % (2 * H)) < H                                       # per-gate [fwd|bwd]
    is_g = (col >= 4 * H) & (col < 6 * H)                              # tanh ('g') gate
    pre_scale = jnp.where(is_g, jnp.float32(1.0), jnp.float32(0.5))

    # Hoisted fwd/bwd gate-input select -- off the recurrence critical path.
    gx_steps = []
    for t in range(T):
        rt = T - 1 - t
        gx_steps.append(jnp.where(is_fwd,
                                  gx[t * B:(t + 1) * B, :],
                                  gx[rt * B:(rt + 1) * B, :]))         # (B, 8H)

    whh_b = whh  # hoisted weight load (value already in vregs)
    h = jnp.zeros((B, 2 * H), f32)                                     # [h_fwd | h_bwd]
    c = jnp.zeros((B, 2 * H), f32)
    h_fwd = [None] * T
    h_bwd = [None] * T
    for t in range(T):      # static unroll: T is small (5); fori_loop if it grows
        gates = gx_steps[t] + jnp.dot(h.astype(jnp.bfloat16), whh_b,
                                      preferred_element_type=f32)
        # single EUP pass over the gate block: sigmoid(x) = 0.5*tanh(x/2) + 0.5
        th = jnp.tanh(gates * pre_scale)
        act = jnp.where(is_g, th, 0.5 * th + 0.5)
        i_g = act[:, 0:2 * H]
        f_g = act[:, 2 * H:4 * H]
        g_g = act[:, 4 * H:6 * H]
        o_g = act[:, 6 * H:8 * H]
        c = f_g * c + i_g * g_g
        h = o_g * jnp.tanh(c)
        h_fwd[t] = h[:, 0:H]
        h_bwd[T - 1 - t] = h[:, H:2 * H]

    # (T*B, 2H) with per-timestep rows [h_fwd(t) | h_bwd(t)] -- fed to ONE dense
    # embedding matmul by the caller (batched epilogue).
    return jnp.concatenate([jnp.concatenate(h_fwd, axis=0),
                            jnp.concatenate(h_bwd, axis=0)], axis=1)


def _rnn_stack_kernel(x_ref,
                      wih1_ref, whh1_ref, b1_ref, ew1_ref, eb1_ref,
                      wih2_ref, whh2_ref, b2_ref, ew2_ref, eb2_ref,
                      o_ref, *, seq_len, batch, hidden):
    """Both BidirectionalLSTMs + both embedding Linears + final log_softmax, fused."""
    T, B, H = seq_len, batch, hidden

    rec1 = _bilstm_core(x_ref[...], wih1_ref[...], whh1_ref[...], b1_ref[...],
                        T, B, H)                                       # (T*B, 2H) f32
    # Batched embedding 1: ONE (T*B,2H)@(2H,nh) matmul; result never leaves VMEM.
    mid = (jnp.dot(rec1.astype(jnp.bfloat16), ew1_ref[...],
                   preferred_element_type=jnp.float32) + eb1_ref[...])

    rec2 = _bilstm_core(mid.astype(jnp.bfloat16), wih2_ref[...], whh2_ref[...],
                        b2_ref[...], T, B, H)                          # (T*B, 2H) f32
    logits = (jnp.dot(rec2.astype(jnp.bfloat16), ew2_ref[...],
                      preferred_element_type=jnp.float32) + eb2_ref[...])

    # log_softmax over classes + single dense store of the (T*B, nclass) block.
    logits = logits - jnp.max(logits, axis=1, keepdims=True)
    logits = logits - jnp.log(jnp.sum(jnp.exp(logits), axis=1, keepdims=True))
    o_ref[...] = logits


# --------------------------- pallas_call wrappers --------------------------- #

def _conv_call(patches, wmat, scale, shift, mask, n_offsets, n_pad):
    cout = wmat.shape[0]
    masked = mask is not None
    kern = functools.partial(_conv_pool_kernel, n_offsets=n_offsets,
                             n_pad=n_pad, masked=masked)
    args = (patches, wmat, scale, shift) + ((mask,) if masked else ())
    return pl.pallas_call(
        kern,
        out_shape=jax.ShapeDtypeStruct((cout, n_pad), jnp.bfloat16),
        compiler_params=pltpu.CompilerParams(vmem_limit_bytes=_VMEM_LIMIT),
    )(*args)


def _rnn_stack(seq_bf16, r1, r2, seq_len, batch):
    hidden = r1['whh'].shape[0] // 2
    n_class = r2['emb_w'].shape[1]
    kern = functools.partial(_rnn_stack_kernel, seq_len=seq_len, batch=batch,
                             hidden=hidden)
    out = pl.pallas_call(
        kern,
        out_shape=jax.ShapeDtypeStruct((seq_len * batch, n_class), jnp.float32),
        compiler_params=pltpu.CompilerParams(vmem_limit_bytes=_VMEM_LIMIT),
    )(seq_bf16, r1['wih'], r1['whh'], r1['bias'], r1['emb_w'], r1['emb_b'],
      r2['wih'], r2['whh'], r2['bias'], r2['emb_w'], r2['emb_b'])
    return out.reshape(seq_len, batch, n_class)


# ------------------------------- glue (JAX) --------------------------------- #

def _conv_block(x, wmat, scale, shift, k, p, pool):
    """Fused conv(k, stride 1, pad p) [+ eval BN] + ReLU [+ 2x2 MaxPool].

    x:    (Cin, B, H, W) channel-major feature map (f32 or bf16)
    wmat: (Cout, Cin*k*k) bf16
    pool: None or (sh, sw, pw_pad)  -- PyTorch MaxPool2d((2,2),(sh,sw),(0,pw_pad))
    returns (Cout, B, PH, PW) bf16
    """
    cin, b, hdim, wdim = x.shape
    oh = hdim + 2 * p - k + 1
    ow = wdim + 2 * p - k + 1
    if pool is None:
        sh, sw, pwp = 1, 1, 0
        ph_out, pw_out = oh, ow
        offsets = [(0, 0)]
    else:
        sh, sw, pwp = pool
        ph_out = (oh - 2) // sh + 1
        pw_out = (ow + 2 * pwp - 2) // sw + 1
        offsets = [(0, 0), (0, 1), (1, 0), (1, 1)]

    xp = jnp.pad(x.astype(jnp.bfloat16),
                 ((0, 0), (0, 0), (p, p), (p + pwp, p + pwp)))
    n = b * ph_out * pw_out
    n_pad = _round_up(n, 128)            # lane-aligned per-offset column group
    k_dim = cin * k * k
    q = len(offsets)

    # TODO(synk): this im2col / pool-window extraction is XLA glue; move in-kernel.
    slabs = []
    for (qi, qj) in offsets:
        cols = []
        for di in range(k):
            for dj in range(k):
                r0 = qi + di
                c0 = qj + dj
                cols.append(xp[:, :, r0:r0 + sh * (ph_out - 1) + 1:sh,
                                      c0:c0 + sw * (pw_out - 1) + 1:sw])
        pq = jnp.stack(cols, axis=1).reshape(k_dim, n)
        if n_pad > n:
            pq = jnp.pad(pq, ((0, 0), (0, n_pad - n)))
        slabs.append(pq)
    patches = jnp.concatenate(slabs, axis=1)                  # (K, Q*Npad) bf16

    masked = pool is not None and pwp > 0
    if masked:
        ow_idx = jnp.arange(pw_out)
        mrows = []
        for (qi, qj) in offsets:
            conv_col = ow_idx + qj - pwp
            valid = ((conv_col >= 0) & (conv_col < ow)).astype(jnp.float32)
            m = jnp.broadcast_to(valid, (b * ph_out, pw_out)).reshape(1, n)
            if n_pad > n:
                m = jnp.pad(m, ((0, 0), (0, n_pad - n)))
            mrows.append(m)
        mask = jnp.concatenate(mrows, axis=1)                 # (1, Q*Npad)
    else:
        mask = None                                           # no mask DMA at all

    out = _conv_call(patches, wmat, scale, shift, mask, q, n_pad)   # (Cout, Npad) bf16
    return out[:, :n].reshape(wmat.shape[0], b, ph_out, pw_out)


# ------------------------------ CRNN forward -------------------------------- #

_CONV_CFG = [        # (kernel, padding, pool=(sh, sw, pw_pad) or None)
    (3, 1, (2, 2, 0)),   # conv0 + pooling0
    (3, 1, (2, 2, 0)),   # conv1 + pooling1
    (3, 1, None),        # conv2 (+BN)
    (3, 1, (2, 1, 1)),   # conv3 + pooling2
    (3, 1, None),        # conv4 (+BN)
    (3, 1, (2, 1, 1)),   # conv5 + pooling3
    (2, 0, None),        # conv6 (+BN)
]


def crnn_forward(prepped, x):
    # NCHW input -> channel-major (C, B, H, W) used throughout the conv stack.
    y = jnp.transpose(x, (1, 0, 2, 3))
    for i, (k, p, pool) in enumerate(_CONV_CFG):
        cp = prepped[f'conv{i}']
        y = _conv_block(y, cp['w'], cp['scale'], cp['shift'], k, p, pool)

    c, b, hc, wc = y.shape
    t_len = wc
    assert c * hc == prepped['rnn1']['wih'].shape[0], 'LSTM input dim mismatch'
    # == conv.reshape(b, c*h, w).permute(2, 0, 1) in the PyTorch module.
    seq = jnp.transpose(y, (3, 1, 0, 2)).reshape(t_len * b, c * hc)

    # Both BiLSTMs + embeddings + final log_softmax in ONE fused kernel.
    return _rnn_stack(seq.astype(jnp.bfloat16), prepped['rnn1'], prepped['rnn2'],
                      t_len, b)                                   # (T, B, nclass)


# ------------------------------ param handling ------------------------------ #

def init_params(key, nc, nh, nclass):
    """Raw parameters in PyTorch-like per-direction layout."""
    ks = [3, 3, 3, 3, 3, 3, 2]
    nm = [8, 32, 64, 64, 64, 64, 64]
    keys = iter(jax.random.split(key, 64))

    def rnd(shape, scale):
        return jax.random.normal(next(keys), shape, jnp.float32) * scale

    params = {}
    cin = nc
    for i in range(7):
        k, cout = ks[i], nm[i]
        fan = cin * k * k
        params[f'conv{i}_w'] = rnd((cout, cin, k, k), 1.0 / jnp.sqrt(fan))
        params[f'conv{i}_b'] = rnd((cout,), 0.05)
        cin = cout
    for i in (2, 4, 6):
        c = nm[i]
        params[f'bn{i}'] = dict(
            gamma=1.0 + rnd((c,), 0.1),
            beta=rnd((c,), 0.1),
            mean=jnp.zeros((c,), jnp.float32),   # PyTorch init running_mean
            var=jnp.ones((c,), jnp.float32))     # PyTorch init running_var

    def lstm_p(n_in, hid, n_out):
        s = 1.0 / jnp.sqrt(hid)
        d = {}
        for dirn in ('f', 'b'):
            d[f'wih_{dirn}'] = rnd((n_in, 4 * hid), s)
            d[f'whh_{dirn}'] = rnd((hid, 4 * hid), s)
            d[f'bias_{dirn}'] = rnd((1, 4 * hid), s)     # b_ih + b_hh folded
        d['emb_w'] = rnd((2 * hid, n_out), 1.0 / jnp.sqrt(2 * hid))
        d['emb_b'] = rnd((1, n_out), 0.05)
        return d

    params['rnn1'] = lstm_p(576, nh, nh)
    params['rnn2'] = lstm_p(nh, nh, nclass)
    return params


def prepare_params(params):
    """One-time preprocessing: BN folding, weight reshapes/reordering, bf16 casts."""
    prepped = {}
    for i in range(7):
        w = params[f'conv{i}_w']
        cout = w.shape[0]
        wmat = w.reshape(cout, -1).astype(jnp.bfloat16)          # (Cout, Cin*k*k)
        bias = params[f'conv{i}_b']
        bn = params.get(f'bn{i}')
        if bn is not None:
            s = bn['gamma'] / jnp.sqrt(bn['var'] + 1e-5)
            scale = s.reshape(cout, 1)
            shift = ((bias - bn['mean']) * s + bn['beta']).reshape(cout, 1)
        else:
            scale = jnp.ones((cout, 1), jnp.float32)
            shift = bias.reshape(cout, 1)
        prepped[f'conv{i}'] = dict(w=wmat, scale=scale, shift=shift)

    for name in ('rnn1', 'rnn2'):
        rp = params[name]
        hid = rp['whh_f'].shape[0]

        def interleave(wf, wb):
            # (*, 4H) x2 -> (*, 8H): per-gate [fwd | bwd] column blocks (i,f,g,o)
            parts = []
            for gi in range(4):
                parts.append(wf[:, gi * hid:(gi + 1) * hid])
                parts.append(wb[:, gi * hid:(gi + 1) * hid])
            return jnp.concatenate(parts, axis=1)

        wih = interleave(rp['wih_f'], rp['wih_b']).astype(jnp.bfloat16)
        zeros_h = jnp.zeros_like(rp['whh_f'])
        whh = jnp.concatenate([interleave(rp['whh_f'], zeros_h),
                               interleave(zeros_h, rp['whh_b'])],
                              axis=0).astype(jnp.bfloat16)       # (2H, 8H)
        bias = interleave(rp['bias_f'], rp['bias_b'])            # (1, 8H) f32
        prepped[name] = dict(wih=wih, whh=whh, bias=bias,
                             emb_w=rp['emb_w'].astype(jnp.bfloat16),
                             emb_b=rp['emb_b'])
    return prepped


# ---------------------------------- main ------------------------------------ #

if __name__ == "__main__":
    key = jax.random.PRNGKey(0)
    k_in, k_par = jax.random.split(key)

    B, NC, IMG_H, IMG_W = 2, 1, 160, 16   # imgH=160 -> feature height 9 -> 64*9=576
    NH, NCLASS = 32, 11

    x = jax.random.normal(k_in, (B, NC, IMG_H, IMG_W), jnp.float32)
    raw_params = init_params(k_par, NC, NH, NCLASS)
    prepped = prepare_params(raw_params)   # one-time weight prep (outside jit)

    fwd = jax.jit(crnn_forward)
    out = fwd(prepped, x)
    jax.block_until_ready(out)

    T_expected = IMG_W // 4 + 1            # width after the conv/pool stack
    assert out.shape == (T_expected, B, NCLASS), out.shape
    assert bool(jnp.all(jnp.isfinite(out)))
    # rows of log_softmax should (approximately) logsumexp to 0
    assert bool(jnp.allclose(jax.scipy.special.logsumexp(out, axis=2),
                             0.0, atol=1e-4))
    print("KERNEL_OK")
</pallas_src>

<mosaic_0001>
module attributes {stable_mosaic.version = 11 : i64} {
  func.func @_conv_pool_kernel(%arg0: memref<9x5120xbf16, #tpu.memory_space<vmem>>, %arg1: memref<8x9xbf16, #tpu.memory_space<vmem>>, %arg2: memref<8x1xf32, #tpu.memory_space<vmem>>, %arg3: memref<8x1xf32, #tpu.memory_space<vmem>>, %arg4: memref<8x1280xbf16, #tpu.memory_space<vmem>>) attributes {dimension_semantics = [], scalar_prefetch = 0 : i64, scratch_operands = 0 : i64, tpu.core_type = #tpu.core_type<tc>} {
    %c0 = arith.constant 0 : index
    %c0_0 = arith.constant 0 : index
    %0 = vector.load %arg1[%c0, %c0_0] : memref<8x9xbf16, #tpu.memory_space<vmem>>, vector<8x9xbf16>
    %c0_1 = arith.constant 0 : index
    %c0_2 = arith.constant 0 : index
    %1 = vector.load %arg0[%c0_1, %c0_2] : memref<9x5120xbf16, #tpu.memory_space<vmem>>, vector<9x5120xbf16>
    %cst = arith.constant dense<0.000000e+00> : vector<8x5120xf32>
    %2 = tpu.matmul %0, %1, %cst {dimension_numbers = #tpu.dot_dimension_numbers<[1], [0], [0], [1], [0, 0, 1, 1], [], []>} : vector<8x9xbf16>, vector<9x5120xbf16>, vector<8x5120xf32> -> vector<8x5120xf32>
    %c0_3 = arith.constant 0 : index
    %c0_4 = arith.constant 0 : index
    %3 = vector.load %arg2[%c0_3, %c0_4] : memref<8x1xf32, #tpu.memory_space<vmem>>, vector<8x1xf32>
    %4 = vector.broadcast %3 : vector<8x1xf32> to vector<8x5120xf32>
    %5 = arith.mulf %2, %4 : vector<8x5120xf32>
    %c0_5 = arith.constant 0 : index
    %c0_6 = arith.constant 0 : index
    %6 = vector.load %arg3[%c0_5, %c0_6] : memref<8x1xf32, #tpu.memory_space<vmem>>, vector<8x1xf32>
    %7 = vector.broadcast %6 : vector<8x1xf32> to vector<8x5120xf32>
    %8 = arith.addf %5, %7 : vector<8x5120xf32>
    %cst_7 = arith.constant 0.000000e+00 : f32
    %9 = vector.broadcast %cst_7 : f32 to vector<8x5120xf32>
    %10 = arith.maximumf %8, %9 : vector<8x5120xf32>
    %11 = vector.extract_strided_slice %10 {offsets = [0, 0], sizes = [8, 1280], strides = [1, 1]} : vector<8x5120xf32> to vector<8x1280xf32>
    %12 = vector.extract_strided_slice %10 {offsets = [0, 1280], sizes = [8, 1280], strides = [1, 1]} : vector<8x5120xf32> to vector<8x1280xf32>
    %13 = arith.maximumf %11, %12 : vector<8x1280xf32>
    %14 = vector.extract_strided_slice %10 {offsets = [0, 2560], sizes = [8, 1280], strides = [1, 1]} : vector<8x5120xf32> to vector<8x1280xf32>
    %15 = arith.maximumf %13, %14 : vector<8x1280xf32>
    %16 = vector.extract_strided_slice %10 {offsets = [0, 3840], sizes = [8, 1280], strides = [1, 1]} : vector<8x5120xf32> to vector<8x1280xf32>
    %17 = arith.maximumf %15, %16 : vector<8x1280xf32>
    %18 = arith.truncf %17 : vector<8x1280xf32> to vector<8x1280xbf16>
    %c0_8 = arith.constant 0 : index
    %c0_9 = arith.constant 0 : index
    %19 = vector.load %arg4[%c0_8, %c0_9] : memref<8x1280xbf16, #tpu.memory_space<vmem>>, vector<8x1280xbf16>
    tpu.vector_store %arg4[%c0_8, %c0_9], %18 {strides = array<i32>} : memref<8x1280xbf16, #tpu.memory_space<vmem>>, vector<8x1280xbf16>,
    return
  }
}

module attributes {stable_mosaic.version = 11 : i64} {
  func.func @_conv_pool_kernel(%arg0: memref<72x1536xbf16, #tpu.memory_space<vmem>>, %arg1: memref<32x72xbf16, #tpu.memory_space<vmem>>, %arg2: memref<32x1xf32, #tpu.memory_space<vmem>>, %arg3: memref<32x1xf32, #tpu.memory_space<vmem>>, %arg4: memref<32x384xbf16, #tpu.memory_space<vmem>>) attributes {dimension_semantics = [], scalar_prefetch = 0 : i64, scratch_operands = 0 : i64, tpu.core_type = #tpu.core_type<tc>} {
    %c0 = arith.constant 0 : index
    %c0_0 = arith.constant 0 : index
    %0 = vector.load %arg1[%c0, %c0_0] : memref<32x72xbf16, #tpu.memory_space<vmem>>, vector<32x72xbf16>
    %c0_1 = arith.constant 0 : index
    %c0_2 = arith.constant 0 : index
    %1 = vector.load %arg0[%c0_1, %c0_2] : memref<72x1536xbf16, #tpu.memory_space<vmem>>, vector<72x1536xbf16>
    %cst = arith.constant dense<0.000000e+00> : vector<32x1536xf32>
    %2 = tpu.matmul %0, %1, %cst {dimension_numbers = #tpu.dot_dimension_numbers<[1], [0], [0], [1], [0, 0, 1, 1], [], []>} : vector<32x72xbf16>, vector<72x1536xbf16>, vector<32x1536xf32> -> vector<32x1536xf32>
    %c0_3 = arith.constant 0 : index
    %c0_4 = arith.constant 0 : index
    %3 = vector.load %arg2[%c0_3, %c0_4] : memref<32x1xf32, #tpu.memory_space<vmem>>, vector<32x1xf32>
    %4 = vector.broadcast %3 : vector<32x1xf32> to vector<32x1536xf32>
    %5 = arith.mulf %2, %4 : vector<32x1536xf32>
    %c0_5 = arith.constant 0 : index
    %c0_6 = arith.constant 0 : index
    %6 = vector.load %arg3[%c0_5, %c0_6] : memref<32x1xf32, #tpu.memory_space<vmem>>, vector<32x1xf32>
    %7 = vector.broadcast %6 : vector<32x1xf32> to vector<32x1536xf32>
    %8 = arith.addf %5, %7 : vector<32x1536xf32>
    %cst_7 = arith.constant 0.000000e+00 : f32
    %9 = vector.broadcast %cst_7 : f32 to vector<32x1536xf32>
    %10 = arith.maximumf %8, %9 : vector<32x1536xf32>
    %11 = vector.extract_strided_slice %10 {offsets = [0, 0], sizes = [32, 384], strides = [1, 1]} : vector<32x1536xf32> to vector<32x384xf32>
    %12 = vector.extract_strided_slice %10 {offsets = [0, 384], sizes = [32, 384], strides = [1, 1]} : vector<32x1536xf32> to vector<32x384xf32>
    %13 = arith.maximumf %11, %12 : vector<32x384xf32>
    %14 = vector.extract_strided_slice %10 {offsets = [0, 768], sizes = [32, 384], strides = [1, 1]} : vector<32x1536xf32> to vector<32x384xf32>
    %15 = arith.maximumf %13, %14 : vector<32x384xf32>
    %16 = vector.extract_strided_slice %10 {offsets = [0, 1152], sizes = [32, 384], strides = [1, 1]} : vector<32x1536xf32> to vector<32x384xf32>
    %17 = arith.maximumf %15, %16 : vector<32x384xf32>
    %18 = arith.truncf %17 : vector<32x384xf32> to vector<32x384xbf16>
    %c0_8 = arith.constant 0 : index
    %c0_9 = arith.constant 0 : index
    %19 = vector.load %arg4[%c0_8, %c0_9] : memref<32x384xbf16, #tpu.memory_space<vmem>>, vector<32x384xbf16>
    tpu.vector_store %arg4[%c0_8, %c0_9], %18 {strides = array<i32>} : memref<32x384xbf16, #tpu.memory_space<vmem>>, vector<32x384xbf16>,
    return
  }
}

module attributes {stable_mosaic.version = 11 : i64} {
  func.func @_conv_pool_kernel(%arg0: memref<288x384xbf16, #tpu.memory_space<vmem>>, %arg1: memref<64x288xbf16, #tpu.memory_space<vmem>>, %arg2: memref<64x1xf32, #tpu.memory_space<vmem>>, %arg3: memref<64x1xf32, #tpu.memory_space<vmem>>, %arg4: memref<64x384xbf16, #tpu.memory_space<vmem>>) attributes {dimension_semantics = [], scalar_prefetch = 0 : i64, scratch_operands = 0 : i64, tpu.core_type = #tpu.core_type<tc>} {
    %c0 = arith.constant 0 : index
    %c0_0 = arith.constant 0 : index
    %0 = vector.load %arg1[%c0, %c0_0] : memref<64x288xbf16, #tpu.memory_space<vmem>>, vector<64x288xbf16>
    %c0_1 = arith.constant 0 : index
    %c0_2 = arith.constant 0 : index
    %1 = vector.load %arg0[%c0_1, %c0_2] : memref<288x384xbf16, #tpu.memory_space<vmem>>, vector<288x384xbf16>
    %cst = arith.constant dense<0.000000e+00> : vector<64x384xf32>
    %2 = tpu.matmul %0, %1, %cst {dimension_numbers = #tpu.dot_dimension_numbers<[1], [0], [0], [1], [0, 0, 1, 1], [], []>} : vector<64x288xbf16>, vector<288x384xbf16>, vector<64x384xf32> -> vector<64x384xf32>
    %c0_3 = arith.constant 0 : index
    %c0_4 = arith.constant 0 : index
    %3 = vector.load %arg2[%c0_3, %c0_4] : memref<64x1xf32, #tpu.memory_space<vmem>>, vector<64x1xf32>
    %4 = vector.broadcast %3 : vector<64x1xf32> to vector<64x384xf32>
    %5 = arith.mulf %2, %4 : vector<64x384xf32>
    %c0_5 = arith.constant 0 : index
    %c0_6 = arith.constant 0 : index
    %6 = vector.load %arg3[%c0_5, %c0_6] : memref<64x1xf32, #tpu.memory_space<vmem>>, vector<64x1xf32>
    %7 = vector.broadcast %6 : vector<64x1xf32> to vector<64x384xf32>
    %8 = arith.addf %5, %7 : vector<64x384xf32>
    %cst_7 = arith.constant 0.000000e+00 : f32
    %9 = vector.broadcast %cst_7 : f32 to vector<64x384xf32>
    %10 = arith.maximumf %8, %9 : vector<64x384xf32>
    %11 = arith.truncf %10 : vector<64x384xf32> to vector<64x384xbf16>
    %c0_8 = arith.constant 0 : index
    %c0_9 = arith.constant 0 : index
    %12 = vector.load %arg4[%c0_8, %c0_9] : memref<64x384xbf16, #tpu.memory_space<vmem>>, vector<64x384xbf16>
    tpu.vector_store %arg4[%c0_8, %c0_9], %11 {strides = array<i32>} : memref<64x384xbf16, #tpu.memory_space<vmem>>, vector<64x384xbf16>,
    return
  }
}

module attributes {stable_mosaic.version = 11 : i64} {
  func.func @_conv_pool_kernel(%arg0: memref<576x1024xbf16, #tpu.memory_space<vmem>>, %arg1: memref<64x576xbf16, #tpu.memory_space<vmem>>, %arg2: memref<64x1xf32, #tpu.memory_space<vmem>>, %arg3: memref<64x1xf32, #tpu.memory_space<vmem>>, %arg4: memref<1x1024xf32, #tpu.memory_space<vmem>>, %arg5: memref<64x256xbf16, #tpu.memory_space<vmem>>) attributes {dimension_semantics = [], scalar_prefetch = 0 : i64, scratch_operands = 0 : i64, tpu.core_type = #tpu.core_type<tc>} {
    %c0 = arith.constant 0 : index
    %c0_0 = arith.constant 0 : index
    %0 = vector.load %arg1[%c0, %c0_0] : memref<64x576xbf16, #tpu.memory_space<vmem>>, vector<64x576xbf16>
    %c0_1 = arith.constant 0 : index
    %c0_2 = arith.constant 0 : index
    %1 = vector.load %arg0[%c0_1, %c0_2] : memref<576x1024xbf16, #tpu.memory_space<vmem>>, vector<576x1024xbf16>
    %cst = arith.constant dense<0.000000e+00> : vector<64x1024xf32>
    %2 = tpu.matmul %0, %1, %cst {dimension_numbers = #tpu.dot_dimension_numbers<[1], [0], [0], [1], [0, 0, 1, 1], [], []>} : vector<64x576xbf16>, vector<576x1024xbf16>, vector<64x1024xf32> -> vector<64x1024xf32>
    %c0_3 = arith.constant 0 : index
    %c0_4 = arith.constant 0 : index
    %3 = vector.load %arg2[%c0_3, %c0_4] : memref<64x1xf32, #tpu.memory_space<vmem>>, vector<64x1xf32>
    %4 = vector.broadcast %3 : vector<64x1xf32> to vector<64x1024xf32>
    %5 = arith.mulf %2, %4 : vector<64x1024xf32>
    %c0_5 = arith.constant 0 : index
    %c0_6 = arith.constant 0 : index
    %6 = vector.load %arg3[%c0_5, %c0_6] : memref<64x1xf32, #tpu.memory_space<vmem>>, vector<64x1xf32>
    %7 = vector.broadcast %6 : vector<64x1xf32> to vector<64x1024xf32>
    %8 = arith.addf %5, %7 : vector<64x1024xf32>
    %cst_7 = arith.constant 0.000000e+00 : f32
    %9 = vector.broadcast %cst_7 : f32 to vector<64x1024xf32>
    %10 = arith.maximumf %8, %9 : vector<64x1024xf32>
    %c0_8 = arith.constant 0 : index
    %c0_9 = arith.constant 0 : index
    %11 = vector.load %arg4[%c0_8, %c0_9] : memref<1x1024xf32, #tpu.memory_space<vmem>>, vector<1x1024xf32>
    %12 = vector.broadcast %11 : vector<1x1024xf32> to vector<64x1024xf32>
    %13 = arith.mulf %10, %12 : vector<64x1024xf32>
    %14 = vector.extract_strided_slice %13 {offsets = [0, 0], sizes = [64, 256], strides = [1, 1]} : vector<64x1024xf32> to vector<64x256xf32>
    %15 = vector.extract_strided_slice %13 {offsets = [0, 256], sizes = [64, 256], strides = [1, 1]} : vector<64x1024xf32> to vector<64x256xf32>
    %16 = arith.maximumf %14, %15 : vector<64x256xf32>
    %17 = vector.extract_strided_slice %13 {offsets = [0, 512], sizes = [64, 256], strides = [1, 1]} : vector<64x1024xf32> to vector<64x256xf32>
    %18 = arith.maximumf %16, %17 : vector<64x256xf32>
    %19 = vector.extract_strided_slice %13 {offsets = [0, 768], sizes = [64, 256], strides = [1, 1]} : vector<64x1024xf32> to vector<64x256xf32>
    %20 = arith.maximumf %18, %19 : vector<64x256xf32>
    %21 = arith.truncf %20 : vector<64x256xf32> to vector<64x256xbf16>
    %c0_10 = arith.constant 0 : index
    %c0_11 = arith.constant 0 : index
    %22 = vector.load %arg5[%c0_10, %c0_11] : memref<64x256xbf16, #tpu.memory_space<vmem>>, vector<64x256xbf16>
    tpu.vector_store %arg5[%c0_10, %c0_11], %21 {strides = array<i32>} : memref<64x256xbf16, #tpu.memory_space<vmem>>, vector<64x256xbf16>,
    return
  }
}

module attributes {stable_mosaic.version = 11 : i64} {
  func.func @_conv_pool_kernel(%arg0: memref<576x256xbf16, #tpu.memory_space<vmem>>, %arg1: memref<64x576xbf16, #tpu.memory_space<vmem>>, %arg2: memref<64x1xf32, #tpu.memory_space<vmem>>, %arg3: memref<64x1xf32, #tpu.memory_space<vmem>>, %arg4: memref<64x256xbf16, #tpu.memory_space<vmem>>) attributes {dimension_semantics = [], scalar_prefetch = 0 : i64, scratch_operands = 0 : i64, tpu.core_type = #tpu.core_type<tc>} {
    %c0 = arith.constant 0 : index
    %c0_0 = arith.constant 0 : index
    %0 = vector.load %arg1[%c0, %c0_0] : memref<64x576xbf16, #tpu.memory_space<vmem>>, vector<64x576xbf16>
    %c0_1 = arith.constant 0 : index
    %c0_2 = arith.constant 0 : index
    %1 = vector.load %arg0[%c0_1, %c0_2] : memref<576x256xbf16, #tpu.memory_space<vmem>>, vector<576x256xbf16>
    %cst = arith.constant dense<0.000000e+00> : vector<64x256xf32>
    %2 = tpu.matmul %0, %1, %cst {dimension_numbers = #tpu.dot_dimension_numbers<[1], [0], [0], [1], [0, 0, 1, 1], [], []>} : vector<64x576xbf16>, vector<576x256xbf16>, vector<64x256xf32> -> vector<64x256xf32>
    %c0_3 = arith.constant 0 : index
    %c0_4 = arith.constant 0 : index
    %3 = vector.load %arg2[%c0_3, %c0_4] : memref<64x1xf32, #tpu.memory_space<vmem>>, vector<64x1xf32>
    %4 = vector.broadcast %3 : vector<64x1xf32> to vector<64x256xf32>
    %5 = arith.mulf %2, %4 : vector<64x256xf32>
    %c0_5 = arith.constant 0 : index
    %c0_6 = arith.constant 0 : index
    %6 = vector.load %arg3[%c0_5, %c0_6] : memref<64x1xf32, #tpu.memory_space<vmem>>, vector<64x1xf32>
    %7 = vector.broadcast %6 : vector<64x1xf32> to vector<64x256xf32>
    %8 = arith.addf %5, %7 : vector<64x256xf32>
    %cst_7 = arith.constant 0.000000e+00 : f32
    %9 = vector.broadcast %cst_7 : f32 to vector<64x256xf32>
    %10 = arith.maximumf %8, %9 : vector<64x256xf32>
    %11 = arith.truncf %10 : vector<64x256xf32> to vector<64x256xbf16>
    %c0_8 = arith.constant 0 : index
    %c0_9 = arith.constant 0 : index
    %12 = vector.load %arg4[%c0_8, %c0_9] : memref<64x256xbf16, #tpu.memory_space<vmem>>, vector<64x256xbf16>
    tpu.vector_store %arg4[%c0_8, %c0_9], %11 {strides = array<i32>} : memref<64x256xbf16, #tpu.memory_space<vmem>>, vector<64x256xbf16>,
    return
  }
}

module attributes {stable_mosaic.version = 11 : i64} {
  func.func @_conv_pool_kernel(%arg0: memref<576x512xbf16, #tpu.memory_space<vmem>>, %arg1: memref<64x576xbf16, #tpu.memory_space<vmem>>, %arg2: memref<64x1xf32, #tpu.memory_space<vmem>>, %arg3: memref<64x1xf32, #tpu.memory_space<vmem>>, %arg4: memref<1x512xf32, #tpu.memory_space<vmem>>, %arg5: memref<64x128xbf16, #tpu.memory_space<vmem>>) attributes {dimension_semantics = [], scalar_prefetch = 0 : i64, scratch_operands = 0 : i64, tpu.core_type = #tpu.core_type<tc>} {
    %c0 = arith.constant 0 : index
    %c0_0 = arith.constant 0 : index
    %0 = vector.load %arg1[%c0, %c0_0] : memref<64x576xbf16, #tpu.memory_space<vmem>>, vector<64x576xbf16>
    %c0_1 = arith.constant 0 : index
    %c0_2 = arith.constant 0 : index
    %1 = vector.load %arg0[%c0_1, %c0_2] : memref<576x512xbf16, #tpu.memory_space<vmem>>, vector<576x512xbf16>
    %cst = arith.constant dense<0.000000e+00> : vector<64x512xf32>
    %2 = tpu.matmul %0, %1, %cst {dimension_numbers = #tpu.dot_dimension_numbers<[1], [0], [0], [1], [0, 0, 1, 1], [], []>} : vector<64x576xbf16>, vector<576x512xbf16>, vector<64x512xf32> -> vector<64x512xf32>
    %c0_3 = arith.constant 0 : index
    %c0_4 = arith.constant 0 : index
    %3 = vector.load %arg2[%c0_3, %c0_4] : memref<64x1xf32, #tpu.memory_space<vmem>>, vector<64x1xf32>
    %4 = vector.broadcast %3 : vector<64x1xf32> to vector<64x512xf32>
    %5 = arith.mulf %2, %4 : vector<64x512xf32>
    %c0_5 = arith.constant 0 : index
    %c0_6 = arith.constant 0 : index
    %6 = vector.load %arg3[%c0_5, %c0_6] : memref<64x1xf32, #tpu.memory_space<vmem>>, vector<64x1xf32>
    %7 = vector.broadcast %6 : vector<64x1xf32> to vector<64x512xf32>
    %8 = arith.addf %5, %7 : vector<64x512xf32>
    %cst_7 = arith.constant 0.000000e+00 : f32
    %9 = vector.broadcast %cst_7 : f32 to vector<64x512xf32>
    %10 = arith.maximumf %8, %9 : vector<64x512xf32>
    %c0_8 = arith.constant 0 : index
    %c0_9 = arith.constant 0 : index
    %11 = vector.load %arg4[%c0_8, %c0_9] : memref<1x512xf32, #tpu.memory_space<vmem>>, vector<1x512xf32>
    %12 = vector.broadcast %11 : vector<1x512xf32> to vector<64x512xf32>
    %13 = arith.mulf %10, %12 : vector<64x512xf32>
    %14 = vector.extract_strided_slice %13 {offsets = [0, 0], sizes = [64, 128], strides = [1, 1]} : vector<64x512xf32> to vector<64x128xf32>
    %15 = vector.extract_strided_slice %13 {offsets = [0, 128], sizes = [64, 128], strides = [1, 1]} : vector<64x512xf32> to vector<64x128xf32>
    %16 = arith.maximumf %14, %15 : vector<64x128xf32>
    %17 = vector.extract_strided_slice %13 {offsets = [0, 256], sizes = [64, 128], strides = [1, 1]} : vector<64x512xf32> to vector<64x128xf32>
    %18 = arith.maximumf %16, %17 : vector<64x128xf32>
    %19 = vector.extract_strided_slice %13 {offsets = [0, 384], sizes = [64, 128], strides = [1, 1]} : vector<64x512xf32> to vector<64x128xf32>
    %20 = arith.maximumf %18, %19 : vector<64x128xf32>
    %21 = arith.truncf %20 : vector<64x128xf32> to vector<64x128xbf16>
    %c0_10 = arith.constant 0 : index
    %c0_11 = arith.constant 0 : index
    %22 = vector.load %arg5[%c0_10, %c0_11] : memref<64x128xbf16, #tpu.memory_space<vmem>>, vector<64x128xbf16>
    tpu.vector_store %arg5[%c0_10, %c0_11], %21 {strides = array<i32>} : memref<64x128xbf16, #tpu.memory_space<vmem>>, vector<64x128xbf16>,
    return
  }
}

module attributes {stable_mosaic.version = 11 : i64} {
  func.func @_conv_pool_kernel(%arg0: memref<256x128xbf16, #tpu.memory_space<vmem>>, %arg1: memref<64x256xbf16, #tpu.memory_space<vmem>>, %arg2: memref<64x1xf32, #tpu.memory_space<vmem>>, %arg3: memref<64x1xf32, #tpu.memory_space<vmem>>, %arg4: memref<64x128xbf16, #tpu.memory_space<vmem>>) attributes {dimension_semantics = [], scalar_prefetch = 0 : i64, scratch_operands = 0 : i64, tpu.core_type = #tpu.core_type<tc>} {
    %c0 = arith.constant 0 : index
    %c0_0 = arith.constant 0 : index
    %0 = vector.load %arg1[%c0, %c0_0] : memref<64x256xbf16, #tpu.memory_space<vmem>>, vector<64x256xbf16>
    %c0_1 = arith.constant 0 : index
    %c0_2 = arith.constant 0 : index
    %1 = vector.load %arg0[%c0_1, %c0_2] : memref<256x128xbf16, #tpu.memory_space<vmem>>, vector<256x128xbf16>
    %cst = arith.constant dense<0.000000e+00> : vector<64x128xf32>
    %2 = tpu.matmul %0, %1, %cst {dimension_numbers = #tpu.dot_dimension_numbers<[1], [0], [0], [1], [0, 0, 1, 1], [], []>} : vector<64x256xbf16>, vector<256x128xbf16>, vector<64x128xf32> -> vector<64x128xf32>
    %c0_3 = arith.constant 0 : index
    %c0_4 = arith.constant 0 : index
    %3 = vector.load %arg2[%c0_3, %c0_4] : memref<64x1xf32, #tpu.memory_space<vmem>>, vector<64x1xf32>
    %4 = vector.broadcast %3 : vector<64x1xf32> to vector<64x128xf32>
    %5 = arith.mulf %2, %4 : vector<64x128xf32>
    %c0_5 = arith.constant 0 : index
    %c0_6 = arith.constant 0 : index
    %6 = vector.load %arg3[%c0_5, %c0_6] : memref<64x1xf32, #tpu.memory_space<vmem>>, vector<64x1xf32>
    %7 = vector.broadcast %6 : vector<64x1xf32> to vector<64x128xf32>
    %8 = arith.addf %5, %7 : vector<64x128xf32>
    %cst_7 = arith.constant 0.000000e+00 : f32
    %9 = vector.broadcast %cst_7 : f32 to vector<64x128xf32>
    %10 = arith.maximumf %8, %9 : vector<64x128xf32>
    %11 = arith.truncf %10 : vector<64x128xf32> to vector<64x128xbf16>
    %c0_8 = arith.constant 0 : index
    %c0_9 = arith.constant 0 : index
    %12 = vector.load %arg4[%c0_8, %c0_9] : memref<64x128xbf16, #tpu.memory_space<vmem>>, vector<64x128xbf16>
    tpu.vector_store %arg4[%c0_8, %c0_9], %11 {strides = array<i32>} : memref<64x128xbf16, #tpu.memory_space<vmem>>, vector<64x128xbf16>,
    return
  }
}

module attributes {stable_mosaic.version = 11 : i64} {
  func.func @_rnn_stack_kernel(%arg0: memref<10x576xbf16, #tpu.memory_space<vmem>>, %arg1: memref<576x256xbf16, #tpu.memory_space<vmem>>, %arg2: memref<64x256xbf16, #tpu.memory_space<vmem>>, %arg3: memref<1x256xf32, #tpu.memory_space<vmem>>, %arg4: memref<64x32xbf16, #tpu.memory_space<vmem>>, %arg5: memref<1x32xf32, #tpu.memory_space<vmem>>, %arg6: memref<32x256xbf16, #tpu.memory_space<vmem>>, %arg7: memref<64x256xbf16, #tpu.memory_space<vmem>>, %arg8: memref<1x256xf32, #tpu.memory_space<vmem>>, %arg9: memref<64x11xbf16, #tpu.memory_space<vmem>>, %arg10: memref<1x11xf32, #tpu.memory_space<vmem>>, %arg11: memref<10x11xf32, #tpu.memory_space<vmem>>) attributes {dimension_semantics = [], scalar_prefetch = 0 : i64, scratch_operands = 0 : i64, tpu.core_type = #tpu.core_type<tc>} {
    %c0 = arith.constant 0 : index
    %c0_0 = arith.constant 0 : index
    %0 = vector.load %arg0[%c0, %c0_0] : memref<10x576xbf16, #tpu.memory_space<vmem>>, vector<10x576xbf16>
    %c0_1 = arith.constant 0 : index
    %c0_2 = arith.constant 0 : index
    %1 = vector.load %arg1[%c0_1, %c0_2] : memref<576x256xbf16, #tpu.memory_space<vmem>>, vector<576x256xbf16>
    %c0_3 = arith.constant 0 : index
    %c0_4 = arith.constant 0 : index
    %2 = vector.load %arg2[%c0_3, %c0_4] : memref<64x256xbf16, #tpu.memory_space<vmem>>, vector<64x256xbf16>
    %c0_5 = arith.constant 0 : index
    %c0_6 = arith.constant 0 : index
    %3 = vector.load %arg3[%c0_5, %c0_6] : memref<1x256xf32, #tpu.memory_space<vmem>>, vector<1x256xf32>
    %cst = arith.constant dense<0.000000e+00> : vector<10x256xf32>
    %4 = tpu.matmul %0, %1, %cst {dimension_numbers = #tpu.dot_dimension_numbers<[1], [0], [0], [1], [0, 0, 1, 1], [], []>} : vector<10x576xbf16>, vector<576x256xbf16>, vector<10x256xf32> -> vector<10x256xf32>
    %5 = vector.broadcast %3 : vector<1x256xf32> to vector<10x256xf32>
    %6 = arith.addf %4, %5 : vector<10x256xf32>
    %7 = tpu.iota {dimensions = array<i32: 1>} : vector<2x256xi32>
    %c64_i32 = arith.constant 64 : i32
    %c0_i32 = arith.constant 0 : i32
    %8 = arith.cmpi eq, %c64_i32, %c0_i32 : i32
    %c1_i32 = arith.constant 1 : i32
    %9 = arith.select %8, %c1_i32, %c64_i32 : i32
    %10 = vector.broadcast %9 : i32 to vector<2x256xi32>
    %11 = arith.remsi %7, %10 : vector<2x256xi32>
    %c0_i32_7 = arith.constant 0 : i32
    %12 = vector.broadcast %c0_i32_7 : i32 to vector<2x256xi32>
    %13 = arith.cmpi ne, %11, %12 : vector<2x256xi32>
    %c0_i32_8 = arith.constant 0 : i32
    %14 = vector.broadcast %c0_i32_8 : i32 to vector<2x256xi32>
    %15 = arith.cmpi slt, %11, %14 : vector<2x256xi32>
    %c0_i32_9 = arith.constant 0 : i32
    %16 = arith.cmpi slt, %9, %c0_i32_9 : i32
    %17 = vector.broadcast %16 : i1 to vector<2x256xi1>
    %18 = vector.broadcast %17 : vector<2x256xi1> to vector<2x256xi1>
    %19 = arith.xori %15, %18 : vector<2x256xi1>
    %20 = arith.andi %19, %13 : vector<2x256xi1>
    %21 = vector.broadcast %9 : i32 to vector<2x256xi32>
    %22 = arith.addi %11, %21 : vector<2x256xi32>
    %23 = arith.select %20, %22, %11 : vector<2x256xi1>, vector<2x256xi32>
    %c32_i32 = arith.constant 32 : i32
    %24 = vector.broadcast %c32_i32 : i32 to vector<2x256xi32>
    %25 = arith.cmpi slt, %23, %24 : vector<2x256xi32>
    %c128_i32 = arith.constant 128 : i32
    %26 = vector.broadcast %c128_i32 : i32 to vector<2x256xi32>
    %27 = arith.cmpi sge, %7, %26 : vector<2x256xi32>
    %c192_i32 = arith.constant 192 : i32
    %28 = vector.broadcast %c192_i32 : i32 to vector<2x256xi32>
    %29 = arith.cmpi slt, %7, %28 : vector<2x256xi32>
    %30 = arith.andi %27, %29 : vector<2x256xi1>
    %cst_10 = arith.constant 1.000000e+00 : f32
    %cst_11 = arith.constant 5.000000e-01 : f32
    %31 = vector.broadcast %cst_10 : f32 to vector<2x256xf32>
    %32 = vector.broadcast %cst_11 : f32 to vector<2x256xf32>
    %33 = arith.select %30, %31, %32 : vector<2x256xi1>, vector<2x256xf32>
    %34 = vector.extract_strided_slice %6 {offsets = [0, 0], sizes = [2, 256], strides = [1, 1]} : vector<10x256xf32> to vector<2x256xf32>
    %35 = vector.extract_strided_slice %6 {offsets = [8, 0], sizes = [2, 256], strides = [1, 1]} : vector<10x256xf32> to vector<2x256xf32>
    %36 = arith.select %25, %34, %35 : vector<2x256xi1>, vector<2x256xf32>
    %37 = vector.extract_strided_slice %6 {offsets = [2, 0], sizes = [2, 256], strides = [1, 1]} : vector<10x256xf32> to vector<2x256xf32>
    %38 = vector.extract_strided_slice %6 {offsets = [6, 0], sizes = [2, 256], strides = [1, 1]} : vector<10x256xf32> to vector<2x256xf32>
    %39 = arith.select %25, %37, %38 : vector<2x256xi1>, vector<2x256xf32>
    %40 = vector.extract_strided_slice %6 {offsets = [4, 0], sizes = [2, 256], strides = [1, 1]} : vector<10x256xf32> to vector<2x256xf32>
    %41 = vector.extract_strided_slice %6 {offsets = [4, 0], sizes = [2, 256], strides = [1, 1]} : vector<10x256xf32> to vector<2x256xf32>
    %42 = arith.select %25, %40, %41 : vector<2x256xi1>, vector<2x256xf32>
    %43 = vector.extract_strided_slice %6 {offsets = [6, 0], sizes = [2, 256], strides = [1, 1]} : vector<10x256xf32> to vector<2x256xf32>
    %44 = vector.extract_strided_slice %6 {offsets = [2, 0], sizes = [2, 256], strides = [1, 1]} : vector<10x256xf32> to vector<2x256xf32>
    %45 = arith.select %25, %43, %44 : vector<2x256xi1>, vector<2x256xf32>
    %46 = vector.extract_strided_slice %6 {offsets = [8, 0], sizes = [2, 256], strides = [1, 1]} : vector<10x256xf32> to vector<2x256xf32>
    %47 = vector.extract_strided_slice %6 {offsets = [0, 0], sizes = [2, 256], strides = [1, 1]} : vector<10x256xf32> to vector<2x256xf32>
    %48 = arith.select %25, %46, %47 : vector<2x256xi1>, vector<2x256xf32>
    %cst_12 = arith.constant 0.000000e+00 : f32
    %49 = vector.broadcast %cst_12 : f32 to vector<2x64xf32>
    %cst_13 = arith.constant 0.000000e+00 : f32
    %50 = vector.broadcast %cst_13 : f32 to vector<2x64xf32>
    %51 = arith.truncf %49 : vector<2x64xf32> to vector<2x64xbf16>
    %cst_14 = arith.constant dense<0.000000e+00> : vector<2x256xf32>
    %52 = tpu.matmul %51, %2, %cst_14 {dimension_numbers = #tpu.dot_dimension_numbers<[1], [0], [0], [1], [0, 0, 1, 1], [], []>} : vector<2x64xbf16>, vector<64x256xbf16>, vector<2x256xf32> -> vector<2x256xf32>
    %53 = arith.addf %36, %52 : vector<2x256xf32>
    %54 = arith.mulf %53, %33 : vector<2x256xf32>
    %55 = math.tanh %54 : vector<2x256xf32>
    %cst_15 = arith.constant 5.000000e-01 : f32
    %56 = vector.broadcast %cst_15 : f32 to vector<2x256xf32>
    %57 = arith.mulf %56, %55 : vector<2x256xf32>
    %cst_16 = arith.constant 5.000000e-01 : f32
    %58 = vector.broadcast %cst_16 : f32 to vector<2x256xf32>
    %59 = arith.addf %57, %58 : vector<2x256xf32>
    %60 = arith.select %30, %55, %59 : vector<2x256xi1>, vector<2x256xf32>
    %61 = vector.extract_strided_slice %60 {offsets = [0, 0], sizes = [2, 64], strides = [1, 1]} : vector<2x256xf32> to vector<2x64xf32>
    %62 = vector.extract_strided_slice %60 {offsets = [0, 64], sizes = [2, 64], strides = [1, 1]} : vector<2x256xf32> to vector<2x64xf32>
    %63 = vector.extract_strided_slice %60 {offsets = [0, 128], sizes = [2, 64], strides = [1, 1]} : vector<2x256xf32> to vector<2x64xf32>
    %64 = vector.extract_strided_slice %60 {offsets = [0, 192], sizes = [2, 64], strides = [1, 1]} : vector<2x256xf32> to vector<2x64xf32>
    %65 = arith.mulf %62, %50 : vector<2x64xf32>
    %66 = arith.mulf %61, %63 : vector<2x64xf32>
    %67 = arith.addf %65, %66 : vector<2x64xf32>
    %68 = math.tanh %67 : vector<2x64xf32>
    %69 = arith.mulf %64, %68 : vector<2x64xf32>
    %70 = vector.extract_strided_slice %69 {offsets = [0, 0], sizes = [2, 32], strides = [1, 1]} : vector<2x64xf32> to vector<2x32xf32>
    %71 = vector.extract_strided_slice %69 {offsets = [0, 32], sizes = [2, 32], strides = [1, 1]} : vector<2x64xf32> to vector<2x32xf32>
    %72 = arith.truncf %69 : vector<2x64xf32> to vector<2x64xbf16>
    %cst_17 = arith.constant dense<0.000000e+00> : vector<2x256xf32>
    %73 = tpu.matmul %72, %2, %cst_17 {dimension_numbers = #tpu.dot_dimension_numbers<[1], [0], [0], [1], [0, 0, 1, 1], [], []>} : vector<2x64xbf16>, vector<64x256xbf16>, vector<2x256xf32> -> vector<2x256xf32>
    %74 = arith.addf %39, %73 : vector<2x256xf32>
    %75 = arith.mulf %74, %33 : vector<2x256xf32>
    %76 = math.tanh %75 : vector<2x256xf32>
    %cst_18 = arith.constant 5.000000e-01 : f32
    %77 = vector.broadcast %cst_18 : f32 to vector<2x256xf32>
    %78 = arith.mulf %77, %76 : vector<2x256xf32>
    %cst_19 = arith.constant 5.000000e-01 : f32
    %79 = vector.broadcast %cst_19 : f32 to vector<2x256xf32>
    %80 = arith.addf %78, %79 : vector<2x256xf32>
    %81 = arith.select %30, %76, %80 : vector<2x256xi1>, vector<2x256xf32>
    %82 = vector.extract_strided_slice %81 {offsets = [0, 0], sizes = [2, 64], strides = [1, 1]} : vector<2x256xf32> to vector<2x64xf32>
    %83 = vector.extract_strided_slice %81 {offsets = [0, 64], sizes = [2, 64], strides = [1, 1]} : vector<2x256xf32> to vector<2x64xf32>
    %84 = vector.extract_strided_slice %81 {offsets = [0, 128], sizes = [2, 64], strides = [1, 1]} : vector<2x256xf32> to vector<2x64xf32>
    %85 = vector.extract_strided_slice %81 {offsets = [0, 192], sizes = [2, 64], strides = [1, 1]} : vector<2x256xf32> to vector<2x64xf32>
    %86 = arith.mulf %83, %67 : vector<2x64xf32>
    %87 = arith.mulf %82, %84 : vector<2x64xf32>
    %88 = arith.addf %86, %87 : vector<2x64xf32>
    %89 = math.tanh %88 : vector<2x64xf32>
    %90 = arith.mulf %85, %89 : vector<2x64xf32>
    %91 = vector.extract_strided_slice %90 {offsets = [0, 0], sizes = [2, 32], strides = [1, 1]} : vector<2x64xf32> to vector<2x32xf32>
    %92 = vector.extract_strided_slice %90 {offsets = [0, 32], sizes = [2, 32], strides = [1, 1]} : vector<2x64xf32> to vector<2x32xf32>
    %93 = arith.truncf %90 : vector<2x64xf32> to vector<2x64xbf16>
    %cst_20 = arith.constant dense<0.000000e+00> : vector<2x256xf32>
    %94 = tpu.matmul %93, %2, %cst_20 {dimension_numbers = #tpu.dot_dimension_numbers<[1], [0], [0], [1], [0, 0, 1, 1], [], []>} : vector<2x64xbf16>, vector<64x256xbf16>, vector<2x256xf32> -> vector<2x256xf32>
    %95 = arith.addf %42, %94 : vector<2x256xf32>
    %96 = arith.mulf %95, %33 : vector<2x256xf32>
    %97 = math.tanh %96 : vector<2x256xf32>
    %cst_21 = arith.constant 5.000000e-01 : f32
    %98 = vector.broadcast %cst_21 : f32 to vector<2x256xf32>
    %99 = arith.mulf %98, %97 : vector<2x256xf32>
    %cst_22 = arith.constant 5.000000e-01 : f32
    %100 = vector.broadcast %cst_22 : f32 to vector<2x256xf32>
    %101 = arith.addf %99, %100 : vector<2x256xf32>
    %102 = arith.select %30, %97, %101 : vector<2x256xi1>, vector<2x256xf32>
    %103 = vector.extract_strided_slice %102 {offsets = [0, 0], sizes = [2, 64], strides = [1, 1]} : vector<2x256xf32> to vector<2x64xf32>
    %104 = vector.extract_strided_slice %102 {offsets = [0, 64], sizes = [2, 64], strides = [1, 1]} : vector<2x256xf32> to vector<2x64xf32>
    %105 = vector.extract_strided_slice %102 {offsets = [0, 128], sizes = [2, 64], strides = [1, 1]} : vector<2x256xf32> to vector<2x64xf32>
    %106 = vector.extract_strided_slice %102 {offsets = [0, 192], sizes = [2, 64], strides = [1, 1]} : vector<2x256xf32> to vector<2x64xf32>
    %107 = arith.mulf %104, %88 : vector<2x64xf32>
    %108 = arith.mulf %103, %105 : vector<2x64xf32>
    %109 = arith.addf %107, %108 : vector<2x64xf32>
    %110 = math.tanh %109 : vector<2x64xf32>
    %111 = arith.mulf %106, %110 : vector<2x64xf32>
    %112 = vector.extract_strided_slice %111 {offsets = [0, 0], sizes = [2, 32], strides = [1, 1]} : vector<2x64xf32> to vector<2x32xf32>
    %113 = vector.extract_strided_slice %111 {offsets = [0, 32], sizes = [2, 32], strides = [1, 1]} : vector<2x64xf32> to vector<2x32xf32>
    %114 = arith.truncf %111 : vector<2x64xf32> to vector<2x64xbf16>
    %cst_23 = arith.constant dense<0.000000e+00> : vector<2x256xf32>
    %115 = tpu.matmul %114, %2, %cst_23 {dimension_numbers = #tpu.dot_dimension_numbers<[1], [0], [0], [1], [0, 0, 1, 1], [], []>} : vector<2x64xbf16>, vector<64x256xbf16>, vector<2x256xf32> -> vector<2x256xf32>
    %116 = arith.addf %45, %115 : vector<2x256xf32>
    %117 = arith.mulf %116, %33 : vector<2x256xf32>
    %118 = math.tanh %117 : vector<2x256xf32>
    %cst_24 = arith.constant 5.000000e-01 : f32
    %119 = vector.broadcast %cst_24 : f32 to vector<2x256xf32>
    %120 = arith.mulf %119, %118 : vector<2x256xf32>
    %cst_25 = arith.constant 5.000000e-01 : f32
    %121 = vector.broadcast %cst_25 : f32 to vector<2x256xf32>
    %122 = arith.addf %120, %121 : vector<2x256xf32>
    %123 = arith.select %30, %118, %122 : vector<2x256xi1>, vector<2x256xf32>
    %124 = vector.extract_strided_slice %123 {offsets = [0, 0], sizes = [2, 64], strides = [1, 1]} : vector<2x256xf32> to vector<2x64xf32>
    %125 = vector.extract_strided_slice %123 {offsets = [0, 64], sizes = [2, 64], strides = [1, 1]} : vector<2x256xf32> to vector<2x64xf32>
    %126 = vector.extract_strided_slice %123 {offsets = [0, 128], sizes = [2, 64], strides = [1, 1]} : vector<2x256xf32> to vector<2x64xf32>
    %127 = vector.extract_strided_slice %123 {offsets = [0, 192], sizes = [2, 64], strides = [1, 1]} : vector<2x256xf32> to vector<2x64xf32>
    %128 = arith.mulf %125, %109 : vector<2x64xf32>
    %129 = arith.mulf %124, %126 : vector<2x64xf32>
    %130 = arith.addf %128, %129 : vector<2x64xf32>
    %131 = math.tanh %130 : vector<2x64xf32>
    %132 = arith.mulf %127, %131 : vector<2x64xf32>
    %133 = vector.extract_strided_slice %132 {offsets = [0, 0], sizes = [2, 32], strides = [1, 1]} : vector<2x64xf32> to vector<2x32xf32>
    %134 = vector.extract_strided_slice %132 {offsets = [0, 32], sizes = [2, 32], strides = [1, 1]} : vector<2x64xf32> to vector<2x32xf32>
    %135 = arith.truncf %132 : vector<2x64xf32> to vector<2x64xbf16>
    %cst_26 = arith.constant dense<0.000000e+00> : vector<2x256xf32>
    %136 = tpu.matmul %135, %2, %cst_26 {dimension_numbers = #tpu.dot_dimension_numbers<[1], [0], [0], [1], [0, 0, 1, 1], [], []>} : vector<2x64xbf16>, vector<64x256xbf16>, vector<2x256xf32> -> vector<2x256xf32>
    %137 = arith.addf %48, %136 : vector<2x256xf32>
    %138 = arith.mulf %137, %33 : vector<2x256xf32>
    %139 = math.tanh %138 : vector<2x256xf32>
    %cst_27 = arith.constant 5.000000e-01 : f32
    %140 = vector.broadcast %cst_27 : f32 to vector<2x256xf32>
    %141 = arith.mulf %140, %139 : vector<2x256xf32>
    %cst_28 = arith.constant 5.000000e-01 : f32
    %142 = vector.broadcast %cst_28 : f32 to vector<2x256xf32>
    %143 = arith.addf %141, %142 : vector<2x256xf32>
    %144 = arith.select %30, %139, %143 : vector<2x256xi1>, vector<2x256xf32>
    %145 = vector.extract_strided_slice %144 {offsets = [0, 0], sizes = [2, 64], strides = [1, 1]} : vector<2x256xf32> to vector<2x64xf32>
    %146 = vector.extract_strided_slice %144 {offsets = [0, 64], sizes = [2, 64], strides = [1, 1]} : vector<2x256xf32> to vector<2x64xf32>
    %147 = vector.extract_strided_slice %144 {offsets = [0, 128], sizes = [2, 64], strides = [1, 1]} : vector<2x256xf32> to vector<2x64xf32>
    %148 = vector.extract_strided_slice %144 {offsets = [0, 192], sizes = [2, 64], strides = [1, 1]} : vector<2x256xf32> to vector<2x64xf32>
    %149 = arith.mulf %146, %130 : vector<2x64xf32>
    %150 = arith.mulf %145, %147 : vector<2x64xf32>
    %151 = arith.addf %149, %150 : vector<2x64xf32>
    %152 = math.tanh %151 : vector<2x64xf32>
    %153 = arith.mulf %148, %152 : vector<2x64xf32>
    %154 = vector.extract_strided_slice %153 {offsets = [0, 0], sizes = [2, 32], strides = [1, 1]} : vector<2x64xf32> to vector<2x32xf32>
    %155 = vector.extract_strided_slice %153 {offsets = [0, 32], sizes = [2, 32], strides = [1, 1]} : vector<2x64xf32> to vector<2x32xf32>
    %156 = tpu.concatenate %70, %91, %112, %133, %154 in 0 : vector<2x32xf32>, vector<2x32xf32>, vector<2x32xf32>, vector<2x32xf32>, vector<2x32xf32> -> vector<10x32xf32>
    %157 = tpu.concatenate %155, %134, %113, %92, %71 in 0 : vector<2x32xf32>, vector<2x32xf32>, vector<2x32xf32>, vector<2x32xf32>, vector<2x32xf32> -> vector<10x32xf32>
    %158 = tpu.concatenate %156, %157 in 1 : vector<10x32xf32>, vector<10x32xf32> -> vector<10x64xf32>
    %159 = arith.truncf %158 : vector<10x64xf32> to vector<10x64xbf16>
    %c0_29 = arith.constant 0 : index
    %c0_30 = arith.constant 0 : index
    %160 = vector.load %arg4[%c0_29, %c0_30] : memref<64x32xbf16, #tpu.memory_space<vmem>>, vector<64x32xbf16>
    %cst_31 = arith.constant dense<0.000000e+00> : vector<10x32xf32>
    %161 = tpu.matmul %159, %160, %cst_31 {dimension_numbers = #tpu.dot_dimension_numbers<[1], [0], [0], [1], [0, 0, 1, 1], [], []>} : vector<10x64xbf16>, vector<64x32xbf16>, vector<10x32xf32> -> vector<10x32xf32>
    %c0_32 = arith.constant 0 : index
    %c0_33 = arith.constant 0 : index
    %162 = vector.load %arg5[%c0_32, %c0_33] : memref<1x32xf32, #tpu.memory_space<vmem>>, vector<1x32xf32>
    %163 = vector.broadcast %162 : vector<1x32xf32> to vector<10x32xf32>
    %164 = arith.addf %161, %163 : vector<10x32xf32>
    %165 = arith.truncf %164 : vector<10x32xf32> to vector<10x32xbf16>
    %c0_34 = arith.constant 0 : index
    %c0_35 = arith.constant 0 : index
    %166 = vector.load %arg6[%c0_34, %c0_35] : memref<32x256xbf16, #tpu.memory_space<vmem>>, vector<32x256xbf16>
    %c0_36 = arith.constant 0 : index
    %c0_37 = arith.constant 0 : index
    %167 = vector.load %arg7[%c0_36, %c0_37] : memref<64x256xbf16, #tpu.memory_space<vmem>>, vector<64x256xbf16>
    %c0_38 = arith.constant 0 : index
    %c0_39 = arith.constant 0 : index
    %168 = vector.load %arg8[%c0_38, %c0_39] : memref<1x256xf32, #tpu.memory_space<vmem>>, vector<1x256xf32>
    %cst_40 = arith.constant dense<0.000000e+00> : vector<10x256xf32>
    %169 = tpu.matmul %165, %166, %cst_40 {dimension_numbers = #tpu.dot_dimension_numbers<[1], [0], [0], [1], [0, 0, 1, 1], [], []>} : vector<10x32xbf16>, vector<32x256xbf16>, vector<10x256xf32> -> vector<10x256xf32>
    %170 = vector.broadcast %168 : vector<1x256xf32> to vector<10x256xf32>
    %171 = arith.addf %169, %170 : vector<10x256xf32>
    %172 = tpu.iota {dimensions = array<i32: 1>} : vector<2x256xi32>
    %c64_i32_41 = arith.constant 64 : i32
    %c0_i32_42 = arith.constant 0 : i32
    %173 = arith.cmpi eq, %c64_i32_41, %c0_i32_42 : i32
    %c1_i32_43 = arith.constant 1 : i32
    %174 = arith.select %173, %c1_i32_43, %c64_i32_41 : i32
    %175 = vector.broadcast %174 : i32 to vector<2x256xi32>
    %176 = arith.remsi %172, %175 : vector<2x256xi32>
    %c0_i32_44 = arith.constant 0 : i32
    %177 = vector.broadcast %c0_i32_44 : i32 to vector<2x256xi32>
    %178 = arith.cmpi ne, %176, %177 : vector<2x256xi32>
    %c0_i32_45 = arith.constant 0 : i32
    %179 = vector.broadcast %c0_i32_45 : i32 to vector<2x256xi32>
    %180 = arith.cmpi slt, %176, %179 : vector<2x256xi32>
    %c0_i32_46 = arith.constant 0 : i32
    %181 = arith.cmpi slt, %174, %c0_i32_46 : i32
    %182 = vector.broadcast %181 : i1 to vector<2x256xi1>
    %183 = vector.broadcast %182 : vector<2x256xi1> to vector<2x256xi1>
    %184 = arith.xori %180, %183 : vector<2x256xi1>
    %185 = arith.andi %184, %178 : vector<2x256xi1>
    %186 = vector.broadcast %174 : i32 to vector<2x256xi32>
    %187 = arith.addi %176, %186 : vector<2x256xi32>
    %188 = arith.select %185, %187, %176 : vector<2x256xi1>, vector<2x256xi32>
    %c32_i32_47 = arith.constant 32 : i32
    %189 = vector.broadcast %c32_i32_47 : i32 to vector<2x256xi32>
    %190 = arith.cmpi slt, %188, %189 : vector<2x256xi32>
    %c128_i32_48 = arith.constant 128 : i32
    %191 = vector.broadcast %c128_i32_48 : i32 to vector<2x256xi32>
    %192 = arith.cmpi sge, %172, %191 : vector<2x256xi32>
    %c192_i32_49 = arith.constant 192 : i32
    %193 = vector.broadcast %c192_i32_49 : i32 to vector<2x256xi32>
    %194 = arith.cmpi slt, %172, %193 : vector<2x256xi32>
    %195 = arith.andi %192, %194 : vector<2x256xi1>
    %cst_50 = arith.constant 1.000000e+00 : f32
    %cst_51 = arith.constant 5.000000e-01 : f32
    %196 = vector.broadcast %cst_50 : f32 to vector<2x256xf32>
    %197 = vector.broadcast %cst_51 : f32 to vector<2x256xf32>
    %198 = arith.select %195, %196, %197 : vector<2x256xi1>, vector<2x256xf32>
    %199 = vector.extract_strided_slice %171 {offsets = [0, 0], sizes = [2, 256], strides = [1, 1]} : vector<10x256xf32> to vector<2x256xf32>
    %200 = vector.extract_strided_slice %171 {offsets = [8, 0], sizes = [2, 256], strides = [1, 1]} : vector<10x256xf32> to vector<2x256xf32>
    %201 = arith.select %190, %199, %200 : vector<2x256xi1>, vector<2x256xf32>
    %202 = vector.extract_strided_slice %171 {offsets = [2, 0], sizes = [2, 256], strides = [1, 1]} : vector<10x256xf32> to vector<2x256xf32>
    %203 = vector.extract_strided_slice %171 {offsets = [6, 0], sizes = [2, 256], strides = [1, 1]} : vector<10x256xf32> to vector<2x256xf32>
    %204 = arith.select %190, %202, %203 : vector<2x256xi1>, vector<2x256xf32>
    %205 = vector.extract_strided_slice %171 {offsets = [4, 0], sizes = [2, 256], strides = [1, 1]} : vector<10x256xf32> to vector<2x256xf32>
    %206 = vector.extract_strided_slice %171 {offsets = [4, 0], sizes = [2, 256], strides = [1, 1]} : vector<10x256xf32> to vector<2x256xf32>
    %207 = arith.select %190, %205, %206 : vector<2x256xi1>, vector<2x256xf32>
    %208 = vector.extract_strided_slice %171 {offsets = [6, 0], sizes = [2, 256], strides = [1, 1]} : vector<10x256xf32> to vector<2x256xf32>
    %209 = vector.extract_strided_slice %171 {offsets = [2, 0], sizes = [2, 256], strides = [1, 1]} : vector<10x256xf32> to vector<2x256xf32>
    %210 = arith.select %190, %208, %209 : vector<2x256xi1>, vector<2x256xf32>
    %211 = vector.extract_strided_slice %171 {offsets = [8, 0], sizes = [2, 256], strides = [1, 1]} : vector<10x256xf32> to vector<2x256xf32>
    %212 = vector.extract_strided_slice %171 {offsets = [0, 0], sizes = [2, 256], strides = [1, 1]} : vector<10x256xf32> to vector<2x256xf32>
    %213 = arith.select %190, %211, %212 : vector<2x256xi1>, vector<2x256xf32>
    %cst_52 = arith.constant 0.000000e+00 : f32
    %214 = vector.broadcast %cst_52 : f32 to vector<2x64xf32>
    %cst_53 = arith.constant 0.000000e+00 : f32
    %215 = vector.broadcast %cst_53 : f32 to vector<2x64xf32>
    %216 = arith.truncf %214 : vector<2x64xf32> to vector<2x64xbf16>
    %cst_54 = arith.constant dense<0.000000e+00> : vector<2x256xf32>
    %217 = tpu.matmul %216, %167, %cst_54 {dimension_numbers = #tpu.dot_dimension_numbers<[1], [0], [0], [1], [0, 0, 1, 1], [], []>} : vector<2x64xbf16>, vector<64x256xbf16>, vector<2x256xf32> -> vector<2x256xf32>
    %218 = arith.addf %201, %217 : vector<2x256xf32>
    %219 = arith.mulf %218, %198 : vector<2x256xf32>
    %220 = math.tanh %219 : vector<2x256xf32>
    %cst_55 = arith.constant 5.000000e-01 : f32
    %221 = vector.broadcast %cst_55 : f32 to vector<2x256xf32>
    %222 = arith.mulf %221, %220 : vector<2x256xf32>
    %cst_56 = arith.constant 5.000000e-01 : f32
    %223 = vector.broadcast %cst_56 : f32 to vector<2x256xf32>
    %224 = arith.addf %222, %223 : vector<2x256xf32>
    %225 = arith.select %195, %220, %224 : vector<2x256xi1>, vector<2x256xf32>
    %226 = vector.extract_strided_slice %225 {offsets = [0, 0], sizes = [2, 64], strides = [1, 1]} : vector<2x256xf32> to vector<2x64xf32>
    %227 = vector.extract_strided_slice %225 {offsets = [0, 64], sizes = [2, 64], strides = [1, 1]} : vector<2x256xf32> to vector<2x64xf32>
    %228 = vector.extract_strided_slice %225 {offsets = [0, 128], sizes = [2, 64], strides = [1, 1]} : vector<2x256xf32> to vector<2x64xf32>
    %229 = vector.extract_strided_slice %225 {offsets = [0, 192], sizes = [2, 64], strides = [1, 1]} : vector<2x256xf32> to vector<2x64xf32>
    %230 = arith.mulf %227, %215 : vector<2x64xf32>
    %231 = arith.mulf %226, %228 : vector<2x64xf32>
    %232 = arith.addf %230, %231 : vector<2x64xf32>
    %233 = math.tanh %232 : vector<2x64xf32>
    %234 = arith.mulf %229, %233 : vector<2x64xf32>
    %235 = vector.extract_strided_slice %234 {offsets = [0, 0], sizes = [2, 32], strides = [1, 1]} : vector<2x64xf32> to vector<2x32xf32>
    %236 = vector.extract_strided_slice %234 {offsets = [0, 32], sizes = [2, 32], strides = [1, 1]} : vector<2x64xf32> to vector<2x32xf32>
    %237 = arith.truncf %234 : vector<2x64xf32> to vector<2x64xbf16>
    %cst_57 = arith.constant dense<0.000000e+00> : vector<2x256xf32>
    %238 = tpu.matmul %237, %167, %cst_57 {dimension_numbers = #tpu.dot_dimension_numbers<[1], [0], [0], [1], [0, 0, 1, 1], [], []>} : vector<2x64xbf16>, vector<64x256xbf16>, vector<2x256xf32> -> vector<2x256xf32>
    %239 = arith.addf %204, %238 : vector<2x256xf32>
    %240 = arith.mulf %239, %198 : vector<2x256xf32>
    %241 = math.tanh %240 : vector<2x256xf32>
    %cst_58 = arith.constant 5.000000e-01 : f32
    %242 = vector.broadcast %cst_58 : f32 to vector<2x256xf32>
    %243 = arith.mulf %242, %241 : vector<2x256xf32>
    %cst_59 = arith.constant 5.000000e-01 : f32
    %244 = vector.broadcast %cst_59 : f32 to vector<2x256xf32>
    %245 = arith.addf %243, %244 : vector<2x256xf32>
    %246 = arith.select %195, %241, %245 : vector<2x256xi1>, vector<2x256xf32>
    %247 = vector.extract_strided_slice %246 {offsets = [0, 0], sizes = [2, 64], strides = [1, 1]} : vector<2x256xf32> to vector<2x64xf32>
    %248 = vector.extract_strided_slice %246 {offsets = [0, 64], sizes = [2, 64], strides = [1, 1]} : vector<2x256xf32> to vector<2x64xf32>
    %249 = vector.extract_strided_slice %246 {offsets = [0, 128], sizes = [2, 64], strides = [1, 1]} : vector<2x256xf32> to vector<2x64xf32>
    %250 = vector.extract_strided_slice %246 {offsets = [0, 192], sizes = [2, 64], strides = [1, 1]} : vector<2x256xf32> to vector<2x64xf32>
    %251 = arith.mulf %248, %232 : vector<2x64xf32>
    %252 = arith.mulf %247, %249 : vector<2x64xf32>
    %253 = arith.addf %251, %252 : vector<2x64xf32>
    %254 = math.tanh %253 : vector<2x64xf32>
    %255 = arith.mulf %250, %254 : vector<2x64xf32>
    %256 = vector.extract_strided_slice %255 {offsets = [0, 0], sizes = [2, 32], strides = [1, 1]} : vector<2x64xf32> to vector<2x32xf32>
    %257 = vector.extract_strided_slice %255 {offsets = [0, 32], sizes = [2, 32], strides = [1, 1]} : vector<2x64xf32> to vector<2x32xf32>
    %258 = arith.truncf %255 : vector<2x64xf32> to vector<2x64xbf16>
    %cst_60 = arith.constant dense<0.000000e+00> : vector<2x256xf32>
    %259 = tpu.matmul %258, %167, %cst_60 {dimension_numbers = #tpu.dot_dimension_numbers<[1], [0], [0], [1], [0, 0, 1, 1], [], []>} : vector<2x64xbf16>, vector<64x256xbf16>, vector<2x256xf32> -> vector<2x256xf32>
    %260 = arith.addf %207, %259 : vector<2x256xf32>
    %261 = arith.mulf %260, %198 : vector<2x256xf32>
    %262 = math.tanh %261 : vector<2x256xf32>
    %cst_61 = arith.constant 5.000000e-01 : f32
    %263 = vector.broadcast %cst_61 : f32 to vector<2x256xf32>
    %264 = arith.mulf %263, %262 : vector<2x256xf32>
    %cst_62 = arith.constant 5.000000e-01 : f32
    %265 = vector.broadcast %cst_62 : f32 to vector<2x256xf32>
    %266 = arith.addf %264, %265 : vector<2x256xf32>
    %267 = arith.select %195, %262, %266 : vector<2x256xi1>, vector<2x256xf32>
    %268 = vector.extract_strided_slice %267 {offsets = [0, 0], sizes = [2, 64], strides = [1, 1]} : vector<2x256xf32> to vector<2x64xf32>
    %269 = vector.extract_strided_slice %267 {offsets = [0, 64], sizes = [2, 64], strides = [1, 1]} : vector<2x256xf32> to vector<2x64xf32>
    %270 = vector.extract_strided_slice %267 {offsets = [0, 128], sizes = [2, 64], strides = [1, 1]} : vector<2x256xf32> to vector<2x64xf32>
    %271 = vector.extract_strided_slice %267 {offsets = [0, 192], sizes = [2, 64], strides = [1, 1]} : vector<2x256xf32> to vector<2x64xf32>
    %272 = arith.mulf %269, %253 : vector<2x64xf32>
    %273 = arith.mulf %268, %270 : vector<2x64xf32>
    %274 = arith.addf %272, %273 : vector<2x64xf32>
    %275 = math.tanh %274 : vector<2x64xf32>
    %276 = arith.mulf %271, %275 : vector<2x64xf32>
    %277 = vector.extract_strided_slice %276 {offsets = [0, 0], sizes = [2, 32], strides = [1, 1]} : vector<2x64xf32> to vector<2x32xf32>
    %278 = vector.extract_strided_slice %276 {offsets = [0, 32], sizes = [2, 32], strides = [1, 1]} : vector<2x64xf32> to vector<2x32xf32>
    %279 = arith.truncf %276 : vector<2x64xf32> to vector<2x64xbf16>
    %cst_63 = arith.constant dense<0.000000e+00> : vector<2x256xf32>
    %280 = tpu.matmul %279, %167, %cst_63 {dimension_numbers = #tpu.dot_dimension_numbers<[1], [0], [0], [1], [0, 0, 1, 1], [], []>} : vector<2x64xbf16>, vector<64x256xbf16>, vector<2x256xf32> -> vector<2x256xf32>
    %281 = arith.addf %210, %280 : vector<2x256xf32>
    %282 = arith.mulf %281, %198 : vector<2x256xf32>
    %283 = math.tanh %282 : vector<2x256xf32>
    %cst_64 = arith.constant 5.000000e-01 : f32
    %284 = vector.broadcast %cst_64 : f32 to vector<2x256xf32>
    %285 = arith.mulf %284, %283 : vector<2x256xf32>
    %cst_65 = arith.constant 5.000000e-01 : f32
    %286 = vector.broadcast %cst_65 : f32 to vector<2x256xf32>
    %287 = arith.addf %285, %286 : vector<2x256xf32>
    %288 = arith.select %195, %283, %287 : vector<2x256xi1>, vector<2x256xf32>
    %289 = vector.extract_strided_slice %288 {offsets = [0, 0], sizes = [2, 64], strides = [1, 1]} : vector<2x256xf32> to vector<2x64xf32>
    %290 = vector.extract_strided_slice %288 {offsets = [0, 64], sizes = [2, 64], strides = [1, 1]} : vector<2x256xf32> to vector<2x64xf32>
    %291 = vector.extract_strided_slice %288 {offsets = [0, 128], sizes = [2, 64], strides = [1, 1]} : vector<2x256xf32> to vector<2x64xf32>
    %292 = vector.extract_strided_slice %288 {offsets = [0, 192], sizes = [2, 64], strides = [1, 1]} : vector<2x256xf32> to vector<2x64xf32>
    %293 = arith.mulf %290, %274 : vector<2x64xf32>
    %294 = arith.mulf %289, %291 : vector<2x64xf32>
    %295 = arith.addf %293, %294 : vector<2x64xf32>
    %296 = math.tanh %295 : vector<2x64xf32>
    %297 = arith.mulf %292, %296 : vector<2x64xf32>
    %298 = vector.extract_strided_slice %297 {offsets = [0, 0], sizes = [2, 32], strides = [1, 1]} : vector<2x64xf32> to vector<2x32xf32>
    %299 = vector.extract_strided_slice %297 {offsets = [0, 32], sizes = [2, 32], strides = [1, 1]} : vector<2x64xf32> to vector<2x32xf32>
    %300 = arith.truncf %297 : vector<2x64xf32> to vector<2x64xbf16>
    %cst_66 = arith.constant dense<0.000000e+00> : vector<2x256xf32>
    %301 = tpu.matmul %300, %167, %cst_66 {dimension_numbers = #tpu.dot_dimension_numbers<[1], [0], [0], [1], [0, 0, 1, 1], [], []>} : vector<2x64xbf16>, vector<64x256xbf16>, vector<2x256xf32> -> vector<2x256xf32>
    %302 = arith.addf %213, %301 : vector<2x256xf32>
    %303 = arith.mulf %302, %198 : vector<2x256xf32>
    %304 = math.tanh %303 : vector<2x256xf32>
    %cst_67 = arith.constant 5.000000e-01 : f32
    %305 = vector.broadcast %cst_67 : f32 to vector<2x256xf32>
    %306 = arith.mulf %305, %304 : vector<2x256xf32>
    %cst_68 = arith.constant 5.000000e-01 : f32
    %307 = vector.broadcast %cst_68 : f32 to vector<2x256xf32>
    %308 = arith.addf %306, %307 : vector<2x256xf32>
    %309 = arith.select %195, %304, %308 : vector<2x256xi1>, vector<2x256xf32>
    %310 = vector.extract_strided_slice %309 {offsets = [0, 0], sizes = [2, 64], strides = [1, 1]} : vector<2x256xf32> to vector<2x64xf32>
    %311 = vector.extract_strided_slice %309 {offsets = [0, 64], sizes = [2, 64], strides = [1, 1]} : vector<2x256xf32> to vector<2x64xf32>
    %312 = vector.extract_strided_slice %309 {offsets = [0, 128], sizes = [2, 64], strides = [1, 1]} : vector<2x256xf32> to vector<2x64xf32>
    %313 = vector.extract_strided_slice %309 {offsets = [0, 192], sizes = [2, 64], strides = [1, 1]} : vector<2x256xf32> to vector<2x64xf32>
    %314 = arith.mulf %311, %295 : vector<2x64xf32>
    %315 = arith.mulf %310, %312 : vector<2x64xf32>
    %316 = arith.addf %314, %315 : vector<2x64xf32>
    %317 = math.tanh %316 : vector<2x64xf32>
    %318 = arith.mulf %313, %317 : vector<2x64xf32>
    %319 = vector.extract_strided_slice %318 {offsets = [0, 0], sizes = [2, 32], strides = [1, 1]} : vector<2x64xf32> to vector<2x32xf32>
    %320 = vector.extract_strided_slice %318 {offsets = [0, 32], sizes = [2, 32], strides = [1, 1]} : vector<2x64xf32> to vector<2x32xf32>
    %321 = tpu.concatenate %235, %256, %277, %298, %319 in 0 : vector<2x32xf32>, vector<2x32xf32>, vector<2x32xf32>, vector<2x32xf32>, vector<2x32xf32> -> vector<10x32xf32>
    %322 = tpu.concatenate %320, %299, %278, %257, %236 in 0 : vector<2x32xf32>, vector<2x32xf32>, vector<2x32xf32>, vector<2x32xf32>, vector<2x32xf32> -> vector<10x32xf32>
    %323 = tpu.concatenate %321, %322 in 1 : vector<10x32xf32>, vector<10x32xf32> -> vector<10x64xf32>
    %324 = arith.truncf %323 : vector<10x64xf32> to vector<10x64xbf16>
    %c0_69 = arith.constant 0 : index
    %c0_70 = arith.constant 0 : index
    %325 = vector.load %arg9[%c0_69, %c0_70] : memref<64x11xbf16, #tpu.memory_space<vmem>>, vector<64x11xbf16>
    %cst_71 = arith.constant dense<0.000000e+00> : vector<10x11xf32>
    %326 = tpu.matmul %324, %325, %cst_71 {dimension_numbers = #tpu.dot_dimension_numbers<[1], [0], [0], [1], [0, 0, 1, 1], [], []>} : vector<10x64xbf16>, vector<64x11xbf16>, vector<10x11xf32> -> vector<10x11xf32>
    %c0_72 = arith.constant 0 : index
    %c0_73 = arith.constant 0 : index
    %327 = vector.load %arg10[%c0_72, %c0_73] : memref<1x11xf32, #tpu.memory_space<vmem>>, vector<1x11xf32>
    %328 = vector.broadcast %327 : vector<1x11xf32> to vector<10x11xf32>
    %329 = arith.addf %326, %328 : vector<10x11xf32>
    %cst_74 = arith.constant dense<0xFF800000> : vector<10xf32>
    %330 = vector.multi_reduction <maximumf>, %329, %cst_74 [1] : vector<10x11xf32> to vector<10xf32>
    %331 = vector.shape_cast %330 : vector<10xf32> to vector<10x1xf32>
    %332 = vector.broadcast %331 : vector<10x1xf32> to vector<10x11xf32>
    %333 = arith.subf %329, %332 : vector<10x11xf32>
    %334 = math.exp %333 : vector<10x11xf32>
    %cst_75 = arith.constant dense<0.000000e+00> : vector<10xf32>
    %335 = vector.multi_reduction <add>, %334, %cst_75 [1] : vector<10x11xf32> to vector<10xf32>
    %336 = vector.shape_cast %335 : vector<10xf32> to vector<10x1xf32>
    %337 = math.log %336 : vector<10x1xf32>
    %338 = vector.broadcast %337 : vector<10x1xf32> to vector<10x11xf32>
    %339 = arith.subf %333, %338 : vector<10x11xf32>
    %c0_76 = arith.constant 0 : index
    %c0_77 = arith.constant 0 : index
    %340 = vector.load %arg11[%c0_76, %c0_77] : memref<10x11xf32, #tpu.memory_space<vmem>>, vector<10x11xf32>
    tpu.vector_store %arg11[%c0_76, %c0_77], %339 {strides = array<i32>} : memref<10x11xf32, #tpu.memory_space<vmem>>, vector<10x11xf32>,
    return
  }
}

</mosaic_0001>

<llo_original>
// kernel: crnn_forward.8
$region0: #{crnn_forward.8}
  #allocation0 [shape = 'u32[]', space=smem, size = 0x4, offset = 0x4, fixed_abs, tag = 'smem constant byte address 0x4 - core index']
  #allocation1 [shape = 'u32[144,128]{1,0:T(1,128)}', space=vmem, size = 0x12000, scoped, tag = 'internal scratch']
  %s0 = inlined_call_operand.vmem [shape: bf16[9,5120], index: 0, kind: input, shape index: {}]
  %s1 = inlined_call_operand.vmem [shape: bf16[8,9], index: 1, kind: input, shape index: {}]
  %s2 = inlined_call_operand.vmem [shape: f32[8,1], index: 2, kind: input, shape index: {}]
  %s3 = inlined_call_operand.vmem [shape: f32[8,1], index: 3, kind: input, shape index: {}]
  %s4 = inlined_call_operand.vmem [shape: bf16[8,1280], index: 4, kind: output, shape index: {}]
  %s5 = sld [smem:[#allocation0]]
  $region26: #{crnn_forward.8} parent=0
    _
  %s7 = ssub.s32 1, %s5
  %s8 = scalar_select 0, %s7, %s5
  // Predicated region
  $region2: #{crnn_forward.8} parent=0 // pred_check
    _
  $region3: #{crnn_forward.8} parent=0 // pred_check_branch
    %10 = sbr.rel (0) target = $region5
  $region4: #{crnn_forward.8} parent=0 // pred_region
    _
  $region5: #{crnn_forward.8} parent=0 // pred_fallthru
    _
  // Predicated region
  $region6: #{crnn_forward.8} parent=0 // pred_check
    _
  $region7: #{crnn_forward.8} parent=0 // pred_check_branch
    %12 = sbr.rel (0) target = $region9
  $region8: #{crnn_forward.8} parent=0 // pred_region
    _
  $region9: #{crnn_forward.8} parent=0 // pred_fallthru
    _
  // Predicated region
  $region10: #{crnn_forward.8} parent=0 // pred_check
    _
  $region11: #{crnn_forward.8} parent=0 // pred_check_branch
    %14 = sbr.rel (0) target = $region13
  $region12: #{crnn_forward.8} parent=0 // pred_region
    _
  $region13: #{crnn_forward.8} parent=0 // pred_fallthru
    _
  // Predicated region
  $region14: #{crnn_forward.8} parent=0 // pred_check
    _
  $region15: #{crnn_forward.8} parent=0 // pred_check_branch
    %16 = sbr.rel (0) target = $region17
  $region16: #{crnn_forward.8} parent=0 // pred_region
    _
  $region17: #{crnn_forward.8} parent=0 // pred_fallthru
    _
  %v18 = vld [vmem:[%s1] sm:$0xf]
  %v19 = vld [vmem:[%s0] sm:$0xff]
  %v20 = vld [vmem:[%s0 + $0x8] sm:$0xff]
  %v21 = vld [vmem:[%s0 + $0x10] sm:$0xff]
  %v22 = vld [vmem:[%s0 + $0x18] sm:$0xff]
  %v23 = vld [vmem:[%s0 + $0x20] sm:$0xff]
  %v24 = vld [vmem:[%s0 + $0x28] sm:$0xff]
  %v25 = vld [vmem:[%s0 + $0x30] sm:$0xff]
  %v26 = vld [vmem:[%s0 + $0x38] sm:$0xff]
  %v27 = vld [vmem:[%s0 + $0x40] sm:$0xff]
  %v28 = vld [vmem:[%s0 + $0x48] sm:$0xff]
  %v29 = vld [vmem:[%s0 + $0x50] sm:$0xff]
  %v30 = vld [vmem:[%s0 + $0x58] sm:$0xff]
  %v31 = vld [vmem:[%s0 + $0x60] sm:$0xff]
  %v32 = vld [vmem:[%s0 + $0x68] sm:$0xff]
  %v33 = vld [vmem:[%s0 + $0x70] sm:$0xff]
  %v34 = vld [vmem:[%s0 + $0x78] sm:$0xff]
  %v35 = vld [vmem:[%s0 + $0x80] sm:$0xff]
  %v36 = vld [vmem:[%s0 + $0x88] sm:$0xff]
  %v37 = vld [vmem:[%s0 + $0x90] sm:$0xff]
  %v38 = vld [vmem:[%s0 + $0x98] sm:$0xff]
  %v39 = vld [vmem:[%s0 + $0xa0] sm:$0x11]
  %v40 = vld [vmem:[%s0 + $0xa8] sm:$0x11]
  %v41 = vld [vmem:[%s0 + $0xb0] sm:$0x11]
  %v42 = vld [vmem:[%s0 + $0xb8] sm:$0x11]
  %v43 = vld [vmem:[%s0 + $0xc0] sm:$0x11]
  %v44 = vld [vmem:[%s0 + $0xc8] sm:$0x11]
  %v45 = vld [vmem:[%s0 + $0xd0] sm:$0x11]
  %v46 = vld [vmem:[%s0 + $0xd8] sm:$0x11]
  %v47 = vld [vmem:[%s0 + $0xe0] sm:$0x11]
  %v48 = vld [vmem:[%s0 + $0xe8] sm:$0x11]
  %v49 = vld [vmem:[%s0 + $0xf0] sm:$0x11]
  %v50 = vld [vmem:[%s0 + $0xf8] sm:$0x11]
  %v51 = vld [vmem:[%s0 + $0x100] sm:$0x11]
  %v52 = vld [vmem:[%s0 + $0x108] sm:$0x11]
  %v53 = vld [vmem:[%s0 + $0x110] sm:$0x11]
  %v54 = vld [vmem:[%s0 + $0x118] sm:$0x11]
  %v55 = vld [vmem:[%s0 + $0x120] sm:$0x11]
  %v56 = vld [vmem:[%s0 + $0x128] sm:$0x11]
  %v57 = vld [vmem:[%s0 + $0x130] sm:$0x11]
  %v58 = vld [vmem:[%s0 + $0x138] sm:$0x11]
  %v99 = vunpack.c.l.b16 %v19
  %v100 = vunpack.c.h.b16 %v19
  %v101 = vunpack.c.l.b16 %v20
  %v102 = vunpack.c.h.b16 %v20
  %v103 = vunpack.c.l.b16 %v21
  %v104 = vunpack.c.h.b16 %v21
  %v105 = vunpack.c.l.b16 %v22
  %v106 = vunpack.c.h.b16 %v22
  %v107 = vunpack.c.l.b16 %v23
  %v108 = vunpack.c.h.b16 %v23
  %v109 = vunpack.c.l.b16 %v24
  %v110 = vunpack.c.h.b16 %v24
  %v111 = vunpack.c.l.b16 %v25
  %v112 = vunpack.c.h.b16 %v25
  %v113 = vunpack.c.l.b16 %v26
  %v114 = vunpack.c.h.b16 %v26
  %v115 = vunpack.c.l.b16 %v27
  %v116 = vunpack.c.h.b16 %v27
  %v117 = vunpack.c.l.b16 %v28
  %v118 = vunpack.c.h.b16 %v28
  %v119 = vunpack.c.l.b16 %v29
  %v120 = vunpack.c.h.b16 %v29
  %v121 = vunpack.c.l.b16 %v30
  %v122 = vunpack.c.h.b16 %v30
  %v123 = vunpack.c.l.b16 %v31
  %v124 = vunpack.c.h.b16 %v31
  %v125 = vunpack.c.l.b16 %v32
  %v126 = vunpack.c.h.b16 %v32
  %v127 = vunpack.c.l.b16 %v33
  %v128 = vunpack.c.h.b16 %v33
  %v129 = vunpack.c.l.b16 %v34
  %v130 = vunpack.c.h.b16 %v34
  %v131 = vunpack.c.l.b16 %v35
  %v132 = vunpack.c.h.b16 %v35
  %v133 = vunpack.c.l.b16 %v36
  %v134 = vunpack.c.h.b16 %v36
  %v135 = vunpack.c.l.b16 %v37
  %v136 = vunpack.c.h.b16 %v37
  %v137 = vunpack.c.l.b16 %v38
  %v138 = vunpack.c.h.b16 %v38
  %v139 = vunpack.c.l.b16 %v39
  %v140 = vunpack.c.h.b16 %v39
  %v141 = vunpack.c.l.b16 %v40
  %v142 = vunpack.c.h.b16 %v40
  %v143 = vunpack.c.l.b16 %v41
  %v144 = vunpack.c.h.b16 %v41
  %v145 = vunpack.c.l.b16 %v42
  %v146 = vunpack.c.h.b16 %v42
  %v147 = vunpack.c.l.b16 %v43
  %v148 = vunpack.c.h.b16 %v43
  %v149 = vunpack.c.l.b16 %v44
  %v150 = vunpack.c.h.b16 %v44
  %v151 = vunpack.c.l.b16 %v45
  %v152 = vunpack.c.h.b16 %v45
  %v153 = vunpack.c.l.b16 %v46
  %v154 = vunpack.c.h.b16 %v46
  %v155 = vunpack.c.l.b16 %v47
  %v156 = vunpack.c.h.b16 %v47
  %v157 = vunpack.c.l.b16 %v48
  %v158 = vunpack.c.h.b16 %v48
  %v159 = vunpack.c.l.b16 %v49
  %v160 = vunpack.c.h.b16 %v49
  %v161 = vunpack.c.l.b16 %v50
  %v162 = vunpack.c.h.b16 %v50
  %v163 = vunpack.c.l.b16 %v51
  %v164 = vunpack.c.h.b16 %v51
  %v165 = vunpack.c.l.b16 %v52
  %v166 = vunpack.c.h.b16 %v52
  %v167 = vunpack.c.l.b16 %v53
  %v168 = vunpack.c.h.b16 %v53
  %v169 = vunpack.c.l.b16 %v54
  %v170 = vunpack.c.h.b16 %v54
  %v171 = vunpack.c.l.b16 %v55
  %v172 = vunpack.c.h.b16 %v55
  %v173 = vunpack.c.l.b16 %v56
  %v174 = vunpack.c.h.b16 %v56
  %v175 = vunpack.c.l.b16 %v57
  %v176 = vunpack.c.h.b16 %v57
  %v177 = vunpack.c.l.b16 %v58
  %v178 = vunpack.c.h.b16 %v58
  %v179 = vpack.c.b16 %v139, %v99
  %v180 = vpack.c.b16 %v140, %v100
  %v181 = vpack.c.b16 %v141, %v101
  %v182 = vpack.c.b16 %v142, %v102
  %v183 = vpack.c.b16 %v143, %v103
  %v184 = vpack.c.b16 %v144, %v104
  %v185 = vpack.c.b16 %v145, %v105
  %v186 = vpack.c.b16 %v146, %v106
  %v187 = vpack.c.b16 %v147, %v107
  %v188 = vpack.c.b16 %v148, %v108
  %v189 = vpack.c.b16 %v149, %v109
  %v190 = vpack.c.b16 %v150, %v110
  %v191 = vpack.c.b16 %v151, %v111
  %v192 = vpack.c.b16 %v152, %v112
  %v193 = vpack.c.b16 %v153, %v113
  %v194 = vpack.c.b16 %v154, %v114
  %v195 = vpack.c.b16 %v155, %v115
  %v196 = vpack.c.b16 %v156, %v116
  %v197 = vpack.c.b16 %v157, %v117
  %v198 = vpack.c.b16 %v158, %v118
  %v199 = vpack.c.b16 %v159, %v119
  %v200 = vpack.c.b16 %v160, %v120
  %v201 = vpack.c.b16 %v161, %v121
  %v202 = vpack.c.b16 %v162, %v122
  %v203 = vpack.c.b16 %v163, %v123
  %v204 = vpack.c.b16 %v164, %v124
  %v205 = vpack.c.b16 %v165, %v125
  %v206 = vpack.c.b16 %v166, %v126
  %v207 = vpack.c.b16 %v167, %v127
  %v208 = vpack.c.b16 %v168, %v128
  %v209 = vpack.c.b16 %v169, %v129
  %v210 = vpack.c.b16 %v170, %v130
  %v211 = vpack.c.b16 %v171, %v131
  %v212 = vpack.c.b16 %v172, %v132
  %v213 = vpack.c.b16 %v173, %v133
  %v214 = vpack.c.b16 %v174, %v134
  %v215 = vpack.c.b16 %v175, %v135
  %v216 = vpack.c.b16 %v176, %v136
  %v217 = vpack.c.b16 %v177, %v137
  %v218 = vpack.c.b16 %v178, %v138
  %vm219 = vcmask 72704
  %v221 = vsel %vm219, %v18, 0
  %vm223 = vcmask 1043456
  %vm224 = vcmask 1044480
  %v225 = vsel %vm223, 4294967295, 65535
  %v226 = vsel %vm224, %v225, 0
  %v228 = vand.u32 %v179, %v226
  %v231 = vand.u32 %v180, %v226
  %v234 = vand.u32 %v181, %v226
  %v237 = vand.u32 %v182, %v226
  %v240 = vand.u32 %v183, %v226
  %v243 = vand.u32 %v184, %v226
  %v246 = vand.u32 %v185, %v226
  %v249 = vand.u32 %v186, %v226
  %v252 = vand.u32 %v187, %v226
  %v255 = vand.u32 %v188, %v226
  %v258 = vand.u32 %v189, %v226
  %v261 = vand.u32 %v190, %v226
  %v264 = vand.u32 %v191, %v226
  %v267 = vand.u32 %v192, %v226
  %v270 = vand.u32 %v193, %v226
  %v273 = vand.u32 %v194, %v226
  %v276 = vand.u32 %v195, %v226
  %v279 = vand.u32 %v196, %v226
  %v282 = vand.u32 %v197, %v226
  %v285 = vand.u32 %v198, %v226
  %v288 = vand.u32 %v199, %v226
  %v291 = vand.u32 %v200, %v226
  %v294 = vand.u32 %v201, %v226
  %v297 = vand.u32 %v202, %v226
  %v300 = vand.u32 %v203, %v226
  %v303 = vand.u32 %v204, %v226
  %v306 = vand.u32 %v205, %v226
  %v309 = vand.u32 %v206, %v226
  %v312 = vand.u32 %v207, %v226
  %v315 = vand.u32 %v208, %v226
  %v318 = vand.u32 %v209, %v226
  %v321 = vand.u32 %v210, %v226
  %v324 = vand.u32 %v211, %v226
  %v327 = vand.u32 %v212, %v226
  %v330 = vand.u32 %v213, %v226
  %v333 = vand.u32 %v214, %v226
  %v336 = vand.u32 %v215, %v226
  %v339 = vand.u32 %v216, %v226
  %v342 = vand.u32 %v217, %v226
  %v345 = vand.u32 %v218, %v226
  %347 = vmatprep.subr.bf16.mxu0 %v231
  %348 = vmatpush1.bf16.msra.mxu0 %v228
  %349 = vmatprep.subr.bf16.mxu0 0
  %350 = vmatpush1.bf16.msra.mxu0 0
  %351 = vmatprep.subr.bf16.mxu0 0
  %352 = vmatpush1.bf16.msra.mxu0 0
  %353 = vmatprep.subr.bf16.mxu0 0
  %354 = vmatpush1.bf16.msra.mxu0 0
  %355 = vmatprep.subr.bf16.mxu0 0
  %356 = vmatpush1.bf16.msra.mxu0 0
  %357 = vmatprep.subr.bf16.mxu0 0
  %358 = vmatpush1.bf16.msra.mxu0 0
  %359 = vmatprep.subr.bf16.mxu0 0
  %360 = vmatpush1.bf16.msra.mxu0 0
  %361 = vmatprep.subr.bf16.mxu0 0
  %362 = vmatpush1.bf16.msra.mxu0 0
  %363 = vmatprep.subr.bf16.mxu0 0
  %364 = vmatpush1.bf16.msra.mxu0 0
  %365 = vmatprep.subr.bf16.mxu0 0
  %366 = vmatpush1.bf16.msra.mxu0 0
  %367 = vmatprep.subr.bf16.mxu0 0
  %368 = vmatpush1.bf16.msra.mxu0 0
  %369 = vmatprep.subr.bf16.mxu0 0
  %370 = vmatpush1.bf16.msra.mxu0 0
  %371 = vmatprep.subr.bf16.mxu0 0
  %372 = vmatpush1.bf16.msra.mxu0 0
  %373 = vmatprep.subr.bf16.mxu0 0
  %374 = vmatpush1.bf16.msra.mxu0 0
  %375 = vmatprep.subr.bf16.mxu0 0
  %376 = vmatpush1.bf16.msra.mxu0 0
  %377 = vmatprep.subr.bf16.mxu0 0
  %378 = vmatpush1.bf16.msra.mxu0 0
  %379 = vmatprep.mubr.bf16.mxu0 0
  %380 = vmatmul.mubr.bf16.gmra.mrb[0].mxu0 %v221
  %v381 = vpop.f32.mrb[0].mxu0
  %v382 = vadd.f32 0.0, %v381
  %v383 = vpop.f32.mrb[0].mxu0
  %v384 = vadd.f32 0.0, %v383
  %v385 = vpop.f32.mrb[0].mxu0
  %v386 = vpop.f32.mrb[0].mxu0
  %387 = vdwg.mxu0
  %388 = vmatprep.subr.bf16.mxu0 %v237
  %389 = vmatpush1.bf16.msra.mxu0 %v234
  %390 = vmatprep.subr.bf16.mxu0 0
  %391 = vmatpush1.bf16.msra.mxu0 0
  %392 = vmatprep.subr.bf16.mxu0 0
  %393 = vmatpush1.bf16.msra.mxu0 0
  %394 = vmatprep.subr.bf16.mxu0 0
  %395 = vmatpush1.bf16.msra.mxu0 0
  %396 = vmatprep.subr.bf16.mxu0 0
  %397 = vmatpush1.bf16.msra.mxu0 0
  %398 = vmatprep.subr.bf16.mxu0 0
  %399 = vmatpush1.bf16.msra.mxu0 0
  %400 = vmatprep.subr.bf16.mxu0 0
  %401 = vmatpush1.bf16.msra.mxu0 0
  %402 = vmatprep.subr.bf16.mxu0 0
  %403 = vmatpush1.bf16.msra.mxu0 0
  %404 = vmatprep.subr.bf16.mxu0 0
  %405 = vmatpush1.bf16.msra.mxu0 0
  %406 = vmatprep.subr.bf16.mxu0 0
  %407 = vmatpush1.bf16.msra.mxu0 0
  %408 = vmatprep.subr.bf16.mxu0 0
  %409 = vmatpush1.bf16.msra.mxu0 0
  %410 = vmatprep.subr.bf16.mxu0 0
  %411 = vmatpush1.bf16.msra.mxu0 0
  %412 = vmatprep.subr.bf16.mxu0 0
  %413 = vmatpush1.bf16.msra.mxu0 0
  %414 = vmatprep.subr.bf16.mxu0 0
  %415 = vmatpush1.bf16.msra.mxu0 0
  %416 = vmatprep.subr.bf16.mxu0 0
  %417 = vmatpush1.bf16.msra.mxu0 0
  %418 = vmatprep.subr.bf16.mxu0 0
  %419 = vmatpush1.bf16.msra.mxu0 0
  %420 = vmatprep.mubr.bf16.mxu0 0
  %421 = vmatmul.mubr.bf16.gmra.mrb[0].mxu0 %v221
  %v422 = vpop.f32.mrb[0].mxu0
  %v423 = vadd.f32 0.0, %v422
  %v424 = vpop.f32.mrb[0].mxu0
  %v425 = vadd.f32 0.0, %v424
  %v426 = vpop.f32.mrb[0].mxu0
  %v427 = vpop.f32.mrb[0].mxu0
  %428 = vdwg.mxu0
  %429 = vmatprep.subr.bf16.mxu0 %v243
  %430 = vmatpush1.bf16.msra.mxu0 %v240
  %431 = vmatprep.subr.bf16.mxu0 0
  %432 = vmatpush1.bf16.msra.mxu0 0
  %433 = vmatprep.subr.bf16.mxu0 0
  %434 = vmatpush1.bf16.msra.mxu0 0
  %435 = vmatprep.subr.bf16.mxu0 0
  %436 = vmatpush1.bf16.msra.mxu0 0
  %437 = vmatprep.subr.bf16.mxu0 0
  %438 = vmatpush1.bf16.msra.mxu0 0
  %439 = vmatprep.subr.bf16.mxu0 0
  %440 = vmatpush1.bf16.msra.mxu0 0
  %441 = vmatprep.subr.bf16.mxu0 0
  %442 = vmatpush1.bf16.msra.mxu0 0
  %443 = vmatprep.subr.bf16.mxu0 0
  %444 = vmatpush1.bf16.msra.mxu0 0
  %445 = vmatprep.subr.bf16.mxu0 0
  %446 = vmatpush1.bf16.msra.mxu0 0
  %447 = vmatprep.subr.bf16.mxu0 0
  %448 = vmatpush1.bf16.msra.mxu0 0
  %449 = vmatprep.subr.bf16.mxu0 0
  %450 = vmatpush1.bf16.msra.mxu0 0
  %451 = vmatprep.subr.bf16.mxu0 0
  %452 = vmatpush1.bf16.msra.mxu0 0
  %453 = vmatprep.subr.bf16.mxu0 0
  %454 = vmatpush1.bf16.msra.mxu0 0
  %455 = vmatprep.subr.bf16.mxu0 0
  %456 = vmatpush1.bf16.msra.mxu0 0
  %457 = vmatprep.subr.bf16.mxu0 0
  %458 = vmatpush1.bf16.msra.mxu0 0
  %459 = vmatprep.subr.bf16.mxu0 0
  %460 = vmatpush1.bf16.msra.mxu0 0
  %461 = vmatprep.mubr.bf16.mxu0 0
  %462 = vmatmul.mubr.bf16.gmra.mrb[0].mxu0 %v221
  %v463 = vpop.f32.mrb[0].mxu0
  %v464 = vadd.f32 0.0, %v463
  %v465 = vpop.f32.mrb[0].mxu0
  %v466 = vadd.f32 0.0, %v465
  %v467 = vpop.f32.mrb[0].mxu0
  %v468 = vpop.f32.mrb[0].mxu0
  %469 = vdwg.mxu0
  %470 = vmatprep.subr.bf16.mxu0 %v249
  %471 = vmatpush1.bf16.msra.mxu0 %v246
  %472 = vmatprep.subr.bf16.mxu0 0
  %473 = vmatpush1.bf16.msra.mxu0 0
  %474 = vmatprep.subr.bf16.mxu0 0
  %475 = vmatpush1.bf16.msra.mxu0 0
  %476 = vmatprep.subr.bf16.mxu0 0
  %477 = vmatpush1.bf16.msra.mxu0 0
  %478 = vmatprep.subr.bf16.mxu0 0
  %479 = vmatpush1.bf16.msra.mxu0 0
  %480 = vmatprep.subr.bf16.mxu0 0
  %481 = vmatpush1.bf16.msra.mxu0 0
  %482 = vmatprep.subr.bf16.mxu0 0
  %483 = vmatpush1.bf16.msra.mxu0 0
  %484 = vmatprep.subr.bf16.mxu0 0
  %485 = vmatpush1.bf16.msra.mxu0 0
  %486 = vmatprep.subr.bf16.mxu0 0
  %487 = vmatpush1.bf16.msra.mxu0 0
  %488 = vmatprep.subr.bf16.mxu0 0
  %489 = vmatpush1.bf16.msra.mxu0 0
  %490 = vmatprep.subr.bf16.mxu0 0
  %491 = vmatpush1.bf16.msra.mxu0 0
  %492 = vmatprep.subr.bf16.mxu0 0
  %493 = vmatpush1.bf16.msra.mxu0 0
  %494 = vmatprep.subr.bf16.mxu0 0
  %495 = vmatpush1.bf16.msra.mxu0 0
  %496 = vmatprep.subr.bf16.mxu0 0
  %497 = vmatpush1.bf16.msra.mxu0 0
  %498 = vmatprep.subr.bf16.mxu0 0
  %499 = vmatpush1.bf16.msra.mxu0 0
  %500 = vmatprep.subr.bf16.mxu0 0
  %501 = vmatpush1.bf16.msra.mxu0 0
  %502 = vmatprep.mubr.bf16.mxu0 0
  %503 = vmatmul.mubr.bf16.gmra.mrb[0].mxu0 %v221
  %v504 = vpop.f32.mrb[0].mxu0
  %v505 = vadd.f32 0.0, %v504
  %v506 = vpop.f32.mrb[0].mxu0
  %v507 = vadd.f32 0.0, %v506
  %v508 = vpop.f32.mrb[0].mxu0
  %v509 = vpop.f32.mrb[0].mxu0
  %510 = vdwg.mxu0
  %511 = vmatprep.subr.bf16.mxu0 %v255
  %512 = vmatpush1.bf16.msra.mxu0 %v252
  %513 = vmatprep.subr.bf16.mxu0 0
  %514 = vmatpush1.bf16.msra.mxu0 0
  %515 = vmatprep.subr.bf16.mxu0 0
  %516 = vmatpush1.bf16.msra.mxu0 0
  %517 = vmatprep.subr.bf16.mxu0 0
  %518 = vmatpush1.bf16.msra.mxu0 0
  %519 = vmatprep.subr.bf16.mxu0 0
  %520 = vmatpush1.bf16.msra.mxu0 0
  %521 = vmatprep.subr.bf16.mxu0 0
  %522 = vmatpush1.bf16.msra.mxu0 0
  %523 = vmatprep.subr.bf16.mxu0 0
  %524 = vmatpush1.bf16.msra.mxu0 0
  %525 = vmatprep.subr.bf16.mxu0 0
  %526 = vmatpush1.bf16.msra.mxu0 0
  %527 = vmatprep.subr.bf16.mxu0 0
  %528 = vmatpush1.bf16.msra.mxu0 0
  %529 = vmatprep.subr.bf16.mxu0 0
  %530 = vmatpush1.bf16.msra.mxu0 0
  %531 = vmatprep.subr.bf16.mxu0 0
  %532 = vmatpush1.bf16.msra.mxu0 0
  %533 = vmatprep.subr.bf16.mxu0 0
  %534 = vmatpush1.bf16.msra.mxu0 0
  %535 = vmatprep.subr.bf16.mxu0 0
  %536 = vmatpush1.bf16.msra.mxu0 0
  %537 = vmatprep.subr.bf16.mxu0 0
  %538 = vmatpush1.bf16.msra.mxu0 0
  %539 = vmatprep.subr.bf16.mxu0 0
  %540 = vmatpush1.bf16.msra.mxu0 0
  %541 = vmatprep.subr.bf16.mxu0 0
  %542 = vmatpush1.bf16.msra.mxu0 0
  %543 = vmatprep.mubr.bf16.mxu0 0
  %544 = vmatmul.mubr.bf16.gmra.mrb[0].mxu0 %v221
  %v545 = vpop.f32.mrb[0].mxu0
  %v546 = vadd.f32 0.0, %v545
  %v547 = vpop.f32.mrb[0].mxu0
  %v548 = vadd.f32 0.0, %v547
  %v549 = vpop.f32.mrb[0].mxu0
  %v550 = vpop.f32.mrb[0].mxu0
  %551 = vdwg.mxu0
  %552 = vmatprep.subr.bf16.mxu0 %v261
  %553 = vmatpush1.bf16.msra.mxu0 %v258
  %554 = vmatprep.subr.bf16.mxu0 0
  %555 = vmatpush1.bf16.msra.mxu0 0
  %556 = vmatprep.subr.bf16.mxu0 0
  %557 = vmatpush1.bf16.msra.mxu0 0
  %558 = vmatprep.subr.bf16.mxu0 0
  %559 = vmatpush1.bf16.msra.mxu0 0
  %560 = vmatprep.subr.bf16.mxu0 0
  %561 = vmatpush1.bf16.msra.mxu0 0
  %562 = vmatprep.subr.bf16.mxu0 0
  %563 = vmatpush1.bf16.msra.mxu0 0
  %564 = vmatprep.subr.bf16.mxu0 0
  %565 = vmatpush1.bf16.msra.mxu0 0
  %566 = vmatprep.subr.bf16.mxu0 0
  %567 = vmatpush1.bf16.msra.mxu0 0
  %568 = vmatprep.subr.bf16.mxu0 0
  %569 = vmatpush1.bf16.msra.mxu0 0
  %570 = vmatprep.subr.bf16.mxu0 0
  %571 = vmatpush1.bf16.msra.mxu0 0
  %572 = vmatprep.subr.bf16.mxu0 0
  %573 = vmatpush1.bf16.msra.mxu0 0
  %574 = vmatprep.subr.bf16.mxu0 0
  %575 = vmatpush1.bf16.msra.mxu0 0
  %576 = vmatprep.subr.bf16.mxu0 0
  %577 = vmatpush1.bf16.msra.mxu0 0
  %578 = vmatprep.subr.bf16.mxu0 0
  %579 = vmatpush1.bf16.msra.mxu0 0
  %580 = vmatprep.subr.bf16.mxu0 0
  %581 = vmatpush1.bf16.msra.mxu0 0
  %582 = vmatprep.subr.bf16.mxu0 0
  %583 = vmatpush1.bf16.msra.mxu0 0
  %584 = vmatprep.mubr.bf16.mxu0 0
  %585 = vmatmul.mubr.bf16.gmra.mrb[0].mxu0 %v221
  %v586 = vpop.f32.mrb[0].mxu0
  %v587 = vadd.f32 0.0, %v586
  %v588 = vpop.f32.mrb[0].mxu0
  %v589 = vadd.f32 0.0, %v588
  %v590 = vpop.f32.mrb[0].mxu0
  %v591 = vpop.f32.mrb[0].mxu0
  %592 = vdwg.mxu0
  %593 = vmatprep.subr.bf16.mxu0 %v267
  %594 = vmatpush1.bf16.msra.mxu0 %v264
  %595 = vmatprep.subr.bf16.mxu0 0
  %596 = vmatpush1.bf16.msra.mxu0 0
  %597 = vmatprep.subr.bf16.mxu0 0
  %598 = vmatpush1.bf16.msra.mxu0 0
  %599 = vmatprep.subr.bf16.mxu0 0
  %600 = vmatpush1.bf16.msra.mxu0 0
  %601 = vmatprep.subr.bf16.mxu0 0
  %602 = vmatpush1.bf16.msra.mxu0 0
  %603 = vmatprep.subr.bf16.mxu0 0
  %604 = vmatpush1.bf16.msra.mxu0 0
  %605 = vmatprep.subr.bf16.mxu0 0
  %606 = vmatpush1.bf16.msra.mxu0 0
  %607 = vmatprep.subr.bf16.mxu0 0
  %608 = vmatpush1.bf16.msra.mxu0 0
  %609 = vmatprep.subr.bf16.mxu0 0
  %610 = vmatpush1.bf16.msra.mxu0 0
  %611 = vmatprep.subr.bf16.mxu0 0
  %612 = vmatpush1.bf16.msra.mxu0 0
  %613 = vmatprep.subr.bf16.mxu0 0
  %614 = vmatpush1.bf16.msra.mxu0 0
  %615 = vmatprep.subr.bf16.mxu0 0
  %616 = vmatpush1.bf16.msra.mxu0 0
  %617 = vmatprep.subr.bf16.mxu0 0
  %618 = vmatpush1.bf16.msra.mxu0 0
  %619 = vmatprep.subr.bf16.mxu0 0
  %620 = vmatpush1.bf16.msra.mxu0 0
  %621 = vmatprep.subr.bf16.mxu0 0
  %622 = vmatpush1.bf16.msra.mxu0 0
  %623 = vmatprep.subr.bf16.mxu0 0
  %624 = vmatpush1.bf16.msra.mxu0 0
  %625 = vmatprep.mubr.bf16.mxu0 0
  %626 = vmatmul.mubr.bf16.gmra.mrb[0].mxu0 %v221
  %v627 = vpop.f32.mrb[0].mxu0
  %v628 = vadd.f32 0.0, %v627
  %v629 = vpop.f32.mrb[0].mxu0
  %v630 = vadd.f32 0.0, %v629
  %v631 = vpop.f32.mrb[0].mxu0
  %v632 = vpop.f32.mrb[0].mxu0
  %633 = vdwg.mxu0
  %634 = vmatprep.subr.bf16.mxu0 %v273
  %635 = vmatpush1.bf16.msra.mxu0 %v270
  %636 = vmatprep.subr.bf16.mxu0 0
  %637 = vmatpush1.bf16.msra.mxu0 0
  %638 = vmatprep.subr.bf16.mxu0 0
  %639 = vmatpush1.bf16.msra.mxu0 0
  %640 = vmatprep.subr.bf16.mxu0 0
  %641 = vmatpush1.bf16.msra.mxu0 0
  %642 = vmatprep.subr.bf16.mxu0 0
  %643 = vmatpush1.bf16.msra.mxu0 0
  %644 = vmatprep.subr.bf16.mxu0 0
  %645 = vmatpush1.bf16.msra.mxu0 0
  %646 = vmatprep.subr.bf16.mxu0 0
  %647 = vmatpush1.bf16.msra.mxu0 0
  %648 = vmatprep.subr.bf16.mxu0 0
  %649 = vmatpush1.bf16.msra.mxu0 0
  %650 = vmatprep.subr.bf16.mxu0 0
  %651 = vmatpush1.bf16.msra.mxu0 0
  %652 = vmatprep.subr.bf16.mxu0 0
  %653 = vmatpush1.bf16.msra.mxu0 0
  %654 = vmatprep.subr.bf16.mxu0 0
  %655 = vmatpush1.bf16.msra.mxu0 0
  %656 = vmatprep.subr.bf16.mxu0 0
  %657 = vmatpush1.bf16.msra.mxu0 0
  %658 = vmatprep.subr.bf16.mxu0 0
  %659 = vmatpush1.bf16.msra.mxu0 0
  %660 = vmatprep.subr.bf16.mxu0 0
  %661 = vmatpush1.bf16.msra.mxu0 0
  %662 = vmatprep.subr.bf16.mxu0 0
  %663 = vmatpush1.bf16.msra.mxu0 0
  %664 = vmatprep.subr.bf16.mxu0 0
  %665 = vmatpush1.bf16.msra.mxu0 0
  %666 = vmatprep.mubr.bf16.mxu0 0
  %667 = vmatmul.mubr.bf16.gmra.mrb[0].mxu0 %v221
  %v668 = vpop.f32.mrb[0].mxu0
  %v669 = vadd.f32 0.0, %v668
  %v670 = vpop.f32.mrb[0].mxu0
  %v671 = vadd.f32 0.0, %v670
  %v672 = vpop.f32.mrb[0].mxu0
  %v673 = vpop.f32.mrb[0].mxu0
  %674 = vdwg.mxu0
  %675 = vmatprep.subr.bf16.mxu0 %v279
  %676 = vmatpush1.bf16.msra.mxu0 %v276
  %677 = vmatprep.subr.bf16.mxu0 0
  %678 = vmatpush1.bf16.msra.mxu0 0
  %679 = vmatprep.subr.bf16.mxu0 0
  %680 = vmatpush1.bf16.msra.mxu0 0
  %681 = vmatprep.subr.bf16.mxu0 0
  %682 = vmatpush1.bf16.msra.mxu0 0
  %683 = vmatprep.subr.bf16.mxu0 0
  %684 = vmatpush1.bf16.msra.mxu0 0
  %685 = vmatprep.subr.bf16.mxu0 0
  %686 = vmatpush1.bf16.msra.mxu0 0
  %687 = vmatprep.subr.bf16.mxu0 0
  %688 = vmatpush1.bf16.msra.mxu0 0
  %689 = vmatprep.subr.bf16.mxu0 0
  %690 = vmatpush1.bf16.msra.mxu0 0
  %691 = vmatprep.subr.bf16.mxu0 0
  %692 = vmatpush1.bf16.msra.mxu0 0
  %693 = vmatprep.subr.bf16.mxu0 0
  %694 = vmatpush1.bf16.msra.mxu0 0
  %695 = vmatprep.subr.bf16.mxu0 0
  %696 = vmatpush1.bf16.msra.mxu0 0
  %697 = vmatprep.subr.bf16.mxu0 0
  %698 = vmatpush1.bf16.msra.mxu0 0
  %699 = vmatprep.subr.bf16.mxu0 0
  %700 = vmatpush1.bf16.msra.mxu0 0
  %701 = vmatprep.subr.bf16.mxu0 0
  %702 = vmatpush1.bf16.msra.mxu0 0
  %703 = vmatprep.subr.bf16.mxu0 0
  %704 = vmatpush1.bf16.msra.mxu0 0
  %705 = vmatprep.subr.bf16.mxu0 0
  %706 = vmatpush1.bf16.msra.mxu0 0
  %707 = vmatprep.mubr.bf16.mxu0 0
  %708 = vmatmul.mubr.bf16.gmra.mrb[0].mxu0 %v221
  %v709 = vpop.f32.mrb[0].mxu0
  %v710 = vadd.f32 0.0, %v709
  %v711 = vpop.f32.mrb[0].mxu0
  %v712 = vadd.f32 0.0, %v711
  %v713 = vpop.f32.mrb[0].mxu0
  %v714 = vpop.f32.mrb[0].mxu0
  %715 = vdwg.mxu0
  %716 = vmatprep.subr.bf16.mxu0 %v285
  %717 = vmatpush1.bf16.msra.mxu0 %v282
  %718 = vmatprep.subr.bf16.mxu0 0
  %719 = vmatpush1.bf16.msra.mxu0 0
  %720 = vmatprep.subr.bf16.mxu0 0
  %721 = vmatpush1.bf16.msra.mxu0 0
  %722 = vmatprep.subr.bf16.mxu0 0
  %723 = vmatpush1.bf16.msra.mxu0 0
  %724 = vmatprep.subr.bf16.mxu0 0
  %725 = vmatpush1.bf16.msra.mxu0 0
  %726 = vmatprep.subr.bf16.mxu0 0
  %727 = vmatpush1.bf16.msra.mxu0 0
  %728 = vmatprep.subr.bf16.mxu0 0
  %729 = vmatpush1.bf16.msra.mxu0 0
  %730 = vmatprep.subr.bf16.mxu0 0
  %731 = vmatpush1.bf16.msra.mxu0 0
  %732 = vmatprep.subr.bf16.mxu0 0
  %733 = vmatpush1.bf16.msra.mxu0 0
  %734 = vmatprep.subr.bf16.mxu0 0
  %735 = vmatpush1.bf16.msra.mxu0 0
  %736 = vmatprep.subr.bf16.mxu0 0
  %737 = vmatpush1.bf16.msra.mxu0 0
  %738 = vmatprep.subr.bf16.mxu0 0
  %739 = vmatpush1.bf16.msra.mxu0 0
  %740 = vmatprep.subr.bf16.mxu0 0
  %741 = vmatpush1.bf16.msra.mxu0 0
  %742 = vmatprep.subr.bf16.mxu0 0
  %743 = vmatpush1.bf16.msra.mxu0 0
  %744 = vmatprep.subr.bf16.mxu0 0
  %745 = vmatpush1.bf16.msra.mxu0 0
  %746 = vmatprep.subr.bf16.mxu0 0
  %747 = vmatpush1.bf16.msra.mxu0 0
  %748 = vmatprep.mubr.bf16.mxu0 0
  %749 = vmatmul.mubr.bf16.gmra.mrb[0].mxu0 %v221
  %v750 = vpop.f32.mrb[0].mxu0
  %v751 = vadd.f32 0.0, %v750
  %v752 = vpop.f32.mrb[0].mxu0
  %v753 = vadd.f32 0.0, %v752
  %v754 = vpop.f32.mrb[0].mxu0
  %v755 = vpop.f32.mrb[0].mxu0
  %756 = vdwg.mxu0
  %757 = vmatprep.subr.bf16.mxu0 %v291
  %758 = vmatpush1.bf16.msra.mxu0 %v288
  %759 = vmatprep.subr.bf16.mxu0 0
  %760 = vmatpush1.bf16.msra.mxu0 0
  %761 = vmatprep.subr.bf16.mxu0 0
  %762 = vmatpush1.bf16.msra.mxu0 0
  %763 = vmatprep.subr.bf16.mxu0 0
  %764 = vmatpush1.bf16.msra.mxu0 0
  %765 = vmatprep.subr.bf16.mxu0 0
  %766 = vmatpush1.bf16.msra.mxu0 0
  %767 = vmatprep.subr.bf16.mxu0 0
  %768 = vmatpush1.bf16.msra.mxu0 0
  %769 = vmatprep.subr.bf16.mxu0 0
  %770 = vmatpush1.bf16.msra.mxu0 0
  %771 = vmatprep.subr.bf16.mxu0 0
  %772 = vmatpush1.bf16.msra.mxu0 0
  %773 = vmatprep.subr.bf16.mxu0 0
  %774 = vmatpush1.bf16.msra.mxu0 0
  %775 = vmatprep.subr.bf16.mxu0 0
  %776 = vmatpush1.bf16.msra.mxu0 0
  %777 = vmatprep.subr.bf16.mxu0 0
  %778 = vmatpush1.bf16.msra.mxu0 0
  %779 = vmatprep.subr.bf16.mxu0 0
  %780 = vmatpush1.bf16.msra.mxu0 0
  %781 = vmatprep.subr.bf16.mxu0 0
  %782 = vmatpush1.bf16.msra.mxu0 0
  %783 = vmatprep.subr.bf16.mxu0 0
  %784 = vmatpush1.bf16.msra.mxu0 0
  %785 = vmatprep.subr.bf16.mxu0 0
  %786 = vmatpush1.bf16.msra.mxu0 0
  %787 = vmatprep.subr.bf16.mxu0 0
  %788 = vmatpush1.bf16.msra.mxu0 0
  %789 = vmatprep.mubr.bf16.mxu0 0
  %790 = vmatmul.mubr.bf16.gmra.mrb[0].mxu0 %v221
  %v791 = vpop.f32.mrb[0].mxu0
  %v792 = vadd.f32 0.0, %v791
  %v793 = vpop.f32.mrb[0].mxu0
  %v794 = vadd.f32 0.0, %v793
  %v795 = vpop.f32.mrb[0].mxu0
  %v796 = vpop.f32.mrb[0].mxu0
  %797 = vdwg.mxu0
  %798 = vmatprep.subr.bf16.mxu0 %v297
  %799 = vmatpush1.bf16.msra.mxu0 %v294
  %800 = vmatprep.subr.bf16.mxu0 0
  %801 = vmatpush1.bf16.msra.mxu0 0
  %802 = vmatprep.subr.bf16.mxu0 0
  %803 = vmatpush1.bf16.msra.mxu0 0
  %804 = vmatprep.subr.bf16.mxu0 0
  %805 = vmatpush1.bf16.msra.mxu0 0
  %806 = vmatprep.subr.bf16.mxu0 0
  %807 = vmatpush1.bf16.msra.mxu0 0
  %808 = vmatprep.subr.bf16.mxu0 0
  %809 = vmatpush1.bf16.msra.mxu0 0
  %810 = vmatprep.subr.bf16.mxu0 0
  %811 = vmatpush1.bf16.msra.mxu0 0
  %812 = vmatprep.subr.bf16.mxu0 0
  %813 = vmatpush1.bf16.msra.mxu0 0
  %814 = vmatprep.subr.bf16.mxu0 0
  %815 = vmatpush1.bf16.msra.mxu0 0
  %816 = vmatprep.subr.bf16.mxu0 0
  %817 = vmatpush1.bf16.msra.mxu0 0
  %818 = vmatprep.subr.bf16.mxu0 0
  %819 = vmatpush1.bf16.msra.mxu0 0
  %820 = vmatprep.subr.bf16.mxu0 0
  %821 = vmatpush1.bf16.msra.mxu0 0
  %822 = vmatprep.subr.bf16.mxu0 0
  %823 = vmatpush1.bf16.msra.mxu0 0
  %824 = vmatprep.subr.bf16.mxu0 0
  %825 = vmatpush1.bf16.msra.mxu0 0
  %826 = vmatprep.subr.bf16.mxu0 0
  %827 = vmatpush1.bf16.msra.mxu0 0
  %828 = vmatprep.subr.bf16.mxu0 0
  %829 = vmatpush1.bf16.msra.mxu0 0
  %830 = vmatprep.mubr.bf16.mxu0 0
  %831 = vmatmul.mubr.bf16.gmra.mrb[0].mxu0 %v221
  %v832 = vpop.f32.mrb[0].mxu0
  %v833 = vadd.f32 0.0, %v832
  %v834 = vpop.f32.mrb[0].mxu0
  %v835 = vadd.f32 0.0, %v834
  %v836 = vpop.f32.mrb[0].mxu0
  %v837 = vpop.f32.mrb[0].mxu0
  %838 = vdwg.mxu0
  %839 = vmatprep.subr.bf16.mxu0 %v303
  %840 = vmatpush1.bf16.msra.mxu0 %v300
  %841 = vmatprep.subr.bf16.mxu0 0
  %842 = vmatpush1.bf16.msra.mxu0 0
  %843 = vmatprep.subr.bf16.mxu0 0
  %844 = vmatpush1.bf16.msra.mxu0 0
  %845 = vmatprep.subr.bf16.mxu0 0
  %846 = vmatpush1.bf16.msra.mxu0 0
  %847 = vmatprep.subr.bf16.mxu0 0
  %848 = vmatpush1.bf16.msra.mxu0 0
  %849 = vmatprep.subr.bf16.mxu0 0
  %850 = vmatpush1.bf16.msra.mxu0 0
  %851 = vmatprep.subr.bf16.mxu0 0
  %852 = vmatpush1.bf16.msra.mxu0 0
  %853 = vmatprep.subr.bf16.mxu0 0
  %854 = vmatpush1.bf16.msra.mxu0 0
  %855 = vmatprep.subr.bf16.mxu0 0
  %856 = vmatpush1.bf16.msra.mxu0 0
  %857 = vmatprep.subr.bf16.mxu0 0
  %858 = vmatpush1.bf16.msra.mxu0 0
  %859 = vmatprep.subr.bf16.mxu0 0
  %860 = vmatpush1.bf16.msra.mxu0 0
  %861 = vmatprep.subr.bf16.mxu0 0
  %862 = vmatpush1.bf16.msra.mxu0 0
  %863 = vmatprep.subr.bf16.mxu0 0
  %864 = vmatpush1.bf16.msra.mxu0 0
  %865 = vmatprep.subr.bf16.mxu0 0
  %866 = vmatpush1.bf16.msra.mxu0 0
  %867 = vmatprep.subr.bf16.mxu0 0
  %868 = vmatpush1.bf16.msra.mxu0 0
  %869 = vmatprep.subr.bf16.mxu0 0
  %870 = vmatpush1.bf16.msra.mxu0 0
  %871 = vmatprep.mubr.bf16.mxu0 0
  %872 = vmatmul.mubr.bf16.gmra.mrb[0].mxu0 %v221
  %v873 = vpop.f32.mrb[0].mxu0
  %v874 = vadd.f32 0.0, %v873
  %v875 = vpop.f32.mrb[0].mxu0
  %v876 = vadd.f32 0.0, %v875
  %v877 = vpop.f32.mrb[0].mxu0
  %v878 = vpop.f32.mrb[0].mxu0
  %879 = vdwg.mxu0
  %880 = vmatprep.subr.bf16.mxu0 %v309
  %881 = vmatpush1.bf16.msra.mxu0 %v306
  %882 = vmatprep.subr.bf16.mxu0 0
  %883 = vmatpush1.bf16.msra.mxu0 0
  %884 = vmatprep.subr.bf16.mxu0 0
  %885 = vmatpush1.bf16.msra.mxu0 0
  %886 = vmatprep.subr.bf16.mxu0 0
  %887 = vmatpush1.bf16.msra.mxu0 0
  %888 = vmatprep.subr.bf16.mxu0 0
  %889 = vmatpush1.bf16.msra.mxu0 0
  %890 = vmatprep.subr.bf16.mxu0 0
  %891 = vmatpush1.bf16.msra.mxu0 0
  %892 = vmatprep.subr.bf16.mxu0 0
  %893 = vmatpush1.bf16.msra.mxu0 0
  %894 = vmatprep.subr.bf16.mxu0 0
  %895 = vmatpush1.bf16.msra.mxu0 0
  %896 = vmatprep.subr.bf16.mxu0 0
  %897 = vmatpush1.bf16.msra.mxu0 0
  %898 = vmatprep.subr.bf16.mxu0 0
  %899 = vmatpush1.bf16.msra.mxu0 0
  %900 = vmatprep.subr.bf16.mxu0 0
  %901 = vmatpush1.bf16.msra.mxu0 0
  %902 = vmatprep.subr.bf16.mxu0 0
  %903 = vmatpush1.bf16.msra.mxu0 0
  %904 = vmatprep.subr.bf16.mxu0 0
  %905 = vmatpush1.bf16.msra.mxu0 0
  %906 = vmatprep.subr.bf16.mxu0 0
  %907 = vmatpush1.bf16.msra.mxu0 0
  %908 = vmatprep.subr.bf16.mxu0 0
  %909 = vmatpush1.bf16.msra.mxu0 0
  %910 = vmatprep.subr.bf16.mxu0 0
  %911 = vmatpush1.bf16.msra.mxu0 0
  %912 = vmatprep.mubr.bf16.mxu0 0
  %913 = vmatmul.mubr.bf16.gmra.mrb[0].mxu0 %v221
  %v914 = vpop.f32.mrb[0].mxu0
  %v915 = vadd.f32 0.0, %v914
  %v916 = vpop.f32.mrb[0].mxu0
  %v917 = vadd.f32 0.0, %v916
  %v918 = vpop.f32.mrb[0].mxu0
  %v919 = vpop.f32.mrb[0].mxu0
  %920 = vdwg.mxu0
  %921 = vmatprep.subr.bf16.mxu0 %v315
  %922 = vmatpush1.bf16.msra.mxu0 %v312
  %923 = vmatprep.subr.bf16.mxu0 0
  %924 = vmatpush1.bf16.msra.mxu0 0
  %925 = vmatprep.subr.bf16.mxu0 0
  %926 = vmatpush1.bf16.msra.mxu0 0
  %927 = vmatprep.subr.bf16.mxu0 0
  %928 = vmatpush1.bf16.msra.mxu0 0
  %929 = vmatprep.subr.bf16.mxu0 0
  %930 = vmatpush1.bf16.msra.mxu0 0
  %931 = vmatprep.subr.bf16.mxu0 0
  %932 = vmatpush1.bf16.msra.mxu0 0
  %933 = vmatprep.subr.bf16.mxu0 0
  %934 = vmatpush1.bf16.msra.mxu0 0
  %935 = vmatprep.subr.bf16.mxu0 0
  %936 = vmatpush1.bf16.msra.mxu0 0
  %937 = vmatprep.subr.bf16.mxu0 0
  %938 = vmatpush1.bf16.msra.mxu0 0
  %939 = vmatprep.subr.bf16.mxu0 0
  %940 = vmatpush1.bf16.msra.mxu0 0
  %941 = vmatprep.subr.bf16.mxu0 0
  %942 = vmatpush1.bf16.msra.mxu0 0
  %943 = vmatprep.subr.bf16.mxu0 0
  %944 = vmatpush1.bf16.msra.mxu0 0
  %945 = vmatprep.subr.bf16.mxu0 0
  %946 = vmatpush1.bf16.msra.mxu0 0
  %947 = vmatprep.subr.bf16.mxu0 0
  %948 = vmatpush1.bf16.msra.mxu0 0
  %949 = vmatprep.subr.bf16.mxu0 0
  %950 = vmatpush1.bf16.msra.mxu0 0
  %951 = vmatprep.subr.bf16.mxu0 0
  %952 = vmatpush1.bf16.msra.mxu0 0
  %953 = vmatprep.mubr.bf16.mxu0 0
  %954 = vmatmul.mubr.bf16.gmra.mrb[0].mxu0 %v221
  %v955 = vpop.f32.mrb[0].mxu0
  %v956 = vadd.f32 0.0, %v955
  %v957 = vpop.f32.mrb[0].mxu0
  %v958 = vadd.f32 0.0, %v957
  %v959 = vpop.f32.mrb[0].mxu0
  %v960 = vpop.f32.mrb[0].mxu0
  %961 = vdwg.mxu0
  %962 = vmatprep.subr.bf16.mxu0 %v321
  %963 = vmatpush1.bf16.msra.mxu0 %v318
  %964 = vmatprep.subr.bf16.mxu0 0
  %965 = vmatpush1.bf16.msra.mxu0 0
  %966 = vmatprep.subr.bf16.mxu0 0
  %967 = vmatpush1.bf16.msra.mxu0 0
  %968 = vmatprep.subr.bf16.mxu0 0
  %969 = vmatpush1.bf16.msra.mxu0 0
  %970 = vmatprep.subr.bf16.mxu0 0
  %971 = vmatpush1.bf16.msra.mxu0 0
  %972 = vmatprep.subr.bf16.mxu0 0
  %973 = vmatpush1.bf16.msra.mxu0 0
  %974 = vmatprep.subr.bf16.mxu0 0
  %975 = vmatpush1.bf16.msra.mxu0 0
  %976 = vmatprep.subr.bf16.mxu0 0
  %977 = vmatpush1.bf16.msra.mxu0 0
  %978 = vmatprep.subr.bf16.mxu0 0
  %979 = vmatpush1.bf16.msra.mxu0 0
  %980 = vmatprep.subr.bf16.mxu0 0
  %981 = vmatpush1.bf16.msra.mxu0 0
  %982 = vmatprep.subr.bf16.mxu0 0
  %983 = vmatpush1.bf16.msra.mxu0 0
  %984 = vmatprep.subr.bf16.mxu0 0
  %985 = vmatpush1.bf16.msra.mxu0 0
  %986 = vmatprep.subr.bf16.mxu0 0
  %987 = vmatpush1.bf16.msra.mxu0 0
  %988 = vmatprep.subr.bf16.mxu0 0
  %989 = vmatpush1.bf16.msra.mxu0 0
  %990 = vmatprep.subr.bf16.mxu0 0
  %991 = vmatpush1.bf16.msra.mxu0 0
  %992 = vmatprep.subr.bf16.mxu0 0
  %993 = vmatpush1.bf16.msra.mxu0 0
  %994 = vmatprep.mubr.bf16.mxu0 0
  %995 = vmatmul.mubr.bf16.gmra.mrb[0].mxu0 %v221
  %v996 = vpop.f32.mrb[0].mxu0
  %v997 = vadd.f32 0.0, %v996
  %v998 = vpop.f32.mrb[0].mxu0
  %v999 = vadd.f32 0.0, %v998
  %v1000 = vpop.f32.mrb[0].mxu0
  %v1001 = vpop.f32.mrb[0].mxu0
  %1002 = vdwg.mxu0
  %1003 = vmatprep.subr.bf16.mxu0 %v327
  %1004 = vmatpush1.bf16.msra.mxu0 %v324
  %1005 = vmatprep.subr.bf16.mxu0 0
  %1006 = vmatpush1.bf16.msra.mxu0 0
  %1007 = vmatprep.subr.bf16.mxu0 0
  %1008 = vmatpush1.bf16.msra.mxu0 0
  %1009 = vmatprep.subr.bf16.mxu0 0
  %1010 = vmatpush1.bf16.msra.mxu0 0
  %1011 = vmatprep.subr.bf16.mxu0 0
  %1012 = vmatpush1.bf16.msra.mxu0 0
  %1013 = vmatprep.subr.bf16.mxu0 0
  %1014 = vmatpush1.bf16.msra.mxu0 0
  %1015 = vmatprep.subr.bf16.mxu0 0
  %1016 = vmatpush1.bf16.msra.mxu0 0
  %1017 = vmatprep.subr.bf16.mxu0 0
  %1018 = vmatpush1.bf16.msra.mxu0 0
  %1019 = vmatprep.subr.bf16.mxu0 0
  %1020 = vmatpush1.bf16.msra.mxu0 0
  %1021 = vmatprep.subr.bf16.mxu0 0
  %1022 = vmatpush1.bf16.msra.mxu0 0
  %1023 = vmatprep.subr.bf16.mxu0 0
  %1024 = vmatpush1.bf16.msra.mxu0 0
  %1025 = vmatprep.subr.bf16.mxu0 0
  %1026 = vmatpush1.bf16.msra.mxu0 0
  %1027 = vmatprep.subr.bf16.mxu0 0
  %1028 = vmatpush1.bf16.msra.mxu0 0
  %1029 = vmatprep.subr.bf16.mxu0 0
  %1030 = vmatpush1.bf16.msra.mxu0 0
  %1031 = vmatprep.subr.bf16.mxu0 0
  %1032 = vmatpush1.bf16.msra.mxu0 0
  %1033 = vmatprep.subr.bf16.mxu0 0
  %1034 = vmatpush1.bf16.msra.mxu0 0
  %1035 = vmatprep.mubr.bf16.mxu0 0
  %1036 = vmatmul.mubr.bf16.gmra.mrb[0].mxu0 %v221
  %v1037 = vpop.f32.mrb[0].mxu0
  %v1038 = vadd.f32 0.0, %v1037
  %v1039 = vpop.f32.mrb[0].mxu0
  %v1040 = vadd.f32 0.0, %v1039
  %v1041 = vpop.f32.mrb[0].mxu0
  %v1042 = vpop.f32.mrb[0].mxu0
  %1043 = vdwg.mxu0
  %1044 = vmatprep.subr.bf16.mxu0 %v333
  %1045 = vmatpush1.bf16.msra.mxu0 %v330
  %1046 = vmatprep.subr.bf16.mxu0 0
  %1047 = vmatpush1.bf16.msra.mxu0 0
  %1048 = vmatprep.subr.bf16.mxu0 0
  %1049 = vmatpush1.bf16.msra.mxu0 0
  %1050 = vmatprep.subr.bf16.mxu0 0
  %1051 = vmatpush1.bf16.msra.mxu0 0
  %1052 = vmatprep.subr.bf16.mxu0 0
  %1053 = vmatpush1.bf16.msra.mxu0 0
  %1054 = vmatprep.subr.bf16.mxu0 0
  %1055 = vmatpush1.bf16.msra.mxu0 0
  %1056 = vmatprep.subr.bf16.mxu0 0
  %1057 = vmatpush1.bf16.msra.mxu0 0
  %1058 = vmatprep.subr.bf16.mxu0 0
  %1059 = vmatpush1.bf16.msra.mxu0 0
  %1060 = vmatprep.subr.bf16.mxu0 0
  %1061 = vmatpush1.bf16.msra.mxu0 0
  %1062 = vmatprep.subr.bf16.mxu0 0
  %1063 = vmatpush1.bf16.msra.mxu0 0
  %1064 = vmatprep.subr.bf16.mxu0 0
  %1065 = vmatpush1.bf16.msra.mxu0 0
  %1066 = vmatprep.subr.bf16.mxu0 0
  %1067 = vmatpush1.bf16.msra.mxu0 0
  %1068 = vmatprep.subr.bf16.mxu0 0
  %1069 = vmatpush1.bf16.msra.mxu0 0
  %1070 = vmatprep.subr.bf16.mxu0 0
  %1071 = vmatpush1.bf16.msra.mxu0 0
  %1072 = vmatprep.subr.bf16.mxu0 0
  %1073 = vmatpush1.bf16.msra.mxu0 0
  %1074 = vmatprep.subr.bf16.mxu0 0
  %1075 = vmatpush1.bf16.msra.mxu0 0
  %1076 = vmatprep.mubr.bf16.mxu0 0
  %1077 = vmatmul.mubr.bf16.gmra.mrb[0].mxu0 %v221
  %v1078 = vpop.f32.mrb[0].mxu0
  %v1079 = vadd.f32 0.0, %v1078
  %v1080 = vpop.f32.mrb[0].mxu0
  %v1081 = vadd.f32 0.0, %v1080
  %v1082 = vpop.f32.mrb[0].mxu0
  %v1083 = vpop.f32.mrb[0].mxu0
  %1084 = vdwg.mxu0
  %1085 = vmatprep.subr.bf16.mxu0 %v339
  %1086 = vmatpush1.bf16.msra.mxu0 %v336
  %1087 = vmatprep.subr.bf16.mxu0 0
  %1088 = vmatpush1.bf16.msra.mxu0 0
  %1089 = vmatprep.subr.bf16.mxu0 0
  %1090 = vmatpush1.bf16.msra.mxu0 0
  %1091 = vmatprep.subr.bf16.mxu0 0
  %1092 = vmatpush1.bf16.msra.mxu0 0
  %1093 = vmatprep.subr.bf16.mxu0 0
  %1094 = vmatpush1.bf16.msra.mxu0 0
  %1095 = vmatprep.subr.bf16.mxu0 0
  %1096 = vmatpush1.bf16.msra.mxu0 0
  %1097 = vmatprep.subr.bf16.mxu0 0
  %1098 = vmatpush1.bf16.msra.mxu0 0
  %1099 = vmatprep.subr.bf16.mxu0 0
  %1100 = vmatpush1.bf16.msra.mxu0 0
  %1101 = vmatprep.subr.bf16.mxu0 0
  %1102 = vmatpush1.bf16.msra.mxu0 0
  %1103 = vmatprep.subr.bf16.mxu0 0
  %1104 = vmatpush1.bf16.msra.mxu0 0
  %1105 = vmatprep.subr.bf16.mxu0 0
  %1106 = vmatpush1.bf16.msra.mxu0 0
  %1107 = vmatprep.subr.bf16.mxu0 0
  %1108 = vmatpush1.bf16.msra.mxu0 0
  %1109 = vmatprep.subr.bf16.mxu0 0
  %1110 = vmatpush1.bf16.msra.mxu0 0
  %1111 = vmatprep.subr.bf16.mxu0 0
  %1112 = vmatpush1.bf16.msra.mxu0 0
  %1113 = vmatprep.subr.bf16.mxu0 0
  %1114 = vmatpush1.bf16.msra.mxu0 0
  %1115 = vmatprep.subr.bf16.mxu0 0
  %1116 = vmatpush1.bf16.msra.mxu0 0
  %1117 = vmatprep.mubr.bf16.mxu0 0
  %1118 = vmatmul.mubr.bf16.gmra.mrb[0].mxu0 %v221
  %v1119 = vpop.f32.mrb[0].mxu0
  %v1120 = vadd.f32 0.0, %v1119
  %v1121 = vpop.f32.mrb[0].mxu0
  %v1122 = vadd.f32 0.0, %v1121
  %v1123 = vpop.f32.mrb[0].mxu0
  %v1124 = vpop.f32.mrb[0].mxu0
  %1125 = vdwg.mxu0
  %1126 = vmatprep.subr.bf16.mxu0 %v345
  %1127 = vmatpush1.bf16.msra.mxu0 %v342
  %1128 = vmatprep.subr.bf16.mxu0 0
  %1129 = vmatpush1.bf16.msra.mxu0 0
  %1130 = vmatprep.subr.bf16.mxu0 0
  %1131 = vmatpush1.bf16.msra.mxu0 0
  %1132 = vmatprep.subr.bf16.mxu0 0
  %1133 = vmatpush1.bf16.msra.mxu0 0
  %1134 = vmatprep.subr.bf16.mxu0 0
  %1135 = vmatpush1.bf16.msra.mxu0 0
  %1136 = vmatprep.subr.bf16.mxu0 0
  %1137 = vmatpush1.bf16.msra.mxu0 0
  %1138 = vmatprep.subr.bf16.mxu0 0
  %1139 = vmatpush1.bf16.msra.mxu0 0
  %1140 = vmatprep.subr.bf16.mxu0 0
  %1141 = vmatpush1.bf16.msra.mxu0 0
  %1142 = vmatprep.subr.bf16.mxu0 0
  %1143 = vmatpush1.bf16.msra.mxu0 0
  %1144 = vmatprep.subr.bf16.mxu0 0
  %1145 = vmatpush1.bf16.msra.mxu0 0
  %1146 = vmatprep.subr.bf16.mxu0 0
  %1147 = vmatpush1.bf16.msra.mxu0 0
  %1148 = vmatprep.subr.bf16.mxu0 0
  %1149 = vmatpush1.bf16.msra.mxu0 0
  %1150 = vmatprep.subr.bf16.mxu0 0
  %1151 = vmatpush1.bf16.msra.mxu0 0
  %1152 = vmatprep.subr.bf16.mxu0 0
  %1153 = vmatpush1.bf16.msra.mxu0 0
  %1154 = vmatprep.subr.bf16.mxu0 0
  %1155 = vmatpush1.bf16.msra.mxu0 0
  %1156 = vmatprep.subr.bf16.mxu0 0
  %1157 = vmatpush1.bf16.msra.mxu0 0
  %1158 = vmatprep.mubr.bf16.mxu0 0
  %1159 = vmatmul.mubr.bf16.gmra.mrb[0].mxu0 %v221
  %v1160 = vpop.f32.mrb[0].mxu0
  %v1161 = vadd.f32 0.0, %v1160
  %v1162 = vpop.f32.mrb[0].mxu0
  %v1163 = vadd.f32 0.0, %v1162
  %v1164 = vpop.f32.mrb[0].mxu0
  %v1165 = vpop.f32.mrb[0].mxu0
  %1166 = vdwg.mxu0
  %v1167 = vld [vmem:[%s2] sm:$0xff]
  %1169 = vset.pattern.permute.xlu0 0
  %1170 = vperm.xlu0 %1169, %v1167
  %v1171 = vpop.permute.xlu0 %1170
  %v1173 = vmul.f32 %v382, %v1171
  %v1174 = vmul.f32 %v384, %v1171
  %v1175 = vmul.f32 %v423, %v1171
  %v1176 = vmul.f32 %v425, %v1171
  %v1177 = vmul.f32 %v464, %v1171
  %v1178 = vmul.f32 %v466, %v1171
  %v1179 = vmul.f32 %v505, %v1171
  %v1180 = vmul.f32 %v507, %v1171
  %v1181 = vmul.f32 %v546, %v1171
  %v1182 = vmul.f32 %v548, %v1171
  %v1183 = vmul.f32 %v587, %v1171
  %v1184 = vmul.f32 %v589, %v1171
  %v1185 = vmul.f32 %v628, %v1171
  %v1186 = vmul.f32 %v630, %v1171
  %v1187 = vmul.f32 %v669, %v1171
  %v1188 = vmul.f32 %v671, %v1171
  %v1189 = vmul.f32 %v710, %v1171
  %v1190 = vmul.f32 %v712, %v1171
  %v1191 = vmul.f32 %v751, %v1171
  %v1192 = vmul.f32 %v753, %v1171
  %v1193 = vmul.f32 %v792, %v1171
  %v1194 = vmul.f32 %v794, %v1171
  %v1195 = vmul.f32 %v833, %v1171
  %v1196 = vmul.f32 %v835, %v1171
  %v1197 = vmul.f32 %v874, %v1171
  %v1198 = vmul.f32 %v876, %v1171
  %v1199 = vmul.f32 %v915, %v1171
  %v1200 = vmul.f32 %v917, %v1171
  %v1201 = vmul.f32 %v956, %v1171
  %v1202 = vmul.f32 %v958, %v1171
  %v1203 = vmul.f32 %v997, %v1171
  %v1204 = vmul.f32 %v999, %v1171
  %v1205 = vmul.f32 %v1038, %v1171
  %v1206 = vmul.f32 %v1040, %v1171
  %v1207 = vmul.f32 %v1079, %v1171
  %v1208 = vmul.f32 %v1081, %v1171
  %v1209 = vmul.f32 %v1120, %v1171
  %v1210 = vmul.f32 %v1122, %v1171
  %v1211 = vmul.f32 %v1161, %v1171
  %v1212 = vmul.f32 %v1163, %v1171
  %v1213 = vld [vmem:[%s3] sm:$0xff]
  %1215 = vset.pattern.permute.xlu0 0
  %1216 = vperm.xlu0 %1215, %v1213
  %v1217 = vpop.permute.xlu0 %1216
  %v1219 = vadd.f32 %v1173, %v1217
  %v1220 = vadd.f32 %v1174, %v1217
  %v1221 = vadd.f32 %v1175, %v1217
  %v1222 = vadd.f32 %v1176, %v1217
  %v1223 = vadd.f32 %v1177, %v1217
  %v1224 = vadd.f32 %v1178, %v1217
  %v1225 = vadd.f32 %v1179, %v1217
  %v1226 = vadd.f32 %v1180, %v1217
  %v1227 = vadd.f32 %v1181, %v1217
  %v1228 = vadd.f32 %v1182, %v1217
  %v1229 = vadd.f32 %v1183, %v1217
  %v1230 = vadd.f32 %v1184, %v1217
  %v1231 = vadd.f32 %v1185, %v1217
  %v1232 = vadd.f32 %v1186, %v1217
  %v1233 = vadd.f32 %v1187, %v1217
  %v1234 = vadd.f32 %v1188, %v1217
  %v1235 = vadd.f32 %v1189, %v1217
  %v1236 = vadd.f32 %v1190, %v1217
  %v1237 = vadd.f32 %v1191, %v1217
  %v1238 = vadd.f32 %v1192, %v1217
  %v1239 = vadd.f32 %v1193, %v1217
  %v1240 = vadd.f32 %v1194, %v1217
  %v1241 = vadd.f32 %v1195, %v1217
  %v1242 = vadd.f32 %v1196, %v1217
  %v1243 = vadd.f32 %v1197, %v1217
  %v1244 = vadd.f32 %v1198, %v1217
  %v1245 = vadd.f32 %v1199, %v1217
  %v1246 = vadd.f32 %v1200, %v1217
  %v1247 = vadd.f32 %v1201, %v1217
  %v1248 = vadd.f32 %v1202, %v1217
  %v1249 = vadd.f32 %v1203, %v1217
  %v1250 = vadd.f32 %v1204, %v1217
  %v1251 = vadd.f32 %v1205, %v1217
  %v1252 = vadd.f32 %v1206, %v1217
  %v1253 = vadd.f32 %v1207, %v1217
  %v1254 = vadd.f32 %v1208, %v1217
  %v1255 = vadd.f32 %v1209, %v1217
  %v1256 = vadd.f32 %v1210, %v1217
  %v1257 = vadd.f32 %v1211, %v1217
  %v1258 = vadd.f32 %v1212, %v1217
  %v1259 = vmax.f32 %v1219, 0.0
  %v1260 = vmax.f32 %v1220, 0.0
  %v1261 = vmax.f32 %v1221, 0.0
  %v1262 = vmax.f32 %v1222, 0.0
  %v1263 = vmax.f32 %v1223, 0.0
  %v1264 = vmax.f32 %v1224, 0.0
  %v1265 = vmax.f32 %v1225, 0.0
  %v1266 = vmax.f32 %v1226, 0.0
  %v1267 = vmax.f32 %v1227, 0.0
  %v1268 = vmax.f32 %v1228, 0.0
  %v1269 = vmax.f32 %v1229, 0.0
  %v1270 = vmax.f32 %v1230, 0.0
  %v1271 = vmax.f32 %v1231, 0.0
  %v1272 = vmax.f32 %v1232, 0.0
  %v1273 = vmax.f32 %v1233, 0.0
  %v1274 = vmax.f32 %v1234, 0.0
  %v1275 = vmax.f32 %v1235, 0.0
  %v1276 = vmax.f32 %v1236, 0.0
  %v1277 = vmax.f32 %v1237, 0.0
  %v1278 = vmax.f32 %v1238, 0.0
  %v1279 = vmax.f32 %v1239, 0.0
  %v1280 = vmax.f32 %v1240, 0.0
  %v1281 = vmax.f32 %v1241, 0.0
  %v1282 = vmax.f32 %v1242, 0.0
  %v1283 = vmax.f32 %v1243, 0.0
  %v1284 = vmax.f32 %v1244, 0.0
  %v1285 = vmax.f32 %v1245, 0.0
  %v1286 = vmax.f32 %v1246, 0.0
  %v1287 = vmax.f32 %v1247, 0.0
  %v1288 = vmax.f32 %v1248, 0.0
  %v1289 = vmax.f32 %v1249, 0.0
  %v1290 = vmax.f32 %v1250, 0.0
  %v1291 = vmax.f32 %v1251, 0.0
  %v1292 = vmax.f32 %v1252, 0.0
  %v1293 = vmax.f32 %v1253, 0.0
  %v1294 = vmax.f32 %v1254, 0.0
  %v1295 = vmax.f32 %v1255, 0.0
  %v1296 = vmax.f32 %v1256, 0.0
  %v1297 = vmax.f32 %v1257, 0.0
  %v1298 = vmax.f32 %v1258, 0.0
  %v1299 = vmax.f32 %v1259, %v1269
  %v1300 = vmax.f32 %v1260, %v1270
  %v1301 = vmax.f32 %v1261, %v1271
  %v1302 = vmax.f32 %v1262, %v1272
  %v1303 = vmax.f32 %v1263, %v1273
  %v1304 = vmax.f32 %v1264, %v1274
  %v1305 = vmax.f32 %v1265, %v1275
  %v1306 = vmax.f32 %v1266, %v1276
  %v1307 = vmax.f32 %v1267, %v1277
  %v1308 = vmax.f32 %v1268, %v1278
  %v1309 = vmax.f32 %v1299, %v1279
  %v1310 = vmax.f32 %v1300, %v1280
  %v1311 = vmax.f32 %v1301, %v1281
  %v1312 = vmax.f32 %v1302, %v1282
  %v1313 = vmax.f32 %v1303, %v1283
  %v1314 = vmax.f32 %v1304, %v1284
  %v1315 = vmax.f32 %v1305, %v1285
  %v1316 = vmax.f32 %v1306, %v1286
  %v1317 = vmax.f32 %v1307, %v1287
  %v1318 = vmax.f32 %v1308, %v1288
  %v1319 = vmax.f32 %v1309, %v1289
  %v1320 = vmax.f32 %v1310, %v1290
  %v1321 = vmax.f32 %v1311, %v1291
  %v1322 = vmax.f32 %v1312, %v1292
  %v1323 = vmax.f32 %v1313, %v1293
  %v1324 = vmax.f32 %v1314, %v1294
  %v1325 = vmax.f32 %v1315, %v1295
  %v1326 = vmax.f32 %v1316, %v1296
  %v1327 = vmax.f32 %v1317, %v1297
  %v1328 = vmax.f32 %v1318, %v1298
  %v1329 = vpack.c.bf16 %v1319, %v1319
  %v1330 = vpack.c.bf16 %v1320, %v1320
  %v1331 = vpack.c.bf16 %v1321, %v1321
  %v1332 = vpack.c.bf16 %v1322, %v1322
  %v1333 = vpack.c.bf16 %v1323, %v1323
  %v1334 = vpack.c.bf16 %v1324, %v1324
  %v1335 = vpack.c.bf16 %v1325, %v1325
  %v1336 = vpack.c.bf16 %v1326, %v1326
  %v1337 = vpack.c.bf16 %v1327, %v1327
  %v1338 = vpack.c.bf16 %v1328, %v1328
  %v1349 = vunpack.c.l.b16 %v1329
  %v1350 = vunpack.c.l.b16 %v1330
  %v1351 = vunpack.c.l.b16 %v1331
  %v1352 = vunpack.c.l.b16 %v1332
  %v1353 = vunpack.c.l.b16 %v1333
  %v1354 = vunpack.c.l.b16 %v1334
  %v1355 = vunpack.c.l.b16 %v1335
  %v1356 = vunpack.c.l.b16 %v1336
  %v1357 = vunpack.c.l.b16 %v1337
  %v1358 = vunpack.c.l.b16 %v1338
  %v1359 = vpack.c.b16 %v1350, %v1349
  %v1360 = vpack.c.b16 %v1352, %v1351
  %v1361 = vpack.c.b16 %v1354, %v1353
  %v1362 = vpack.c.b16 %v1356, %v1355
  %v1363 = vpack.c.b16 %v1358, %v1357
  %1369 = vst [vmem:[%s4] sm:$0xff] %v1359
  %1370 = vst [vmem:[%s4 + $0x8] sm:$0xff] %v1360
  %1371 = vst [vmem:[%s4 + $0x10] sm:$0xff] %v1361
  %1372 = vst [vmem:[%s4 + $0x18] sm:$0xff] %v1362
  %1373 = vst [vmem:[%s4 + $0x20] sm:$0xff] %v1363
  // Predicated region
  $region18: #{crnn_forward.8} parent=0 // pred_check
    _
  $region19: #{crnn_forward.8} parent=0 // pred_check_branch
    %1375 = sbr.rel (0) target = $region21
  $region20: #{crnn_forward.8} parent=0 // pred_region
    _
  $region21: #{crnn_forward.8} parent=0 // pred_fallthru
    _
  // Predicated region
  $region22: #{crnn_forward.8} parent=0 // pred_check
    _
  $region23: #{crnn_forward.8} parent=0 // pred_check_branch
    %1377 = sbr.rel (0) target = $region25
  $region24: #{crnn_forward.8} parent=0 // pred_region
    _
  $region25: #{crnn_forward.8} parent=0 // pred_fallthru
    _

// kernel: crnn_forward.9
$region0: #{crnn_forward.9}
  #allocation0 [shape = 'u32[]', space=smem, size = 0x4, offset = 0x4, fixed_abs, tag = 'smem constant byte address 0x4 - core index']
  #allocation1 [shape = 'u32[144,128]{1,0:T(1,128)}', space=vmem, size = 0x12000, scoped, tag = 'internal scratch']
  %s0 = inlined_call_operand.vmem [shape: bf16[72,1536], index: 0, kind: input, shape index: {}]
  %s1 = inlined_call_operand.vmem [shape: bf16[32,72], index: 1, kind: input, shape index: {}]
  %s2 = inlined_call_operand.vmem [shape: f32[32,1], index: 2, kind: input, shape index: {}]
  %s3 = inlined_call_operand.vmem [shape: f32[32,1], index: 3, kind: input, shape index: {}]
  %s4 = inlined_call_operand.vmem [shape: bf16[32,384], index: 4, kind: output, shape index: {}]
  %s5 = sld [smem:[#allocation0]]
  $region26: #{crnn_forward.9} parent=0
    _
  %s7 = ssub.s32 1, %s5
  %s8 = scalar_select 0, %s7, %s5
  // Predicated region
  $region2: #{crnn_forward.9} parent=0 // pred_check
    _
  $region3: #{crnn_forward.9} parent=0 // pred_check_branch
    %10 = sbr.rel (0) target = $region5
  $region4: #{crnn_forward.9} parent=0 // pred_region
    _
  $region5: #{crnn_forward.9} parent=0 // pred_fallthru
    _
  // Predicated region
  $region6: #{crnn_forward.9} parent=0 // pred_check
    _
  $region7: #{crnn_forward.9} parent=0 // pred_check_branch
    %12 = sbr.rel (0) target = $region9
  $region8: #{crnn_forward.9} parent=0 // pred_region
    _
  $region9: #{crnn_forward.9} parent=0 // pred_fallthru
    _
  // Predicated region
  $region10: #{crnn_forward.9} parent=0 // pred_check
    _
  $region11: #{crnn_forward.9} parent=0 // pred_check_branch
    %14 = sbr.rel (0) target = $region13
  $region12: #{crnn_forward.9} parent=0 // pred_region
    _
  $region13: #{crnn_forward.9} parent=0 // pred_fallthru
    _
  // Predicated region
  $region14: #{crnn_forward.9} parent=0 // pred_check
    _
  $region15: #{crnn_forward.9} parent=0 // pred_check_branch
    %16 = sbr.rel (0) target = $region17
  $region16: #{crnn_forward.9} parent=0 // pred_region
    _
  $region17: #{crnn_forward.9} parent=0 // pred_fallthru
    _
  %v18 = vld [vmem:[%s1] sm:$0xf]
  %v19 = vld [vmem:[%s1 + $0x4] sm:$0xf]
  %v20 = vld [vmem:[%s1 + $0x8] sm:$0xf]
  %v21 = vld [vmem:[%s1 + $0xc] sm:$0xf]
  %v22 = vld [vmem:[%s0] sm:$0xff]
  %v23 = vld [vmem:[%s0 + $0x8] sm:$0xff]
  %v24 = vld [vmem:[%s0 + $0x10] sm:$0xff]
  %v25 = vld [vmem:[%s0 + $0x18] sm:$0xff]
  %v26 = vld [vmem:[%s0 + $0x20] sm:$0xff]
  %v27 = vld [vmem:[%s0 + $0x28] sm:$0xff]
  %v28 = vld [vmem:[%s0 + $0x30] sm:$0xff]
  %v29 = vld [vmem:[%s0 + $0x38] sm:$0xff]
  %v30 = vld [vmem:[%s0 + $0x40] sm:$0xff]
  %v31 = vld [vmem:[%s0 + $0x48] sm:$0xff]
  %v32 = vld [vmem:[%s0 + $0x50] sm:$0xff]
  %v33 = vld [vmem:[%s0 + $0x58] sm:$0xff]
  %v34 = vld [vmem:[%s0 + $0x60] sm:$0xff]
  %v35 = vld [vmem:[%s0 + $0x68] sm:$0xff]
  %v36 = vld [vmem:[%s0 + $0x70] sm:$0xff]
  %v37 = vld [vmem:[%s0 + $0x78] sm:$0xff]
  %v38 = vld [vmem:[%s0 + $0x80] sm:$0xff]
  %v39 = vld [vmem:[%s0 + $0x88] sm:$0xff]
  %v40 = vld [vmem:[%s0 + $0x90] sm:$0xff]
  %v41 = vld [vmem:[%s0 + $0x98] sm:$0xff]
  %v42 = vld [vmem:[%s0 + $0xa0] sm:$0xff]
  %v43 = vld [vmem:[%s0 + $0xa8] sm:$0xff]
  %v44 = vld [vmem:[%s0 + $0xb0] sm:$0xff]
  %v45 = vld [vmem:[%s0 + $0xb8] sm:$0xff]
  %v46 = vld [vmem:[%s0 + $0xc0] sm:$0xff]
  %v47 = vld [vmem:[%s0 + $0xc8] sm:$0xff]
  %v48 = vld [vmem:[%s0 + $0xd0] sm:$0xff]
  %v49 = vld [vmem:[%s0 + $0xd8] sm:$0xff]
  %v50 = vld [vmem:[%s0 + $0xe0] sm:$0xff]
  %v51 = vld [vmem:[%s0 + $0xe8] sm:$0xff]
  %v52 = vld [vmem:[%s0 + $0xf0] sm:$0xff]
  %v53 = vld [vmem:[%s0 + $0xf8] sm:$0xff]
  %v54 = vld [vmem:[%s0 + $0x100] sm:$0xff]
  %v55 = vld [vmem:[%s0 + $0x108] sm:$0xff]
  %v56 = vld [vmem:[%s0 + $0x110] sm:$0xff]
  %v57 = vld [vmem:[%s0 + $0x118] sm:$0xff]
  %v58 = vld [vmem:[%s0 + $0x120] sm:$0xff]
  %v59 = vld [vmem:[%s0 + $0x128] sm:$0xff]
  %v60 = vld [vmem:[%s0 + $0x130] sm:$0xff]
  %v61 = vld [vmem:[%s0 + $0x138] sm:$0xff]
  %v62 = vld [vmem:[%s0 + $0x140] sm:$0xff]
  %v63 = vld [vmem:[%s0 + $0x148] sm:$0xff]
  %v64 = vld [vmem:[%s0 + $0x150] sm:$0xff]
  %v65 = vld [vmem:[%s0 + $0x158] sm:$0xff]
  %v66 = vld [vmem:[%s0 + $0x160] sm:$0xff]
  %v67 = vld [vmem:[%s0 + $0x168] sm:$0xff]
  %v68 = vld [vmem:[%s0 + $0x170] sm:$0xff]
  %v69 = vld [vmem:[%s0 + $0x178] sm:$0xff]
  %v70 = vld [vmem:[%s0 + $0x180] sm:$0xff]
  %v71 = vld [vmem:[%s0 + $0x188] sm:$0xff]
  %v72 = vld [vmem:[%s0 + $0x190] sm:$0xff]
  %v73 = vld [vmem:[%s0 + $0x198] sm:$0xff]
  %v74 = vld [vmem:[%s0 + $0x1a0] sm:$0xff]
  %v75 = vld [vmem:[%s0 + $0x1a8] sm:$0xff]
  %v80 = vunpack.c.l.b16 %v18
  %v81 = vunpack.c.l.b16 %v19
  %v82 = vunpack.c.l.b16 %v20
  %v83 = vunpack.c.l.b16 %v21
  %v84 = vpack.c.b16 %v81, %v80
  %v85 = vpack.c.b16 %v83, %v82
  %v140 = vunpack.c.l.b16 %v22
  %v141 = vunpack.c.h.b16 %v22
  %v142 = vunpack.c.l.b16 %v23
  %v143 = vunpack.c.h.b16 %v23
  %v144 = vunpack.c.l.b16 %v24
  %v145 = vunpack.c.h.b16 %v24
  %v146 = vunpack.c.l.b16 %v25
  %v147 = vunpack.c.h.b16 %v25
  %v148 = vunpack.c.l.b16 %v26
  %v149 = vunpack.c.h.b16 %v26
  %v150 = vunpack.c.l.b16 %v27
  %v151 = vunpack.c.h.b16 %v27
  %v152 = vunpack.c.l.b16 %v28
  %v153 = vunpack.c.h.b16 %v28
  %v154 = vunpack.c.l.b16 %v29
  %v155 = vunpack.c.h.b16 %v29
  %v156 = vunpack.c.l.b16 %v30
  %v157 = vunpack.c.h.b16 %v30
  %v158 = vunpack.c.l.b16 %v31
  %v159 = vunpack.c.h.b16 %v31
  %v160 = vunpack.c.l.b16 %v32
  %v161 = vunpack.c.h.b16 %v32
  %v162 = vunpack.c.l.b16 %v33
  %v163 = vunpack.c.h.b16 %v33
  %v164 = vunpack.c.l.b16 %v34
  %v165 = vunpack.c.h.b16 %v34
  %v166 = vunpack.c.l.b16 %v35
  %v167 = vunpack.c.h.b16 %v35
  %v168 = vunpack.c.l.b16 %v36
  %v169 = vunpack.c.h.b16 %v36
  %v170 = vunpack.c.l.b16 %v37
  %v171 = vunpack.c.h.b16 %v37
  %v172 = vunpack.c.l.b16 %v38
  %v173 = vunpack.c.h.b16 %v38
  %v174 = vunpack.c.l.b16 %v39
  %v175 = vunpack.c.h.b16 %v39
  %v176 = vunpack.c.l.b16 %v40
  %v177 = vunpack.c.h.b16 %v40
  %v178 = vunpack.c.l.b16 %v41
  %v179 = vunpack.c.h.b16 %v41
  %v180 = vunpack.c.l.b16 %v42
  %v181 = vunpack.c.h.b16 %v42
  %v182 = vunpack.c.l.b16 %v43
  %v183 = vunpack.c.h.b16 %v43
  %v184 = vunpack.c.l.b16 %v44
  %v185 = vunpack.c.h.b16 %v44
  %v186 = vunpack.c.l.b16 %v45
  %v187 = vunpack.c.h.b16 %v45
  %v188 = vunpack.c.l.b16 %v46
  %v189 = vunpack.c.h.b16 %v46
  %v190 = vunpack.c.l.b16 %v47
  %v191 = vunpack.c.h.b16 %v47
  %v192 = vunpack.c.l.b16 %v48
  %v193 = vunpack.c.h.b16 %v48
  %v194 = vunpack.c.l.b16 %v49
  %v195 = vunpack.c.h.b16 %v49
  %v196 = vunpack.c.l.b16 %v50
  %v197 = vunpack.c.h.b16 %v50
  %v198 = vunpack.c.l.b16 %v51
  %v199 = vunpack.c.h.b16 %v51
  %v200 = vunpack.c.l.b16 %v52
  %v201 = vunpack.c.h.b16 %v52
  %v202 = vunpack.c.l.b16 %v53
  %v203 = vunpack.c.h.b16 %v53
  %v204 = vunpack.c.l.b16 %v54
  %v205 = vunpack.c.h.b16 %v54
  %v206 = vunpack.c.l.b16 %v55
  %v207 = vunpack.c.h.b16 %v55
  %v208 = vunpack.c.l.b16 %v56
  %v209 = vunpack.c.h.b16 %v56
  %v210 = vunpack.c.l.b16 %v57
  %v211 = vunpack.c.h.b16 %v57
  %v212 = vunpack.c.l.b16 %v58
  %v213 = vunpack.c.h.b16 %v58
  %v214 = vunpack.c.l.b16 %v59
  %v215 = vunpack.c.h.b16 %v59
  %v216 = vunpack.c.l.b16 %v60
  %v217 = vunpack.c.h.b16 %v60
  %v218 = vunpack.c.l.b16 %v61
  %v219 = vunpack.c.h.b16 %v61
  %v220 = vunpack.c.l.b16 %v62
  %v221 = vunpack.c.h.b16 %v62
  %v222 = vunpack.c.l.b16 %v63
  %v223 = vunpack.c.h.b16 %v63
  %v224 = vunpack.c.l.b16 %v64
  %v225 = vunpack.c.h.b16 %v64
  %v226 = vunpack.c.l.b16 %v65
  %v227 = vunpack.c.h.b16 %v65
  %v228 = vunpack.c.l.b16 %v66
  %v229 = vunpack.c.h.b16 %v66
  %v230 = vunpack.c.l.b16 %v67
  %v231 = vunpack.c.h.b16 %v67
  %v232 = vunpack.c.l.b16 %v68
  %v233 = vunpack.c.h.b16 %v68
  %v234 = vunpack.c.l.b16 %v69
  %v235 = vunpack.c.h.b16 %v69
  %v236 = vunpack.c.l.b16 %v70
  %v237 = vunpack.c.h.b16 %v70
  %v238 = vunpack.c.l.b16 %v71
  %v239 = vunpack.c.h.b16 %v71
  %v240 = vunpack.c.l.b16 %v72
  %v241 = vunpack.c.h.b16 %v72
  %v242 = vunpack.c.l.b16 %v73
  %v243 = vunpack.c.h.b16 %v73
  %v244 = vunpack.c.l.b16 %v74
  %v245 = vunpack.c.h.b16 %v74
  %v246 = vunpack.c.l.b16 %v75
  %v247 = vunpack.c.h.b16 %v75
  %v248 = vpack.c.b16 %v152, %v140
  %v249 = vpack.c.b16 %v153, %v141
  %v250 = vpack.c.b16 %v154, %v142
  %v251 = vpack.c.b16 %v155, %v143
  %v252 = vpack.c.b16 %v156, %v144
  %v253 = vpack.c.b16 %v157, %v145
  %v254 = vpack.c.b16 %v158, %v146
  %v255 = vpack.c.b16 %v159, %v147
  %v256 = vpack.c.b16 %v160, %v148
  %v257 = vpack.c.b16 %v161, %v149
  %v258 = vpack.c.b16 %v162, %v150
  %v259 = vpack.c.b16 %v163, %v151
  %v260 = vpack.c.b16 %v176, %v164
  %v261 = vpack.c.b16 %v177, %v165
  %v262 = vpack.c.b16 %v178, %v166
  %v263 = vpack.c.b16 %v179, %v167
  %v264 = vpack.c.b16 %v180, %v168
  %v265 = vpack.c.b16 %v181, %v169
  %v266 = vpack.c.b16 %v182, %v170
  %v267 = vpack.c.b16 %v183, %v171
  %v268 = vpack.c.b16 %v184, %v172
  %v269 = vpack.c.b16 %v185, %v173
  %v270 = vpack.c.b16 %v186, %v174
  %v271 = vpack.c.b16 %v187, %v175
  %v272 = vpack.c.b16 %v200, %v188
  %v273 = vpack.c.b16 %v201, %v189
  %v274 = vpack.c.b16 %v202, %v190
  %v275 = vpack.c.b16 %v203, %v191
  %v276 = vpack.c.b16 %v204, %v192
  %v277 = vpack.c.b16 %v205, %v193
  %v278 = vpack.c.b16 %v206, %v194
  %v279 = vpack.c.b16 %v207, %v195
  %v280 = vpack.c.b16 %v208, %v196
  %v281 = vpack.c.b16 %v209, %v197
  %v282 = vpack.c.b16 %v210, %v198
  %v283 = vpack.c.b16 %v211, %v199
  %v284 = vpack.c.b16 %v224, %v212
  %v285 = vpack.c.b16 %v225, %v213
  %v286 = vpack.c.b16 %v226, %v214
  %v287 = vpack.c.b16 %v227, %v215
  %v288 = vpack.c.b16 %v228, %v216
  %v289 = vpack.c.b16 %v229, %v217
  %v290 = vpack.c.b16 %v230, %v218
  %v291 = vpack.c.b16 %v231, %v219
  %v292 = vpack.c.b16 %v232, %v220
  %v293 = vpack.c.b16 %v233, %v221
  %v294 = vpack.c.b16 %v234, %v222
  %v295 = vpack.c.b16 %v235, %v223
  %v296 = vpack.c.b16 %v236, %v236
  %v297 = vpack.c.b16 %v237, %v237
  %v298 = vpack.c.b16 %v238, %v238
  %v299 = vpack.c.b16 %v239, %v239
  %v300 = vpack.c.b16 %v240, %v240
  %v301 = vpack.c.b16 %v241, %v241
  %v302 = vpack.c.b16 %v242, %v242
  %v303 = vpack.c.b16 %v243, %v243
  %v304 = vpack.c.b16 %v244, %v244
  %v305 = vpack.c.b16 %v245, %v245
  %v306 = vpack.c.b16 %v246, %v246
  %v307 = vpack.c.b16 %v247, %v247
  %vm356 = vcmask 588800
  %v358 = vsel %vm356, %v84, 0
  %v361 = vsel %vm356, %v85, 0
  %vm363 = vcmask 1043456
  %v365 = vsel %vm363, %v296, 0
  %v368 = vsel %vm363, %v297, 0
  %v371 = vsel %vm363, %v298, 0
  %v374 = vsel %vm363, %v299, 0
  %v377 = vsel %vm363, %v300, 0
  %v380 = vsel %vm363, %v301, 0
  %v383 = vsel %vm363, %v302, 0
  %v386 = vsel %vm363, %v303, 0
  %v389 = vsel %vm363, %v304, 0
  %v392 = vsel %vm363, %v305, 0
  %v395 = vsel %vm363, %v306, 0
  %v398 = vsel %vm363, %v307, 0
  %400 = vmatprep.subr.bf16.mxu0 %v249
  %401 = vmatpush1.bf16.msra.mxu0 %v248
  %402 = vmatprep.subr.bf16.mxu0 %v261
  %403 = vmatpush1.bf16.msra.mxu0 %v260
  %404 = vmatprep.subr.bf16.mxu0 %v273
  %405 = vmatpush1.bf16.msra.mxu0 %v272
  %406 = vmatprep.subr.bf16.mxu0 %v285
  %407 = vmatpush1.bf16.msra.mxu0 %v284
  %408 = vmatprep.subr.bf16.mxu0 %v368
  %409 = vmatpush1.bf16.msra.mxu0 %v365
  %410 = vmatprep.subr.bf16.mxu0 0
  %411 = vmatpush1.bf16.msra.mxu0 0
  %412 = vmatprep.subr.bf16.mxu0 0
  %413 = vmatpush1.bf16.msra.mxu0 0
  %414 = vmatprep.subr.bf16.mxu0 0
  %415 = vmatpush1.bf16.msra.mxu0 0
  %416 = vmatprep.subr.bf16.mxu0 0
  %417 = vmatpush1.bf16.msra.mxu0 0
  %418 = vmatprep.subr.bf16.mxu0 0
  %419 = vmatpush1.bf16.msra.mxu0 0
  %420 = vmatprep.subr.bf16.mxu0 0
  %421 = vmatpush1.bf16.msra.mxu0 0
  %422 = vmatprep.subr.bf16.mxu0 0
  %423 = vmatpush1.bf16.msra.mxu0 0
  %424 = vmatprep.subr.bf16.mxu0 0
  %425 = vmatpush1.bf16.msra.mxu0 0
  %426 = vmatprep.subr.bf16.mxu0 0
  %427 = vmatpush1.bf16.msra.mxu0 0
  %428 = vmatprep.subr.bf16.mxu0 0
  %429 = vmatpush1.bf16.msra.mxu0 0
  %430 = vmatprep.subr.bf16.mxu0 0
  %431 = vmatpush1.bf16.msra.mxu0 0
  %432 = vmatprep.mubr.bf16.mxu0 0
  %433 = vmatmul.mubr.bf16.gmra.mrb[0].mxu0 %v358
  %v434 = vpop.f32.mrb[0].mxu0
  %v435 = vadd.f32 0.0, %v434
  %v436 = vpop.f32.mrb[0].mxu0
  %v437 = vadd.f32 0.0, %v436
  %v438 = vpop.f32.mrb[0].mxu0
  %v439 = vadd.f32 0.0, %v438
  %v440 = vpop.f32.mrb[0].mxu0
  %v441 = vadd.f32 0.0, %v440
  %442 = vmatprep.mubr.bf16.mxu0 0
  %443 = vmatmul.mubr.bf16.gmra.mrb[0].mxu0 %v361
  %v444 = vpop.f32.mrb[0].mxu0
  %v445 = vadd.f32 0.0, %v444
  %v446 = vpop.f32.mrb[0].mxu0
  %v447 = vadd.f32 0.0, %v446
  %v448 = vpop.f32.mrb[0].mxu0
  %v449 = vadd.f32 0.0, %v448
  %v450 = vpop.f32.mrb[0].mxu0
  %v451 = vadd.f32 0.0, %v450
  %452 = vdwg.mxu0
  %453 = vmatprep.subr.bf16.mxu0 %v251
  %454 = vmatpush1.bf16.msra.mxu0 %v250
  %455 = vmatprep.subr.bf16.mxu0 %v263
  %456 = vmatpush1.bf16.msra.mxu0 %v262
  %457 = vmatprep.subr.bf16.mxu0 %v275
  %458 = vmatpush1.bf16.msra.mxu0 %v274
  %459 = vmatprep.subr.bf16.mxu0 %v287
  %460 = vmatpush1.bf16.msra.mxu0 %v286
  %461 = vmatprep.subr.bf16.mxu0 %v374
  %462 = vmatpush1.bf16.msra.mxu0 %v371
  %463 = vmatprep.subr.bf16.mxu0 0
  %464 = vmatpush1.bf16.msra.mxu0 0
  %465 = vmatprep.subr.bf16.mxu0 0
  %466 = vmatpush1.bf16.msra.mxu0 0
  %467 = vmatprep.subr.bf16.mxu0 0
  %468 = vmatpush1.bf16.msra.mxu0 0
  %469 = vmatprep.subr.bf16.mxu0 0
  %470 = vmatpush1.bf16.msra.mxu0 0
  %471 = vmatprep.subr.bf16.mxu0 0
  %472 = vmatpush1.bf16.msra.mxu0 0
  %473 = vmatprep.subr.bf16.mxu0 0
  %474 = vmatpush1.bf16.msra.mxu0 0
  %475 = vmatprep.subr.bf16.mxu0 0
  %476 = vmatpush1.bf16.msra.mxu0 0
  %477 = vmatprep.subr.bf16.mxu0 0
  %478 = vmatpush1.bf16.msra.mxu0 0
  %479 = vmatprep.subr.bf16.mxu0 0
  %480 = vmatpush1.bf16.msra.mxu0 0
  %481 = vmatprep.subr.bf16.mxu0 0
  %482 = vmatpush1.bf16.msra.mxu0 0
  %483 = vmatprep.subr.bf16.mxu0 0
  %484 = vmatpush1.bf16.msra.mxu0 0
  %485 = vmatprep.mubr.bf16.mxu0 0
  %486 = vmatmul.mubr.bf16.gmra.mrb[0].mxu0 %v358
  %v487 = vpop.f32.mrb[0].mxu0
  %v488 = vadd.f32 0.0, %v487
  %v489 = vpop.f32.mrb[0].mxu0
  %v490 = vadd.f32 0.0, %v489
  %v491 = vpop.f32.mrb[0].mxu0
  %v492 = vadd.f32 0.0, %v491
  %v493 = vpop.f32.mrb[0].mxu0
  %v494 = vadd.f32 0.0, %v493
  %495 = vmatprep.mubr.bf16.mxu0 0
  %496 = vmatmul.mubr.bf16.gmra.mrb[0].mxu0 %v361
  %v497 = vpop.f32.mrb[0].mxu0
  %v498 = vadd.f32 0.0, %v497
  %v499 = vpop.f32.mrb[0].mxu0
  %v500 = vadd.f32 0.0, %v499
  %v501 = vpop.f32.mrb[0].mxu0
  %v502 = vadd.f32 0.0, %v501
  %v503 = vpop.f32.mrb[0].mxu0
  %v504 = vadd.f32 0.0, %v503
  %505 = vdwg.mxu0
  %506 = vmatprep.subr.bf16.mxu0 %v253
  %507 = vmatpush1.bf16.msra.mxu0 %v252
  %508 = vmatprep.subr.bf16.mxu0 %v265
  %509 = vmatpush1.bf16.msra.mxu0 %v264
  %510 = vmatprep.subr.bf16.mxu0 %v277
  %511 = vmatpush1.bf16.msra.mxu0 %v276
  %512 = vmatprep.subr.bf16.mxu0 %v289
  %513 = vmatpush1.bf16.msra.mxu0 %v288
  %514 = vmatprep.subr.bf16.mxu0 %v380
  %515 = vmatpush1.bf16.msra.mxu0 %v377
  %516 = vmatprep.subr.bf16.mxu0 0
  %517 = vmatpush1.bf16.msra.mxu0 0
  %518 = vmatprep.subr.bf16.mxu0 0
  %519 = vmatpush1.bf16.msra.mxu0 0
  %520 = vmatprep.subr.bf16.mxu0 0
  %521 = vmatpush1.bf16.msra.mxu0 0
  %522 = vmatprep.subr.bf16.mxu0 0
  %523 = vmatpush1.bf16.msra.mxu0 0
  %524 = vmatprep.subr.bf16.mxu0 0
  %525 = vmatpush1.bf16.msra.mxu0 0
  %526 = vmatprep.subr.bf16.mxu0 0
  %527 = vmatpush1.bf16.msra.mxu0 0
  %528 = vmatprep.subr.bf16.mxu0 0
  %529 = vmatpush1.bf16.msra.mxu0 0
  %530 = vmatprep.subr.bf16.mxu0 0
  %531 = vmatpush1.bf16.msra.mxu0 0
  %532 = vmatprep.subr.bf16.mxu0 0
  %533 = vmatpush1.bf16.msra.mxu0 0
  %534 = vmatprep.subr.bf16.mxu0 0
  %535 = vmatpush1.bf16.msra.mxu0 0
  %536 = vmatprep.subr.bf16.mxu0 0
  %537 = vmatpush1.bf16.msra.mxu0 0
  %538 = vmatprep.mubr.bf16.mxu0 0
  %539 = vmatmul.mubr.bf16.gmra.mrb[0].mxu0 %v358
  %v540 = vpop.f32.mrb[0].mxu0
  %v541 = vadd.f32 0.0, %v540
  %v542 = vpop.f32.mrb[0].mxu0
  %v543 = vadd.f32 0.0, %v542
  %v544 = vpop.f32.mrb[0].mxu0
  %v545 = vadd.f32 0.0, %v544
  %v546 = vpop.f32.mrb[0].mxu0
  %v547 = vadd.f32 0.0, %v546
  %548 = vmatprep.mubr.bf16.mxu0 0
  %549 = vmatmul.mubr.bf16.gmra.mrb[0].mxu0 %v361
  %v550 = vpop.f32.mrb[0].mxu0
  %v551 = vadd.f32 0.0, %v550
  %v552 = vpop.f32.mrb[0].mxu0
  %v553 = vadd.f32 0.0, %v552
  %v554 = vpop.f32.mrb[0].mxu0
  %v555 = vadd.f32 0.0, %v554
  %v556 = vpop.f32.mrb[0].mxu0
  %v557 = vadd.f32 0.0, %v556
  %558 = vdwg.mxu0
  %559 = vmatprep.subr.bf16.mxu0 %v255
  %560 = vmatpush1.bf16.msra.mxu0 %v254
  %561 = vmatprep.subr.bf16.mxu0 %v267
  %562 = vmatpush1.bf16.msra.mxu0 %v266
  %563 = vmatprep.subr.bf16.mxu0 %v279
  %564 = vmatpush1.bf16.msra.mxu0 %v278
  %565 = vmatprep.subr.bf16.mxu0 %v291
  %566 = vmatpush1.bf16.msra.mxu0 %v290
  %567 = vmatprep.subr.bf16.mxu0 %v386
  %568 = vmatpush1.bf16.msra.mxu0 %v383
  %569 = vmatprep.subr.bf16.mxu0 0
  %570 = vmatpush1.bf16.msra.mxu0 0
  %571 = vmatprep.subr.bf16.mxu0 0
  %572 = vmatpush1.bf16.msra.mxu0 0
  %573 = vmatprep.subr.bf16.mxu0 0
  %574 = vmatpush1.bf16.msra.mxu0 0
  %575 = vmatprep.subr.bf16.mxu0 0
  %576 = vmatpush1.bf16.msra.mxu0 0
  %577 = vmatprep.subr.bf16.mxu0 0
  %578 = vmatpush1.bf16.msra.mxu0 0
  %579 = vmatprep.subr.bf16.mxu0 0
  %580 = vmatpush1.bf16.msra.mxu0 0
  %581 = vmatprep.subr.bf16.mxu0 0
  %582 = vmatpush1.bf16.msra.mxu0 0
  %583 = vmatprep.subr.bf16.mxu0 0
  %584 = vmatpush1.bf16.msra.mxu0 0
  %585 = vmatprep.subr.bf16.mxu0 0
  %586 = vmatpush1.bf16.msra.mxu0 0
  %587 = vmatprep.subr.bf16.mxu0 0
  %588 = vmatpush1.bf16.msra.mxu0 0
  %589 = vmatprep.subr.bf16.mxu0 0
  %590 = vmatpush1.bf16.msra.mxu0 0
  %591 = vmatprep.mubr.bf16.mxu0 0
  %592 = vmatmul.mubr.bf16.gmra.mrb[0].mxu0 %v358
  %v593 = vpop.f32.mrb[0].mxu0
  %v594 = vadd.f32 0.0, %v593
  %v595 = vpop.f32.mrb[0].mxu0
  %v596 = vadd.f32 0.0, %v595
  %v597 = vpop.f32.mrb[0].mxu0
  %v598 = vadd.f32 0.0, %v597
  %v599 = vpop.f32.mrb[0].mxu0
  %v600 = vadd.f32 0.0, %v599
  %601 = vmatprep.mubr.bf16.mxu0 0
  %602 = vmatmul.mubr.bf16.gmra.mrb[0].mxu0 %v361
  %v603 = vpop.f32.mrb[0].mxu0
  %v604 = vadd.f32 0.0, %v603
  %v605 = vpop.f32.mrb[0].mxu0
  %v606 = vadd.f32 0.0, %v605
  %v607 = vpop.f32.mrb[0].mxu0
  %v608 = vadd.f32 0.0, %v607
  %v609 = vpop.f32.mrb[0].mxu0
  %v610 = vadd.f32 0.0, %v609
  %611 = vdwg.mxu0
  %612 = vmatprep.subr.bf16.mxu0 %v257
  %613 = vmatpush1.bf16.msra.mxu0 %v256
  %614 = vmatprep.subr.bf16.mxu0 %v269
  %615 = vmatpush1.bf16.msra.mxu0 %v268
  %616 = vmatprep.subr.bf16.mxu0 %v281
  %617 = vmatpush1.bf16.msra.mxu0 %v280
  %618 = vmatprep.subr.bf16.mxu0 %v293
  %619 = vmatpush1.bf16.msra.mxu0 %v292
  %620 = vmatprep.subr.bf16.mxu0 %v392
  %621 = vmatpush1.bf16.msra.mxu0 %v389
  %622 = vmatprep.subr.bf16.mxu0 0
  %623 = vmatpush1.bf16.msra.mxu0 0
  %624 = vmatprep.subr.bf16.mxu0 0
  %625 = vmatpush1.bf16.msra.mxu0 0
  %626 = vmatprep.subr.bf16.mxu0 0
  %627 = vmatpush1.bf16.msra.mxu0 0
  %628 = vmatprep.subr.bf16.mxu0 0
  %629 = vmatpush1.bf16.msra.mxu0 0
  %630 = vmatprep.subr.bf16.mxu0 0
  %631 = vmatpush1.bf16.msra.mxu0 0
  %632 = vmatprep.subr.bf16.mxu0 0
  %633 = vmatpush1.bf16.msra.mxu0 0
  %634 = vmatprep.subr.bf16.mxu0 0
  %635 = vmatpush1.bf16.msra.mxu0 0
  %636 = vmatprep.subr.bf16.mxu0 0
  %637 = vmatpush1.bf16.msra.mxu0 0
  %638 = vmatprep.subr.bf16.mxu0 0
  %639 = vmatpush1.bf16.msra.mxu0 0
  %640 = vmatprep.subr.bf16.mxu0 0
  %641 = vmatpush1.bf16.msra.mxu0 0
  %642 = vmatprep.subr.bf16.mxu0 0
  %643 = vmatpush1.bf16.msra.mxu0 0
  %644 = vmatprep.mubr.bf16.mxu0 0
  %645 = vmatmul.mubr.bf16.gmra.mrb[0].mxu0 %v358
  %v646 = vpop.f32.mrb[0].mxu0
  %v647 = vadd.f32 0.0, %v646
  %v648 = vpop.f32.mrb[0].mxu0
  %v649 = vadd.f32 0.0, %v648
  %v650 = vpop.f32.mrb[0].mxu0
  %v651 = vadd.f32 0.0, %v650
  %v652 = vpop.f32.mrb[0].mxu0
  %v653 = vadd.f32 0.0, %v652
  %654 = vmatprep.mubr.bf16.mxu0 0
  %655 = vmatmul.mubr.bf16.gmra.mrb[0].mxu0 %v361
  %v656 = vpop.f32.mrb[0].mxu0
  %v657 = vadd.f32 0.0, %v656
  %v658 = vpop.f32.mrb[0].mxu0
  %v659 = vadd.f32 0.0, %v658
  %v660 = vpop.f32.mrb[0].mxu0
  %v661 = vadd.f32 0.0, %v660
  %v662 = vpop.f32.mrb[0].mxu0
  %v663 = vadd.f32 0.0, %v662
  %664 = vdwg.mxu0
  %665 = vmatprep.subr.bf16.mxu0 %v259
  %666 = vmatpush1.bf16.msra.mxu0 %v258
  %667 = vmatprep.subr.bf16.mxu0 %v271
  %668 = vmatpush1.bf16.msra.mxu0 %v270
  %669 = vmatprep.subr.bf16.mxu0 %v283
  %670 = vmatpush1.bf16.msra.mxu0 %v282
  %671 = vmatprep.subr.bf16.mxu0 %v295
  %672 = vmatpush1.bf16.msra.mxu0 %v294
  %673 = vmatprep.subr.bf16.mxu0 %v398
  %674 = vmatpush1.bf16.msra.mxu0 %v395
  %675 = vmatprep.subr.bf16.mxu0 0
  %676 = vmatpush1.bf16.msra.mxu0 0
  %677 = vmatprep.subr.bf16.mxu0 0
  %678 = vmatpush1.bf16.msra.mxu0 0
  %679 = vmatprep.subr.bf16.mxu0 0
  %680 = vmatpush1.bf16.msra.mxu0 0
  %681 = vmatprep.subr.bf16.mxu0 0
  %682 = vmatpush1.bf16.msra.mxu0 0
  %683 = vmatprep.subr.bf16.mxu0 0
  %684 = vmatpush1.bf16.msra.mxu0 0
  %685 = vmatprep.subr.bf16.mxu0 0
  %686 = vmatpush1.bf16.msra.mxu0 0
  %687 = vmatprep.subr.bf16.mxu0 0
  %688 = vmatpush1.bf16.msra.mxu0 0
  %689 = vmatprep.subr.bf16.mxu0 0
  %690 = vmatpush1.bf16.msra.mxu0 0
  %691 = vmatprep.subr.bf16.mxu0 0
  %692 = vmatpush1.bf16.msra.mxu0 0
  %693 = vmatprep.subr.bf16.mxu0 0
  %694 = vmatpush1.bf16.msra.mxu0 0
  %695 = vmatprep.subr.bf16.mxu0 0
  %696 = vmatpush1.bf16.msra.mxu0 0
  %697 = vmatprep.mubr.bf16.mxu0 0
  %698 = vmatmul.mubr.bf16.gmra.mrb[0].mxu0 %v358
  %v699 = vpop.f32.mrb[0].mxu0
  %v700 = vadd.f32 0.0, %v699
  %v701 = vpop.f32.mrb[0].mxu0
  %v702 = vadd.f32 0.0, %v701
  %v703 = vpop.f32.mrb[0].mxu0
  %v704 = vadd.f32 0.0, %v703
  %v705 = vpop.f32.mrb[0].mxu0
  %v706 = vadd.f32 0.0, %v705
  %707 = vmatprep.mubr.bf16.mxu0 0
  %708 = vmatmul.mubr.bf16.gmra.mrb[0].mxu0 %v361
  %v709 = vpop.f32.mrb[0].mxu0
  %v710 = vadd.f32 0.0, %v709
  %v711 = vpop.f32.mrb[0].mxu0
  %v712 = vadd.f32 0.0, %v711
  %v713 = vpop.f32.mrb[0].mxu0
  %v714 = vadd.f32 0.0, %v713
  %v715 = vpop.f32.mrb[0].mxu0
  %v716 = vadd.f32 0.0, %v715
  %717 = vdwg.mxu0
  %v718 = vld [vmem:[%s2] sm:$0xff]
  %v719 = vld [vmem:[%s2 + $0x8] sm:$0xff]
  %v720 = vld [vmem:[%s2 + $0x10] sm:$0xff]
  %v721 = vld [vmem:[%s2 + $0x18] sm:$0xff]
  %723 = vset.pattern.permute.xlu0 0
  %724 = vperm.xlu0 %723, %v718
  %v725 = vpop.permute.xlu0 %724
  %728 = vset.pattern.permute.xlu0 0
  %729 = vperm.xlu0 %728, %v719
  %v730 = vpop.permute.xlu0 %729
  %733 = vset.pattern.permute.xlu0 0
  %734 = vperm.xlu0 %733, %v720
  %v735 = vpop.permute.xlu0 %734
  %738 = vset.pattern.permute.xlu0 0
  %739 = vperm.xlu0 %738, %v721
  %v740 = vpop.permute.xlu0 %739
  %v742 = vmul.f32 %v435, %v725
  %v743 = vmul.f32 %v437, %v725
  %v744 = vmul.f32 %v488, %v725
  %v745 = vmul.f32 %v490, %v725
  %v746 = vmul.f32 %v541, %v725
  %v747 = vmul.f32 %v543, %v725
  %v748 = vmul.f32 %v594, %v725
  %v749 = vmul.f32 %v596, %v725
  %v750 = vmul.f32 %v647, %v725
  %v751 = vmul.f32 %v649, %v725
  %v752 = vmul.f32 %v700, %v725
  %v753 = vmul.f32 %v702, %v725
  %v754 = vmul.f32 %v439, %v730
  %v755 = vmul.f32 %v441, %v730
  %v756 = vmul.f32 %v492, %v730
  %v757 = vmul.f32 %v494, %v730
  %v758 = vmul.f32 %v545, %v730
  %v759 = vmul.f32 %v547, %v730
  %v760 = vmul.f32 %v598, %v730
  %v761 = vmul.f32 %v600, %v730
  %v762 = vmul.f32 %v651, %v730
  %v763 = vmul.f32 %v653, %v730
  %v764 = vmul.f32 %v704, %v730
  %v765 = vmul.f32 %v706, %v730
  %v766 = vmul.f32 %v445, %v735
  %v767 = vmul.f32 %v447, %v735
  %v768 = vmul.f32 %v498, %v735
  %v769 = vmul.f32 %v500, %v735
  %v770 = vmul.f32 %v551, %v735
  %v771 = vmul.f32 %v553, %v735
  %v772 = vmul.f32 %v604, %v735
  %v773 = vmul.f32 %v606, %v735
  %v774 = vmul.f32 %v657, %v735
  %v775 = vmul.f32 %v659, %v735
  %v776 = vmul.f32 %v710, %v735
  %v777 = vmul.f32 %v712, %v735
  %v778 = vmul.f32 %v449, %v740
  %v779 = vmul.f32 %v451, %v740
  %v780 = vmul.f32 %v502, %v740
  %v781 = vmul.f32 %v504, %v740
  %v782 = vmul.f32 %v555, %v740
  %v783 = vmul.f32 %v557, %v740
  %v784 = vmul.f32 %v608, %v740
  %v785 = vmul.f32 %v610, %v740
  %v786 = vmul.f32 %v661, %v740
  %v787 = vmul.f32 %v663, %v740
  %v788 = vmul.f32 %v714, %v740
  %v789 = vmul.f32 %v716, %v740
  %v790 = vld [vmem:[%s3] sm:$0xff]
  %v791 = vld [vmem:[%s3 + $0x8] sm:$0xff]
  %v792 = vld [vmem:[%s3 + $0x10] sm:$0xff]
  %v793 = vld [vmem:[%s3 + $0x18] sm:$0xff]
  %795 = vset.pattern.permute.xlu0 0
  %796 = vperm.xlu0 %795, %v790
  %v797 = vpop.permute.xlu0 %796
  %800 = vset.pattern.permute.xlu0 0
  %801 = vperm.xlu0 %800, %v791
  %v802 = vpop.permute.xlu0 %801
  %805 = vset.pattern.permute.xlu0 0
  %806 = vperm.xlu0 %805, %v792
  %v807 = vpop.permute.xlu0 %806
  %810 = vset.pattern.permute.xlu0 0
  %811 = vperm.xlu0 %810, %v793
  %v812 = vpop.permute.xlu0 %811
  %v814 = vadd.f32 %v742, %v797
  %v815 = vadd.f32 %v743, %v797
  %v816 = vadd.f32 %v744, %v797
  %v817 = vadd.f32 %v745, %v797
  %v818 = vadd.f32 %v746, %v797
  %v819 = vadd.f32 %v747, %v797
  %v820 = vadd.f32 %v748, %v797
  %v821 = vadd.f32 %v749, %v797
  %v822 = vadd.f32 %v750, %v797
  %v823 = vadd.f32 %v751, %v797
  %v824 = vadd.f32 %v752, %v797
  %v825 = vadd.f32 %v753, %v797
  %v826 = vadd.f32 %v754, %v802
  %v827 = vadd.f32 %v755, %v802
  %v828 = vadd.f32 %v756, %v802
  %v829 = vadd.f32 %v757, %v802
  %v830 = vadd.f32 %v758, %v802
  %v831 = vadd.f32 %v759, %v802
  %v832 = vadd.f32 %v760, %v802
  %v833 = vadd.f32 %v761, %v802
  %v834 = vadd.f32 %v762, %v802
  %v835 = vadd.f32 %v763, %v802
  %v836 = vadd.f32 %v764, %v802
  %v837 = vadd.f32 %v765, %v802
  %v838 = vadd.f32 %v766, %v807
  %v839 = vadd.f32 %v767, %v807
  %v840 = vadd.f32 %v768, %v807
  %v841 = vadd.f32 %v769, %v807
  %v842 = vadd.f32 %v770, %v807
  %v843 = vadd.f32 %v771, %v807
  %v844 = vadd.f32 %v772, %v807
  %v845 = vadd.f32 %v773, %v807
  %v846 = vadd.f32 %v774, %v807
  %v847 = vadd.f32 %v775, %v807
  %v848 = vadd.f32 %v776, %v807
  %v849 = vadd.f32 %v777, %v807
  %v850 = vadd.f32 %v778, %v812
  %v851 = vadd.f32 %v779, %v812
  %v852 = vadd.f32 %v780, %v812
  %v853 = vadd.f32 %v781, %v812
  %v854 = vadd.f32 %v782, %v812
  %v855 = vadd.f32 %v783, %v812
  %v856 = vadd.f32 %v784, %v812
  %v857 = vadd.f32 %v785, %v812
  %v858 = vadd.f32 %v786, %v812
  %v859 = vadd.f32 %v787, %v812
  %v860 = vadd.f32 %v788, %v812
  %v861 = vadd.f32 %v789, %v812
  %v862 = vmax.f32 %v814, 0.0
  %v863 = vmax.f32 %v815, 0.0
  %v864 = vmax.f32 %v816, 0.0
  %v865 = vmax.f32 %v817, 0.0
  %v866 = vmax.f32 %v818, 0.0
  %v867 = vmax.f32 %v819, 0.0
  %v868 = vmax.f32 %v820, 0.0
  %v869 = vmax.f32 %v821, 0.0
  %v870 = vmax.f32 %v822, 0.0
  %v871 = vmax.f32 %v823, 0.0
  %v872 = vmax.f32 %v824, 0.0
  %v873 = vmax.f32 %v825, 0.0
  %v874 = vmax.f32 %v826, 0.0
  %v875 = vmax.f32 %v827, 0.0
  %v876 = vmax.f32 %v828, 0.0
  %v877 = vmax.f32 %v829, 0.0
  %v878 = vmax.f32 %v830, 0.0
  %v879 = vmax.f32 %v831, 0.0
  %v880 = vmax.f32 %v832, 0.0
  %v881 = vmax.f32 %v833, 0.0
  %v882 = vmax.f32 %v834, 0.0
  %v883 = vmax.f32 %v835, 0.0
  %v884 = vmax.f32 %v836, 0.0
  %v885 = vmax.f32 %v837, 0.0
  %v886 = vmax.f32 %v838, 0.0
  %v887 = vmax.f32 %v839, 0.0
  %v888 = vmax.f32 %v840, 0.0
  %v889 = vmax.f32 %v841, 0.0
  %v890 = vmax.f32 %v842, 0.0
  %v891 = vmax.f32 %v843, 0.0
  %v892 = vmax.f32 %v844, 0.0
  %v893 = vmax.f32 %v845, 0.0
  %v894 = vmax.f32 %v846, 0.0
  %v895 = vmax.f32 %v847, 0.0
  %v896 = vmax.f32 %v848, 0.0
  %v897 = vmax.f32 %v849, 0.0
  %v898 = vmax.f32 %v850, 0.0
  %v899 = vmax.f32 %v851, 0.0
  %v900 = vmax.f32 %v852, 0.0
  %v901 = vmax.f32 %v853, 0.0
  %v902 = vmax.f32 %v854, 0.0
  %v903 = vmax.f32 %v855, 0.0
  %v904 = vmax.f32 %v856, 0.0
  %v905 = vmax.f32 %v857, 0.0
  %v906 = vmax.f32 %v858, 0.0
  %v907 = vmax.f32 %v859, 0.0
  %v908 = vmax.f32 %v860, 0.0
  %v909 = vmax.f32 %v861, 0.0
  %v910 = vmax.f32 %v862, %v865
  %v911 = vmax.f32 %v863, %v866
  %v912 = vmax.f32 %v864, %v867
  %v913 = vmax.f32 %v874, %v877
  %v914 = vmax.f32 %v875, %v878
  %v915 = vmax.f32 %v876, %v879
  %v916 = vmax.f32 %v886, %v889
  %v917 = vmax.f32 %v887, %v890
  %v918 = vmax.f32 %v888, %v891
  %v919 = vmax.f32 %v898, %v901
  %v920 = vmax.f32 %v899, %v902
  %v921 = vmax.f32 %v900, %v903
  %v922 = vmax.f32 %v910, %v868
  %v923 = vmax.f32 %v911, %v869
  %v924 = vmax.f32 %v912, %v870
  %v925 = vmax.f32 %v913, %v880
  %v926 = vmax.f32 %v914, %v881
  %v927 = vmax.f32 %v915, %v882
  %v928 = vmax.f32 %v916, %v892
  %v929 = vmax.f32 %v917, %v893
  %v930 = vmax.f32 %v918, %v894
  %v931 = vmax.f32 %v919, %v904
  %v932 = vmax.f32 %v920, %v905
  %v933 = vmax.f32 %v921, %v906
  %v934 = vmax.f32 %v922, %v871
  %v935 = vmax.f32 %v923, %v872
  %v936 = vmax.f32 %v924, %v873
  %v937 = vmax.f32 %v925, %v883
  %v938 = vmax.f32 %v926, %v884
  %v939 = vmax.f32 %v927, %v885
  %v940 = vmax.f32 %v928, %v895
  %v941 = vmax.f32 %v929, %v896
  %v942 = vmax.f32 %v930, %v897
  %v943 = vmax.f32 %v931, %v907
  %v944 = vmax.f32 %v932, %v908
  %v945 = vmax.f32 %v933, %v909
  %v946 = vpack.c.bf16 %v937, %v934
  %v947 = vpack.c.bf16 %v938, %v935
  %v948 = vpack.c.bf16 %v939, %v936
  %v949 = vpack.c.bf16 %v943, %v940
  %v950 = vpack.c.bf16 %v944, %v941
  %v951 = vpack.c.bf16 %v945, %v942
  %v958 = vunpack.c.l.b16 %v946
  %v959 = vunpack.c.l.b16 %v947
  %v960 = vunpack.c.l.b16 %v948
  %v961 = vunpack.c.h.b16 %v946
  %v962 = vunpack.c.h.b16 %v947
  %v963 = vunpack.c.h.b16 %v948
  %v964 = vunpack.c.l.b16 %v949
  %v965 = vunpack.c.l.b16 %v950
  %v966 = vunpack.c.l.b16 %v951
  %v967 = vunpack.c.h.b16 %v949
  %v968 = vunpack.c.h.b16 %v950
  %v969 = vunpack.c.h.b16 %v951
  %v970 = vpack.c.b16 %v959, %v958
  %v971 = vpack.c.b16 %v960, %v960
  %v972 = vpack.c.b16 %v962, %v961
  %v973 = vpack.c.b16 %v963, %v963
  %v974 = vpack.c.b16 %v965, %v964
  %v975 = vpack.c.b16 %v966, %v966
  %v976 = vpack.c.b16 %v968, %v967
  %v977 = vpack.c.b16 %v969, %v969
  %986 = vst [vmem:[%s4] sm:$0xff] %v970
  %987 = vst [vmem:[%s4 + $0x8] sm:$0xf] %v971
  %988 = vst [vmem:[%s4 + $0xc] sm:$0xff] %v972
  %989 = vst [vmem:[%s4 + $0x14] sm:$0xf] %v973
  %990 = vst [vmem:[%s4 + $0x18] sm:$0xff] %v974
  %991 = vst [vmem:[%s4 + $0x20] sm:$0xf] %v975
  %992 = vst [vmem:[%s4 + $0x24] sm:$0xff] %v976
  %993 = vst [vmem:[%s4 + $0x2c] sm:$0xf] %v977
  // Predicated region
  $region18: #{crnn_forward.9} parent=0 // pred_check
    _
  $region19: #{crnn_forward.9} parent=0 // pred_check_branch
    %995 = sbr.rel (0) target = $region21
  $region20: #{crnn_forward.9} parent=0 // pred_region
    _
  $region21: #{crnn_forward.9} parent=0 // pred_fallthru
    _
  // Predicated region
  $region22: #{crnn_forward.9} parent=0 // pred_check
    _
  $region23: #{crnn_forward.9} parent=0 // pred_check_branch
    %997 = sbr.rel (0) target = $region25
  $region24: #{crnn_forward.9} parent=0 // pred_region
    _
  $region25: #{crnn_forward.9} parent=0 // pred_fallthru
    _

// kernel: crnn_forward.10
$region0: #{crnn_forward.10}
  #allocation0 [shape = 'u32[]', space=smem, size = 0x4, offset = 0x4, fixed_abs, tag = 'smem constant byte address 0x4 - core index']
  #allocation1 [shape = 'u32[144,128]{1,0:T(1,128)}', space=vmem, size = 0x12000, scoped, tag = 'internal scratch']
  %s0 = inlined_call_operand.vmem [shape: bf16[288,384], index: 0, kind: input, shape index: {}]
  %s1 = inlined_call_operand.vmem [shape: bf16[64,288], index: 1, kind: input, shape index: {}]
  %s2 = inlined_call_operand.vmem [shape: f32[64,1], index: 2, kind: input, shape index: {}]
  %s3 = inlined_call_operand.vmem [shape: f32[64,1], index: 3, kind: input, shape index: {}]
  %s4 = inlined_call_operand.vmem [shape: bf16[64,384], index: 4, kind: output, shape index: {}]
  %s5 = sld [smem:[#allocation0]]
  $region26: #{crnn_forward.10} parent=0
    _
  %s7 = ssub.s32 1, %s5
  %s8 = scalar_select 0, %s7, %s5
  // Predicated region
  $region2: #{crnn_forward.10} parent=0 // pred_check
    _
  $region3: #{crnn_forward.10} parent=0 // pred_check_branch
    %10 = sbr.rel (0) target = $region5
  $region4: #{crnn_forward.10} parent=0 // pred_region
    _
  $region5: #{crnn_forward.10} parent=0 // pred_fallthru
    _
  // Predicated region
  $region6: #{crnn_forward.10} parent=0 // pred_check
    _
  $region7: #{crnn_forward.10} parent=0 // pred_check_branch
    %12 = sbr.rel (0) target = $region9
  $region8: #{crnn_forward.10} parent=0 // pred_region
    _
  $region9: #{crnn_forward.10} parent=0 // pred_fallthru
    _
  // Predicated region
  $region10: #{crnn_forward.10} parent=0 // pred_check
    _
  $region11: #{crnn_forward.10} parent=0 // pred_check_branch
    %14 = sbr.rel (0) target = $region13
  $region12: #{crnn_forward.10} parent=0 // pred_region
    _
  $region13: #{crnn_forward.10} parent=0 // pred_fallthru
    _
  // Predicated region
  $region14: #{crnn_forward.10} parent=0 // pred_check
    _
  $region15: #{crnn_forward.10} parent=0 // pred_check_branch
    %16 = sbr.rel (0) target = $region17
  $region16: #{crnn_forward.10} parent=0 // pred_region
    _
  $region17: #{crnn_forward.10} parent=0 // pred_fallthru
    _
  %v18 = vld [vmem:[%s1] sm:$0xff]
  %v19 = vld [vmem:[%s1 + $0x8] sm:$0xf]
  %v20 = vld [vmem:[%s1 + $0xc] sm:$0xff]
  %v21 = vld [vmem:[%s1 + $0x14] sm:$0xf]
  %v22 = vld [vmem:[%s1 + $0x18] sm:$0xff]
  %v23 = vld [vmem:[%s1 + $0x20] sm:$0xf]
  %v24 = vld [vmem:[%s1 + $0x24] sm:$0xff]
  %v25 = vld [vmem:[%s1 + $0x2c] sm:$0xf]
  %v26 = vld [vmem:[%s1 + $0x30] sm:$0xff]
  %v27 = vld [vmem:[%s1 + $0x38] sm:$0xf]
  %v28 = vld [vmem:[%s1 + $0x3c] sm:$0xff]
  %v29 = vld [vmem:[%s1 + $0x44] sm:$0xf]
  %v30 = vld [vmem:[%s1 + $0x48] sm:$0xff]
  %v31 = vld [vmem:[%s1 + $0x50] sm:$0xf]
  %v32 = vld [vmem:[%s1 + $0x54] sm:$0xff]
  %v33 = vld [vmem:[%s1 + $0x5c] sm:$0xf]
  %v34 = vld [vmem:[%s0] sm:$0xff]
  %v35 = vld [vmem:[%s0 + $0x8] sm:$0xf]
  %v36 = vld [vmem:[%s0 + $0xc] sm:$0xff]
  %v37 = vld [vmem:[%s0 + $0x14] sm:$0xf]
  %v38 = vld [vmem:[%s0 + $0x18] sm:$0xff]
  %v39 = vld [vmem:[%s0 + $0x20] sm:$0xf]
  %v40 = vld [vmem:[%s0 + $0x24] sm:$0xff]
  %v41 = vld [vmem:[%s0 + $0x2c] sm:$0xf]
  %v42 = vld [vmem:[%s0 + $0x30] sm:$0xff]
  %v43 = vld [vmem:[%s0 + $0x38] sm:$0xf]
  %v44 = vld [vmem:[%s0 + $0x3c] sm:$0xff]
  %v45 = vld [vmem:[%s0 + $0x44] sm:$0xf]
  %v46 = vld [vmem:[%s0 + $0x48] sm:$0xff]
  %v47 = vld [vmem:[%s0 + $0x50] sm:$0xf]
  %v48 = vld [vmem:[%s0 + $0x54] sm:$0xff]
  %v49 = vld [vmem:[%s0 + $0x5c] sm:$0xf]
  %v50 = vld [vmem:[%s0 + $0x60] sm:$0xff]
  %v51 = vld [vmem:[%s0 + $0x68] sm:$0xf]
  %v52 = vld [vmem:[%s0 + $0x6c] sm:$0xff]
  %v53 = vld [vmem:[%s0 + $0x74] sm:$0xf]
  %v54 = vld [vmem:[%s0 + $0x78] sm:$0xff]
  %v55 = vld [vmem:[%s0 + $0x80] sm:$0xf]
  %v56 = vld [vmem:[%s0 + $0x84] sm:$0xff]
  %v57 = vld [vmem:[%s0 + $0x8c] sm:$0xf]
  %v58 = vld [vmem:[%s0 + $0x90] sm:$0xff]
  %v59 = vld [vmem:[%s0 + $0x98] sm:$0xf]
  %v60 = vld [vmem:[%s0 + $0x9c] sm:$0xff]
  %v61 = vld [vmem:[%s0 + $0xa4] sm:$0xf]
  %v62 = vld [vmem:[%s0 + $0xa8] sm:$0xff]
  %v63 = vld [vmem:[%s0 + $0xb0] sm:$0xf]
  %v64 = vld [vmem:[%s0 + $0xb4] sm:$0xff]
  %v65 = vld [vmem:[%s0 + $0xbc] sm:$0xf]
  %v66 = vld [vmem:[%s0 + $0xc0] sm:$0xff]
  %v67 = vld [vmem:[%s0 + $0xc8] sm:$0xf]
  %v68 = vld [vmem:[%s0 + $0xcc] sm:$0xff]
  %v69 = vld [vmem:[%s0 + $0xd4] sm:$0xf]
  %v70 = vld [vmem:[%s0 + $0xd8] sm:$0xff]
  %v71 = vld [vmem:[%s0 + $0xe0] sm:$0xf]
  %v72 = vld [vmem:[%s0 + $0xe4] sm:$0xff]
  %v73 = vld [vmem:[%s0 + $0xec] sm:$0xf]
  %v74 = vld [vmem:[%s0 + $0xf0] sm:$0xff]
  %v75 = vld [vmem:[%s0 + $0xf8] sm:$0xf]
  %v76 = vld [vmem:[%s0 + $0xfc] sm:$0xff]
  %v77 = vld [vmem:[%s0 + $0x104] sm:$0xf]
  %v78 = vld [vmem:[%s0 + $0x108] sm:$0xff]
  %v79 = vld [vmem:[%s0 + $0x110] sm:$0xf]
  %v80 = vld [vmem:[%s0 + $0x114] sm:$0xff]
  %v81 = vld [vmem:[%s0 + $0x11c] sm:$0xf]
  %v82 = vld [vmem:[%s0 + $0x120] sm:$0xff]
  %v83 = vld [vmem:[%s0 + $0x128] sm:$0xf]
  %v84 = vld [vmem:[%s0 + $0x12c] sm:$0xff]
  %v85 = vld [vmem:[%s0 + $0x134] sm:$0xf]
  %v86 = vld [vmem:[%s0 + $0x138] sm:$0xff]
  %v87 = vld [vmem:[%s0 + $0x140] sm:$0xf]
  %v88 = vld [vmem:[%s0 + $0x144] sm:$0xff]
  %v89 = vld [vmem:[%s0 + $0x14c] sm:$0xf]
  %v90 = vld [vmem:[%s0 + $0x150] sm:$0xff]
  %v91 = vld [vmem:[%s0 + $0x158] sm:$0xf]
  %v92 = vld [vmem:[%s0 + $0x15c] sm:$0xff]
  %v93 = vld [vmem:[%s0 + $0x164] sm:$0xf]
  %v94 = vld [vmem:[%s0 + $0x168] sm:$0xff]
  %v95 = vld [vmem:[%s0 + $0x170] sm:$0xf]
  %v96 = vld [vmem:[%s0 + $0x174] sm:$0xff]
  %v97 = vld [vmem:[%s0 + $0x17c] sm:$0xf]
  %v98 = vld [vmem:[%s0 + $0x180] sm:$0xff]
  %v99 = vld [vmem:[%s0 + $0x188] sm:$0xf]
  %v100 = vld [vmem:[%s0 + $0x18c] sm:$0xff]
  %v101 = vld [vmem:[%s0 + $0x194] sm:$0xf]
  %v102 = vld [vmem:[%s0 + $0x198] sm:$0xff]
  %v103 = vld [vmem:[%s0 + $0x1a0] sm:$0xf]
  %v104 = vld [vmem:[%s0 + $0x1a4] sm:$0xff]
  %v105 = vld [vmem:[%s0 + $0x1ac] sm:$0xf]
  %v122 = vunpack.c.l.b16 %v18
  %v123 = vunpack.c.h.b16 %v18
  %v124 = vunpack.c.l.b16 %v19
  %v125 = vunpack.c.l.b16 %v20
  %v126 = vunpack.c.h.b16 %v20
  %v127 = vunpack.c.l.b16 %v21
  %v128 = vunpack.c.l.b16 %v22
  %v129 = vunpack.c.h.b16 %v22
  %v130 = vunpack.c.l.b16 %v23
  %v131 = vunpack.c.l.b16 %v24
  %v132 = vunpack.c.h.b16 %v24
  %v133 = vunpack.c.l.b16 %v25
  %v134 = vunpack.c.l.b16 %v26
  %v135 = vunpack.c.h.b16 %v26
  %v136 = vunpack.c.l.b16 %v27
  %v137 = vunpack.c.l.b16 %v28
  %v138 = vunpack.c.h.b16 %v28
  %v139 = vunpack.c.l.b16 %v29
  %v140 = vunpack.c.l.b16 %v30
  %v141 = vunpack.c.h.b16 %v30
  %v142 = vunpack.c.l.b16 %v31
  %v143 = vunpack.c.l.b16 %v32
  %v144 = vunpack.c.h.b16 %v32
  %v145 = vunpack.c.l.b16 %v33
  %v146 = vpack.c.b16 %v125, %v122
  %v147 = vpack.c.b16 %v126, %v123
  %v148 = vpack.c.b16 %v127, %v124
  %v149 = vpack.c.b16 %v131, %v128
  %v150 = vpack.c.b16 %v132, %v129
  %v151 = vpack.c.b16 %v133, %v130
  %v152 = vpack.c.b16 %v137, %v134
  %v153 = vpack.c.b16 %v138, %v135
  %v154 = vpack.c.b16 %v139, %v136
  %v155 = vpack.c.b16 %v143, %v140
  %v156 = vpack.c.b16 %v144, %v141
  %v157 = vpack.c.b16 %v145, %v142
  %v238 = vunpack.c.l.b16 %v34
  %v239 = vunpack.c.h.b16 %v34
  %v240 = vunpack.c.l.b16 %v35
  %v241 = vunpack.c.l.b16 %v36
  %v242 = vunpack.c.h.b16 %v36
  %v243 = vunpack.c.l.b16 %v37
  %v244 = vunpack.c.l.b16 %v38
  %v245 = vunpack.c.h.b16 %v38
  %v246 = vunpack.c.l.b16 %v39
  %v247 = vunpack.c.l.b16 %v40
  %v248 = vunpack.c.h.b16 %v40
  %v249 = vunpack.c.l.b16 %v41
  %v250 = vunpack.c.l.b16 %v42
  %v251 = vunpack.c.h.b16 %v42
  %v252 = vunpack.c.l.b16 %v43
  %v253 = vunpack.c.l.b16 %v44
  %v254 = vunpack.c.h.b16 %v44
  %v255 = vunpack.c.l.b16 %v45
  %v256 = vunpack.c.l.b16 %v46
  %v257 = vunpack.c.h.b16 %v46
  %v258 = vunpack.c.l.b16 %v47
  %v259 = vunpack.c.l.b16 %v48
  %v260 = vunpack.c.h.b16 %v48
  %v261 = vunpack.c.l.b16 %v49
  %v262 = vunpack.c.l.b16 %v50
  %v263 = vunpack.c.h.b16 %v50
  %v264 = vunpack.c.l.b16 %v51
  %v265 = vunpack.c.l.b16 %v52
  %v266 = vunpack.c.h.b16 %v52
  %v267 = vunpack.c.l.b16 %v53
  %v268 = vunpack.c.l.b16 %v54
  %v269 = vunpack.c.h.b16 %v54
  %v270 = vunpack.c.l.b16 %v55
  %v271 = vunpack.c.l.b16 %v56
  %v272 = vunpack.c.h.b16 %v56
  %v273 = vunpack.c.l.b16 %v57
  %v274 = vunpack.c.l.b16 %v58
  %v275 = vunpack.c.h.b16 %v58
  %v276 = vunpack.c.l.b16 %v59
  %v277 = vunpack.c.l.b16 %v60
  %v278 = vunpack.c.h.b16 %v60
  %v279 = vunpack.c.l.b16 %v61
  %v280 = vunpack.c.l.b16 %v62
  %v281 = vunpack.c.h.b16 %v62
  %v282 = vunpack.c.l.b16 %v63
  %v283 = vunpack.c.l.b16 %v64
  %v284 = vunpack.c.h.b16 %v64
  %v285 = vunpack.c.l.b16 %v65
  %v286 = vunpack.c.l.b16 %v66
  %v287 = vunpack.c.h.b16 %v66
  %v288 = vunpack.c.l.b16 %v67
  %v289 = vunpack.c.l.b16 %v68
  %v290 = vunpack.c.h.b16 %v68
  %v291 = vunpack.c.l.b16 %v69
  %v292 = vunpack.c.l.b16 %v70
  %v293 = vunpack.c.h.b16 %v70
  %v294 = vunpack.c.l.b16 %v71
  %v295 = vunpack.c.l.b16 %v72
  %v296 = vunpack.c.h.b16 %v72
  %v297 = vunpack.c.l.b16 %v73
  %v298 = vunpack.c.l.b16 %v74
  %v299 = vunpack.c.h.b16 %v74
  %v300 = vunpack.c.l.b16 %v75
  %v301 = vunpack.c.l.b16 %v76
  %v302 = vunpack.c.h.b16 %v76
  %v303 = vunpack.c.l.b16 %v77
  %v304 = vunpack.c.l.b16 %v78
  %v305 = vunpack.c.h.b16 %v78
  %v306 = vunpack.c.l.b16 %v79
  %v307 = vunpack.c.l.b16 %v80
  %v308 = vunpack.c.h.b16 %v80
  %v309 = vunpack.c.l.b16 %v81
  %v310 = vunpack.c.l.b16 %v82
  %v311 = vunpack.c.h.b16 %v82
  %v312 = vunpack.c.l.b16 %v83
  %v313 = vunpack.c.l.b16 %v84
  %v314 = vunpack.c.h.b16 %v84
  %v315 = vunpack.c.l.b16 %v85
  %v316 = vunpack.c.l.b16 %v86
  %v317 = vunpack.c.h.b16 %v86
  %v318 = vunpack.c.l.b16 %v87
  %v319 = vunpack.c.l.b16 %v88
  %v320 = vunpack.c.h.b16 %v88
  %v321 = vunpack.c.l.b16 %v89
  %v322 = vunpack.c.l.b16 %v90
  %v323 = vunpack.c.h.b16 %v90
  %v324 = vunpack.c.l.b16 %v91
  %v325 = vunpack.c.l.b16 %v92
  %v326 = vunpack.c.h.b16 %v92
  %v327 = vunpack.c.l.b16 %v93
  %v328 = vunpack.c.l.b16 %v94
  %v329 = vunpack.c.h.b16 %v94
  %v330 = vunpack.c.l.b16 %v95
  %v331 = vunpack.c.l.b16 %v96
  %v332 = vunpack.c.h.b16 %v96
  %v333 = vunpack.c.l.b16 %v97
  %v334 = vunpack.c.l.b16 %v98
  %v335 = vunpack.c.h.b16 %v98
  %v336 = vunpack.c.l.b16 %v99
  %v337 = vunpack.c.l.b16 %v100
  %v338 = vunpack.c.h.b16 %v100
  %v339 = vunpack.c.l.b16 %v101
  %v340 = vunpack.c.l.b16 %v102
  %v341 = vunpack.c.h.b16 %v102
  %v342 = vunpack.c.l.b16 %v103
  %v343 = vunpack.c.l.b16 %v104
  %v344 = vunpack.c.h.b16 %v104
  %v345 = vunpack.c.l.b16 %v105
  %v346 = vpack.c.b16 %v241, %v238
  %v347 = vpack.c.b16 %v242, %v239
  %v348 = vpack.c.b16 %v243, %v240
  %v349 = vpack.c.b16 %v247, %v244
  %v350 = vpack.c.b16 %v248, %v245
  %v351 = vpack.c.b16 %v249, %v246
  %v352 = vpack.c.b16 %v253, %v250
  %v353 = vpack.c.b16 %v254, %v251
  %v354 = vpack.c.b16 %v255, %v252
  %v355 = vpack.c.b16 %v259, %v256
  %v356 = vpack.c.b16 %v260, %v257
  %v357 = vpack.c.b16 %v261, %v258
  %v358 = vpack.c.b16 %v265, %v262
  %v359 = vpack.c.b16 %v266, %v263
  %v360 = vpack.c.b16 %v267, %v264
  %v361 = vpack.c.b16 %v271, %v268
  %v362 = vpack.c.b16 %v272, %v269
  %v363 = vpack.c.b16 %v273, %v270
  %v364 = vpack.c.b16 %v277, %v274
  %v365 = vpack.c.b16 %v278, %v275
  %v366 = vpack.c.b16 %v279, %v276
  %v367 = vpack.c.b16 %v283, %v280
  %v368 = vpack.c.b16 %v284, %v281
  %v369 = vpack.c.b16 %v285, %v282
  %v370 = vpack.c.b16 %v289, %v286
  %v371 = vpack.c.b16 %v290, %v287
  %v372 = vpack.c.b16 %v291, %v288
  %v373 = vpack.c.b16 %v295, %v292
  %v374 = vpack.c.b16 %v296, %v293
  %v375 = vpack.c.b16 %v297, %v294
  %v376 = vpack.c.b16 %v301, %v298
  %v377 = vpack.c.b16 %v302, %v299
  %v378 = vpack.c.b16 %v303, %v300
  %v379 = vpack.c.b16 %v307, %v304
  %v380 = vpack.c.b16 %v308, %v305
  %v381 = vpack.c.b16 %v309, %v306
  %v382 = vpack.c.b16 %v313, %v310
  %v383 = vpack.c.b16 %v314, %v311
  %v384 = vpack.c.b16 %v315, %v312
  %v385 = vpack.c.b16 %v319, %v316
  %v386 = vpack.c.b16 %v320, %v317
  %v387 = vpack.c.b16 %v321, %v318
  %v388 = vpack.c.b16 %v325, %v322
  %v389 = vpack.c.b16 %v326, %v323
  %v390 = vpack.c.b16 %v327, %v324
  %v391 = vpack.c.b16 %v331, %v328
  %v392 = vpack.c.b16 %v332, %v329
  %v393 = vpack.c.b16 %v333, %v330
  %v394 = vpack.c.b16 %v337, %v334
  %v395 = vpack.c.b16 %v338, %v335
  %v396 = vpack.c.b16 %v339, %v336
  %v397 = vpack.c.b16 %v343, %v340
  %v398 = vpack.c.b16 %v344, %v341
  %v399 = vpack.c.b16 %v345, %v342
  %vm454 = vcmask 261120
  %v456 = vsel %vm454, %v148, 0
  %v459 = vsel %vm454, %v151, 0
  %v462 = vsel %vm454, %v154, 0
  %v465 = vsel %vm454, %v157, 0
  %467 = vmatprep.subr.bf16.mxu0 %v347
  %468 = vmatpush1.bf16.msra.mxu0 %v346
  %469 = vmatprep.subr.bf16.mxu0 %v350
  %470 = vmatpush1.bf16.msra.mxu0 %v349
  %471 = vmatprep.subr.bf16.mxu0 %v353
  %472 = vmatpush1.bf16.msra.mxu0 %v352
  %473 = vmatprep.subr.bf16.mxu0 %v356
  %474 = vmatpush1.bf16.msra.mxu0 %v355
  %475 = vmatprep.subr.bf16.mxu0 %v359
  %476 = vmatpush1.bf16.msra.mxu0 %v358
  %477 = vmatprep.subr.bf16.mxu0 %v362
  %478 = vmatpush1.bf16.msra.mxu0 %v361
  %479 = vmatprep.subr.bf16.mxu0 %v365
  %480 = vmatpush1.bf16.msra.mxu0 %v364
  %481 = vmatprep.subr.bf16.mxu0 %v368
  %482 = vmatpush1.bf16.msra.mxu0 %v367
  %483 = vmatprep.subr.bf16.mxu0 %v371
  %484 = vmatpush1.bf16.msra.mxu0 %v370
  %485 = vmatprep.subr.bf16.mxu0 %v374
  %486 = vmatpush1.bf16.msra.mxu0 %v373
  %487 = vmatprep.subr.bf16.mxu0 %v377
  %488 = vmatpush1.bf16.msra.mxu0 %v376
  %489 = vmatprep.subr.bf16.mxu0 %v380
  %490 = vmatpush1.bf16.msra.mxu0 %v379
  %491 = vmatprep.subr.bf16.mxu0 %v383
  %492 = vmatpush1.bf16.msra.mxu0 %v382
  %493 = vmatprep.subr.bf16.mxu0 %v386
  %494 = vmatpush1.bf16.msra.mxu0 %v385
  %495 = vmatprep.subr.bf16.mxu0 %v389
  %496 = vmatpush1.bf16.msra.mxu0 %v388
  %497 = vmatprep.subr.bf16.mxu0 %v392
  %498 = vmatpush1.bf16.msra.mxu0 %v391
  %499 = vmatprep.mubr.bf16.mxu0 %v147
  %500 = vmatmul.mubr.bf16.gmra.mrb[0].mxu0 %v146
  %v501 = vpop.f32.mrb[0].mxu0
  %v502 = vadd.f32 0.0, %v501
  %v503 = vpop.f32.mrb[0].mxu0
  %v504 = vadd.f32 0.0, %v503
  %v505 = vpop.f32.mrb[0].mxu0
  %v506 = vadd.f32 0.0, %v505
  %v507 = vpop.f32.mrb[0].mxu0
  %v508 = vadd.f32 0.0, %v507
  %509 = vmatprep.mubr.bf16.mxu0 %v150
  %510 = vmatmul.mubr.bf16.gmra.mrb[0].mxu0 %v149
  %v511 = vpop.f32.mrb[0].mxu0
  %v512 = vadd.f32 0.0, %v511
  %v513 = vpop.f32.mrb[0].mxu0
  %v514 = vadd.f32 0.0, %v513
  %v515 = vpop.f32.mrb[0].mxu0
  %v516 = vadd.f32 0.0, %v515
  %v517 = vpop.f32.mrb[0].mxu0
  %v518 = vadd.f32 0.0, %v517
  %519 = vmatprep.mubr.bf16.mxu0 %v153
  %520 = vmatmul.mubr.bf16.gmra.mrb[0].mxu0 %v152
  %v521 = vpop.f32.mrb[0].mxu0
  %v522 = vadd.f32 0.0, %v521
  %v523 = vpop.f32.mrb[0].mxu0
  %v524 = vadd.f32 0.0, %v523
  %v525 = vpop.f32.mrb[0].mxu0
  %v526 = vadd.f32 0.0, %v525
  %v527 = vpop.f32.mrb[0].mxu0
  %v528 = vadd.f32 0.0, %v527
  %529 = vmatprep.mubr.bf16.mxu0 %v156
  %530 = vmatmul.mubr.bf16.gmra.mrb[0].mxu0 %v155
  %v531 = vpop.f32.mrb[0].mxu0
  %v532 = vadd.f32 0.0, %v531
  %v533 = vpop.f32.mrb[0].mxu0
  %v534 = vadd.f32 0.0, %v533
  %v535 = vpop.f32.mrb[0].mxu0
  %v536 = vadd.f32 0.0, %v535
  %v537 = vpop.f32.mrb[0].mxu0
  %v538 = vadd.f32 0.0, %v537
  %539 = vdwg.mxu0
  %540 = vmatprep.subr.bf16.mxu0 %v395
  %541 = vmatpush1.bf16.msra.mxu0 %v394
  %542 = vmatprep.subr.bf16.mxu0 %v398
  %543 = vmatpush1.bf16.msra.mxu0 %v397
  %544 = vmatprep.subr.bf16.mxu0 0
  %545 = vmatpush1.bf16.msra.mxu0 0
  %546 = vmatprep.subr.bf16.mxu0 0
  %547 = vmatpush1.bf16.msra.mxu0 0
  %548 = vmatprep.subr.bf16.mxu0 0
  %549 = vmatpush1.bf16.msra.mxu0 0
  %550 = vmatprep.subr.bf16.mxu0 0
  %551 = vmatpush1.bf16.msra.mxu0 0
  %552 = vmatprep.subr.bf16.mxu0 0
  %553 = vmatpush1.bf16.msra.mxu0 0
  %554 = vmatprep.subr.bf16.mxu0 0
  %555 = vmatpush1.bf16.msra.mxu0 0
  %556 = vmatprep.subr.bf16.mxu0 0
  %557 = vmatpush1.bf16.msra.mxu0 0
  %558 = vmatprep.subr.bf16.mxu0 0
  %559 = vmatpush1.bf16.msra.mxu0 0
  %560 = vmatprep.subr.bf16.mxu0 0
  %561 = vmatpush1.bf16.msra.mxu0 0
  %562 = vmatprep.subr.bf16.mxu0 0
  %563 = vmatpush1.bf16.msra.mxu0 0
  %564 = vmatprep.subr.bf16.mxu0 0
  %565 = vmatpush1.bf16.msra.mxu0 0
  %566 = vmatprep.subr.bf16.mxu0 0
  %567 = vmatpush1.bf16.msra.mxu0 0
  %568 = vmatprep.subr.bf16.mxu0 0
  %569 = vmatpush1.bf16.msra.mxu0 0
  %570 = vmatprep.subr.bf16.mxu0 0
  %571 = vmatpush1.bf16.msra.mxu0 0
  %572 = vmatprep.mubr.bf16.mxu0 0
  %573 = vmatmul.mubr.bf16.gmra.mrb[0].mxu0 %v456
  %v574 = vpop.f32.mrb[0].mxu0
  %v575 = vadd.f32 %v502, %v574
  %v576 = vpop.f32.mrb[0].mxu0
  %v577 = vadd.f32 %v504, %v576
  %v578 = vpop.f32.mrb[0].mxu0
  %v579 = vadd.f32 %v506, %v578
  %v580 = vpop.f32.mrb[0].mxu0
  %v581 = vadd.f32 %v508, %v580
  %582 = vmatprep.mubr.bf16.mxu0 0
  %583 = vmatmul.mubr.bf16.gmra.mrb[0].mxu0 %v459
  %v584 = vpop.f32.mrb[0].mxu0
  %v585 = vadd.f32 %v512, %v584
  %v586 = vpop.f32.mrb[0].mxu0
  %v587 = vadd.f32 %v514, %v586
  %v588 = vpop.f32.mrb[0].mxu0
  %v589 = vadd.f32 %v516, %v588
  %v590 = vpop.f32.mrb[0].mxu0
  %v591 = vadd.f32 %v518, %v590
  %592 = vmatprep.mubr.bf16.mxu0 0
  %593 = vmatmul.mubr.bf16.gmra.mrb[0].mxu0 %v462
  %v594 = vpop.f32.mrb[0].mxu0
  %v595 = vadd.f32 %v522, %v594
  %v596 = vpop.f32.mrb[0].mxu0
  %v597 = vadd.f32 %v524, %v596
  %v598 = vpop.f32.mrb[0].mxu0
  %v599 = vadd.f32 %v526, %v598
  %v600 = vpop.f32.mrb[0].mxu0
  %v601 = vadd.f32 %v528, %v600
  %602 = vmatprep.mubr.bf16.mxu0 0
  %603 = vmatmul.mubr.bf16.gmra.mrb[0].mxu0 %v465
  %v604 = vpop.f32.mrb[0].mxu0
  %v605 = vadd.f32 %v532, %v604
  %v606 = vpop.f32.mrb[0].mxu0
  %v607 = vadd.f32 %v534, %v606
  %v608 = vpop.f32.mrb[0].mxu0
  %v609 = vadd.f32 %v536, %v608
  %v610 = vpop.f32.mrb[0].mxu0
  %v611 = vadd.f32 %v538, %v610
  %612 = vdwg.mxu0
  %613 = vmatprep.subr.bf16.mxu0 0
  %614 = vmatpush1.bf16.msra.mxu0 %v348
  %615 = vmatprep.subr.bf16.mxu0 0
  %616 = vmatpush1.bf16.msra.mxu0 %v351
  %617 = vmatprep.subr.bf16.mxu0 0
  %618 = vmatpush1.bf16.msra.mxu0 %v354
  %619 = vmatprep.subr.bf16.mxu0 0
  %620 = vmatpush1.bf16.msra.mxu0 %v357
  %621 = vmatprep.subr.bf16.mxu0 0
  %622 = vmatpush1.bf16.msra.mxu0 %v360
  %623 = vmatprep.subr.bf16.mxu0 0
  %624 = vmatpush1.bf16.msra.mxu0 %v363
  %625 = vmatprep.subr.bf16.mxu0 0
  %626 = vmatpush1.bf16.msra.mxu0 %v366
  %627 = vmatprep.subr.bf16.mxu0 0
  %628 = vmatpush1.bf16.msra.mxu0 %v369
  %629 = vmatprep.subr.bf16.mxu0 0
  %630 = vmatpush1.bf16.msra.mxu0 %v372
  %631 = vmatprep.subr.bf16.mxu0 0
  %632 = vmatpush1.bf16.msra.mxu0 %v375
  %633 = vmatprep.subr.bf16.mxu0 0
  %634 = vmatpush1.bf16.msra.mxu0 %v378
  %635 = vmatprep.subr.bf16.mxu0 0
  %636 = vmatpush1.bf16.msra.mxu0 %v381
  %637 = vmatprep.subr.bf16.mxu0 0
  %638 = vmatpush1.bf16.msra.mxu0 %v384
  %639 = vmatprep.subr.bf16.mxu0 0
  %640 = vmatpush1.bf16.msra.mxu0 %v387
  %641 = vmatprep.subr.bf16.mxu0 0
  %642 = vmatpush1.bf16.msra.mxu0 %v390
  %643 = vmatprep.subr.bf16.mxu0 0
  %644 = vmatpush1.bf16.msra.mxu0 %v393
  %645 = vmatprep.mubr.bf16.mxu0 %v147
  %646 = vmatmul.mubr.bf16.gmra.mrb[0].mxu0 %v146
  %v647 = vpop.f32.mrb[0].mxu0
  %v648 = vadd.f32 0.0, %v647
  %v649 = vpop.f32.mrb[0].mxu0
  %v650 = vpop.f32.mrb[0].mxu0
  %v651 = vadd.f32 0.0, %v650
  %v652 = vpop.f32.mrb[0].mxu0
  %653 = vmatprep.mubr.bf16.mxu0 %v150
  %654 = vmatmul.mubr.bf16.gmra.mrb[0].mxu0 %v149
  %v655 = vpop.f32.mrb[0].mxu0
  %v656 = vadd.f32 0.0, %v655
  %v657 = vpop.f32.mrb[0].mxu0
  %v658 = vpop.f32.mrb[0].mxu0
  %v659 = vadd.f32 0.0, %v658
  %v660 = vpop.f32.mrb[0].mxu0
  %661 = vmatprep.mubr.bf16.mxu0 %v153
  %662 = vmatmul.mubr.bf16.gmra.mrb[0].mxu0 %v152
  %v663 = vpop.f32.mrb[0].mxu0
  %v664 = vadd.f32 0.0, %v663
  %v665 = vpop.f32.mrb[0].mxu0
  %v666 = vpop.f32.mrb[0].mxu0
  %v667 = vadd.f32 0.0, %v666
  %v668 = vpop.f32.mrb[0].mxu0
  %669 = vmatprep.mubr.bf16.mxu0 %v156
  %670 = vmatmul.mubr.bf16.gmra.mrb[0].mxu0 %v155
  %v671 = vpop.f32.mrb[0].mxu0
  %v672 = vadd.f32 0.0, %v671
  %v673 = vpop.f32.mrb[0].mxu0
  %v674 = vpop.f32.mrb[0].mxu0
  %v675 = vadd.f32 0.0, %v674
  %v676 = vpop.f32.mrb[0].mxu0
  %677 = vdwg.mxu0
  %678 = vmatprep.subr.bf16.mxu0 0
  %679 = vmatpush1.bf16.msra.mxu0 %v396
  %680 = vmatprep.subr.bf16.mxu0 0
  %681 = vmatpush1.bf16.msra.mxu0 %v399
  %682 = vmatprep.subr.bf16.mxu0 0
  %683 = vmatpush1.bf16.msra.mxu0 0
  %684 = vmatprep.subr.bf16.mxu0 0
  %685 = vmatpush1.bf16.msra.mxu0 0
  %686 = vmatprep.subr.bf16.mxu0 0
  %687 = vmatpush1.bf16.msra.mxu0 0
  %688 = vmatprep.subr.bf16.mxu0 0
  %689 = vmatpush1.bf16.msra.mxu0 0
  %690 = vmatprep.subr.bf16.mxu0 0
  %691 = vmatpush1.bf16.msra.mxu0 0
  %692 = vmatprep.subr.bf16.mxu0 0
  %693 = vmatpush1.bf16.msra.mxu0 0
  %694 = vmatprep.subr.bf16.mxu0 0
  %695 = vmatpush1.bf16.msra.mxu0 0
  %696 = vmatprep.subr.bf16.mxu0 0
  %697 = vmatpush1.bf16.msra.mxu0 0
  %698 = vmatprep.subr.bf16.mxu0 0
  %699 = vmatpush1.bf16.msra.mxu0 0
  %700 = vmatprep.subr.bf16.mxu0 0
  %701 = vmatpush1.bf16.msra.mxu0 0
  %702 = vmatprep.subr.bf16.mxu0 0
  %703 = vmatpush1.bf16.msra.mxu0 0
  %704 = vmatprep.subr.bf16.mxu0 0
  %705 = vmatpush1.bf16.msra.mxu0 0
  %706 = vmatprep.subr.bf16.mxu0 0
  %707 = vmatpush1.bf16.msra.mxu0 0
  %708 = vmatprep.subr.bf16.mxu0 0
  %709 = vmatpush1.bf16.msra.mxu0 0
  %710 = vmatprep.mubr.bf16.mxu0 0
  %711 = vmatmul.mubr.bf16.gmra.mrb[0].mxu0 %v456
  %v712 = vpop.f32.mrb[0].mxu0
  %v713 = vadd.f32 %v648, %v712
  %v714 = vpop.f32.mrb[0].mxu0
  %v715 = vpop.f32.mrb[0].mxu0
  %v716 = vadd.f32 %v651, %v715
  %v717 = vpop.f32.mrb[0].mxu0
  %718 = vmatprep.mubr.bf16.mxu0 0
  %719 = vmatmul.mubr.bf16.gmra.mrb[0].mxu0 %v459
  %v720 = vpop.f32.mrb[0].mxu0
  %v721 = vadd.f32 %v656, %v720
  %v722 = vpop.f32.mrb[0].mxu0
  %v723 = vpop.f32.mrb[0].mxu0
  %v724 = vadd.f32 %v659, %v723
  %v725 = vpop.f32.mrb[0].mxu0
  %726 = vmatprep.mubr.bf16.mxu0 0
  %727 = vmatmul.mubr.bf16.gmra.mrb[0].mxu0 %v462
  %v728 = vpop.f32.mrb[0].mxu0
  %v729 = vadd.f32 %v664, %v728
  %v730 = vpop.f32.mrb[0].mxu0
  %v731 = vpop.f32.mrb[0].mxu0
  %v732 = vadd.f32 %v667, %v731
  %v733 = vpop.f32.mrb[0].mxu0
  %734 = vmatprep.mubr.bf16.mxu0 0
  %735 = vmatmul.mubr.bf16.gmra.mrb[0].mxu0 %v465
  %v736 = vpop.f32.mrb[0].mxu0
  %v737 = vadd.f32 %v672, %v736
  %v738 = vpop.f32.mrb[0].mxu0
  %v739 = vpop.f32.mrb[0].mxu0
  %v740 = vadd.f32 %v675, %v739
  %v741 = vpop.f32.mrb[0].mxu0
  %742 = vdwg.mxu0
  %v743 = vld [vmem:[%s2] sm:$0xff]
  %v744 = vld [vmem:[%s2 + $0x8] sm:$0xff]
  %v745 = vld [vmem:[%s2 + $0x10] sm:$0xff]
  %v746 = vld [vmem:[%s2 + $0x18] sm:$0xff]
  %v747 = vld [vmem:[%s2 + $0x20] sm:$0xff]
  %v748 = vld [vmem:[%s2 + $0x28] sm:$0xff]
  %v749 = vld [vmem:[%s2 + $0x30] sm:$0xff]
  %v750 = vld [vmem:[%s2 + $0x38] sm:$0xff]
  %752 = vset.pattern.permute.xlu0 0
  %753 = vperm.xlu0 %752, %v743
  %v754 = vpop.permute.xlu0 %753
  %757 = vset.pattern.permute.xlu0 0
  %758 = vperm.xlu0 %757, %v744
  %v759 = vpop.permute.xlu0 %758
  %762 = vset.pattern.permute.xlu0 0
  %763 = vperm.xlu0 %762, %v745
  %v764 = vpop.permute.xlu0 %763
  %767 = vset.pattern.permute.xlu0 0
  %768 = vperm.xlu0 %767, %v746
  %v769 = vpop.permute.xlu0 %768
  %772 = vset.pattern.permute.xlu0 0
  %773 = vperm.xlu0 %772, %v747
  %v774 = vpop.permute.xlu0 %773
  %777 = vset.pattern.permute.xlu0 0
  %778 = vperm.xlu0 %777, %v748
  %v779 = vpop.permute.xlu0 %778
  %782 = vset.pattern.permute.xlu0 0
  %783 = vperm.xlu0 %782, %v749
  %v784 = vpop.permute.xlu0 %783
  %787 = vset.pattern.permute.xlu0 0
  %788 = vperm.xlu0 %787, %v750
  %v789 = vpop.permute.xlu0 %788
  %v791 = vmul.f32 %v575, %v754
  %v792 = vmul.f32 %v577, %v754
  %v793 = vmul.f32 %v713, %v754
  %v794 = vmul.f32 %v579, %v759
  %v795 = vmul.f32 %v581, %v759
  %v796 = vmul.f32 %v716, %v759
  %v797 = vmul.f32 %v585, %v764
  %v798 = vmul.f32 %v587, %v764
  %v799 = vmul.f32 %v721, %v764
  %v800 = vmul.f32 %v589, %v769
  %v801 = vmul.f32 %v591, %v769
  %v802 = vmul.f32 %v724, %v769
  %v803 = vmul.f32 %v595, %v774
  %v804 = vmul.f32 %v597, %v774
  %v805 = vmul.f32 %v729, %v774
  %v806 = vmul.f32 %v599, %v779
  %v807 = vmul.f32 %v601, %v779
  %v808 = vmul.f32 %v732, %v779
  %v809 = vmul.f32 %v605, %v784
  %v810 = vmul.f32 %v607, %v784
  %v811 = vmul.f32 %v737, %v784
  %v812 = vmul.f32 %v609, %v789
  %v813 = vmul.f32 %v611, %v789
  %v814 = vmul.f32 %v740, %v789
  %v815 = vld [vmem:[%s3] sm:$0xff]
  %v816 = vld [vmem:[%s3 + $0x8] sm:$0xff]
  %v817 = vld [vmem:[%s3 + $0x10] sm:$0xff]
  %v818 = vld [vmem:[%s3 + $0x18] sm:$0xff]
  %v819 = vld [vmem:[%s3 + $0x20] sm:$0xff]
  %v820 = vld [vmem:[%s3 + $0x28] sm:$0xff]
  %v821 = vld [vmem:[%s3 + $0x30] sm:$0xff]
  %v822 = vld [vmem:[%s3 + $0x38] sm:$0xff]
  %824 = vset.pattern.permute.xlu0 0
  %825 = vperm.xlu0 %824, %v815
  %v826 = vpop.permute.xlu0 %825
  %829 = vset.pattern.permute.xlu0 0
  %830 = vperm.xlu0 %829, %v816
  %v831 = vpop.permute.xlu0 %830
  %834 = vset.pattern.permute.xlu0 0
  %835 = vperm.xlu0 %834, %v817
  %v836 = vpop.permute.xlu0 %835
  %839 = vset.pattern.permute.xlu0 0
  %840 = vperm.xlu0 %839, %v818
  %v841 = vpop.permute.xlu0 %840
  %844 = vset.pattern.permute.xlu0 0
  %845 = vperm.xlu0 %844, %v819
  %v846 = vpop.permute.xlu0 %845
  %849 = vset.pattern.permute.xlu0 0
  %850 = vperm.xlu0 %849, %v820
  %v851 = vpop.permute.xlu0 %850
  %854 = vset.pattern.permute.xlu0 0
  %855 = vperm.xlu0 %854, %v821
  %v856 = vpop.permute.xlu0 %855
  %859 = vset.pattern.permute.xlu0 0
  %860 = vperm.xlu0 %859, %v822
  %v861 = vpop.permute.xlu0 %860
  %v863 = vadd.f32 %v791, %v826
  %v864 = vadd.f32 %v792, %v826
  %v865 = vadd.f32 %v793, %v826
  %v866 = vadd.f32 %v794, %v831
  %v867 = vadd.f32 %v795, %v831
  %v868 = vadd.f32 %v796, %v831
  %v869 = vadd.f32 %v797, %v836
  %v870 = vadd.f32 %v798, %v836
  %v871 = vadd.f32 %v799, %v836
  %v872 = vadd.f32 %v800, %v841
  %v873 = vadd.f32 %v801, %v841
  %v874 = vadd.f32 %v802, %v841
  %v875 = vadd.f32 %v803, %v846
  %v876 = vadd.f32 %v804, %v846
  %v877 = vadd.f32 %v805, %v846
  %v878 = vadd.f32 %v806, %v851
  %v879 = vadd.f32 %v807, %v851
  %v880 = vadd.f32 %v808, %v851
  %v881 = vadd.f32 %v809, %v856
  %v882 = vadd.f32 %v810, %v856
  %v883 = vadd.f32 %v811, %v856
  %v884 = vadd.f32 %v812, %v861
  %v885 = vadd.f32 %v813, %v861
  %v886 = vadd.f32 %v814, %v861
  %v887 = vmax.f32 %v863, 0.0
  %v888 = vmax.f32 %v864, 0.0
  %v889 = vmax.f32 %v865, 0.0
  %v890 = vmax.f32 %v866, 0.0
  %v891 = vmax.f32 %v867, 0.0
  %v892 = vmax.f32 %v868, 0.0
  %v893 = vmax.f32 %v869, 0.0
  %v894 = vmax.f32 %v870, 0.0
  %v895 = vmax.f32 %v871, 0.0
  %v896 = vmax.f32 %v872, 0.0
  %v897 = vmax.f32 %v873, 0.0
  %v898 = vmax.f32 %v874, 0.0
  %v899 = vmax.f32 %v875, 0.0
  %v900 = vmax.f32 %v876, 0.0
  %v901 = vmax.f32 %v877, 0.0
  %v902 = vmax.f32 %v878, 0.0
  %v903 = vmax.f32 %v879, 0.0
  %v904 = vmax.f32 %v880, 0.0
  %v905 = vmax.f32 %v881, 0.0
  %v906 = vmax.f32 %v882, 0.0
  %v907 = vmax.f32 %v883, 0.0
  %v908 = vmax.f32 %v884, 0.0
  %v909 = vmax.f32 %v885, 0.0
  %v910 = vmax.f32 %v886, 0.0
  %v911 = vpack.c.bf16 %v890, %v887
  %v912 = vpack.c.bf16 %v891, %v888
  %v913 = vpack.c.bf16 %v892, %v889
  %v914 = vpack.c.bf16 %v896, %v893
  %v915 = vpack.c.bf16 %v897, %v894
  %v916 = vpack.c.bf16 %v898, %v895
  %v917 = vpack.c.bf16 %v902, %v899
  %v918 = vpack.c.bf16 %v903, %v900
  %v919 = vpack.c.bf16 %v904, %v901
  %v920 = vpack.c.bf16 %v908, %v905
  %v921 = vpack.c.bf16 %v909, %v906
  %v922 = vpack.c.bf16 %v910, %v907
  %v935 = vunpack.c.l.b16 %v911
  %v936 = vunpack.c.l.b16 %v912
  %v937 = vunpack.c.l.b16 %v913
  %v938 = vunpack.c.h.b16 %v911
  %v939 = vunpack.c.h.b16 %v912
  %v940 = vunpack.c.h.b16 %v913
  %v941 = vunpack.c.l.b16 %v914
  %v942 = vunpack.c.l.b16 %v915
  %v943 = vunpack.c.l.b16 %v916
  %v944 = vunpack.c.h.b16 %v914
  %v945 = vunpack.c.h.b16 %v915
  %v946 = vunpack.c.h.b16 %v916
  %v947 = vunpack.c.l.b16 %v917
  %v948 = vunpack.c.l.b16 %v918
  %v949 = vunpack.c.l.b16 %v919
  %v950 = vunpack.c.h.b16 %v917
  %v951 = vunpack.c.h.b16 %v918
  %v952 = vunpack.c.h.b16 %v919
  %v953 = vunpack.c.l.b16 %v920
  %v954 = vunpack.c.l.b16 %v921
  %v955 = vunpack.c.l.b16 %v922
  %v956 = vunpack.c.h.b16 %v920
  %v957 = vunpack.c.h.b16 %v921
  %v958 = vunpack.c.h.b16 %v922
  %v959 = vpack.c.b16 %v936, %v935
  %v960 = vpack.c.b16 %v937, %v937
  %v961 = vpack.c.b16 %v939, %v938
  %v962 = vpack.c.b16 %v940, %v940
  %v963 = vpack.c.b16 %v942, %v941
  %v964 = vpack.c.b16 %v943, %v943
  %v965 = vpack.c.b16 %v945, %v944
  %v966 = vpack.c.b16 %v946, %v946
  %v967 = vpack.c.b16 %v948, %v947
  %v968 = vpack.c.b16 %v949, %v949
  %v969 = vpack.c.b16 %v951, %v950
  %v970 = vpack.c.b16 %v952, %v952
  %v971 = vpack.c.b16 %v954, %v953
  %v972 = vpack.c.b16 %v955, %v955
  %v973 = vpack.c.b16 %v957, %v956
  %v974 = vpack.c.b16 %v958, %v958
  %991 = vst [vmem:[%s4] sm:$0xff] %v959
  %992 = vst [vmem:[%s4 + $0x8] sm:$0xf] %v960
  %993 = vst [vmem:[%s4 + $0xc] sm:$0xff] %v961
  %994 = vst [vmem:[%s4 + $0x14] sm:$0xf] %v962
  %995 = vst [vmem:[%s4 + $0x18] sm:$0xff] %v963
  %996 = vst [vmem:[%s4 + $0x20] sm:$0xf] %v964
  %997 = vst [vmem:[%s4 + $0x24] sm:$0xff] %v965
  %998 = vst [vmem:[%s4 + $0x2c] sm:$0xf] %v966
  %999 = vst [vmem:[%s4 + $0x30] sm:$0xff] %v967
  %1000 = vst [vmem:[%s4 + $0x38] sm:$0xf] %v968
  %1001 = vst [vmem:[%s4 + $0x3c] sm:$0xff] %v969
  %1002 = vst [vmem:[%s4 + $0x44] sm:$0xf] %v970
  %1003 = vst [vmem:[%s4 + $0x48] sm:$0xff] %v971
  %1004 = vst [vmem:[%s4 + $0x50] sm:$0xf] %v972
  %1005 = vst [vmem:[%s4 + $0x54] sm:$0xff] %v973
  %1006 = vst [vmem:[%s4 + $0x5c] sm:$0xf] %v974
  // Predicated region
  $region18: #{crnn_forward.10} parent=0 // pred_check
    _
  $region19: #{crnn_forward.10} parent=0 // pred_check_branch
    %1008 = sbr.rel (0) target = $region21
  $region20: #{crnn_forward.10} parent=0 // pred_region
    _
  $region21: #{crnn_forward.10} parent=0 // pred_fallthru
    _
  // Predicated region
  $region22: #{crnn_forward.10} parent=0 // pred_check
    _
  $region23: #{crnn_forward.10} parent=0 // pred_check_branch
    %1010 = sbr.rel (0) target = $region25
  $region24: #{crnn_forward.10} parent=0 // pred_region
    _
  $region25: #{crnn_forward.10} parent=0 // pred_fallthru
    _

// kernel: crnn_forward.11
$region0: #{crnn_forward.11}
  #allocation0 [shape = 'u32[]', space=smem, size = 0x4, offset = 0x4, fixed_abs, tag = 'smem constant byte address 0x4 - core index']
  #allocation1 [shape = 'u32[144,128]{1,0:T(1,128)}', space=vmem, size = 0x12000, scoped, tag = 'internal scratch']
  %s0 = inlined_call_operand.vmem [shape: bf16[576,1024], index: 0, kind: input, shape index: {}]
  %s1 = inlined_call_operand.vmem [shape: bf16[64,576], index: 1, kind: input, shape index: {}]
  %s2 = inlined_call_operand.vmem [shape: f32[64,1], index: 2, kind: input, shape index: {}]
  %s3 = inlined_call_operand.vmem [shape: f32[64,1], index: 3, kind: input, shape index: {}]
  %s4 = inlined_call_operand.vmem [shape: f32[1,1024], index: 4, kind: input, shape index: {}]
  %s5 = inlined_call_operand.vmem [shape: bf16[64,256], index: 5, kind: output, shape index: {}]
  %s6 = sld [smem:[#allocation0]]
  $region30: #{crnn_forward.11} parent=0
    _
  %s8 = ssub.s32 1, %s6
  %s9 = scalar_select 0, %s8, %s6
  // Predicated region
  $region2: #{crnn_forward.11} parent=0 // pred_check
    _
  $region3: #{crnn_forward.11} parent=0 // pred_check_branch
    %11 = sbr.rel (0) target = $region5
  $region4: #{crnn_forward.11} parent=0 // pred_region
    _
  $region5: #{crnn_forward.11} parent=0 // pred_fallthru
    _
  // Predicated region
  $region6: #{crnn_forward.11} parent=0 // pred_check
    _
  $region7: #{crnn_forward.11} parent=0 // pred_check_branch
    %13 = sbr.rel (0) target = $region9
  $region8: #{crnn_forward.11} parent=0 // pred_region
    _
  $region9: #{crnn_forward.11} parent=0 // pred_fallthru
    _
  // Predicated region
  $region10: #{crnn_forward.11} parent=0 // pred_check
    _
  $region11: #{crnn_forward.11} parent=0 // pred_check_branch
    %15 = sbr.rel (0) target = $region13
  $region12: #{crnn_forward.11} parent=0 // pred_region
    _
  $region13: #{crnn_forward.11} parent=0 // pred_fallthru
    _
  // Predicated region
  $region14: #{crnn_forward.11} parent=0 // pred_check
    _
  $region15: #{crnn_forward.11} parent=0 // pred_check_branch
    %17 = sbr.rel (0) target = $region17
  $region16: #{crnn_forward.11} parent=0 // pred_region
    _
  $region17: #{crnn_forward.11} parent=0 // pred_fallthru
    _
  // Predicated region
  $region18: #{crnn_forward.11} parent=0 // pred_check
    _
  $region19: #{crnn_forward.11} parent=0 // pred_check_branch
    %19 = sbr.rel (0) target = $region21
  $region20: #{crnn_forward.11} parent=0 // pred_region
    _
  $region21: #{crnn_forward.11} parent=0 // pred_fallthru
    _
  %v21 = vld [vmem:[%s1] sm:$0xff]
  %v22 = vld [vmem:[%s1 + $0x8] sm:$0xff]
  %v23 = vld [vmem:[%s1 + $0x10] sm:$0xf]
  %v24 = vld [vmem:[%s1 + $0x14] sm:$0xff]
  %v25 = vld [vmem:[%s1 + $0x1c] sm:$0xff]
  %v26 = vld [vmem:[%s1 + $0x24] sm:$0xf]
  %v27 = vld [vmem:[%s1 + $0x28] sm:$0xff]
  %v28 = vld [vmem:[%s1 + $0x30] sm:$0xff]
  %v29 = vld [vmem:[%s1 + $0x38] sm:$0xf]
  %v30 = vld [vmem:[%s1 + $0x3c] sm:$0xff]
  %v31 = vld [vmem:[%s1 + $0x44] sm:$0xff]
  %v32 = vld [vmem:[%s1 + $0x4c] sm:$0xf]
  %v33 = vld [vmem:[%s1 + $0x50] sm:$0xff]
  %v34 = vld [vmem:[%s1 + $0x58] sm:$0xff]
  %v35 = vld [vmem:[%s1 + $0x60] sm:$0xf]
  %v36 = vld [vmem:[%s1 + $0x64] sm:$0xff]
  %v37 = vld [vmem:[%s1 + $0x6c] sm:$0xff]
  %v38 = vld [vmem:[%s1 + $0x74] sm:$0xf]
  %v39 = vld [vmem:[%s1 + $0x78] sm:$0xff]
  %v40 = vld [vmem:[%s1 + $0x80] sm:$0xff]
  %v41 = vld [vmem:[%s1 + $0x88] sm:$0xf]
  %v42 = vld [vmem:[%s1 + $0x8c] sm:$0xff]
  %v43 = vld [vmem:[%s1 + $0x94] sm:$0xff]
  %v44 = vld [vmem:[%s1 + $0x9c] sm:$0xf]
  %v45 = vld [vmem:[%s0] sm:$0xff]
  %v46 = vld [vmem:[%s0 + $0x8] sm:$0xff]
  %v47 = vld [vmem:[%s0 + $0x10] sm:$0xff]
  %v48 = vld [vmem:[%s0 + $0x18] sm:$0xff]
  %v49 = vld [vmem:[%s0 + $0x20] sm:$0xff]
  %v50 = vld [vmem:[%s0 + $0x28] sm:$0xff]
  %v51 = vld [vmem:[%s0 + $0x30] sm:$0xff]
  %v52 = vld [vmem:[%s0 + $0x38] sm:$0xff]
  %v53 = vld [vmem:[%s0 + $0x40] sm:$0xff]
  %v54 = vld [vmem:[%s0 + $0x48] sm:$0xff]
  %v55 = vld [vmem:[%s0 + $0x50] sm:$0xff]
  %v56 = vld [vmem:[%s0 + $0x58] sm:$0xff]
  %v57 = vld [vmem:[%s0 + $0x60] sm:$0xff]
  %v58 = vld [vmem:[%s0 + $0x68] sm:$0xff]
  %v59 = vld [vmem:[%s0 + $0x70] sm:$0xff]
  %v60 = vld [vmem:[%s0 + $0x78] sm:$0xff]
  %v61 = vld [vmem:[%s0 + $0x80] sm:$0xff]
  %v62 = vld [vmem:[%s0 + $0x88] sm:$0xff]
  %v63 = vld [vmem:[%s0 + $0x90] sm:$0xff]
  %v64 = vld [vmem:[%s0 + $0x98] sm:$0xff]
  %v65 = vld [vmem:[%s0 + $0xa0] sm:$0xff]
  %v66 = vld [vmem:[%s0 + $0xa8] sm:$0xff]
  %v67 = vld [vmem:[%s0 + $0xb0] sm:$0xff]
  %v68 = vld [vmem:[%s0 + $0xb8] sm:$0xff]
  %v69 = vld [vmem:[%s0 + $0xc0] sm:$0xff]
  %v70 = vld [vmem:[%s0 + $0xc8] sm:$0xff]
  %v71 = vld [vmem:[%s0 + $0xd0] sm:$0xff]
  %v72 = vld [vmem:[%s0 + $0xd8] sm:$0xff]
  %v73 = vld [vmem:[%s0 + $0xe0] sm:$0xff]
  %v74 = vld [vmem:[%s0 + $0xe8] sm:$0xff]
  %v75 = vld [vmem:[%s0 + $0xf0] sm:$0xff]
  %v76 = vld [vmem:[%s0 + $0xf8] sm:$0xff]
  %v77 = vld [vmem:[%s0 + $0x100] sm:$0xff]
  %v78 = vld [vmem:[%s0 + $0x108] sm:$0xff]
  %v79 = vld [vmem:[%s0 + $0x110] sm:$0xff]
  %v80 = vld [vmem:[%s0 + $0x118] sm:$0xff]
  %v81 = vld [vmem:[%s0 + $0x120] sm:$0xff]
  %v82 = vld [vmem:[%s0 + $0x128] sm:$0xff]
  %v83 = vld [vmem:[%s0 + $0x130] sm:$0xff]
  %v84 = vld [vmem:[%s0 + $0x138] sm:$0xff]
  %v85 = vld [vmem:[%s0 + $0x140] sm:$0xff]
  %v86 = vld [vmem:[%s0 + $0x148] sm:$0xff]
  %v87 = vld [vmem:[%s0 + $0x150] sm:$0xff]
  %v88 = vld [vmem:[%s0 + $0x158] sm:$0xff]
  %v89 = vld [vmem:[%s0 + $0x160] sm:$0xff]
  %v90 = vld [vmem:[%s0 + $0x168] sm:$0xff]
  %v91 = vld [vmem:[%s0 + $0x170] sm:$0xff]
  %v92 = vld [vmem:[%s0 + $0x178] sm:$0xff]
  %v93 = vld [vmem:[%s0 + $0x180] sm:$0xff]
  %v94 = vld [vmem:[%s0 + $0x188] sm:$0xff]
  %v95 = vld [vmem:[%s0 + $0x190] sm:$0xff]
  %v96 = vld [vmem:[%s0 + $0x198] sm:$0xff]
  %v97 = vld [vmem:[%s0 + $0x1a0] sm:$0xff]
  %v98 = vld [vmem:[%s0 + $0x1a8] sm:$0xff]
  %v99 = vld [vmem:[%s0 + $0x1b0] sm:$0xff]
  %v100 = vld [vmem:[%s0 + $0x1b8] sm:$0xff]
  %v101 = vld [vmem:[%s0 + $0x1c0] sm:$0xff]
  %v102 = vld [vmem:[%s0 + $0x1c8] sm:$0xff]
  %v103 = vld [vmem:[%s0 + $0x1d0] sm:$0xff]
  %v104 = vld [vmem:[%s0 + $0x1d8] sm:$0xff]
  %v105 = vld [vmem:[%s0 + $0x1e0] sm:$0xff]
  %v106 = vld [vmem:[%s0 + $0x1e8] sm:$0xff]
  %v107 = vld [vmem:[%s0 + $0x1f0] sm:$0xff]
  %v108 = vld [vmem:[%s0 + $0x1f8] sm:$0xff]
  %v109 = vld [vmem:[%s0 + $0x200] sm:$0xff]
  %v110 = vld [vmem:[%s0 + $0x208] sm:$0xff]
  %v111 = vld [vmem:[%s0 + $0x210] sm:$0xff]
  %v112 = vld [vmem:[%s0 + $0x218] sm:$0xff]
  %v113 = vld [vmem:[%s0 + $0x220] sm:$0xff]
  %v114 = vld [vmem:[%s0 + $0x228] sm:$0xff]
  %v115 = vld [vmem:[%s0 + $0x230] sm:$0xff]
  %v116 = vld [vmem:[%s0 + $0x238] sm:$0xff]
  %v117 = vld [vmem:[%s0 + $0x240] sm:$0xff]
  %v118 = vld [vmem:[%s0 + $0x248] sm:$0xff]
  %v119 = vld [vmem:[%s0 + $0x250] sm:$0xff]
  %v120 = vld [vmem:[%s0 + $0x258] sm:$0xff]
  %v121 = vld [vmem:[%s0 + $0x260] sm:$0xff]
  %v122 = vld [vmem:[%s0 + $0x268] sm:$0xff]
  %v123 = vld [vmem:[%s0 + $0x270] sm:$0xff]
  %v124 = vld [vmem:[%s0 + $0x278] sm:$0xff]
  %v125 = vld [vmem:[%s0 + $0x280] sm:$0xff]
  %v126 = vld [vmem:[%s0 + $0x288] sm:$0xff]
  %v127 = vld [vmem:[%s0 + $0x290] sm:$0xff]
  %v128 = vld [vmem:[%s0 + $0x298] sm:$0xff]
  %v129 = vld [vmem:[%s0 + $0x2a0] sm:$0xff]
  %v130 = vld [vmem:[%s0 + $0x2a8] sm:$0xff]
  %v131 = vld [vmem:[%s0 + $0x2b0] sm:$0xff]
  %v132 = vld [vmem:[%s0 + $0x2b8] sm:$0xff]
  %v133 = vld [vmem:[%s0 + $0x2c0] sm:$0xff]
  %v134 = vld [vmem:[%s0 + $0x2c8] sm:$0xff]
  %v135 = vld [vmem:[%s0 + $0x2d0] sm:$0xff]
  %v136 = vld [vmem:[%s0 + $0x2d8] sm:$0xff]
  %v137 = vld [vmem:[%s0 + $0x2e0] sm:$0xff]
  %v138 = vld [vmem:[%s0 + $0x2e8] sm:$0xff]
  %v139 = vld [vmem:[%s0 + $0x2f0] sm:$0xff]
  %v140 = vld [vmem:[%s0 + $0x2f8] sm:$0xff]
  %v141 = vld [vmem:[%s0 + $0x300] sm:$0xff]
  %v142 = vld [vmem:[%s0 + $0x308] sm:$0xff]
  %v143 = vld [vmem:[%s0 + $0x310] sm:$0xff]
  %v144 = vld [vmem:[%s0 + $0x318] sm:$0xff]
  %v145 = vld [vmem:[%s0 + $0x320] sm:$0xff]
  %v146 = vld [vmem:[%s0 + $0x328] sm:$0xff]
  %v147 = vld [vmem:[%s0 + $0x330] sm:$0xff]
  %v148 = vld [vmem:[%s0 + $0x338] sm:$0xff]
  %v149 = vld [vmem:[%s0 + $0x340] sm:$0xff]
  %v150 = vld [vmem:[%s0 + $0x348] sm:$0xff]
  %v151 = vld [vmem:[%s0 + $0x350] sm:$0xff]
  %v152 = vld [vmem:[%s0 + $0x358] sm:$0xff]
  %v153 = vld [vmem:[%s0 + $0x360] sm:$0xff]
  %v154 = vld [vmem:[%s0 + $0x368] sm:$0xff]
  %v155 = vld [vmem:[%s0 + $0x370] sm:$0xff]
  %v156 = vld [vmem:[%s0 + $0x378] sm:$0xff]
  %v157 = vld [vmem:[%s0 + $0x380] sm:$0xff]
  %v158 = vld [vmem:[%s0 + $0x388] sm:$0xff]
  %v159 = vld [vmem:[%s0 + $0x390] sm:$0xff]
  %v160 = vld [vmem:[%s0 + $0x398] sm:$0xff]
  %v161 = vld [vmem:[%s0 + $0x3a0] sm:$0xff]
  %v162 = vld [vmem:[%s0 + $0x3a8] sm:$0xff]
  %v163 = vld [vmem:[%s0 + $0x3b0] sm:$0xff]
  %v164 = vld [vmem:[%s0 + $0x3b8] sm:$0xff]
  %v165 = vld [vmem:[%s0 + $0x3c0] sm:$0xff]
  %v166 = vld [vmem:[%s0 + $0x3c8] sm:$0xff]
  %v167 = vld [vmem:[%s0 + $0x3d0] sm:$0xff]
  %v168 = vld [vmem:[%s0 + $0x3d8] sm:$0xff]
  %v169 = vld [vmem:[%s0 + $0x3e0] sm:$0xff]
  %v170 = vld [vmem:[%s0 + $0x3e8] sm:$0xff]
  %v171 = vld [vmem:[%s0 + $0x3f0] sm:$0xff]
  %v172 = vld [vmem:[%s0 + $0x3f8] sm:$0xff]
  %v173 = vld [vmem:[%s0 + $0x400] sm:$0xff]
  %v174 = vld [vmem:[%s0 + $0x408] sm:$0xff]
  %v175 = vld [vmem:[%s0 + $0x410] sm:$0xff]
  %v176 = vld [vmem:[%s0 + $0x418] sm:$0xff]
  %v177 = vld [vmem:[%s0 + $0x420] sm:$0xff]
  %v178 = vld [vmem:[%s0 + $0x428] sm:$0xff]
  %v179 = vld [vmem:[%s0 + $0x430] sm:$0xff]
  %v180 = vld [vmem:[%s0 + $0x438] sm:$0xff]
  %v181 = vld [vmem:[%s0 + $0x440] sm:$0xff]
  %v182 = vld [vmem:[%s0 + $0x448] sm:$0xff]
  %v183 = vld [vmem:[%s0 + $0x450] sm:$0xff]
  %v184 = vld [vmem:[%s0 + $0x458] sm:$0xff]
  %v185 = vld [vmem:[%s0 + $0x460] sm:$0xff]
  %v186 = vld [vmem:[%s0 + $0x468] sm:$0xff]
  %v187 = vld [vmem:[%s0 + $0x470] sm:$0xff]
  %v188 = vld [vmem:[%s0 + $0x478] sm:$0xff]
  %v189 = vld [vmem:[%s0 + $0x480] sm:$0xff]
  %v190 = vld [vmem:[%s0 + $0x488] sm:$0xff]
  %v191 = vld [vmem:[%s0 + $0x490] sm:$0xff]
  %v192 = vld [vmem:[%s0 + $0x498] sm:$0xff]
  %v193 = vld [vmem:[%s0 + $0x4a0] sm:$0xff]
  %v194 = vld [vmem:[%s0 + $0x4a8] sm:$0xff]
  %v195 = vld [vmem:[%s0 + $0x4b0] sm:$0xff]
  %v196 = vld [vmem:[%s0 + $0x4b8] sm:$0xff]
  %v197 = vld [vmem:[%s0 + $0x4c0] sm:$0xff]
  %v198 = vld [vmem:[%s0 + $0x4c8] sm:$0xff]
  %v199 = vld [vmem:[%s0 + $0x4d0] sm:$0xff]
  %v200 = vld [vmem:[%s0 + $0x4d8] sm:$0xff]
  %v201 = vld [vmem:[%s0 + $0x4e0] sm:$0xff]
  %v202 = vld [vmem:[%s0 + $0x4e8] sm:$0xff]
  %v203 = vld [vmem:[%s0 + $0x4f0] sm:$0xff]
  %v204 = vld [vmem:[%s0 + $0x4f8] sm:$0xff]
  %v205 = vld [vmem:[%s0 + $0x500] sm:$0xff]
  %v206 = vld [vmem:[%s0 + $0x508] sm:$0xff]
  %v207 = vld [vmem:[%s0 + $0x510] sm:$0xff]
  %v208 = vld [vmem:[%s0 + $0x518] sm:$0xff]
  %v209 = vld [vmem:[%s0 + $0x520] sm:$0xff]
  %v210 = vld [vmem:[%s0 + $0x528] sm:$0xff]
  %v211 = vld [vmem:[%s0 + $0x530] sm:$0xff]
  %v212 = vld [vmem:[%s0 + $0x538] sm:$0xff]
  %v213 = vld [vmem:[%s0 + $0x540] sm:$0xff]
  %v214 = vld [vmem:[%s0 + $0x548] sm:$0xff]
  %v215 = vld [vmem:[%s0 + $0x550] sm:$0xff]
  %v216 = vld [vmem:[%s0 + $0x558] sm:$0xff]
  %v217 = vld [vmem:[%s0 + $0x560] sm:$0xff]
  %v218 = vld [vmem:[%s0 + $0x568] sm:$0xff]
  %v219 = vld [vmem:[%s0 + $0x570] sm:$0xff]
  %v220 = vld [vmem:[%s0 + $0x578] sm:$0xff]
  %v221 = vld [vmem:[%s0 + $0x580] sm:$0xff]
  %v222 = vld [vmem:[%s0 + $0x588] sm:$0xff]
  %v223 = vld [vmem:[%s0 + $0x590] sm:$0xff]
  %v224 = vld [vmem:[%s0 + $0x598] sm:$0xff]
  %v225 = vld [vmem:[%s0 + $0x5a0] sm:$0xff]
  %v226 = vld [vmem:[%s0 + $0x5a8] sm:$0xff]
  %v227 = vld [vmem:[%s0 + $0x5b0] sm:$0xff]
  %v228 = vld [vmem:[%s0 + $0x5b8] sm:$0xff]
  %v229 = vld [vmem:[%s0 + $0x5c0] sm:$0xff]
  %v230 = vld [vmem:[%s0 + $0x5c8] sm:$0xff]
  %v231 = vld [vmem:[%s0 + $0x5d0] sm:$0xff]
  %v232 = vld [vmem:[%s0 + $0x5d8] sm:$0xff]
  %v233 = vld [vmem:[%s0 + $0x5e0] sm:$0xff]
  %v234 = vld [vmem:[%s0 + $0x5e8] sm:$0xff]
  %v235 = vld [vmem:[%s0 + $0x5f0] sm:$0xff]
  %v236 = vld [vmem:[%s0 + $0x5f8] sm:$0xff]
  %v237 = vld [vmem:[%s0 + $0x600] sm:$0xff]
  %v238 = vld [vmem:[%s0 + $0x608] sm:$0xff]
  %v239 = vld [vmem:[%s0 + $0x610] sm:$0xff]
  %v240 = vld [vmem:[%s0 + $0x618] sm:$0xff]
  %v241 = vld [vmem:[%s0 + $0x620] sm:$0xff]
  %v242 = vld [vmem:[%s0 + $0x628] sm:$0xff]
  %v243 = vld [vmem:[%s0 + $0x630] sm:$0xff]
  %v244 = vld [vmem:[%s0 + $0x638] sm:$0xff]
  %v245 = vld [vmem:[%s0 + $0x640] sm:$0xff]
  %v246 = vld [vmem:[%s0 + $0x648] sm:$0xff]
  %v247 = vld [vmem:[%s0 + $0x650] sm:$0xff]
  %v248 = vld [vmem:[%s0 + $0x658] sm:$0xff]
  %v249 = vld [vmem:[%s0 + $0x660] sm:$0xff]
  %v250 = vld [vmem:[%s0 + $0x668] sm:$0xff]
  %v251 = vld [vmem:[%s0 + $0x670] sm:$0xff]
  %v252 = vld [vmem:[%s0 + $0x678] sm:$0xff]
  %v253 = vld [vmem:[%s0 + $0x680] sm:$0xff]
  %v254 = vld [vmem:[%s0 + $0x688] sm:$0xff]
  %v255 = vld [vmem:[%s0 + $0x690] sm:$0xff]
  %v256 = vld [vmem:[%s0 + $0x698] sm:$0xff]
  %v257 = vld [vmem:[%s0 + $0x6a0] sm:$0xff]
  %v258 = vld [vmem:[%s0 + $0x6a8] sm:$0xff]
  %v259 = vld [vmem:[%s0 + $0x6b0] sm:$0xff]
  %v260 = vld [vmem:[%s0 + $0x6b8] sm:$0xff]
  %v261 = vld [vmem:[%s0 + $0x6c0] sm:$0xff]
  %v262 = vld [vmem:[%s0 + $0x6c8] sm:$0xff]
  %v263 = vld [vmem:[%s0 + $0x6d0] sm:$0xff]
  %v264 = vld [vmem:[%s0 + $0x6d8] sm:$0xff]
  %v265 = vld [vmem:[%s0 + $0x6e0] sm:$0xff]
  %v266 = vld [vmem:[%s0 + $0x6e8] sm:$0xff]
  %v267 = vld [vmem:[%s0 + $0x6f0] sm:$0xff]
  %v268 = vld [vmem:[%s0 + $0x6f8] sm:$0xff]
  %v269 = vld [vmem:[%s0 + $0x700] sm:$0xff]
  %v270 = vld [vmem:[%s0 + $0x708] sm:$0xff]
  %v271 = vld [vmem:[%s0 + $0x710] sm:$0xff]
  %v272 = vld [vmem:[%s0 + $0x718] sm:$0xff]
  %v273 = vld [vmem:[%s0 + $0x720] sm:$0xff]
  %v274 = vld [vmem:[%s0 + $0x728] sm:$0xff]
  %v275 = vld [vmem:[%s0 + $0x730] sm:$0xff]
  %v276 = vld [vmem:[%s0 + $0x738] sm:$0xff]
  %v277 = vld [vmem:[%s0 + $0x740] sm:$0xff]
  %v278 = vld [vmem:[%s0 + $0x748] sm:$0xff]
  %v279 = vld [vmem:[%s0 + $0x750] sm:$0xff]
  %v280 = vld [vmem:[%s0 + $0x758] sm:$0xff]
  %v281 = vld [vmem:[%s0 + $0x760] sm:$0xff]
  %v282 = vld [vmem:[%s0 + $0x768] sm:$0xff]
  %v283 = vld [vmem:[%s0 + $0x770] sm:$0xff]
  %v284 = vld [vmem:[%s0 + $0x778] sm:$0xff]
  %v285 = vld [vmem:[%s0 + $0x780] sm:$0xff]
  %v286 = vld [vmem:[%s0 + $0x788] sm:$0xff]
  %v287 = vld [vmem:[%s0 + $0x790] sm:$0xff]
  %v288 = vld [vmem:[%s0 + $0x798] sm:$0xff]
  %v289 = vld [vmem:[%s0 + $0x7a0] sm:$0xff]
  %v290 = vld [vmem:[%s0 + $0x7a8] sm:$0xff]
  %v291 = vld [vmem:[%s0 + $0x7b0] sm:$0xff]
  %v292 = vld [vmem:[%s0 + $0x7b8] sm:$0xff]
  %v293 = vld [vmem:[%s0 + $0x7c0] sm:$0xff]
  %v294 = vld [vmem:[%s0 + $0x7c8] sm:$0xff]
  %v295 = vld [vmem:[%s0 + $0x7d0] sm:$0xff]
  %v296 = vld [vmem:[%s0 + $0x7d8] sm:$0xff]
  %v297 = vld [vmem:[%s0 + $0x7e0] sm:$0xff]
  %v298 = vld [vmem:[%s0 + $0x7e8] sm:$0xff]
  %v299 = vld [vmem:[%s0 + $0x7f0] sm:$0xff]
  %v300 = vld [vmem:[%s0 + $0x7f8] sm:$0xff]
  %v301 = vld [vmem:[%s0 + $0x800] sm:$0xff]
  %v302 = vld [vmem:[%s0 + $0x808] sm:$0xff]
  %v303 = vld [vmem:[%s0 + $0x810] sm:$0xff]
  %v304 = vld [vmem:[%s0 + $0x818] sm:$0xff]
  %v305 = vld [vmem:[%s0 + $0x820] sm:$0xff]
  %v306 = vld [vmem:[%s0 + $0x828] sm:$0xff]
  %v307 = vld [vmem:[%s0 + $0x830] sm:$0xff]
  %v308 = vld [vmem:[%s0 + $0x838] sm:$0xff]
  %v309 = vld [vmem:[%s0 + $0x840] sm:$0xff]
  %v310 = vld [vmem:[%s0 + $0x848] sm:$0xff]
  %v311 = vld [vmem:[%s0 + $0x850] sm:$0xff]
  %v312 = vld [vmem:[%s0 + $0x858] sm:$0xff]
  %v313 = vld [vmem:[%s0 + $0x860] sm:$0xff]
  %v314 = vld [vmem:[%s0 + $0x868] sm:$0xff]
  %v315 = vld [vmem:[%s0 + $0x870] sm:$0xff]
  %v316 = vld [vmem:[%s0 + $0x878] sm:$0xff]
  %v317 = vld [vmem:[%s0 + $0x880] sm:$0xff]
  %v318 = vld [vmem:[%s0 + $0x888] sm:$0xff]
  %v319 = vld [vmem:[%s0 + $0x890] sm:$0xff]
  %v320 = vld [vmem:[%s0 + $0x898] sm:$0xff]
  %v321 = vld [vmem:[%s0 + $0x8a0] sm:$0xff]
  %v322 = vld [vmem:[%s0 + $0x8a8] sm:$0xff]
  %v323 = vld [vmem:[%s0 + $0x8b0] sm:$0xff]
  %v324 = vld [vmem:[%s0 + $0x8b8] sm:$0xff]
  %v325 = vld [vmem:[%s0 + $0x8c0] sm:$0xff]
  %v326 = vld [vmem:[%s0 + $0x8c8] sm:$0xff]
  %v327 = vld [vmem:[%s0 + $0x8d0] sm:$0xff]
  %v328 = vld [vmem:[%s0 + $0x8d8] sm:$0xff]
  %v329 = vld [vmem:[%s0 + $0x8e0] sm:$0xff]
  %v330 = vld [vmem:[%s0 + $0x8e8] sm:$0xff]
  %v331 = vld [vmem:[%s0 + $0x8f0] sm:$0xff]
  %v332 = vld [vmem:[%s0 + $0x8f8] sm:$0xff]
  %v357 = vunpack.c.l.b16 %v21
  %v358 = vunpack.c.h.b16 %v21
  %v359 = vunpack.c.l.b16 %v22
  %v360 = vunpack.c.h.b16 %v22
  %v361 = vunpack.c.l.b16 %v23
  %v362 = vunpack.c.l.b16 %v24
  %v363 = vunpack.c.h.b16 %v24
  %v364 = vunpack.c.l.b16 %v25
  %v365 = vunpack.c.h.b16 %v25
  %v366 = vunpack.c.l.b16 %v26
  %v367 = vunpack.c.l.b16 %v27
  %v368 = vunpack.c.h.b16 %v27
  %v369 = vunpack.c.l.b16 %v28
  %v370 = vunpack.c.h.b16 %v28
  %v371 = vunpack.c.l.b16 %v29
  %v372 = vunpack.c.l.b16 %v30
  %v373 = vunpack.c.h.b16 %v30
  %v374 = vunpack.c.l.b16 %v31
  %v375 = vunpack.c.h.b16 %v31
  %v376 = vunpack.c.l.b16 %v32
  %v377 = vunpack.c.l.b16 %v33
  %v378 = vunpack.c.h.b16 %v33
  %v379 = vunpack.c.l.b16 %v34
  %v380 = vunpack.c.h.b16 %v34
  %v381 = vunpack.c.l.b16 %v35
  %v382 = vunpack.c.l.b16 %v36
  %v383 = vunpack.c.h.b16 %v36
  %v384 = vunpack.c.l.b16 %v37
  %v385 = vunpack.c.h.b16 %v37
  %v386 = vunpack.c.l.b16 %v38
  %v387 = vunpack.c.l.b16 %v39
  %v388 = vunpack.c.h.b16 %v39
  %v389 = vunpack.c.l.b16 %v40
  %v390 = vunpack.c.h.b16 %v40
  %v391 = vunpack.c.l.b16 %v41
  %v392 = vunpack.c.l.b16 %v42
  %v393 = vunpack.c.h.b16 %v42
  %v394 = vunpack.c.l.b16 %v43
  %v395 = vunpack.c.h.b16 %v43
  %v396 = vunpack.c.l.b16 %v44
  %v397 = vpack.c.b16 %v362, %v357
  %v398 = vpack.c.b16 %v363, %v358
  %v399 = vpack.c.b16 %v364, %v359
  %v400 = vpack.c.b16 %v365, %v360
  %v401 = vpack.c.b16 %v366, %v361
  %v402 = vpack.c.b16 %v372, %v367
  %v403 = vpack.c.b16 %v373, %v368
  %v404 = vpack.c.b16 %v374, %v369
  %v405 = vpack.c.b16 %v375, %v370
  %v406 = vpack.c.b16 %v376, %v371
  %v407 = vpack.c.b16 %v382, %v377
  %v408 = vpack.c.b16 %v383, %v378
  %v409 = vpack.c.b16 %v384, %v379
  %v410 = vpack.c.b16 %v385, %v380
  %v411 = vpack.c.b16 %v386, %v381
  %v412 = vpack.c.b16 %v392, %v387
  %v413 = vpack.c.b16 %v393, %v388
  %v414 = vpack.c.b16 %v394, %v389
  %v415 = vpack.c.b16 %v395, %v390
  %v416 = vpack.c.b16 %v396, %v391
  %v721 = vunpack.c.l.b16 %v45
  %v722 = vunpack.c.h.b16 %v45
  %v723 = vunpack.c.l.b16 %v46
  %v724 = vunpack.c.h.b16 %v46
  %v725 = vunpack.c.l.b16 %v47
  %v726 = vunpack.c.h.b16 %v47
  %v727 = vunpack.c.l.b16 %v48
  %v728 = vunpack.c.h.b16 %v48
  %v729 = vunpack.c.l.b16 %v49
  %v730 = vunpack.c.h.b16 %v49
  %v731 = vunpack.c.l.b16 %v50
  %v732 = vunpack.c.h.b16 %v50
  %v733 = vunpack.c.l.b16 %v51
  %v734 = vunpack.c.h.b16 %v51
  %v735 = vunpack.c.l.b16 %v52
  %v736 = vunpack.c.h.b16 %v52
  %v737 = vunpack.c.l.b16 %v53
  %v738 = vunpack.c.h.b16 %v53
  %v739 = vunpack.c.l.b16 %v54
  %v740 = vunpack.c.h.b16 %v54
  %v741 = vunpack.c.l.b16 %v55
  %v742 = vunpack.c.h.b16 %v55
  %v743 = vunpack.c.l.b16 %v56
  %v744 = vunpack.c.h.b16 %v56
  %v745 = vunpack.c.l.b16 %v57
  %v746 = vunpack.c.h.b16 %v57
  %v747 = vunpack.c.l.b16 %v58
  %v748 = vunpack.c.h.b16 %v58
  %v749 = vunpack.c.l.b16 %v59
  %v750 = vunpack.c.h.b16 %v59
  %v751 = vunpack.c.l.b16 %v60
  %v752 = vunpack.c.h.b16 %v60
  %v753 = vunpack.c.l.b16 %v61
  %v754 = vunpack.c.h.b16 %v61
  %v755 = vunpack.c.l.b16 %v62
  %v756 = vunpack.c.h.b16 %v62
  %v757 = vunpack.c.l.b16 %v63
  %v758 = vunpack.c.h.b16 %v63
  %v759 = vunpack.c.l.b16 %v64
  %v760 = vunpack.c.h.b16 %v64
  %v761 = vunpack.c.l.b16 %v65
  %v762 = vunpack.c.h.b16 %v65
  %v763 = vunpack.c.l.b16 %v66
  %v764 = vunpack.c.h.b16 %v66
  %v765 = vunpack.c.l.b16 %v67
  %v766 = vunpack.c.h.b16 %v67
  %v767 = vunpack.c.l.b16 %v68
  %v768 = vunpack.c.h.b16 %v68
  %v769 = vunpack.c.l.b16 %v69
  %v770 = vunpack.c.h.b16 %v69
  %v771 = vunpack.c.l.b16 %v70
  %v772 = vunpack.c.h.b16 %v70
  %v773 = vunpack.c.l.b16 %v71
  %v774 = vunpack.c.h.b16 %v71
  %v775 = vunpack.c.l.b16 %v72
  %v776 = vunpack.c.h.b16 %v72
  %v777 = vunpack.c.l.b16 %v73
  %v778 = vunpack.c.h.b16 %v73
  %v779 = vunpack.c.l.b16 %v74
  %v780 = vunpack.c.h.b16 %v74
  %v781 = vunpack.c.l.b16 %v75
  %v782 = vunpack.c.h.b16 %v75
  %v783 = vunpack.c.l.b16 %v76
  %v784 = vunpack.c.h.b16 %v76
  %v785 = vunpack.c.l.b16 %v77
  %v786 = vunpack.c.h.b16 %v77
  %v787 = vunpack.c.l.b16 %v78
  %v788 = vunpack.c.h.b16 %v78
  %v789 = vunpack.c.l.b16 %v79
  %v790 = vunpack.c.h.b16 %v79
  %v791 = vunpack.c.l.b16 %v80
  %v792 = vunpack.c.h.b16 %v80
  %v793 = vunpack.c.l.b16 %v81
  %v794 = vunpack.c.h.b16 %v81
  %v795 = vunpack.c.l.b16 %v82
  %v796 = vunpack.c.h.b16 %v82
  %v797 = vunpack.c.l.b16 %v83
  %v798 = vunpack.c.h.b16 %v83
  %v799 = vunpack.c.l.b16 %v84
  %v800 = vunpack.c.h.b16 %v84
  %v801 = vunpack.c.l.b16 %v85
  %v802 = vunpack.c.h.b16 %v85
  %v803 = vunpack.c.l.b16 %v86
  %v804 = vunpack.c.h.b16 %v86
  %v805 = vunpack.c.l.b16 %v87
  %v806 = vunpack.c.h.b16 %v87
  %v807 = vunpack.c.l.b16 %v88
  %v808 = vunpack.c.h.b16 %v88
  %v809 = vunpack.c.l.b16 %v89
  %v810 = vunpack.c.h.b16 %v89
  %v811 = vunpack.c.l.b16 %v90
  %v812 = vunpack.c.h.b16 %v90
  %v813 = vunpack.c.l.b16 %v91
  %v814 = vunpack.c.h.b16 %v91
  %v815 = vunpack.c.l.b16 %v92
  %v816 = vunpack.c.h.b16 %v92
  %v817 = vunpack.c.l.b16 %v93
  %v818 = vunpack.c.h.b16 %v93
  %v819 = vunpack.c.l.b16 %v94
  %v820 = vunpack.c.h.b16 %v94
  %v821 = vunpack.c.l.b16 %v95
  %v822 = vunpack.c.h.b16 %v95
  %v823 = vunpack.c.l.b16 %v96
  %v824 = vunpack.c.h.b16 %v96
  %v825 = vunpack.c.l.b16 %v97
  %v826 = vunpack.c.h.b16 %v97
  %v827 = vunpack.c.l.b16 %v98
  %v828 = vunpack.c.h.b16 %v98
  %v829 = vunpack.c.l.b16 %v99
  %v830 = vunpack.c.h.b16 %v99
  %v831 = vunpack.c.l.b16 %v100
  %v832 = vunpack.c.h.b16 %v100
  %v833 = vunpack.c.l.b16 %v101
  %v834 = vunpack.c.h.b16 %v101
  %v835 = vunpack.c.l.b16 %v102
  %v836 = vunpack.c.h.b16 %v102
  %v837 = vunpack.c.l.b16 %v103
  %v838 = vunpack.c.h.b16 %v103
  %v839 = vunpack.c.l.b16 %v104
  %v840 = vunpack.c.h.b16 %v104
  %v841 = vunpack.c.l.b16 %v105
  %v842 = vunpack.c.h.b16 %v105
  %v843 = vunpack.c.l.b16 %v106
  %v844 = vunpack.c.h.b16 %v106
  %v845 = vunpack.c.l.b16 %v107
  %v846 = vunpack.c.h.b16 %v107
  %v847 = vunpack.c.l.b16 %v108
  %v848 = vunpack.c.h.b16 %v108
  %v849 = vunpack.c.l.b16 %v109
  %v850 = vunpack.c.h.b16 %v109
  %v851 = vunpack.c.l.b16 %v110
  %v852 = vunpack.c.h.b16 %v110
  %v853 = vunpack.c.l.b16 %v111
  %v854 = vunpack.c.h.b16 %v111
  %v855 = vunpack.c.l.b16 %v112
  %v856 = vunpack.c.h.b16 %v112
  %v857 = vunpack.c.l.b16 %v113
  %v858 = vunpack.c.h.b16 %v113
  %v859 = vunpack.c.l.b16 %v114
  %v860 = vunpack.c.h.b16 %v114
  %v861 = vunpack.c.l.b16 %v115
  %v862 = vunpack.c.h.b16 %v115
  %v863 = vunpack.c.l.b16 %v116
  %v864 = vunpack.c.h.b16 %v116
  %v865 = vunpack.c.l.b16 %v117
  %v866 = vunpack.c.h.b16 %v117
  %v867 = vunpack.c.l.b16 %v118
  %v868 = vunpack.c.h.b16 %v118
  %v869 = vunpack.c.l.b16 %v119
  %v870 = vunpack.c.h.b16 %v119
  %v871 = vunpack.c.l.b16 %v120
  %v872 = vunpack.c.h.b16 %v120
  %v873 = vunpack.c.l.b16 %v121
  %v874 = vunpack.c.h.b16 %v121
  %v875 = vunpack.c.l.b16 %v122
  %v876 = vunpack.c.h.b16 %v122
  %v877 = vunpack.c.l.b16 %v123
  %v878 = vunpack.c.h.b16 %v123
  %v879 = vunpack.c.l.b16 %v124
  %v880 = vunpack.c.h.b16 %v124
  %v881 = vunpack.c.l.b16 %v125
  %v882 = vunpack.c.h.b16 %v125
  %v883 = vunpack.c.l.b16 %v126
  %v884 = vunpack.c.h.b16 %v126
  %v885 = vunpack.c.l.b16 %v127
  %v886 = vunpack.c.h.b16 %v127
  %v887 = vunpack.c.l.b16 %v128
  %v888 = vunpack.c.h.b16 %v128
  %v889 = vunpack.c.l.b16 %v129
  %v890 = vunpack.c.h.b16 %v129
  %v891 = vunpack.c.l.b16 %v130
  %v892 = vunpack.c.h.b16 %v130
  %v893 = vunpack.c.l.b16 %v131
  %v894 = vunpack.c.h.b16 %v131
  %v895 = vunpack.c.l.b16 %v132
  %v896 = vunpack.c.h.b16 %v132
  %v897 = vunpack.c.l.b16 %v133
  %v898 = vunpack.c.h.b16 %v133
  %v899 = vunpack.c.l.b16 %v134
  %v900 = vunpack.c.h.b16 %v134
  %v901 = vunpack.c.l.b16 %v135
  %v902 = vunpack.c.h.b16 %v135
  %v903 = vunpack.c.l.b16 %v136
  %v904 = vunpack.c.h.b16 %v136
  %v905 = vunpack.c.l.b16 %v137
  %v906 = vunpack.c.h.b16 %v137
  %v907 = vunpack.c.l.b16 %v138
  %v908 = vunpack.c.h.b16 %v138
  %v909 = vunpack.c.l.b16 %v139
  %v910 = vunpack.c.h.b16 %v139
  %v911 = vunpack.c.l.b16 %v140
  %v912 = vunpack.c.h.b16 %v140
  %v913 = vunpack.c.l.b16 %v141
  %v914 = vunpack.c.h.b16 %v141
  %v915 = vunpack.c.l.b16 %v142
  %v916 = vunpack.c.h.b16 %v142
  %v917 = vunpack.c.l.b16 %v143
  %v918 = vunpack.c.h.b16 %v143
  %v919 = vunpack.c.l.b16 %v144
  %v920 = vunpack.c.h.b16 %v144
  %v921 = vunpack.c.l.b16 %v145
  %v922 = vunpack.c.h.b16 %v145
  %v923 = vunpack.c.l.b16 %v146
  %v924 = vunpack.c.h.b16 %v146
  %v925 = vunpack.c.l.b16 %v147
  %v926 = vunpack.c.h.b16 %v147
  %v927 = vunpack.c.l.b16 %v148
  %v928 = vunpack.c.h.b16 %v148
  %v929 = vunpack.c.l.b16 %v149
  %v930 = vunpack.c.h.b16 %v149
  %v931 = vunpack.c.l.b16 %v150
  %v932 = vunpack.c.h.b16 %v150
  %v933 = vunpack.c.l.b16 %v151
  %v934 = vunpack.c.h.b16 %v151
  %v935 = vunpack.c.l.b16 %v152
  %v936 = vunpack.c.h.b16 %v152
  %v937 = vunpack.c.l.b16 %v153
  %v938 = vunpack.c.h.b16 %v153
  %v939 = vunpack.c.l.b16 %v154
  %v940 = vunpack.c.h.b16 %v154
  %v941 = vunpack.c.l.b16 %v155
  %v942 = vunpack.c.h.b16 %v155
  %v943 = vunpack.c.l.b16 %v156
  %v944 = vunpack.c.h.b16 %v156
  %v945 = vunpack.c.l.b16 %v157
  %v946 = vunpack.c.h.b16 %v157
  %v947 = vunpack.c.l.b16 %v158
  %v948 = vunpack.c.h.b16 %v158
  %v949 = vunpack.c.l.b16 %v159
  %v950 = vunpack.c.h.b16 %v159
  %v951 = vunpack.c.l.b16 %v160
  %v952 = vunpack.c.h.b16 %v160
  %v953 = vunpack.c.l.b16 %v161
  %v954 = vunpack.c.h.b16 %v161
  %v955 = vunpack.c.l.b16 %v162
  %v956 = vunpack.c.h.b16 %v162
  %v957 = vunpack.c.l.b16 %v163
  %v958 = vunpack.c.h.b16 %v163
  %v959 = vunpack.c.l.b16 %v164
  %v960 = vunpack.c.h.b16 %v164
  %v961 = vunpack.c.l.b16 %v165
  %v962 = vunpack.c.h.b16 %v165
  %v963 = vunpack.c.l.b16 %v166
  %v964 = vunpack.c.h.b16 %v166
  %v965 = vunpack.c.l.b16 %v167
  %v966 = vunpack.c.h.b16 %v167
  %v967 = vunpack.c.l.b16 %v168
  %v968 = vunpack.c.h.b16 %v168
  %v969 = vunpack.c.l.b16 %v169
  %v970 = vunpack.c.h.b16 %v169
  %v971 = vunpack.c.l.b16 %v170
  %v972 = vunpack.c.h.b16 %v170
  %v973 = vunpack.c.l.b16 %v171
  %v974 = vunpack.c.h.b16 %v171
  %v975 = vunpack.c.l.b16 %v172
  %v976 = vunpack.c.h.b16 %v172
  %v977 = vunpack.c.l.b16 %v173
  %v978 = vunpack.c.h.b16 %v173
  %v979 = vunpack.c.l.b16 %v174
  %v980 = vunpack.c.h.b16 %v174
  %v981 = vunpack.c.l.b16 %v175
  %v982 = vunpack.c.h.b16 %v175
  %v983 = vunpack.c.l.b16 %v176
  %v984 = vunpack.c.h.b16 %v176
  %v985 = vunpack.c.l.b16 %v177
  %v986 = vunpack.c.h.b16 %v177
  %v987 = vunpack.c.l.b16 %v178
  %v988 = vunpack.c.h.b16 %v178
  %v989 = vunpack.c.l.b16 %v179
  %v990 = vunpack.c.h.b16 %v179
  %v991 = vunpack.c.l.b16 %v180
  %v992 = vunpack.c.h.b16 %v180
  %v993 = vunpack.c.l.b16 %v181
  %v994 = vunpack.c.h.b16 %v181
  %v995 = vunpack.c.l.b16 %v182
  %v996 = vunpack.c.h.b16 %v182
  %v997 = vunpack.c.l.b16 %v183
  %v998 = vunpack.c.h.b16 %v183
  %v999 = vunpack.c.l.b16 %v184
  %v1000 = vunpack.c.h.b16 %v184
  %v1001 = vunpack.c.l.b16 %v185
  %v1002 = vunpack.c.h.b16 %v185
  %v1003 = vunpack.c.l.b16 %v186
  %v1004 = vunpack.c.h.b16 %v186
  %v1005 = vunpack.c.l.b16 %v187
  %v1006 = vunpack.c.h.b16 %v187
  %v1007 = vunpack.c.l.b16 %v188
  %v1008 = vunpack.c.h.b16 %v188
  %v1009 = vunpack.c.l.b16 %v189
  %v1010 = vunpack.c.h.b16 %v189
  %v1011 = vunpack.c.l.b16 %v190
  %v1012 = vunpack.c.h.b16 %v190
  %v1013 = vunpack.c.l.b16 %v191
  %v1014 = vunpack.c.h.b16 %v191
  %v1015 = vunpack.c.l.b16 %v192
  %v1016 = vunpack.c.h.b16 %v192
  %v1017 = vunpack.c.l.b16 %v193
  %v1018 = vunpack.c.h.b16 %v193
  %v1019 = vunpack.c.l.b16 %v194
  %v1020 = vunpack.c.h.b16 %v194
  %v1021 = vunpack.c.l.b16 %v195
  %v1022 = vunpack.c.h.b16 %v195
  %v1023 = vunpack.c.l.b16 %v196
  %v1024 = vunpack.c.h.b16 %v196
  %v1025 = vunpack.c.l.b16 %v197
  %v1026 = vunpack.c.h.b16 %v197
  %v1027 = vunpack.c.l.b16 %v198
  %v1028 = vunpack.c.h.b16 %v198
  %v1029 = vunpack.c.l.b16 %v199
  %v1030 = vunpack.c.h.b16 %v199
  %v1031 = vunpack.c.l.b16 %v200
  %v1032 = vunpack.c.h.b16 %v200
  %v1033 = vunpack.c.l.b16 %v201
  %v1034 = vunpack.c.h.b16 %v201
  %v1035 = vunpack.c.l.b16 %v202
  %v1036 = vunpack.c.h.b16 %v202
  %v1037 = vunpack.c.l.b16 %v203
  %v1038 = vunpack.c.h.b16 %v203
  %v1039 = vunpack.c.l.b16 %v204
  %v1040 = vunpack.c.h.b16 %v204
  %v1041 = vunpack.c.l.b16 %v205
  %v1042 = vunpack.c.h.b16 %v205
  %v1043 = vunpack.c.l.b16 %v206
  %v1044 = vunpack.c.h.b16 %v206
  %v1045 = vunpack.c.l.b16 %v207
  %v1046 = vunpack.c.h.b16 %v207
  %v1047 = vunpack.c.l.b16 %v208
  %v1048 = vunpack.c.h.b16 %v208
  %v1049 = vunpack.c.l.b16 %v209
  %v1050 = vunpack.c.h.b16 %v209
  %v1051 = vunpack.c.l.b16 %v210
  %v1052 = vunpack.c.h.b16 %v210
  %v1053 = vunpack.c.l.b16 %v211
  %v1054 = vunpack.c.h.b16 %v211
  %v1055 = vunpack.c.l.b16 %v212
  %v1056 = vunpack.c.h.b16 %v212
  %v1057 = vunpack.c.l.b16 %v213
  %v1058 = vunpack.c.h.b16 %v213
  %v1059 = vunpack.c.l.b16 %v214
  %v1060 = vunpack.c.h.b16 %v214
  %v1061 = vunpack.c.l.b16 %v215
  %v1062 = vunpack.c.h.b16 %v215
  %v1063 = vunpack.c.l.b16 %v216
  %v1064 = vunpack.c.h.b16 %v216
  %v1065 = vunpack.c.l.b16 %v217
  %v1066 = vunpack.c.h.b16 %v217
  %v1067 = vunpack.c.l.b16 %v218
  %v1068 = vunpack.c.h.b16 %v218
  %v1069 = vunpack.c.l.b16 %v219
  %v1070 = vunpack.c.h.b16 %v219
  %v1071 = vunpack.c.l.b16 %v220
  %v1072 = vunpack.c.h.b16 %v220
  %v1073 = vunpack.c.l.b16 %v221
  %v1074 = vunpack.c.h.b16 %v221
  %v1075 = vunpack.c.l.b16 %v222
  %v1076 = vunpack.c.h.b16 %v222
  %v1077 = vunpack.c.l.b16 %v223
  %v1078 = vunpack.c.h.b16 %v223
  %v1079 = vunpack.c.l.b16 %v224
  %v1080 = vunpack.c.h.b16 %v224
  %v1081 = vunpack.c.l.b16 %v225
  %v1082 = vunpack.c.h.b16 %v225
  %v1083 = vunpack.c.l.b16 %v226
  %v1084 = vunpack.c.h.b16 %v226
  %v1085 = vunpack.c.l.b16 %v227
  %v1086 = vunpack.c.h.b16 %v227
  %v1087 = vunpack.c.l.b16 %v228
  %v1088 = vunpack.c.h.b16 %v228
  %v1089 = vunpack.c.l.b16 %v229
  %v1090 = vunpack.c.h.b16 %v229
  %v1091 = vunpack.c.l.b16 %v230
  %v1092 = vunpack.c.h.b16 %v230
  %v1093 = vunpack.c.l.b16 %v231
  %v1094 = vunpack.c.h.b16 %v231
  %v1095 = vunpack.c.l.b16 %v232
  %v1096 = vunpack.c.h.b16 %v232
  %v1097 = vunpack.c.l.b16 %v233
  %v1098 = vunpack.c.h.b16 %v233
  %v1099 = vunpack.c.l.b16 %v234
  %v1100 = vunpack.c.h.b16 %v234
  %v1101 = vunpack.c.l.b16 %v235
  %v1102 = vunpack.c.h.b16 %v235
  %v1103 = vunpack.c.l.b16 %v236
  %v1104 = vunpack.c.h.b16 %v236
  %v1105 = vunpack.c.l.b16 %v237
  %v1106 = vunpack.c.h.b16 %v237
  %v1107 = vunpack.c.l.b16 %v238
  %v1108 = vunpack.c.h.b16 %v238
  %v1109 = vunpack.c.l.b16 %v239
  %v1110 = vunpack.c.h.b16 %v239
  %v1111 = vunpack.c.l.b16 %v240
  %v1112 = vunpack.c.h.b16 %v240
  %v1113 = vunpack.c.l.b16 %v241
  %v1114 = vunpack.c.h.b16 %v241
  %v1115 = vunpack.c.l.b16 %v242
  %v1116 = vunpack.c.h.b16 %v242
  %v1117 = vunpack.c.l.b16 %v243
  %v1118 = vunpack.c.h.b16 %v243
  %v1119 = vunpack.c.l.b16 %v244
  %v1120 = vunpack.c.h.b16 %v244
  %v1121 = vunpack.c.l.b16 %v245
  %v1122 = vunpack.c.h.b16 %v245
  %v1123 = vunpack.c.l.b16 %v246
  %v1124 = vunpack.c.h.b16 %v246
  %v1125 = vunpack.c.l.b16 %v247
  %v1126 = vunpack.c.h.b16 %v247
  %v1127 = vunpack.c.l.b16 %v248
  %v1128 = vunpack.c.h.b16 %v248
  %v1129 = vunpack.c.l.b16 %v249
  %v1130 = vunpack.c.h.b16 %v249
  %v1131 = vunpack.c.l.b16 %v250
  %v1132 = vunpack.c.h.b16 %v250
  %v1133 = vunpack.c.l.b16 %v251
  %v1134 = vunpack.c.h.b16 %v251
  %v1135 = vunpack.c.l.b16 %v252
  %v1136 = vunpack.c.h.b16 %v252
  %v1137 = vunpack.c.l.b16 %v253
  %v1138 = vunpack.c.h.b16 %v253
  %v1139 = vunpack.c.l.b16 %v254
  %v1140 = vunpack.c.h.b16 %v254
  %v1141 = vunpack.c.l.b16 %v255
  %v1142 = vunpack.c.h.b16 %v255
  %v1143 = vunpack.c.l.b16 %v256
  %v1144 = vunpack.c.h.b16 %v256
  %v1145 = vunpack.c.l.b16 %v257
  %v1146 = vunpack.c.h.b16 %v257
  %v1147 = vunpack.c.l.b16 %v258
  %v1148 = vunpack.c.h.b16 %v258
  %v1149 = vunpack.c.l.b16 %v259
  %v1150 = vunpack.c.h.b16 %v259
  %v1151 = vunpack.c.l.b16 %v260
  %v1152 = vunpack.c.h.b16 %v260
  %v1153 = vunpack.c.l.b16 %v261
  %v1154 = vunpack.c.h.b16 %v261
  %v1155 = vunpack.c.l.b16 %v262
  %v1156 = vunpack.c.h.b16 %v262
  %v1157 = vunpack.c.l.b16 %v263
  %v1158 = vunpack.c.h.b16 %v263
  %v1159 = vunpack.c.l.b16 %v264
  %v1160 = vunpack.c.h.b16 %v264
  %v1161 = vunpack.c.l.b16 %v265
  %v1162 = vunpack.c.h.b16 %v265
  %v1163 = vunpack.c.l.b16 %v266
  %v1164 = vunpack.c.h.b16 %v266
  %v1165 = vunpack.c.l.b16 %v267
  %v1166 = vunpack.c.h.b16 %v267
  %v1167 = vunpack.c.l.b16 %v268
  %v1168 = vunpack.c.h.b16 %v268
  %v1169 = vunpack.c.l.b16 %v269
  %v1170 = vunpack.c.h.b16 %v269
  %v1171 = vunpack.c.l.b16 %v270
  %v1172 = vunpack.c.h.b16 %v270
  %v1173 = vunpack.c.l.b16 %v271
  %v1174 = vunpack.c.h.b16 %v271
  %v1175 = vunpack.c.l.b16 %v272
  %v1176 = vunpack.c.h.b16 %v272
  %v1177 = vunpack.c.l.b16 %v273
  %v1178 = vunpack.c.h.b16 %v273
  %v1179 = vunpack.c.l.b16 %v274
  %v1180 = vunpack.c.h.b16 %v274
  %v1181 = vunpack.c.l.b16 %v275
  %v1182 = vunpack.c.h.b16 %v275
  %v1183 = vunpack.c.l.b16 %v276
  %v1184 = vunpack.c.h.b16 %v276
  %v1185 = vunpack.c.l.b16 %v277
  %v1186 = vunpack.c.h.b16 %v277
  %v1187 = vunpack.c.l.b16 %v278
  %v1188 = vunpack.c.h.b16 %v278
  %v1189 = vunpack.c.l.b16 %v279
  %v1190 = vunpack.c.h.b16 %v279
  %v1191 = vunpack.c.l.b16 %v280
  %v1192 = vunpack.c.h.b16 %v280
  %v1193 = vunpack.c.l.b16 %v281
  %v1194 = vunpack.c.h.b16 %v281
  %v1195 = vunpack.c.l.b16 %v282
  %v1196 = vunpack.c.h.b16 %v282
  %v1197 = vunpack.c.l.b16 %v283
  %v1198 = vunpack.c.h.b16 %v283
  %v1199 = vunpack.c.l.b16 %v284
  %v1200 = vunpack.c.h.b16 %v284
  %v1201 = vunpack.c.l.b16 %v285
  %v1202 = vunpack.c.h.b16 %v285
  %v1203 = vunpack.c.l.b16 %v286
  %v1204 = vunpack.c.h.b16 %v286
  %v1205 = vunpack.c.l.b16 %v287
  %v1206 = vunpack.c.h.b16 %v287
  %v1207 = vunpack.c.l.b16 %v288
  %v1208 = vunpack.c.h.b16 %v288
  %v1209 = vunpack.c.l.b16 %v289
  %v1210 = vunpack.c.h.b16 %v289
  %v1211 = vunpack.c.l.b16 %v290
  %v1212 = vunpack.c.h.b16 %v290
  %v1213 = vunpack.c.l.b16 %v291
  %v1214 = vunpack.c.h.b16 %v291
  %v1215 = vunpack.c.l.b16 %v292
  %v1216 = vunpack.c.h.b16 %v292
  %v1217 = vunpack.c.l.b16 %v293
  %v1218 = vunpack.c.h.b16 %v293
  %v1219 = vunpack.c.l.b16 %v294
  %v1220 = vunpack.c.h.b16 %v294
  %v1221 = vunpack.c.l.b16 %v295
  %v1222 = vunpack.c.h.b16 %v295
  %v1223 = vunpack.c.l.b16 %v296
  %v1224 = vunpack.c.h.b16 %v296
  %v1225 = vunpack.c.l.b16 %v297
  %v1226 = vunpack.c.h.b16 %v297
  %v1227 = vunpack.c.l.b16 %v298
  %v1228 = vunpack.c.h.b16 %v298
  %v1229 = vunpack.c.l.b16 %v299
  %v1230 = vunpack.c.h.b16 %v299
  %v1231 = vunpack.c.l.b16 %v300
  %v1232 = vunpack.c.h.b16 %v300
  %v1233 = vunpack.c.l.b16 %v301
  %v1234 = vunpack.c.h.b16 %v301
  %v1235 = vunpack.c.l.b16 %v302
  %v1236 = vunpack.c.h.b16 %v302
  %v1237 = vunpack.c.l.b16 %v303
  %v1238 = vunpack.c.h.b16 %v303
  %v1239 = vunpack.c.l.b16 %v304
  %v1240 = vunpack.c.h.b16 %v304
  %v1241 = vunpack.c.l.b16 %v305
  %v1242 = vunpack.c.h.b16 %v305
  %v1243 = vunpack.c.l.b16 %v306
  %v1244 = vunpack.c.h.b16 %v306
  %v1245 = vunpack.c.l.b16 %v307
  %v1246 = vunpack.c.h.b16 %v307
  %v1247 = vunpack.c.l.b16 %v308
  %v1248 = vunpack.c.h.b16 %v308
  %v1249 = vunpack.c.l.b16 %v309
  %v1250 = vunpack.c.h.b16 %v309
  %v1251 = vunpack.c.l.b16 %v310
  %v1252 = vunpack.c.h.b16 %v310
  %v1253 = vunpack.c.l.b16 %v311
  %v1254 = vunpack.c.h.b16 %v311
  %v1255 = vunpack.c.l.b16 %v312
  %v1256 = vunpack.c.h.b16 %v312
  %v1257 = vunpack.c.l.b16 %v313
  %v1258 = vunpack.c.h.b16 %v313
  %v1259 = vunpack.c.l.b16 %v314
  %v1260 = vunpack.c.h.b16 %v314
  %v1261 = vunpack.c.l.b16 %v315
  %v1262 = vunpack.c.h.b16 %v315
  %v1263 = vunpack.c.l.b16 %v316
  %v1264 = vunpack.c.h.b16 %v316
  %v1265 = vunpack.c.l.b16 %v317
  %v1266 = vunpack.c.h.b16 %v317
  %v1267 = vunpack.c.l.b16 %v318
  %v1268 = vunpack.c.h.b16 %v318
  %v1269 = vunpack.c.l.b16 %v319
  %v1270 = vunpack.c.h.b16 %v319
  %v1271 = vunpack.c.l.b16 %v320
  %v1272 = vunpack.c.h.b16 %v320
  %v1273 = vunpack.c.l.b16 %v321
  %v1274 = vunpack.c.h.b16 %v321
  %v1275 = vunpack.c.l.b16 %v322
  %v1276 = vunpack.c.h.b16 %v322
  %v1277 = vunpack.c.l.b16 %v323
  %v1278 = vunpack.c.h.b16 %v323
  %v1279 = vunpack.c.l.b16 %v324
  %v1280 = vunpack.c.h.b16 %v324
  %v1281 = vunpack.c.l.b16 %v325
  %v1282 = vunpack.c.h.b16 %v325
  %v1283 = vunpack.c.l.b16 %v326
  %v1284 = vunpack.c.h.b16 %v326
  %v1285 = vunpack.c.l.b16 %v327
  %v1286 = vunpack.c.h.b16 %v327
  %v1287 = vunpack.c.l.b16 %v328
  %v1288 = vunpack.c.h.b16 %v328
  %v1289 = vunpack.c.l.b16 %v329
  %v1290 = vunpack.c.h.b16 %v329
  %v1291 = vunpack.c.l.b16 %v330
  %v1292 = vunpack.c.h.b16 %v330
  %v1293 = vunpack.c.l.b16 %v331
  %v1294 = vunpack.c.h.b16 %v331
  %v1295 = vunpack.c.l.b16 %v332
  %v1296 = vunpack.c.h.b16 %v332
  %v1297 = vpack.c.b16 %v729, %v721
  %v1298 = vpack.c.b16 %v730, %v722
  %v1299 = vpack.c.b16 %v731, %v723
  %v1300 = vpack.c.b16 %v732, %v724
  %v1301 = vpack.c.b16 %v733, %v725
  %v1302 = vpack.c.b16 %v734, %v726
  %v1303 = vpack.c.b16 %v735, %v727
  %v1304 = vpack.c.b16 %v736, %v728
  %v1305 = vpack.c.b16 %v745, %v737
  %v1306 = vpack.c.b16 %v746, %v738
  %v1307 = vpack.c.b16 %v747, %v739
  %v1308 = vpack.c.b16 %v748, %v740
  %v1309 = vpack.c.b16 %v749, %v741
  %v1310 = vpack.c.b16 %v750, %v742
  %v1311 = vpack.c.b16 %v751, %v743
  %v1312 = vpack.c.b16 %v752, %v744
  %v1313 = vpack.c.b16 %v761, %v753
  %v1314 = vpack.c.b16 %v762, %v754
  %v1315 = vpack.c.b16 %v763, %v755
  %v1316 = vpack.c.b16 %v764, %v756
  %v1317 = vpack.c.b16 %v765, %v757
  %v1318 = vpack.c.b16 %v766, %v758
  %v1319 = vpack.c.b16 %v767, %v759
  %v1320 = vpack.c.b16 %v768, %v760
  %v1321 = vpack.c.b16 %v777, %v769
  %v1322 = vpack.c.b16 %v778, %v770
  %v1323 = vpack.c.b16 %v779, %v771
  %v1324 = vpack.c.b16 %v780, %v772
  %v1325 = vpack.c.b16 %v781, %v773
  %v1326 = vpack.c.b16 %v782, %v774
  %v1327 = vpack.c.b16 %v783, %v775
  %v1328 = vpack.c.b16 %v784, %v776
  %v1329 = vpack.c.b16 %v793, %v785
  %v1330 = vpack.c.b16 %v794, %v786
  %v1331 = vpack.c.b16 %v795, %v787
  %v1332 = vpack.c.b16 %v796, %v788
  %v1333 = vpack.c.b16 %v797, %v789
  %v1334 = vpack.c.b16 %v798, %v790
  %v1335 = vpack.c.b16 %v799, %v791
  %v1336 = vpack.c.b16 %v800, %v792
  %v1337 = vpack.c.b16 %v809, %v801
  %v1338 = vpack.c.b16 %v810, %v802
  %v1339 = vpack.c.b16 %v811, %v803
  %v1340 = vpack.c.b16 %v812, %v804
  %v1341 = vpack.c.b16 %v813, %v805
  %v1342 = vpack.c.b16 %v814, %v806
  %v1343 = vpack.c.b16 %v815, %v807
  %v1344 = vpack.c.b16 %v816, %v808
  %v1345 = vpack.c.b16 %v825, %v817
  %v1346 = vpack.c.b16 %v826, %v818
  %v1347 = vpack.c.b16 %v827, %v819
  %v1348 = vpack.c.b16 %v828, %v820
  %v1349 = vpack.c.b16 %v829, %v821
  %v1350 = vpack.c.b16 %v830, %v822
  %v1351 = vpack.c.b16 %v831, %v823
  %v1352 = vpack.c.b16 %v832, %v824
  %v1353 = vpack.c.b16 %v841, %v833
  %v1354 = vpack.c.b16 %v842, %v834
  %v1355 = vpack.c.b16 %v843, %v835
  %v1356 = vpack.c.b16 %v844, %v836
  %v1357 = vpack.c.b16 %v845, %v837
  %v1358 = vpack.c.b16 %v846, %v838
  %v1359 = vpack.c.b16 %v847, %v839
  %v1360 = vpack.c.b16 %v848, %v840
  %v1361 = vpack.c.b16 %v857, %v849
  %v1362 = vpack.c.b16 %v858, %v850
  %v1363 = vpack.c.b16 %v859, %v851
  %v1364 = vpack.c.b16 %v860, %v852
  %v1365 = vpack.c.b16 %v861, %v853
  %v1366 = vpack.c.b16 %v862, %v854
  %v1367 = vpack.c.b16 %v863, %v855
  %v1368 = vpack.c.b16 %v864, %v856
  %v1369 = vpack.c.b16 %v873, %v865
  %v1370 = vpack.c.b16 %v874, %v866
  %v1371 = vpack.c.b16 %v875, %v867
  %v1372 = vpack.c.b16 %v876, %v868
  %v1373 = vpack.c.b16 %v877, %v869
  %v1374 = vpack.c.b16 %v878, %v870
  %v1375 = vpack.c.b16 %v879, %v871
  %v1376 = vpack.c.b16 %v880, %v872
  %v1377 = vpack.c.b16 %v889, %v881
  %v1378 = vpack.c.b16 %v890, %v882
  %v1379 = vpack.c.b16 %v891, %v883
  %v1380 = vpack.c.b16 %v892, %v884
  %v1381 = vpack.c.b16 %v893, %v885
  %v1382 = vpack.c.b16 %v894, %v886
  %v1383 = vpack.c.b16 %v895, %v887
  %v1384 = vpack.c.b16 %v896, %v888
  %v1385 = vpack.c.b16 %v905, %v897
  %v1386 = vpack.c.b16 %v906, %v898
  %v1387 = vpack.c.b16 %v907, %v899
  %v1388 = vpack.c.b16 %v908, %v900
  %v1389 = vpack.c.b16 %v909, %v901
  %v1390 = vpack.c.b16 %v910, %v902
  %v1391 = vpack.c.b16 %v911, %v903
  %v1392 = vpack.c.b16 %v912, %v904
  %v1393 = vpack.c.b16 %v921, %v913
  %v1394 = vpack.c.b16 %v922, %v914
  %v1395 = vpack.c.b16 %v923, %v915
  %v1396 = vpack.c.b16 %v924, %v916
  %v1397 = vpack.c.b16 %v925, %v917
  %v1398 = vpack.c.b16 %v926, %v918
  %v1399 = vpack.c.b16 %v927, %v919
  %v1400 = vpack.c.b16 %v928, %v920
  %v1401 = vpack.c.b16 %v937, %v929
  %v1402 = vpack.c.b16 %v938, %v930
  %v1403 = vpack.c.b16 %v939, %v931
  %v1404 = vpack.c.b16 %v940, %v932
  %v1405 = vpack.c.b16 %v941, %v933
  %v1406 = vpack.c.b16 %v942, %v934
  %v1407 = vpack.c.b16 %v943, %v935
  %v1408 = vpack.c.b16 %v944, %v936
  %v1409 = vpack.c.b16 %v953, %v945
  %v1410 = vpack.c.b16 %v954, %v946
  %v1411 = vpack.c.b16 %v955, %v947
  %v1412 = vpack.c.b16 %v956, %v948
  %v1413 = vpack.c.b16 %v957, %v949
  %v1414 = vpack.c.b16 %v958, %v950
  %v1415 = vpack.c.b16 %v959, %v951
  %v1416 = vpack.c.b16 %v960, %v952
  %v1417 = vpack.c.b16 %v969, %v961
  %v1418 = vpack.c.b16 %v970, %v962
  %v1419 = vpack.c.b16 %v971, %v963
  %v1420 = vpack.c.b16 %v972, %v964
  %v1421 = vpack.c.b16 %v973, %v965
  %v1422 = vpack.c.b16 %v974, %v966
  %v1423 = vpack.c.b16 %v975, %v967
  %v1424 = vpack.c.b16 %v976, %v968
  %v1425 = vpack.c.b16 %v985, %v977
  %v1426 = vpack.c.b16 %v986, %v978
  %v1427 = vpack.c.b16 %v987, %v979
  %v1428 = vpack.c.b16 %v988, %v980
  %v1429 = vpack.c.b16 %v989, %v981
  %v1430 = vpack.c.b16 %v990, %v982
  %v1431 = vpack.c.b16 %v991, %v983
  %v1432 = vpack.c.b16 %v992, %v984
  %v1433 = vpack.c.b16 %v1001, %v993
  %v1434 = vpack.c.b16 %v1002, %v994
  %v1435 = vpack.c.b16 %v1003, %v995
  %v1436 = vpack.c.b16 %v1004, %v996
  %v1437 = vpack.c.b16 %v1005, %v997
  %v1438 = vpack.c.b16 %v1006, %v998
  %v1439 = vpack.c.b16 %v1007, %v999
  %v1440 = vpack.c.b16 %v1008, %v1000
  %v1441 = vpack.c.b16 %v1017, %v1009
  %v1442 = vpack.c.b16 %v1018, %v1010
  %v1443 = vpack.c.b16 %v1019, %v1011
  %v1444 = vpack.c.b16 %v1020, %v1012
  %v1445 = vpack.c.b16 %v1021, %v1013
  %v1446 = vpack.c.b16 %v1022, %v1014
  %v1447 = vpack.c.b16 %v1023, %v1015
  %v1448 = vpack.c.b16 %v1024, %v1016
  %v1449 = vpack.c.b16 %v1033, %v1025
  %v1450 = vpack.c.b16 %v1034, %v1026
  %v1451 = vpack.c.b16 %v1035, %v1027
  %v1452 = vpack.c.b16 %v1036, %v1028
  %v1453 = vpack.c.b16 %v1037, %v1029
  %v1454 = vpack.c.b16 %v1038, %v1030
  %v1455 = vpack.c.b16 %v1039, %v1031
  %v1456 = vpack.c.b16 %v1040, %v1032
  %v1457 = vpack.c.b16 %v1049, %v1041
  %v1458 = vpack.c.b16 %v1050, %v1042
  %v1459 = vpack.c.b16 %v1051, %v1043
  %v1460 = vpack.c.b16 %v1052, %v1044
  %v1461 = vpack.c.b16 %v1053, %v1045
  %v1462 = vpack.c.b16 %v1054, %v1046
  %v1463 = vpack.c.b16 %v1055, %v1047
  %v1464 = vpack.c.b16 %v1056, %v1048
  %v1465 = vpack.c.b16 %v1065, %v1057
  %v1466 = vpack.c.b16 %v1066, %v1058
  %v1467 = vpack.c.b16 %v1067, %v1059
  %v1468 = vpack.c.b16 %v1068, %v1060
  %v1469 = vpack.c.b16 %v1069, %v1061
  %v1470 = vpack.c.b16 %v1070, %v1062
  %v1471 = vpack.c.b16 %v1071, %v1063
  %v1472 = vpack.c.b16 %v1072, %v1064
  %v1473 = vpack.c.b16 %v1081, %v1073
  %v1474 = vpack.c.b16 %v1082, %v1074
  %v1475 = vpack.c.b16 %v1083, %v1075
  %v1476 = vpack.c.b16 %v1084, %v1076
  %v1477 = vpack.c.b16 %v1085, %v1077
  %v1478 = vpack.c.b16 %v1086, %v1078
  %v1479 = vpack.c.b16 %v1087, %v1079
  %v1480 = vpack.c.b16 %v1088, %v1080
  %v1481 = vpack.c.b16 %v1097, %v1089
  %v1482 = vpack.c.b16 %v1098, %v1090
  %v1483 = vpack.c.b16 %v1099, %v1091
  %v1484 = vpack.c.b16 %v1100, %v1092
  %v1485 = vpack.c.b16 %v1101, %v1093
  %v1486 = vpack.c.b16 %v1102, %v1094
  %v1487 = vpack.c.b16 %v1103, %v1095
  %v1488 = vpack.c.b16 %v1104, %v1096
  %v1489 = vpack.c.b16 %v1113, %v1105
  %v1490 = vpack.c.b16 %v1114, %v1106
  %v1491 = vpack.c.b16 %v1115, %v1107
  %v1492 = vpack.c.b16 %v1116, %v1108
  %v1493 = vpack.c.b16 %v1117, %v1109
  %v1494 = vpack.c.b16 %v1118, %v1110
  %v1495 = vpack.c.b16 %v1119, %v1111
  %v1496 = vpack.c.b16 %v1120, %v1112
  %v1497 = vpack.c.b16 %v1129, %v1121
  %v1498 = vpack.c.b16 %v1130, %v1122
  %v1499 = vpack.c.b16 %v1131, %v1123
  %v1500 = vpack.c.b16 %v1132, %v1124
  %v1501 = vpack.c.b16 %v1133, %v1125
  %v1502 = vpack.c.b16 %v1134, %v1126
  %v1503 = vpack.c.b16 %v1135, %v1127
  %v1504 = vpack.c.b16 %v1136, %v1128
  %v1505 = vpack.c.b16 %v1145, %v1137
  %v1506 = vpack.c.b16 %v1146, %v1138
  %v1507 = vpack.c.b16 %v1147, %v1139
  %v1508 = vpack.c.b16 %v1148, %v1140
  %v1509 = vpack.c.b16 %v1149, %v1141
  %v1510 = vpack.c.b16 %v1150, %v1142
  %v1511 = vpack.c.b16 %v1151, %v1143
  %v1512 = vpack.c.b16 %v1152, %v1144
  %v1513 = vpack.c.b16 %v1161, %v1153
  %v1514 = vpack.c.b16 %v1162, %v1154
  %v1515 = vpack.c.b16 %v1163, %v1155
  %v1516 = vpack.c.b16 %v1164, %v1156
  %v1517 = vpack.c.b16 %v1165, %v1157
  %v1518 = vpack.c.b16 %v1166, %v1158
  %v1519 = vpack.c.b16 %v1167, %v1159
  %v1520 = vpack.c.b16 %v1168, %v1160
  %v1521 = vpack.c.b16 %v1177, %v1169
  %v1522 = vpack.c.b16 %v1178, %v1170
  %v1523 = vpack.c.b16 %v1179, %v1171
  %v1524 = vpack.c.b16 %v1180, %v1172
  %v1525 = vpack.c.b16 %v1181, %v1173
  %v1526 = vpack.c.b16 %v1182, %v1174
  %v1527 = vpack.c.b16 %v1183, %v1175
  %v1528 = vpack.c.b16 %v1184, %v1176
  %v1529 = vpack.c.b16 %v1193, %v1185
  %v1530 = vpack.c.b16 %v1194, %v1186
  %v1531 = vpack.c.b16 %v1195, %v1187
  %v1532 = vpack.c.b16 %v1196, %v1188
  %v1533 = vpack.c.b16 %v1197, %v1189
  %v1534 = vpack.c.b16 %v1198, %v1190
  %v1535 = vpack.c.b16 %v1199, %v1191
  %v1536 = vpack.c.b16 %v1200, %v1192
  %v1537 = vpack.c.b16 %v1209, %v1201
  %v1538 = vpack.c.b16 %v1210, %v1202
  %v1539 = vpack.c.b16 %v1211, %v1203
  %v1540 = vpack.c.b16 %v1212, %v1204
  %v1541 = vpack.c.b16 %v1213, %v1205
  %v1542 = vpack.c.b16 %v1214, %v1206
  %v1543 = vpack.c.b16 %v1215, %v1207
  %v1544 = vpack.c.b16 %v1216, %v1208
  %v1545 = vpack.c.b16 %v1225, %v1217
  %v1546 = vpack.c.b16 %v1226, %v1218
  %v1547 = vpack.c.b16 %v1227, %v1219
  %v1548 = vpack.c.b16 %v1228, %v1220
  %v1549 = vpack.c.b16 %v1229, %v1221
  %v1550 = vpack.c.b16 %v1230, %v1222
  %v1551 = vpack.c.b16 %v1231, %v1223
  %v1552 = vpack.c.b16 %v1232, %v1224
  %v1553 = vpack.c.b16 %v1241, %v1233
  %v1554 = vpack.c.b16 %v1242, %v1234
  %v1555 = vpack.c.b16 %v1243, %v1235
  %v1556 = vpack.c.b16 %v1244, %v1236
  %v1557 = vpack.c.b16 %v1245, %v1237
  %v1558 = vpack.c.b16 %v1246, %v1238
  %v1559 = vpack.c.b16 %v1247, %v1239
  %v1560 = vpack.c.b16 %v1248, %v1240
  %v1561 = vpack.c.b16 %v1257, %v1249
  %v1562 = vpack.c.b16 %v1258, %v1250
  %v1563 = vpack.c.b16 %v1259, %v1251
  %v1564 = vpack.c.b16 %v1260, %v1252
  %v1565 = vpack.c.b16 %v1261, %v1253
  %v1566 = vpack.c.b16 %v1262, %v1254
  %v1567 = vpack.c.b16 %v1263, %v1255
  %v1568 = vpack.c.b16 %v1264, %v1256
  %v1569 = vpack.c.b16 %v1273, %v1265
  %v1570 = vpack.c.b16 %v1274, %v1266
  %v1571 = vpack.c.b16 %v1275, %v1267
  %v1572 = vpack.c.b16 %v1276, %v1268
  %v1573 = vpack.c.b16 %v1277, %v1269
  %v1574 = vpack.c.b16 %v1278, %v1270
  %v1575 = vpack.c.b16 %v1279, %v1271
  %v1576 = vpack.c.b16 %v1280, %v1272
  %v1577 = vpack.c.b16 %v1289, %v1281
  %v1578 = vpack.c.b16 %v1290, %v1282
  %v1579 = vpack.c.b16 %v1291, %v1283
  %v1580 = vpack.c.b16 %v1292, %v1284
  %v1581 = vpack.c.b16 %v1293, %v1285
  %v1582 = vpack.c.b16 %v1294, %v1286
  %v1583 = vpack.c.b16 %v1295, %v1287
  %v1584 = vpack.c.b16 %v1296, %v1288
  %vm1873 = vcmask 523264
  %v1875 = vsel %vm1873, %v401, 0
  %v1878 = vsel %vm1873, %v406, 0
  %v1881 = vsel %vm1873, %v411, 0
  %v1884 = vsel %vm1873, %v416, 0
  %1886 = vmatprep.subr.bf16.mxu0 %v1298
  %1887 = vmatpush1.bf16.msra.mxu0 %v1297
  %1888 = vmatprep.subr.bf16.mxu0 %v1306
  %1889 = vmatpush1.bf16.msra.mxu0 %v1305
  %1890 = vmatprep.subr.bf16.mxu0 %v1314
  %1891 = vmatpush1.bf16.msra.mxu0 %v1313
  %1892 = vmatprep.subr.bf16.mxu0 %v1322
  %1893 = vmatpush1.bf16.msra.mxu0 %v1321
  %1894 = vmatprep.subr.bf16.mxu0 %v1330
  %1895 = vmatpush1.bf16.msra.mxu0 %v1329
  %1896 = vmatprep.subr.bf16.mxu0 %v1338
  %1897 = vmatpush1.bf16.msra.mxu0 %v1337
  %1898 = vmatprep.subr.bf16.mxu0 %v1346
  %1899 = vmatpush1.bf16.msra.mxu0 %v1345
  %1900 = vmatprep.subr.bf16.mxu0 %v1354
  %1901 = vmatpush1.bf16.msra.mxu0 %v1353
  %1902 = vmatprep.subr.bf16.mxu0 %v1362
  %1903 = vmatpush1.bf16.msra.mxu0 %v1361
  %1904 = vmatprep.subr.bf16.mxu0 %v1370
  %1905 = vmatpush1.bf16.msra.mxu0 %v1369
  %1906 = vmatprep.subr.bf16.mxu0 %v1378
  %1907 = vmatpush1.bf16.msra.mxu0 %v1377
  %1908 = vmatprep.subr.bf16.mxu0 %v1386
  %1909 = vmatpush1.bf16.msra.mxu0 %v1385
  %1910 = vmatprep.subr.bf16.mxu0 %v1394
  %1911 = vmatpush1.bf16.msra.mxu0 %v1393
  %1912 = vmatprep.subr.bf16.mxu0 %v1402
  %1913 = vmatpush1.bf16.msra.mxu0 %v1401
  %1914 = vmatprep.subr.bf16.mxu0 %v1410
  %1915 = vmatpush1.bf16.msra.mxu0 %v1409
  %1916 = vmatprep.subr.bf16.mxu0 %v1418
  %1917 = vmatpush1.bf16.msra.mxu0 %v1417
  %1918 = vmatprep.mubr.bf16.mxu0 %v398
  %1919 = vmatmul.mubr.bf16.gmra.mrb[0].mxu0 %v397
  %v1920 = vpop.f32.mrb[0].mxu0
  %v1921 = vadd.f32 0.0, %v1920
  %v1922 = vpop.f32.mrb[0].mxu0
  %v1923 = vadd.f32 0.0, %v1922
  %v1924 = vpop.f32.mrb[0].mxu0
  %v1925 = vadd.f32 0.0, %v1924
  %v1926 = vpop.f32.mrb[0].mxu0
  %v1927 = vadd.f32 0.0, %v1926
  %1928 = vmatprep.mubr.bf16.mxu0 %v403
  %1929 = vmatmul.mubr.bf16.gmra.mrb[0].mxu0 %v402
  %v1930 = vpop.f32.mrb[0].mxu0
  %v1931 = vadd.f32 0.0, %v1930
  %v1932 = vpop.f32.mrb[0].mxu0
  %v1933 = vadd.f32 0.0, %v1932
  %v1934 = vpop.f32.mrb[0].mxu0
  %v1935 = vadd.f32 0.0, %v1934
  %v1936 = vpop.f32.mrb[0].mxu0
  %v1937 = vadd.f32 0.0, %v1936
  %1938 = vmatprep.mubr.bf16.mxu0 %v408
  %1939 = vmatmul.mubr.bf16.gmra.mrb[0].mxu0 %v407
  %v1940 = vpop.f32.mrb[0].mxu0
  %v1941 = vadd.f32 0.0, %v1940
  %v1942 = vpop.f32.mrb[0].mxu0
  %v1943 = vadd.f32 0.0, %v1942
  %v1944 = vpop.f32.mrb[0].mxu0
  %v1945 = vadd.f32 0.0, %v1944
  %v1946 = vpop.f32.mrb[0].mxu0
  %v1947 = vadd.f32 0.0, %v1946
  %1948 = vmatprep.mubr.bf16.mxu0 %v413
  %1949 = vmatmul.mubr.bf16.gmra.mrb[0].mxu0 %v412
  %v1950 = vpop.f32.mrb[0].mxu0
  %v1951 = vadd.f32 0.0, %v1950
  %v1952 = vpop.f32.mrb[0].mxu0
  %v1953 = vadd.f32 0.0, %v1952
  %v1954 = vpop.f32.mrb[0].mxu0
  %v1955 = vadd.f32 0.0, %v1954
  %v1956 = vpop.f32.mrb[0].mxu0
  %v1957 = vadd.f32 0.0, %v1956
  %1958 = vdwg.mxu0
  %1959 = vmatprep.subr.bf16.mxu0 %v1426
  %1960 = vmatpush1.bf16.msra.mxu0 %v1425
  %1961 = vmatprep.subr.bf16.mxu0 %v1434
  %1962 = vmatpush1.bf16.msra.mxu0 %v1433
  %1963 = vmatprep.subr.bf16.mxu0 %v1442
  %1964 = vmatpush1.bf16.msra.mxu0 %v1441
  %1965 = vmatprep.subr.bf16.mxu0 %v1450
  %1966 = vmatpush1.bf16.msra.mxu0 %v1449
  %1967 = vmatprep.subr.bf16.mxu0 %v1458
  %1968 = vmatpush1.bf16.msra.mxu0 %v1457
  %1969 = vmatprep.subr.bf16.mxu0 %v1466
  %1970 = vmatpush1.bf16.msra.mxu0 %v1465
  %1971 = vmatprep.subr.bf16.mxu0 %v1474
  %1972 = vmatpush1.bf16.msra.mxu0 %v1473
  %1973 = vmatprep.subr.bf16.mxu0 %v1482
  %1974 = vmatpush1.bf16.msra.mxu0 %v1481
  %1975 = vmatprep.subr.bf16.mxu0 %v1490
  %1976 = vmatpush1.bf16.msra.mxu0 %v1489
  %1977 = vmatprep.subr.bf16.mxu0 %v1498
  %1978 = vmatpush1.bf16.msra.mxu0 %v1497
  %1979 = vmatprep.subr.bf16.mxu0 %v1506
  %1980 = vmatpush1.bf16.msra.mxu0 %v1505
  %1981 = vmatprep.subr.bf16.mxu0 %v1514
  %1982 = vmatpush1.bf16.msra.mxu0 %v1513
  %1983 = vmatprep.subr.bf16.mxu0 %v1522
  %1984 = vmatpush1.bf16.msra.mxu0 %v1521
  %1985 = vmatprep.subr.bf16.mxu0 %v1530
  %1986 = vmatpush1.bf16.msra.mxu0 %v1529
  %1987 = vmatprep.subr.bf16.mxu0 %v1538
  %1988 = vmatpush1.bf16.msra.mxu0 %v1537
  %1989 = vmatprep.subr.bf16.mxu0 %v1546
  %1990 = vmatpush1.bf16.msra.mxu0 %v1545
  %1991 = vmatprep.mubr.bf16.mxu0 %v400
  %1992 = vmatmul.mubr.bf16.gmra.mrb[0].mxu0 %v399
  %v1993 = vpop.f32.mrb[0].mxu0
  %v1994 = vadd.f32 %v1921, %v1993
  %v1995 = vpop.f32.mrb[0].mxu0
  %v1996 = vadd.f32 %v1923, %v1995
  %v1997 = vpop.f32.mrb[0].mxu0
  %v1998 = vadd.f32 %v1925, %v1997
  %v1999 = vpop.f32.mrb[0].mxu0
  %v2000 = vadd.f32 %v1927, %v1999
  %2001 = vmatprep.mubr.bf16.mxu0 %v405
  %2002 = vmatmul.mubr.bf16.gmra.mrb[0].mxu0 %v404
  %v2003 = vpop.f32.mrb[0].mxu0
  %v2004 = vadd.f32 %v1931, %v2003
  %v2005 = vpop.f32.mrb[0].mxu0
  %v2006 = vadd.f32 %v1933, %v2005
  %v2007 = vpop.f32.mrb[0].mxu0
  %v2008 = vadd.f32 %v1935, %v2007
  %v2009 = vpop.f32.mrb[0].mxu0
  %v2010 = vadd.f32 %v1937, %v2009
  %2011 = vmatprep.mubr.bf16.mxu0 %v410
  %2012 = vmatmul.mubr.bf16.gmra.mrb[0].mxu0 %v409
  %v2013 = vpop.f32.mrb[0].mxu0
  %v2014 = vadd.f32 %v1941, %v2013
  %v2015 = vpop.f32.mrb[0].mxu0
  %v2016 = vadd.f32 %v1943, %v2015
  %v2017 = vpop.f32.mrb[0].mxu0
  %v2018 = vadd.f32 %v1945, %v2017
  %v2019 = vpop.f32.mrb[0].mxu0
  %v2020 = vadd.f32 %v1947, %v2019
  %2021 = vmatprep.mubr.bf16.mxu0 %v415
  %2022 = vmatmul.mubr.bf16.gmra.mrb[0].mxu0 %v414
  %v2023 = vpop.f32.mrb[0].mxu0
  %v2024 = vadd.f32 %v1951, %v2023
  %v2025 = vpop.f32.mrb[0].mxu0
  %v2026 = vadd.f32 %v1953, %v2025
  %v2027 = vpop.f32.mrb[0].mxu0
  %v2028 = vadd.f32 %v1955, %v2027
  %v2029 = vpop.f32.mrb[0].mxu0
  %v2030 = vadd.f32 %v1957, %v2029
  %2031 = vdwg.mxu0
  %2032 = vmatprep.subr.bf16.mxu0 %v1554
  %2033 = vmatpush1.bf16.msra.mxu0 %v1553
  %2034 = vmatprep.subr.bf16.mxu0 %v1562
  %2035 = vmatpush1.bf16.msra.mxu0 %v1561
  %2036 = vmatprep.subr.bf16.mxu0 %v1570
  %2037 = vmatpush1.bf16.msra.mxu0 %v1569
  %2038 = vmatprep.subr.bf16.mxu0 %v1578
  %2039 = vmatpush1.bf16.msra.mxu0 %v1577
  %2040 = vmatprep.subr.bf16.mxu0 0
  %2041 = vmatpush1.bf16.msra.mxu0 0
  %2042 = vmatprep.subr.bf16.mxu0 0
  %2043 = vmatpush1.bf16.msra.mxu0 0
  %2044 = vmatprep.subr.bf16.mxu0 0
  %2045 = vmatpush1.bf16.msra.mxu0 0
  %2046 = vmatprep.subr.bf16.mxu0 0
  %2047 = vmatpush1.bf16.msra.mxu0 0
  %2048 = vmatprep.subr.bf16.mxu0 0
  %2049 = vmatpush1.bf16.msra.mxu0 0
  %2050 = vmatprep.subr.bf16.mxu0 0
  %2051 = vmatpush1.bf16.msra.mxu0 0
  %2052 = vmatprep.subr.bf16.mxu0 0
  %2053 = vmatpush1.bf16.msra.mxu0 0
  %2054 = vmatprep.subr.bf16.mxu0 0
  %2055 = vmatpush1.bf16.msra.mxu0 0
  %2056 = vmatprep.subr.bf16.mxu0 0
  %2057 = vmatpush1.bf16.msra.mxu0 0
  %2058 = vmatprep.subr.bf16.mxu0 0
  %2059 = vmatpush1.bf16.msra.mxu0 0
  %2060 = vmatprep.subr.bf16.mxu0 0
  %2061 = vmatpush1.bf16.msra.mxu0 0
  %2062 = vmatprep.subr.bf16.mxu0 0
  %2063 = vmatpush1.bf16.msra.mxu0 0
  %2064 = vmatprep.mubr.bf16.mxu0 0
  %2065 = vmatmul.mubr.bf16.gmra.mrb[0].mxu0 %v1875
  %v2066 = vpop.f32.mrb[0].mxu0
  %v2067 = vadd.f32 %v1994, %v2066
  %v2068 = vpop.f32.mrb[0].mxu0
  %v2069 = vadd.f32 %v1996, %v2068
  %v2070 = vpop.f32.mrb[0].mxu0
  %v2071 = vadd.f32 %v1998, %v2070
  %v2072 = vpop.f32.mrb[0].mxu0
  %v2073 = vadd.f32 %v2000, %v2072
  %2074 = vmatprep.mubr.bf16.mxu0 0
  %2075 = vmatmul.mubr.bf16.gmra.mrb[0].mxu0 %v1878
  %v2076 = vpop.f32.mrb[0].mxu0
  %v2077 = vadd.f32 %v2004, %v2076
  %v2078 = vpop.f32.mrb[0].mxu0
  %v2079 = vadd.f32 %v2006, %v2078
  %v2080 = vpop.f32.mrb[0].mxu0
  %v2081 = vadd.f32 %v2008, %v2080
  %v2082 = vpop.f32.mrb[0].mxu0
  %v2083 = vadd.f32 %v2010, %v2082
  %2084 = vmatprep.mubr.bf16.mxu0 0
  %2085 = vmatmul.mubr.bf16.gmra.mrb[0].mxu0 %v1881
  %v2086 = vpop.f32.mrb[0].mxu0
  %v2087 = vadd.f32 %v2014, %v2086
  %v2088 = vpop.f32.mrb[0].mxu0
  %v2089 = vadd.f32 %v2016, %v2088
  %v2090 = vpop.f32.mrb[0].mxu0
  %v2091 = vadd.f32 %v2018, %v2090
  %v2092 = vpop.f32.mrb[0].mxu0
  %v2093 = vadd.f32 %v2020, %v2092
  %2094 = vmatprep.mubr.bf16.mxu0 0
  %2095 = vmatmul.mubr.bf16.gmra.mrb[0].mxu0 %v1884
  %v2096 = vpop.f32.mrb[0].mxu0
  %v2097 = vadd.f32 %v2024, %v2096
  %v2098 = vpop.f32.mrb[0].mxu0
  %v2099 = vadd.f32 %v2026, %v2098
  %v2100 = vpop.f32.mrb[0].mxu0
  %v2101 = vadd.f32 %v2028, %v2100
  %v2102 = vpop.f32.mrb[0].mxu0
  %v2103 = vadd.f32 %v2030, %v2102
  %2104 = vdwg.mxu0
  %2105 = vmatprep.subr.bf16.mxu0 %v1300
  %2106 = vmatpush1.bf16.msra.mxu0 %v1299
  %2107 = vmatprep.subr.bf16.mxu0 %v1308
  %2108 = vmatpush1.bf16.msra.mxu0 %v1307
  %2109 = vmatprep.subr.bf16.mxu0 %v1316
  %2110 = vmatpush1.bf16.msra.mxu0 %v1315
  %2111 = vmatprep.subr.bf16.mxu0 %v1324
  %2112 = vmatpush1.bf16.msra.mxu0 %v1323
  %2113 = vmatprep.subr.bf16.mxu0 %v1332
  %2114 = vmatpush1.bf16.msra.mxu0 %v1331
  %2115 = vmatprep.subr.bf16.mxu0 %v1340
  %2116 = vmatpush1.bf16.msra.mxu0 %v1339
  %2117 = vmatprep.subr.bf16.mxu0 %v1348
  %2118 = vmatpush1.bf16.msra.mxu0 %v1347
  %2119 = vmatprep.subr.bf16.mxu0 %v1356
  %2120 = vmatpush1.bf16.msra.mxu0 %v1355
  %2121 = vmatprep.subr.bf16.mxu0 %v1364
  %2122 = vmatpush1.bf16.msra.mxu0 %v1363
  %2123 = vmatprep.subr.bf16.mxu0 %v1372
  %2124 = vmatpush1.bf16.msra.mxu0 %v1371
  %2125 = vmatprep.subr.bf16.mxu0 %v1380
  %2126 = vmatpush1.bf16.msra.mxu0 %v1379
  %2127 = vmatprep.subr.bf16.mxu0 %v1388
  %2128 = vmatpush1.bf16.msra.mxu0 %v1387
  %2129 = vmatprep.subr.bf16.mxu0 %v1396
  %2130 = vmatpush1.bf16.msra.mxu0 %v1395
  %2131 = vmatprep.subr.bf16.mxu0 %v1404
  %2132 = vmatpush1.bf16.msra.mxu0 %v1403
  %2133 = vmatprep.subr.bf16.mxu0 %v1412
  %2134 = vmatpush1.bf16.msra.mxu0 %v1411
  %2135 = vmatprep.subr.bf16.mxu0 %v1420
  %2136 = vmatpush1.bf16.msra.mxu0 %v1419
  %2137 = vmatprep.mubr.bf16.mxu0 %v398
  %2138 = vmatmul.mubr.bf16.gmra.mrb[0].mxu0 %v397
  %v2139 = vpop.f32.mrb[0].mxu0
  %v2140 = vadd.f32 0.0, %v2139
  %v2141 = vpop.f32.mrb[0].mxu0
  %v2142 = vadd.f32 0.0, %v2141
  %v2143 = vpop.f32.mrb[0].mxu0
  %v2144 = vadd.f32 0.0, %v2143
  %v2145 = vpop.f32.mrb[0].mxu0
  %v2146 = vadd.f32 0.0, %v2145
  %2147 = vmatprep.mubr.bf16.mxu0 %v403
  %2148 = vmatmul.mubr.bf16.gmra.mrb[0].mxu0 %v402
  %v2149 = vpop.f32.mrb[0].mxu0
  %v2150 = vadd.f32 0.0, %v2149
  %v2151 = vpop.f32.mrb[0].mxu0
  %v2152 = vadd.f32 0.0, %v2151
  %v2153 = vpop.f32.mrb[0].mxu0
  %v2154 = vadd.f32 0.0, %v2153
  %v2155 = vpop.f32.mrb[0].mxu0
  %v2156 = vadd.f32 0.0, %v2155
  %2157 = vmatprep.mubr.bf16.mxu0 %v408
  %2158 = vmatmul.mubr.bf16.gmra.mrb[0].mxu0 %v407
  %v2159 = vpop.f32.mrb[0].mxu0
  %v2160 = vadd.f32 0.0, %v2159
  %v2161 = vpop.f32.mrb[0].mxu0
  %v2162 = vadd.f32 0.0, %v2161
  %v2163 = vpop.f32.mrb[0].mxu0
  %v2164 = vadd.f32 0.0, %v2163
  %v2165 = vpop.f32.mrb[0].mxu0
  %v2166 = vadd.f32 0.0, %v2165
  %2167 = vmatprep.mubr.bf16.mxu0 %v413
  %2168 = vmatmul.mubr.bf16.gmra.mrb[0].mxu0 %v412
  %v2169 = vpop.f32.mrb[0].mxu0
  %v2170 = vadd.f32 0.0, %v2169
  %v2171 = vpop.f32.mrb[0].mxu0
  %v2172 = vadd.f32 0.0, %v2171
  %v2173 = vpop.f32.mrb[0].mxu0
  %v2174 = vadd.f32 0.0, %v2173
  %v2175 = vpop.f32.mrb[0].mxu0
  %v2176 = vadd.f32 0.0, %v2175
  %2177 = vdwg.mxu0
  %2178 = vmatprep.subr.bf16.mxu0 %v1428
  %2179 = vmatpush1.bf16.msra.mxu0 %v1427
  %2180 = vmatprep.subr.bf16.mxu0 %v1436
  %2181 = vmatpush1.bf16.msra.mxu0 %v1435
  %2182 = vmatprep.subr.bf16.mxu0 %v1444
  %2183 = vmatpush1.bf16.msra.mxu0 %v1443
  %2184 = vmatprep.subr.bf16.mxu0 %v1452
  %2185 = vmatpush1.bf16.msra.mxu0 %v1451
  %2186 = vmatprep.subr.bf16.mxu0 %v1460
  %2187 = vmatpush1.bf16.msra.mxu0 %v1459
  %2188 = vmatprep.subr.bf16.mxu0 %v1468
  %2189 = vmatpush1.bf16.msra.mxu0 %v1467
  %2190 = vmatprep.subr.bf16.mxu0 %v1476
  %2191 = vmatpush1.bf16.msra.mxu0 %v1475
  %2192 = vmatprep.subr.bf16.mxu0 %v1484
  %2193 = vmatpush1.bf16.msra.mxu0 %v1483
  %2194 = vmatprep.subr.bf16.mxu0 %v1492
  %2195 = vmatpush1.bf16.msra.mxu0 %v1491
  %2196 = vmatprep.subr.bf16.mxu0 %v1500
  %2197 = vmatpush1.bf16.msra.mxu0 %v1499
  %2198 = vmatprep.subr.bf16.mxu0 %v1508
  %2199 = vmatpush1.bf16.msra.mxu0 %v1507
  %2200 = vmatprep.subr.bf16.mxu0 %v1516
  %2201 = vmatpush1.bf16.msra.mxu0 %v1515
  %2202 = vmatprep.subr.bf16.mxu0 %v1524
  %2203 = vmatpush1.bf16.msra.mxu0 %v1523
  %2204 = vmatprep.subr.bf16.mxu0 %v1532
  %2205 = vmatpush1.bf16.msra.mxu0 %v1531
  %2206 = vmatprep.subr.bf16.mxu0 %v1540
  %2207 = vmatpush1.bf16.msra.mxu0 %v1539
  %2208 = vmatprep.subr.bf16.mxu0 %v1548
  %2209 = vmatpush1.bf16.msra.mxu0 %v1547
  %2210 = vmatprep.mubr.bf16.mxu0 %v400
  %2211 = vmatmul.mubr.bf16.gmra.mrb[0].mxu0 %v399
  %v2212 = vpop.f32.mrb[0].mxu0
  %v2213 = vadd.f32 %v2140, %v2212
  %v2214 = vpop.f32.mrb[0].mxu0
  %v2215 = vadd.f32 %v2142, %v2214
  %v2216 = vpop.f32.mrb[0].mxu0
  %v2217 = vadd.f32 %v2144, %v2216
  %v2218 = vpop.f32.mrb[0].mxu0
  %v2219 = vadd.f32 %v2146, %v2218
  %2220 = vmatprep.mubr.bf16.mxu0 %v405
  %2221 = vmatmul.mubr.bf16.gmra.mrb[0].mxu0 %v404
  %v2222 = vpop.f32.mrb[0].mxu0
  %v2223 = vadd.f32 %v2150, %v2222
  %v2224 = vpop.f32.mrb[0].mxu0
  %v2225 = vadd.f32 %v2152, %v2224
  %v2226 = vpop.f32.mrb[0].mxu0
  %v2227 = vadd.f32 %v2154, %v2226
  %v2228 = vpop.f32.mrb[0].mxu0
  %v2229 = vadd.f32 %v2156, %v2228
  %2230 = vmatprep.mubr.bf16.mxu0 %v410
  %2231 = vmatmul.mubr.bf16.gmra.mrb[0].mxu0 %v409
  %v2232 = vpop.f32.mrb[0].mxu0
  %v2233 = vadd.f32 %v2160, %v2232
  %v2234 = vpop.f32.mrb[0].mxu0
  %v2235 = vadd.f32 %v2162, %v2234
  %v2236 = vpop.f32.mrb[0].mxu0
  %v2237 = vadd.f32 %v2164, %v2236
  %v2238 = vpop.f32.mrb[0].mxu0
  %v2239 = vadd.f32 %v2166, %v2238
  %2240 = vmatprep.mubr.bf16.mxu0 %v415
  %2241 = vmatmul.mubr.bf16.gmra.mrb[0].mxu0 %v414
  %v2242 = vpop.f32.mrb[0].mxu0
  %v2243 = vadd.f32 %v2170, %v2242
  %v2244 = vpop.f32.mrb[0].mxu0
  %v2245 = vadd.f32 %v2172, %v2244
  %v2246 = vpop.f32.mrb[0].mxu0
  %v2247 = vadd.f32 %v2174, %v2246
  %v2248 = vpop.f32.mrb[0].mxu0
  %v2249 = vadd.f32 %v2176, %v2248
  %2250 = vdwg.mxu0
  %2251 = vmatprep.subr.bf16.mxu0 %v1556
  %2252 = vmatpush1.bf16.msra.mxu0 %v1555
  %2253 = vmatprep.subr.bf16.mxu0 %v1564
  %2254 = vmatpush1.bf16.msra.mxu0 %v1563
  %2255 = vmatprep.subr.bf16.mxu0 %v1572
  %2256 = vmatpush1.bf16.msra.mxu0 %v1571
  %2257 = vmatprep.subr.bf16.mxu0 %v1580
  %2258 = vmatpush1.bf16.msra.mxu0 %v1579
  %2259 = vmatprep.subr.bf16.mxu0 0
  %2260 = vmatpush1.bf16.msra.mxu0 0
  %2261 = vmatprep.subr.bf16.mxu0 0
  %2262 = vmatpush1.bf16.msra.mxu0 0
  %2263 = vmatprep.subr.bf16.mxu0 0
  %2264 = vmatpush1.bf16.msra.mxu0 0
  %2265 = vmatprep.subr.bf16.mxu0 0
  %2266 = vmatpush1.bf16.msra.mxu0 0
  %2267 = vmatprep.subr.bf16.mxu0 0
  %2268 = vmatpush1.bf16.msra.mxu0 0
  %2269 = vmatprep.subr.bf16.mxu0 0
  %2270 = vmatpush1.bf16.msra.mxu0 0
  %2271 = vmatprep.subr.bf16.mxu0 0
  %2272 = vmatpush1.bf16.msra.mxu0 0
  %2273 = vmatprep.subr.bf16.mxu0 0
  %2274 = vmatpush1.bf16.msra.mxu0 0
  %2275 = vmatprep.subr.bf16.mxu0 0
  %2276 = vmatpush1.bf16.msra.mxu0 0
  %2277 = vmatprep.subr.bf16.mxu0 0
  %2278 = vmatpush1.bf16.msra.mxu0 0
  %2279 = vmatprep.subr.bf16.mxu0 0
  %2280 = vmatpush1.bf16.msra.mxu0 0
  %2281 = vmatprep.subr.bf16.mxu0 0
  %2282 = vmatpush1.bf16.msra.mxu0 0
  %2283 = vmatprep.mubr.bf16.mxu0 0
  %2284 = vmatmul.mubr.bf16.gmra.mrb[0].mxu0 %v1875
  %v2285 = vpop.f32.mrb[0].mxu0
  %v2286 = vadd.f32 %v2213, %v2285
  %v2287 = vpop.f32.mrb[0].mxu0
  %v2288 = vadd.f32 %v2215, %v2287
  %v2289 = vpop.f32.mrb[0].mxu0
  %v2290 = vadd.f32 %v2217, %v2289
  %v2291 = vpop.f32.mrb[0].mxu0
  %v2292 = vadd.f32 %v2219, %v2291
  %2293 = vmatprep.mubr.bf16.mxu0 0
  %2294 = vmatmul.mubr.bf16.gmra.mrb[0].mxu0 %v1878
  %v2295 = vpop.f32.mrb[0].mxu0
  %v2296 = vadd.f32 %v2223, %v2295
  %v2297 = vpop.f32.mrb[0].mxu0
  %v2298 = vadd.f32 %v2225, %v2297
  %v2299 = vpop.f32.mrb[0].mxu0
  %v2300 = vadd.f32 %v2227, %v2299
  %v2301 = vpop.f32.mrb[0].mxu0
  %v2302 = vadd.f32 %v2229, %v2301
  %2303 = vmatprep.mubr.bf16.mxu0 0
  %2304 = vmatmul.mubr.bf16.gmra.mrb[0].mxu0 %v1881
  %v2305 = vpop.f32.mrb[0].mxu0
  %v2306 = vadd.f32 %v2233, %v2305
  %v2307 = vpop.f32.mrb[0].mxu0
  %v2308 = vadd.f32 %v2235, %v2307
  %v2309 = vpop.f32.mrb[0].mxu0
  %v2310 = vadd.f32 %v2237, %v2309
  %v2311 = vpop.f32.mrb[0].mxu0
  %v2312 = vadd.f32 %v2239, %v2311
  %2313 = vmatprep.mubr.bf16.mxu0 0
  %2314 = vmatmul.mubr.bf16.gmra.mrb[0].mxu0 %v1884
  %v2315 = vpop.f32.mrb[0].mxu0
  %v2316 = vadd.f32 %v2243, %v2315
  %v2317 = vpop.f32.mrb[0].mxu0
  %v2318 = vadd.f32 %v2245, %v2317
  %v2319 = vpop.f32.mrb[0].mxu0
  %v2320 = vadd.f32 %v2247, %v2319
  %v2321 = vpop.f32.mrb[0].mxu0
  %v2322 = vadd.f32 %v2249, %v2321
  %2323 = vdwg.mxu0
  %2324 = vmatprep.subr.bf16.mxu0 %v1302
  %2325 = vmatpush1.bf16.msra.mxu0 %v1301
  %2326 = vmatprep.subr.bf16.mxu0 %v1310
  %2327 = vmatpush1.bf16.msra.mxu0 %v1309
  %2328 = vmatprep.subr.bf16.mxu0 %v1318
  %2329 = vmatpush1.bf16.msra.mxu0 %v1317
  %2330 = vmatprep.subr.bf16.mxu0 %v1326
  %2331 = vmatpush1.bf16.msra.mxu0 %v1325
  %2332 = vmatprep.subr.bf16.mxu0 %v1334
  %2333 = vmatpush1.bf16.msra.mxu0 %v1333
  %2334 = vmatprep.subr.bf16.mxu0 %v1342
  %2335 = vmatpush1.bf16.msra.mxu0 %v1341
  %2336 = vmatprep.subr.bf16.mxu0 %v1350
  %2337 = vmatpush1.bf16.msra.mxu0 %v1349
  %2338 = vmatprep.subr.bf16.mxu0 %v1358
  %2339 = vmatpush1.bf16.msra.mxu0 %v1357
  %2340 = vmatprep.subr.bf16.mxu0 %v1366
  %2341 = vmatpush1.bf16.msra.mxu0 %v1365
  %2342 = vmatprep.subr.bf16.mxu0 %v1374
  %2343 = vmatpush1.bf16.msra.mxu0 %v1373
  %2344 = vmatprep.subr.bf16.mxu0 %v1382
  %2345 = vmatpush1.bf16.msra.mxu0 %v1381
  %2346 = vmatprep.subr.bf16.mxu0 %v1390
  %2347 = vmatpush1.bf16.msra.mxu0 %v1389
  %2348 = vmatprep.subr.bf16.mxu0 %v1398
  %2349 = vmatpush1.bf16.msra.mxu0 %v1397
  %2350 = vmatprep.subr.bf16.mxu0 %v1406
  %2351 = vmatpush1.bf16.msra.mxu0 %v1405
  %2352 = vmatprep.subr.bf16.mxu0 %v1414
  %2353 = vmatpush1.bf16.msra.mxu0 %v1413
  %2354 = vmatprep.subr.bf16.mxu0 %v1422
  %2355 = vmatpush1.bf16.msra.mxu0 %v1421
  %2356 = vmatprep.mubr.bf16.mxu0 %v398
  %2357 = vmatmul.mubr.bf16.gmra.mrb[0].mxu0 %v397
  %v2358 = vpop.f32.mrb[0].mxu0
  %v2359 = vadd.f32 0.0, %v2358
  %v2360 = vpop.f32.mrb[0].mxu0
  %v2361 = vadd.f32 0.0, %v2360
  %v2362 = vpop.f32.mrb[0].mxu0
  %v2363 = vadd.f32 0.0, %v2362
  %v2364 = vpop.f32.mrb[0].mxu0
  %v2365 = vadd.f32 0.0, %v2364
  %2366 = vmatprep.mubr.bf16.mxu0 %v403
  %2367 = vmatmul.mubr.bf16.gmra.mrb[0].mxu0 %v402
  %v2368 = vpop.f32.mrb[0].mxu0
  %v2369 = vadd.f32 0.0, %v2368
  %v2370 = vpop.f32.mrb[0].mxu0
  %v2371 = vadd.f32 0.0, %v2370
  %v2372 = vpop.f32.mrb[0].mxu0
  %v2373 = vadd.f32 0.0, %v2372
  %v2374 = vpop.f32.mrb[0].mxu0
  %v2375 = vadd.f32 0.0, %v2374
  %2376 = vmatprep.mubr.bf16.mxu0 %v408
  %2377 = vmatmul.mubr.bf16.gmra.mrb[0].mxu0 %v407
  %v2378 = vpop.f32.mrb[0].mxu0
  %v2379 = vadd.f32 0.0, %v2378
  %v2380 = vpop.f32.mrb[0].mxu0
  %v2381 = vadd.f32 0.0, %v2380
  %v2382 = vpop.f32.mrb[0].mxu0
  %v2383 = vadd.f32 0.0, %v2382
  %v2384 = vpop.f32.mrb[0].mxu0
  %v2385 = vadd.f32 0.0, %v2384
  %2386 = vmatprep.mubr.bf16.mxu0 %v413
  %2387 = vmatmul.mubr.bf16.gmra.mrb[0].mxu0 %v412
  %v2388 = vpop.f32.mrb[0].mxu0
  %v2389 = vadd.f32 0.0, %v2388
  %v2390 = vpop.f32.mrb[0].mxu0
  %v2391 = vadd.f32 0.0, %v2390
  %v2392 = vpop.f32.mrb[0].mxu0
  %v2393 = vadd.f32 0.0, %v2392
  %v2394 = vpop.f32.mrb[0].mxu0
  %v2395 = vadd.f32 0.0, %v2394
  %2396 = vdwg.mxu0
  %2397 = vmatprep.subr.bf16.mxu0 %v1430
  %2398 = vmatpush1.bf16.msra.mxu0 %v1429
  %2399 = vmatprep.subr.bf16.mxu0 %v1438
  %2400 = vmatpush1.bf16.msra.mxu0 %v1437
  %2401 = vmatprep.subr.bf16.mxu0 %v1446
  %2402 = vmatpush1.bf16.msra.mxu0 %v1445
  %2403 = vmatprep.subr.bf16.mxu0 %v1454
  %2404 = vmatpush1.bf16.msra.mxu0 %v1453
  %2405 = vmatprep.subr.bf16.mxu0 %v1462
  %2406 = vmatpush1.bf16.msra.mxu0 %v1461
  %2407 = vmatprep.subr.bf16.mxu0 %v1470
  %2408 = vmatpush1.bf16.msra.mxu0 %v1469
  %2409 = vmatprep.subr.bf16.mxu0 %v1478
  %2410 = vmatpush1.bf16.msra.mxu0 %v1477
  %2411 = vmatprep.subr.bf16.mxu0 %v1486
  %2412 = vmatpush1.bf16.msra.mxu0 %v1485
  %2413 = vmatprep.subr.bf16.mxu0 %v1494
  %2414 = vmatpush1.bf16.msra.mxu0 %v1493
  %2415 = vmatprep.subr.bf16.mxu0 %v1502
  %2416 = vmatpush1.bf16.msra.mxu0 %v1501
  %2417 = vmatprep.subr.bf16.mxu0 %v1510
  %2418 = vmatpush1.bf16.msra.mxu0 %v1509
  %2419 = vmatprep.subr.bf16.mxu0 %v1518
  %2420 = vmatpush1.bf16.msra.mxu0 %v1517
  %2421 = vmatprep.subr.bf16.mxu0 %v1526
  %2422 = vmatpush1.bf16.msra.mxu0 %v1525
  %2423 = vmatprep.subr.bf16.mxu0 %v1534
  %2424 = vmatpush1.bf16.msra.mxu0 %v1533
  %2425 = vmatprep.subr.bf16.mxu0 %v1542
  %2426 = vmatpush1.bf16.msra.mxu0 %v1541
  %2427 = vmatprep.subr.bf16.mxu0 %v1550
  %2428 = vmatpush1.bf16.msra.mxu0 %v1549
  %2429 = vmatprep.mubr.bf16.mxu0 %v400
  %2430 = vmatmul.mubr.bf16.gmra.mrb[0].mxu0 %v399
  %v2431 = vpop.f32.mrb[0].mxu0
  %v2432 = vadd.f32 %v2359, %v2431
  %v2433 = vpop.f32.mrb[0].mxu0
  %v2434 = vadd.f32 %v2361, %v2433
  %v2435 = vpop.f32.mrb[0].mxu0
  %v2436 = vadd.f32 %v2363, %v2435
  %v2437 = vpop.f32.mrb[0].mxu0
  %v2438 = vadd.f32 %v2365, %v2437
  %2439 = vmatprep.mubr.bf16.mxu0 %v405
  %2440 = vmatmul.mubr.bf16.gmra.mrb[0].mxu0 %v404
  %v2441 = vpop.f32.mrb[0].mxu0
  %v2442 = vadd.f32 %v2369, %v2441
  %v2443 = vpop.f32.mrb[0].mxu0
  %v2444 = vadd.f32 %v2371, %v2443
  %v2445 = vpop.f32.mrb[0].mxu0
  %v2446 = vadd.f32 %v2373, %v2445
  %v2447 = vpop.f32.mrb[0].mxu0
  %v2448 = vadd.f32 %v2375, %v2447
  %2449 = vmatprep.mubr.bf16.mxu0 %v410
  %2450 = vmatmul.mubr.bf16.gmra.mrb[0].mxu0 %v409
  %v2451 = vpop.f32.mrb[0].mxu0
  %v2452 = vadd.f32 %v2379, %v2451
  %v2453 = vpop.f32.mrb[0].mxu0
  %v2454 = vadd.f32 %v2381, %v2453
  %v2455 = vpop.f32.mrb[0].mxu0
  %v2456 = vadd.f32 %v2383, %v2455
  %v2457 = vpop.f32.mrb[0].mxu0
  %v2458 = vadd.f32 %v2385, %v2457
  %2459 = vmatprep.mubr.bf16.mxu0 %v415
  %2460 = vmatmul.mubr.bf16.gmra.mrb[0].mxu0 %v414
  %v2461 = vpop.f32.mrb[0].mxu0
  %v2462 = vadd.f32 %v2389, %v2461
  %v2463 = vpop.f32.mrb[0].mxu0
  %v2464 = vadd.f32 %v2391, %v2463
  %v2465 = vpop.f32.mrb[0].mxu0
  %v2466 = vadd.f32 %v2393, %v2465
  %v2467 = vpop.f32.mrb[0].mxu0
  %v2468 = vadd.f32 %v2395, %v2467
  %2469 = vdwg.mxu0
  %2470 = vmatprep.subr.bf16.mxu0 %v1558
  %2471 = vmatpush1.bf16.msra.mxu0 %v1557
  %2472 = vmatprep.subr.bf16.mxu0 %v1566
  %2473 = vmatpush1.bf16.msra.mxu0 %v1565
  %2474 = vmatprep.subr.bf16.mxu0 %v1574
  %2475 = vmatpush1.bf16.msra.mxu0 %v1573
  %2476 = vmatprep.subr.bf16.mxu0 %v1582
  %2477 = vmatpush1.bf16.msra.mxu0 %v1581
  %2478 = vmatprep.subr.bf16.mxu0 0
  %2479 = vmatpush1.bf16.msra.mxu0 0
  %2480 = vmatprep.subr.bf16.mxu0 0
  %2481 = vmatpush1.bf16.msra.mxu0 0
  %2482 = vmatprep.subr.bf16.mxu0 0
  %2483 = vmatpush1.bf16.msra.mxu0 0
  %2484 = vmatprep.subr.bf16.mxu0 0
  %2485 = vmatpush1.bf16.msra.mxu0 0
  %2486 = vmatprep.subr.bf16.mxu0 0
  %2487 = vmatpush1.bf16.msra.mxu0 0
  %2488 = vmatprep.subr.bf16.mxu0 0
  %2489 = vmatpush1.bf16.msra.mxu0 0
  %2490 = vmatprep.subr.bf16.mxu0 0
  %2491 = vmatpush1.bf16.msra.mxu0 0
  %2492 = vmatprep.subr.bf16.mxu0 0
  %2493 = vmatpush1.bf16.msra.mxu0 0
  %2494 = vmatprep.subr.bf16.mxu0 0
  %2495 = vmatpush1.bf16.msra.mxu0 0
  %2496 = vmatprep.subr.bf16.mxu0 0
  %2497 = vmatpush1.bf16.msra.mxu0 0
  %2498 = vmatprep.subr.bf16.mxu0 0
  %2499 = vmatpush1.bf16.msra.mxu0 0
  %2500 = vmatprep.subr.bf16.mxu0 0
  %2501 = vmatpush1.bf16.msra.mxu0 0
  %2502 = vmatprep.mubr.bf16.mxu0 0
  %2503 = vmatmul.mubr.bf16.gmra.mrb[0].mxu0 %v1875
  %v2504 = vpop.f32.mrb[0].mxu0
  %v2505 = vadd.f32 %v2432, %v2504
  %v2506 = vpop.f32.mrb[0].mxu0
  %v2507 = vadd.f32 %v2434, %v2506
  %v2508 = vpop.f32.mrb[0].mxu0
  %v2509 = vadd.f32 %v2436, %v2508
  %v2510 = vpop.f32.mrb[0].mxu0
  %v2511 = vadd.f32 %v2438, %v2510
  %2512 = vmatprep.mubr.bf16.mxu0 0
  %2513 = vmatmul.mubr.bf16.gmra.mrb[0].mxu0 %v1878
  %v2514 = vpop.f32.mrb[0].mxu0
  %v2515 = vadd.f32 %v2442, %v2514
  %v2516 = vpop.f32.mrb[0].mxu0
  %v2517 = vadd.f32 %v2444, %v2516
  %v2518 = vpop.f32.mrb[0].mxu0
  %v2519 = vadd.f32 %v2446, %v2518
  %v2520 = vpop.f32.mrb[0].mxu0
  %v2521 = vadd.f32 %v2448, %v2520
  %2522 = vmatprep.mubr.bf16.mxu0 0
  %2523 = vmatmul.mubr.bf16.gmra.mrb[0].mxu0 %v1881
  %v2524 = vpop.f32.mrb[0].mxu0
  %v2525 = vadd.f32 %v2452, %v2524
  %v2526 = vpop.f32.mrb[0].mxu0
  %v2527 = vadd.f32 %v2454, %v2526
  %v2528 = vpop.f32.mrb[0].mxu0
  %v2529 = vadd.f32 %v2456, %v2528
  %v2530 = vpop.f32.mrb[0].mxu0
  %v2531 = vadd.f32 %v2458, %v2530
  %2532 = vmatprep.mubr.bf16.mxu0 0
  %2533 = vmatmul.mubr.bf16.gmra.mrb[0].mxu0 %v1884
  %v2534 = vpop.f32.mrb[0].mxu0
  %v2535 = vadd.f32 %v2462, %v2534
  %v2536 = vpop.f32.mrb[0].mxu0
  %v2537 = vadd.f32 %v2464, %v2536
  %v2538 = vpop.f32.mrb[0].mxu0
  %v2539 = vadd.f32 %v2466, %v2538
  %v2540 = vpop.f32.mrb[0].mxu0
  %v2541 = vadd.f32 %v2468, %v2540
  %2542 = vdwg.mxu0
  %2543 = vmatprep.subr.bf16.mxu0 %v1304
  %2544 = vmatpush1.bf16.msra.mxu0 %v1303
  %2545 = vmatprep.subr.bf16.mxu0 %v1312
  %2546 = vmatpush1.bf16.msra.mxu0 %v1311
  %2547 = vmatprep.subr.bf16.mxu0 %v1320
  %2548 = vmatpush1.bf16.msra.mxu0 %v1319
  %2549 = vmatprep.subr.bf16.mxu0 %v1328
  %2550 = vmatpush1.bf16.msra.mxu0 %v1327
  %2551 = vmatprep.subr.bf16.mxu0 %v1336
  %2552 = vmatpush1.bf16.msra.mxu0 %v1335
  %2553 = vmatprep.subr.bf16.mxu0 %v1344
  %2554 = vmatpush1.bf16.msra.mxu0 %v1343
  %2555 = vmatprep.subr.bf16.mxu0 %v1352
  %2556 = vmatpush1.bf16.msra.mxu0 %v1351
  %2557 = vmatprep.subr.bf16.mxu0 %v1360
  %2558 = vmatpush1.bf16.msra.mxu0 %v1359
  %2559 = vmatprep.subr.bf16.mxu0 %v1368
  %2560 = vmatpush1.bf16.msra.mxu0 %v1367
  %2561 = vmatprep.subr.bf16.mxu0 %v1376
  %2562 = vmatpush1.bf16.msra.mxu0 %v1375
  %2563 = vmatprep.subr.bf16.mxu0 %v1384
  %2564 = vmatpush1.bf16.msra.mxu0 %v1383
  %2565 = vmatprep.subr.bf16.mxu0 %v1392
  %2566 = vmatpush1.bf16.msra.mxu0 %v1391
  %2567 = vmatprep.subr.bf16.mxu0 %v1400
  %2568 = vmatpush1.bf16.msra.mxu0 %v1399
  %2569 = vmatprep.subr.bf16.mxu0 %v1408
  %2570 = vmatpush1.bf16.msra.mxu0 %v1407
  %2571 = vmatprep.subr.bf16.mxu0 %v1416
  %2572 = vmatpush1.bf16.msra.mxu0 %v1415
  %2573 = vmatprep.subr.bf16.mxu0 %v1424
  %2574 = vmatpush1.bf16.msra.mxu0 %v1423
  %2575 = vmatprep.mubr.bf16.mxu0 %v398
  %2576 = vmatmul.mubr.bf16.gmra.mrb[0].mxu0 %v397
  %v2577 = vpop.f32.mrb[0].mxu0
  %v2578 = vadd.f32 0.0, %v2577
  %v2579 = vpop.f32.mrb[0].mxu0
  %v2580 = vadd.f32 0.0, %v2579
  %v2581 = vpop.f32.mrb[0].mxu0
  %v2582 = vadd.f32 0.0, %v2581
  %v2583 = vpop.f32.mrb[0].mxu0
  %v2584 = vadd.f32 0.0, %v2583
  %2585 = vmatprep.mubr.bf16.mxu0 %v403
  %2586 = vmatmul.mubr.bf16.gmra.mrb[0].mxu0 %v402
  %v2587 = vpop.f32.mrb[0].mxu0
  %v2588 = vadd.f32 0.0, %v2587
  %v2589 = vpop.f32.mrb[0].mxu0
  %v2590 = vadd.f32 0.0, %v2589
  %v2591 = vpop.f32.mrb[0].mxu0
  %v2592 = vadd.f32 0.0, %v2591
  %v2593 = vpop.f32.mrb[0].mxu0
  %v2594 = vadd.f32 0.0, %v2593
  %2595 = vmatprep.mubr.bf16.mxu0 %v408
  %2596 = vmatmul.mubr.bf16.gmra.mrb[0].mxu0 %v407
  %v2597 = vpop.f32.mrb[0].mxu0
  %v2598 = vadd.f32 0.0, %v2597
  %v2599 = vpop.f32.mrb[0].mxu0
  %v2600 = vadd.f32 0.0, %v2599
  %v2601 = vpop.f32.mrb[0].mxu0
  %v2602 = vadd.f32 0.0, %v2601
  %v2603 = vpop.f32.mrb[0].mxu0
  %v2604 = vadd.f32 0.0, %v2603
  %2605 = vmatprep.mubr.bf16.mxu0 %v413
  %2606 = vmatmul.mubr.bf16.gmra.mrb[0].mxu0 %v412
  %v2607 = vpop.f32.mrb[0].mxu0
  %v2608 = vadd.f32 0.0, %v2607
  %v2609 = vpop.f32.mrb[0].mxu0
  %v2610 = vadd.f32 0.0, %v2609
  %v2611 = vpop.f32.mrb[0].mxu0
  %v2612 = vadd.f32 0.0, %v2611
  %v2613 = vpop.f32.mrb[0].mxu0
  %v2614 = vadd.f32 0.0, %v2613
  %2615 = vdwg.mxu0
  %2616 = vmatprep.subr.bf16.mxu0 %v1432
  %2617 = vmatpush1.bf16.msra.mxu0 %v1431
  %2618 = vmatprep.subr.bf16.mxu0 %v1440
  %2619 = vmatpush1.bf16.msra.mxu0 %v1439
  %2620 = vmatprep.subr.bf16.mxu0 %v1448
  %2621 = vmatpush1.bf16.msra.mxu0 %v1447
  %2622 = vmatprep.subr.bf16.mxu0 %v1456
  %2623 = vmatpush1.bf16.msra.mxu0 %v1455
  %2624 = vmatprep.subr.bf16.mxu0 %v1464
  %2625 = vmatpush1.bf16.msra.mxu0 %v1463
  %2626 = vmatprep.subr.bf16.mxu0 %v1472
  %2627 = vmatpush1.bf16.msra.mxu0 %v1471
  %2628 = vmatprep.subr.bf16.mxu0 %v1480
  %2629 = vmatpush1.bf16.msra.mxu0 %v1479
  %2630 = vmatprep.subr.bf16.mxu0 %v1488
  %2631 = vmatpush1.bf16.msra.mxu0 %v1487
  %2632 = vmatprep.subr.bf16.mxu0 %v1496
  %2633 = vmatpush1.bf16.msra.mxu0 %v1495
  %2634 = vmatprep.subr.bf16.mxu0 %v1504
  %2635 = vmatpush1.bf16.msra.mxu0 %v1503
  %2636 = vmatprep.subr.bf16.mxu0 %v1512
  %2637 = vmatpush1.bf16.msra.mxu0 %v1511
  %2638 = vmatprep.subr.bf16.mxu0 %v1520
  %2639 = vmatpush1.bf16.msra.mxu0 %v1519
  %2640 = vmatprep.subr.bf16.mxu0 %v1528
  %2641 = vmatpush1.bf16.msra.mxu0 %v1527
  %2642 = vmatprep.subr.bf16.mxu0 %v1536
  %2643 = vmatpush1.bf16.msra.mxu0 %v1535
  %2644 = vmatprep.subr.bf16.mxu0 %v1544
  %2645 = vmatpush1.bf16.msra.mxu0 %v1543
  %2646 = vmatprep.subr.bf16.mxu0 %v1552
  %2647 = vmatpush1.bf16.msra.mxu0 %v1551
  %2648 = vmatprep.mubr.bf16.mxu0 %v400
  %2649 = vmatmul.mubr.bf16.gmra.mrb[0].mxu0 %v399
  %v2650 = vpop.f32.mrb[0].mxu0
  %v2651 = vadd.f32 %v2578, %v2650
  %v2652 = vpop.f32.mrb[0].mxu0
  %v2653 = vadd.f32 %v2580, %v2652
  %v2654 = vpop.f32.mrb[0].mxu0
  %v2655 = vadd.f32 %v2582, %v2654
  %v2656 = vpop.f32.mrb[0].mxu0
  %v2657 = vadd.f32 %v2584, %v2656
  %2658 = vmatprep.mubr.bf16.mxu0 %v405
  %2659 = vmatmul.mubr.bf16.gmra.mrb[0].mxu0 %v404
  %v2660 = vpop.f32.mrb[0].mxu0
  %v2661 = vadd.f32 %v2588, %v2660
  %v2662 = vpop.f32.mrb[0].mxu0
  %v2663 = vadd.f32 %v2590, %v2662
  %v2664 = vpop.f32.mrb[0].mxu0
  %v2665 = vadd.f32 %v2592, %v2664
  %v2666 = vpop.f32.mrb[0].mxu0
  %v2667 = vadd.f32 %v2594, %v2666
  %2668 = vmatprep.mubr.bf16.mxu0 %v410
  %2669 = vmatmul.mubr.bf16.gmra.mrb[0].mxu0 %v409
  %v2670 = vpop.f32.mrb[0].mxu0
  %v2671 = vadd.f32 %v2598, %v2670
  %v2672 = vpop.f32.mrb[0].mxu0
  %v2673 = vadd.f32 %v2600, %v2672
  %v2674 = vpop.f32.mrb[0].mxu0
  %v2675 = vadd.f32 %v2602, %v2674
  %v2676 = vpop.f32.mrb[0].mxu0
  %v2677 = vadd.f32 %v2604, %v2676
  %2678 = vmatprep.mubr.bf16.mxu0 %v415
  %2679 = vmatmul.mubr.bf16.gmra.mrb[0].mxu0 %v414
  %v2680 = vpop.f32.mrb[0].mxu0
  %v2681 = vadd.f32 %v2608, %v2680
  %v2682 = vpop.f32.mrb[0].mxu0
  %v2683 = vadd.f32 %v2610, %v2682
  %v2684 = vpop.f32.mrb[0].mxu0
  %v2685 = vadd.f32 %v2612, %v2684
  %v2686 = vpop.f32.mrb[0].mxu0
  %v2687 = vadd.f32 %v2614, %v2686
  %2688 = vdwg.mxu0
  %2689 = vmatprep.subr.bf16.mxu0 %v1560
  %2690 = vmatpush1.bf16.msra.mxu0 %v1559
  %2691 = vmatprep.subr.bf16.mxu0 %v1568
  %2692 = vmatpush1.bf16.msra.mxu0 %v1567
  %2693 = vmatprep.subr.bf16.mxu0 %v1576
  %2694 = vmatpush1.bf16.msra.mxu0 %v1575
  %2695 = vmatprep.subr.bf16.mxu0 %v1584
  %2696 = vmatpush1.bf16.msra.mxu0 %v1583
  %2697 = vmatprep.subr.bf16.mxu0 0
  %2698 = vmatpush1.bf16.msra.mxu0 0
  %2699 = vmatprep.subr.bf16.mxu0 0
  %2700 = vmatpush1.bf16.msra.mxu0 0
  %2701 = vmatprep.subr.bf16.mxu0 0
  %2702 = vmatpush1.bf16.msra.mxu0 0
  %2703 = vmatprep.subr.bf16.mxu0 0
  %2704 = vmatpush1.bf16.msra.mxu0 0
  %2705 = vmatprep.subr.bf16.mxu0 0
  %2706 = vmatpush1.bf16.msra.mxu0 0
  %2707 = vmatprep.subr.bf16.mxu0 0
  %2708 = vmatpush1.bf16.msra.mxu0 0
  %2709 = vmatprep.subr.bf16.mxu0 0
  %2710 = vmatpush1.bf16.msra.mxu0 0
  %2711 = vmatprep.subr.bf16.mxu0 0
  %2712 = vmatpush1.bf16.msra.mxu0 0
  %2713 = vmatprep.subr.bf16.mxu0 0
  %2714 = vmatpush1.bf16.msra.mxu0 0
  %2715 = vmatprep.subr.bf16.mxu0 0
  %2716 = vmatpush1.bf16.msra.mxu0 0
  %2717 = vmatprep.subr.bf16.mxu0 0
  %2718 = vmatpush1.bf16.msra.mxu0 0
  %2719 = vmatprep.subr.bf16.mxu0 0
  %2720 = vmatpush1.bf16.msra.mxu0 0
  %2721 = vmatprep.mubr.bf16.mxu0 0
  %2722 = vmatmul.mubr.bf16.gmra.mrb[0].mxu0 %v1875
  %v2723 = vpop.f32.mrb[0].mxu0
  %v2724 = vadd.f32 %v2651, %v2723
  %v2725 = vpop.f32.mrb[0].mxu0
  %v2726 = vadd.f32 %v2653, %v2725
  %v2727 = vpop.f32.mrb[0].mxu0
  %v2728 = vadd.f32 %v2655, %v2727
  %v2729 = vpop.f32.mrb[0].mxu0
  %v2730 = vadd.f32 %v2657, %v2729
  %2731 = vmatprep.mubr.bf16.mxu0 0
  %2732 = vmatmul.mubr.bf16.gmra.mrb[0].mxu0 %v1878
  %v2733 = vpop.f32.mrb[0].mxu0
  %v2734 = vadd.f32 %v2661, %v2733
  %v2735 = vpop.f32.mrb[0].mxu0
  %v2736 = vadd.f32 %v2663, %v2735
  %v2737 = vpop.f32.mrb[0].mxu0
  %v2738 = vadd.f32 %v2665, %v2737
  %v2739 = vpop.f32.mrb[0].mxu0
  %v2740 = vadd.f32 %v2667, %v2739
  %2741 = vmatprep.mubr.bf16.mxu0 0
  %2742 = vmatmul.mubr.bf16.gmra.mrb[0].mxu0 %v1881
  %v2743 = vpop.f32.mrb[0].mxu0
  %v2744 = vadd.f32 %v2671, %v2743
  %v2745 = vpop.f32.mrb[0].mxu0
  %v2746 = vadd.f32 %v2673, %v2745
  %v2747 = vpop.f32.mrb[0].mxu0
  %v2748 = vadd.f32 %v2675, %v2747
  %v2749 = vpop.f32.mrb[0].mxu0
  %v2750 = vadd.f32 %v2677, %v2749
  %2751 = vmatprep.mubr.bf16.mxu0 0
  %2752 = vmatmul.mubr.bf16.gmra.mrb[0].mxu0 %v1884
  %v2753 = vpop.f32.mrb[0].mxu0
  %v2754 = vadd.f32 %v2681, %v2753
  %v2755 = vpop.f32.mrb[0].mxu0
  %v2756 = vadd.f32 %v2683, %v2755
  %v2757 = vpop.f32.mrb[0].mxu0
  %v2758 = vadd.f32 %v2685, %v2757
  %v2759 = vpop.f32.mrb[0].mxu0
  %v2760 = vadd.f32 %v2687, %v2759
  %2761 = vdwg.mxu0
  %v2762 = vld [vmem:[%s2] sm:$0xff]
  %v2763 = vld [vmem:[%s2 + $0x8] sm:$0xff]
  %v2764 = vld [vmem:[%s2 + $0x10] sm:$0xff]
  %v2765 = vld [vmem:[%s2 + $0x18] sm:$0xff]
  %v2766 = vld [vmem:[%s2 + $0x20] sm:$0xff]
  %v2767 = vld [vmem:[%s2 + $0x28] sm:$0xff]
  %v2768 = vld [vmem:[%s2 + $0x30] sm:$0xff]
  %v2769 = vld [vmem:[%s2 + $0x38] sm:$0xff]
  %2771 = vset.pattern.permute.xlu0 0
  %2772 = vperm.xlu0 %2771, %v2762
  %v2773 = vpop.permute.xlu0 %2772
  %2776 = vset.pattern.permute.xlu0 0
  %2777 = vperm.xlu0 %2776, %v2763
  %v2778 = vpop.permute.xlu0 %2777
  %2781 = vset.pattern.permute.xlu0 0
  %2782 = vperm.xlu0 %2781, %v2764
  %v2783 = vpop.permute.xlu0 %2782
  %2786 = vset.pattern.permute.xlu0 0
  %2787 = vperm.xlu0 %2786, %v2765
  %v2788 = vpop.permute.xlu0 %2787
  %2791 = vset.pattern.permute.xlu0 0
  %2792 = vperm.xlu0 %2791, %v2766
  %v2793 = vpop.permute.xlu0 %2792
  %2796 = vset.pattern.permute.xlu0 0
  %2797 = vperm.xlu0 %2796, %v2767
  %v2798 = vpop.permute.xlu0 %2797
  %2801 = vset.pattern.permute.xlu0 0
  %2802 = vperm.xlu0 %2801, %v2768
  %v2803 = vpop.permute.xlu0 %2802
  %2806 = vset.pattern.permute.xlu0 0
  %2807 = vperm.xlu0 %2806, %v2769
  %v2808 = vpop.permute.xlu0 %2807
  %v2810 = vmul.f32 %v2067, %v2773
  %v2811 = vmul.f32 %v2069, %v2773
  %v2812 = vmul.f32 %v2286, %v2773
  %v2813 = vmul.f32 %v2288, %v2773
  %v2814 = vmul.f32 %v2505, %v2773
  %v2815 = vmul.f32 %v2507, %v2773
  %v2816 = vmul.f32 %v2724, %v2773
  %v2817 = vmul.f32 %v2726, %v2773
  %v2818 = vmul.f32 %v2071, %v2778
  %v2819 = vmul.f32 %v2073, %v2778
  %v2820 = vmul.f32 %v2290, %v2778
  %v2821 = vmul.f32 %v2292, %v2778
  %v2822 = vmul.f32 %v2509, %v2778
  %v2823 = vmul.f32 %v2511, %v2778
  %v2824 = vmul.f32 %v2728, %v2778
  %v2825 = vmul.f32 %v2730, %v2778
  %v2826 = vmul.f32 %v2077, %v2783
  %v2827 = vmul.f32 %v2079, %v2783
  %v2828 = vmul.f32 %v2296, %v2783
  %v2829 = vmul.f32 %v2298, %v2783
  %v2830 = vmul.f32 %v2515, %v2783
  %v2831 = vmul.f32 %v2517, %v2783
  %v2832 = vmul.f32 %v2734, %v2783
  %v2833 = vmul.f32 %v2736, %v2783
  %v2834 = vmul.f32 %v2081, %v2788
  %v2835 = vmul.f32 %v2083, %v2788
  %v2836 = vmul.f32 %v2300, %v2788
  %v2837 = vmul.f32 %v2302, %v2788
  %v2838 = vmul.f32 %v2519, %v2788
  %v2839 = vmul.f32 %v2521, %v2788
  %v2840 = vmul.f32 %v2738, %v2788
  %v2841 = vmul.f32 %v2740, %v2788
  %v2842 = vmul.f32 %v2087, %v2793
  %v2843 = vmul.f32 %v2089, %v2793
  %v2844 = vmul.f32 %v2306, %v2793
  %v2845 = vmul.f32 %v2308, %v2793
  %v2846 = vmul.f32 %v2525, %v2793
  %v2847 = vmul.f32 %v2527, %v2793
  %v2848 = vmul.f32 %v2744, %v2793
  %v2849 = vmul.f32 %v2746, %v2793
  %v2850 = vmul.f32 %v2091, %v2798
  %v2851 = vmul.f32 %v2093, %v2798
  %v2852 = vmul.f32 %v2310, %v2798
  %v2853 = vmul.f32 %v2312, %v2798
  %v2854 = vmul.f32 %v2529, %v2798
  %v2855 = vmul.f32 %v2531, %v2798
  %v2856 = vmul.f32 %v2748, %v2798
  %v2857 = vmul.f32 %v2750, %v2798
  %v2858 = vmul.f32 %v2097, %v2803
  %v2859 = vmul.f32 %v2099, %v2803
  %v2860 = vmul.f32 %v2316, %v2803
  %v2861 = vmul.f32 %v2318, %v2803
  %v2862 = vmul.f32 %v2535, %v2803
  %v2863 = vmul.f32 %v2537, %v2803
  %v2864 = vmul.f32 %v2754, %v2803
  %v2865 = vmul.f32 %v2756, %v2803
  %v2866 = vmul.f32 %v2101, %v2808
  %v2867 = vmul.f32 %v2103, %v2808
  %v2868 = vmul.f32 %v2320, %v2808
  %v2869 = vmul.f32 %v2322, %v2808
  %v2870 = vmul.f32 %v2539, %v2808
  %v2871 = vmul.f32 %v2541, %v2808
  %v2872 = vmul.f32 %v2758, %v2808
  %v2873 = vmul.f32 %v2760, %v2808
  %v2874 = vld [vmem:[%s3] sm:$0xff]
  %v2875 = vld [vmem:[%s3 + $0x8] sm:$0xff]
  %v2876 = vld [vmem:[%s3 + $0x10] sm:$0xff]
  %v2877 = vld [vmem:[%s3 + $0x18] sm:$0xff]
  %v2878 = vld [vmem:[%s3 + $0x20] sm:$0xff]
  %v2879 = vld [vmem:[%s3 + $0x28] sm:$0xff]
  %v2880 = vld [vmem:[%s3 + $0x30] sm:$0xff]
  %v2881 = vld [vmem:[%s3 + $0x38] sm:$0xff]
  %2883 = vset.pattern.permute.xlu0 0
  %2884 = vperm.xlu0 %2883, %v2874
  %v2885 = vpop.permute.xlu0 %2884
  %2888 = vset.pattern.permute.xlu0 0
  %2889 = vperm.xlu0 %2888, %v2875
  %v2890 = vpop.permute.xlu0 %2889
  %2893 = vset.pattern.permute.xlu0 0
  %2894 = vperm.xlu0 %2893, %v2876
  %v2895 = vpop.permute.xlu0 %2894
  %2898 = vset.pattern.permute.xlu0 0
  %2899 = vperm.xlu0 %2898, %v2877
  %v2900 = vpop.permute.xlu0 %2899
  %2903 = vset.pattern.permute.xlu0 0
  %2904 = vperm.xlu0 %2903, %v2878
  %v2905 = vpop.permute.xlu0 %2904
  %2908 = vset.pattern.permute.xlu0 0
  %2909 = vperm.xlu0 %2908, %v2879
  %v2910 = vpop.permute.xlu0 %2909
  %2913 = vset.pattern.permute.xlu0 0
  %2914 = vperm.xlu0 %2913, %v2880
  %v2915 = vpop.permute.xlu0 %2914
  %2918 = vset.pattern.permute.xlu0 0
  %2919 = vperm.xlu0 %2918, %v2881
  %v2920 = vpop.permute.xlu0 %2919
  %v2922 = vadd.f32 %v2810, %v2885
  %v2923 = vadd.f32 %v2811, %v2885
  %v2924 = vadd.f32 %v2812, %v2885
  %v2925 = vadd.f32 %v2813, %v2885
  %v2926 = vadd.f32 %v2814, %v2885
  %v2927 = vadd.f32 %v2815, %v2885
  %v2928 = vadd.f32 %v2816, %v2885
  %v2929 = vadd.f32 %v2817, %v2885
  %v2930 = vadd.f32 %v2818, %v2890
  %v2931 = vadd.f32 %v2819, %v2890
  %v2932 = vadd.f32 %v2820, %v2890
  %v2933 = vadd.f32 %v2821, %v2890
  %v2934 = vadd.f32 %v2822, %v2890
  %v2935 = vadd.f32 %v2823, %v2890
  %v2936 = vadd.f32 %v2824, %v2890
  %v2937 = vadd.f32 %v2825, %v2890
  %v2938 = vadd.f32 %v2826, %v2895
  %v2939 = vadd.f32 %v2827, %v2895
  %v2940 = vadd.f32 %v2828, %v2895
  %v2941 = vadd.f32 %v2829, %v2895
  %v2942 = vadd.f32 %v2830, %v2895
  %v2943 = vadd.f32 %v2831, %v2895
  %v2944 = vadd.f32 %v2832, %v2895
  %v2945 = vadd.f32 %v2833, %v2895
  %v2946 = vadd.f32 %v2834, %v2900
  %v2947 = vadd.f32 %v2835, %v2900
  %v2948 = vadd.f32 %v2836, %v2900
  %v2949 = vadd.f32 %v2837, %v2900
  %v2950 = vadd.f32 %v2838, %v2900
  %v2951 = vadd.f32 %v2839, %v2900
  %v2952 = vadd.f32 %v2840, %v2900
  %v2953 = vadd.f32 %v2841, %v2900
  %v2954 = vadd.f32 %v2842, %v2905
  %v2955 = vadd.f32 %v2843, %v2905
  %v2956 = vadd.f32 %v2844, %v2905
  %v2957 = vadd.f32 %v2845, %v2905
  %v2958 = vadd.f32 %v2846, %v2905
  %v2959 = vadd.f32 %v2847, %v2905
  %v2960 = vadd.f32 %v2848, %v2905
  %v2961 = vadd.f32 %v2849, %v2905
  %v2962 = vadd.f32 %v2850, %v2910
  %v2963 = vadd.f32 %v2851, %v2910
  %v2964 = vadd.f32 %v2852, %v2910
  %v2965 = vadd.f32 %v2853, %v2910
  %v2966 = vadd.f32 %v2854, %v2910
  %v2967 = vadd.f32 %v2855, %v2910
  %v2968 = vadd.f32 %v2856, %v2910
  %v2969 = vadd.f32 %v2857, %v2910
  %v2970 = vadd.f32 %v2858, %v2915
  %v2971 = vadd.f32 %v2859, %v2915
  %v2972 = vadd.f32 %v2860, %v2915
  %v2973 = vadd.f32 %v2861, %v2915
  %v2974 = vadd.f32 %v2862, %v2915
  %v2975 = vadd.f32 %v2863, %v2915
  %v2976 = vadd.f32 %v2864, %v2915
  %v2977 = vadd.f32 %v2865, %v2915
  %v2978 = vadd.f32 %v2866, %v2920
  %v2979 = vadd.f32 %v2867, %v2920
  %v2980 = vadd.f32 %v2868, %v2920
  %v2981 = vadd.f32 %v2869, %v2920
  %v2982 = vadd.f32 %v2870, %v2920
  %v2983 = vadd.f32 %v2871, %v2920
  %v2984 = vadd.f32 %v2872, %v2920
  %v2985 = vadd.f32 %v2873, %v2920
  %v2986 = vmax.f32 %v2922, 0.0
  %v2987 = vmax.f32 %v2923, 0.0
  %v2988 = vmax.f32 %v2924, 0.0
  %v2989 = vmax.f32 %v2925, 0.0
  %v2990 = vmax.f32 %v2926, 0.0
  %v2991 = vmax.f32 %v2927, 0.0
  %v2992 = vmax.f32 %v2928, 0.0
  %v2993 = vmax.f32 %v2929, 0.0
  %v2994 = vmax.f32 %v2930, 0.0
  %v2995 = vmax.f32 %v2931, 0.0
  %v2996 = vmax.f32 %v2932, 0.0
  %v2997 = vmax.f32 %v2933, 0.0
  %v2998 = vmax.f32 %v2934, 0.0
  %v2999 = vmax.f32 %v2935, 0.0
  %v3000 = vmax.f32 %v2936, 0.0
  %v3001 = vmax.f32 %v2937, 0.0
  %v3002 = vmax.f32 %v2938, 0.0
  %v3003 = vmax.f32 %v2939, 0.0
  %v3004 = vmax.f32 %v2940, 0.0
  %v3005 = vmax.f32 %v2941, 0.0
  %v3006 = vmax.f32 %v2942, 0.0
  %v3007 = vmax.f32 %v2943, 0.0
  %v3008 = vmax.f32 %v2944, 0.0
  %v3009 = vmax.f32 %v2945, 0.0
  %v3010 = vmax.f32 %v2946, 0.0
  %v3011 = vmax.f32 %v2947, 0.0
  %v3012 = vmax.f32 %v2948, 0.0
  %v3013 = vmax.f32 %v2949, 0.0
  %v3014 = vmax.f32 %v2950, 0.0
  %v3015 = vmax.f32 %v2951, 0.0
  %v3016 = vmax.f32 %v2952, 0.0
  %v3017 = vmax.f32 %v2953, 0.0
  %v3018 = vmax.f32 %v2954, 0.0
  %v3019 = vmax.f32 %v2955, 0.0
  %v3020 = vmax.f32 %v2956, 0.0
  %v3021 = vmax.f32 %v2957, 0.0
  %v3022 = vmax.f32 %v2958, 0.0
  %v3023 = vmax.f32 %v2959, 0.0
  %v3024 = vmax.f32 %v2960, 0.0
  %v3025 = vmax.f32 %v2961, 0.0
  %v3026 = vmax.f32 %v2962, 0.0
  %v3027 = vmax.f32 %v2963, 0.0
  %v3028 = vmax.f32 %v2964, 0.0
  %v3029 = vmax.f32 %v2965, 0.0
  %v3030 = vmax.f32 %v2966, 0.0
  %v3031 = vmax.f32 %v2967, 0.0
  %v3032 = vmax.f32 %v2968, 0.0
  %v3033 = vmax.f32 %v2969, 0.0
  %v3034 = vmax.f32 %v2970, 0.0
  %v3035 = vmax.f32 %v2971, 0.0
  %v3036 = vmax.f32 %v2972, 0.0
  %v3037 = vmax.f32 %v2973, 0.0
  %v3038 = vmax.f32 %v2974, 0.0
  %v3039 = vmax.f32 %v2975, 0.0
  %v3040 = vmax.f32 %v2976, 0.0
  %v3041 = vmax.f32 %v2977, 0.0
  %v3042 = vmax.f32 %v2978, 0.0
  %v3043 = vmax.f32 %v2979, 0.0
  %v3044 = vmax.f32 %v2980, 0.0
  %v3045 = vmax.f32 %v2981, 0.0
  %v3046 = vmax.f32 %v2982, 0.0
  %v3047 = vmax.f32 %v2983, 0.0
  %v3048 = vmax.f32 %v2984, 0.0
  %v3049 = vmax.f32 %v2985, 0.0
  %v3050 = vld [vmem:[%s4] sm:$0xff]
  %v3052 = vlaneseq
  %v3053 = vshrl.u32 %v3052, 7
  %v3054 = vsub.s32 0, %v3053
  %v3055 = vrot.slane %v3050, %v3054
  %v3056 = vlaneseq
  %v3057 = vshrl.u32 %v3056, 7
  %v3058 = vsub.s32 1, %v3057
  %v3059 = vrot.slane %v3050, %v3058
  %v3060 = vlaneseq
  %v3061 = vshrl.u32 %v3060, 7
  %v3062 = vsub.s32 2, %v3061
  %v3063 = vrot.slane %v3050, %v3062
  %v3064 = vlaneseq
  %v3065 = vshrl.u32 %v3064, 7
  %v3066 = vsub.s32 3, %v3065
  %v3067 = vrot.slane %v3050, %v3066
  %v3068 = vlaneseq
  %v3069 = vshrl.u32 %v3068, 7
  %v3070 = vsub.s32 4, %v3069
  %v3071 = vrot.slane %v3050, %v3070
  %v3072 = vlaneseq
  %v3073 = vshrl.u32 %v3072, 7
  %v3074 = vsub.s32 5, %v3073
  %v3075 = vrot.slane %v3050, %v3074
  %v3076 = vlaneseq
  %v3077 = vshrl.u32 %v3076, 7
  %v3078 = vsub.s32 6, %v3077
  %v3079 = vrot.slane %v3050, %v3078
  %v3080 = vlaneseq
  %v3081 = vshrl.u32 %v3080, 7
  %v3082 = vsub.s32 7, %v3081
  %v3083 = vrot.slane %v3050, %v3082
  %v3092 = vmul.f32 %v2986, %v3055
  %v3093 = vmul.f32 %v2987, %v3059
  %v3094 = vmul.f32 %v2988, %v3063
  %v3095 = vmul.f32 %v2989, %v3067
  %v3096 = vmul.f32 %v2990, %v3071
  %v3097 = vmul.f32 %v2991, %v3075
  %v3098 = vmul.f32 %v2992, %v3079
  %v3099 = vmul.f32 %v2993, %v3083
  %v3100 = vmul.f32 %v2994, %v3055
  %v3101 = vmul.f32 %v2995, %v3059
  %v3102 = vmul.f32 %v2996, %v3063
  %v3103 = vmul.f32 %v2997, %v3067
  %v3104 = vmul.f32 %v2998, %v3071
  %v3105 = vmul.f32 %v2999, %v3075
  %v3106 = vmul.f32 %v3000, %v3079
  %v3107 = vmul.f32 %v3001, %v3083
  %v3108 = vmul.f32 %v3002, %v3055
  %v3109 = vmul.f32 %v3003, %v3059
  %v3110 = vmul.f32 %v3004, %v3063
  %v3111 = vmul.f32 %v3005, %v3067
  %v3112 = vmul.f32 %v3006, %v3071
  %v3113 = vmul.f32 %v3007, %v3075
  %v3114 = vmul.f32 %v3008, %v3079
  %v3115 = vmul.f32 %v3009, %v3083
  %v3116 = vmul.f32 %v3010, %v3055
  %v3117 = vmul.f32 %v3011, %v3059
  %v3118 = vmul.f32 %v3012, %v3063
  %v3119 = vmul.f32 %v3013, %v3067
  %v3120 = vmul.f32 %v3014, %v3071
  %v3121 = vmul.f32 %v3015, %v3075
  %v3122 = vmul.f32 %v3016, %v3079
  %v3123 = vmul.f32 %v3017, %v3083
  %v3124 = vmul.f32 %v3018, %v3055
  %v3125 = vmul.f32 %v3019, %v3059
  %v3126 = vmul.f32 %v3020, %v3063
  %v3127 = vmul.f32 %v3021, %v3067
  %v3128 = vmul.f32 %v3022, %v3071
  %v3129 = vmul.f32 %v3023, %v3075
  %v3130 = vmul.f32 %v3024, %v3079
  %v3131 = vmul.f32 %v3025, %v3083
  %v3132 = vmul.f32 %v3026, %v3055
  %v3133 = vmul.f32 %v3027, %v3059
  %v3134 = vmul.f32 %v3028, %v3063
  %v3135 = vmul.f32 %v3029, %v3067
  %v3136 = vmul.f32 %v3030, %v3071
  %v3137 = vmul.f32 %v3031, %v3075
  %v3138 = vmul.f32 %v3032, %v3079
  %v3139 = vmul.f32 %v3033, %v3083
  %v3140 = vmul.f32 %v3034, %v3055
  %v3141 = vmul.f32 %v3035, %v3059
  %v3142 = vmul.f32 %v3036, %v3063
  %v3143 = vmul.f32 %v3037, %v3067
  %v3144 = vmul.f32 %v3038, %v3071
  %v3145 = vmul.f32 %v3039, %v3075
  %v3146 = vmul.f32 %v3040, %v3079
  %v3147 = vmul.f32 %v3041, %v3083
  %v3148 = vmul.f32 %v3042, %v3055
  %v3149 = vmul.f32 %v3043, %v3059
  %v3150 = vmul.f32 %v3044, %v3063
  %v3151 = vmul.f32 %v3045, %v3067
  %v3152 = vmul.f32 %v3046, %v3071
  %v3153 = vmul.f32 %v3047, %v3075
  %v3154 = vmul.f32 %v3048, %v3079
  %v3155 = vmul.f32 %v3049, %v3083
  %v3156 = vmax.f32 %v3092, %v3094
  %v3157 = vmax.f32 %v3093, %v3095
  %v3158 = vmax.f32 %v3100, %v3102
  %v3159 = vmax.f32 %v3101, %v3103
  %v3160 = vmax.f32 %v3108, %v3110
  %v3161 = vmax.f32 %v3109, %v3111
  %v3162 = vmax.f32 %v3116, %v3118
  %v3163 = vmax.f32 %v3117, %v3119
  %v3164 = vmax.f32 %v3124, %v3126
  %v3165 = vmax.f32 %v3125, %v3127
  %v3166 = vmax.f32 %v3132, %v3134
  %v3167 = vmax.f32 %v3133, %v3135
  %v3168 = vmax.f32 %v3140, %v3142
  %v3169 = vmax.f32 %v3141, %v3143
  %v3170 = vmax.f32 %v3148, %v3150
  %v3171 = vmax.f32 %v3149, %v3151
  %v3172 = vmax.f32 %v3156, %v3096
  %v3173 = vmax.f32 %v3157, %v3097
  %v3174 = vmax.f32 %v3158, %v3104
  %v3175 = vmax.f32 %v3159, %v3105
  %v3176 = vmax.f32 %v3160, %v3112
  %v3177 = vmax.f32 %v3161, %v3113
  %v3178 = vmax.f32 %v3162, %v3120
  %v3179 = vmax.f32 %v3163, %v3121
  %v3180 = vmax.f32 %v3164, %v3128
  %v3181 = vmax.f32 %v3165, %v3129
  %v3182 = vmax.f32 %v3166, %v3136
  %v3183 = vmax.f32 %v3167, %v3137
  %v3184 = vmax.f32 %v3168, %v3144
  %v3185 = vmax.f32 %v3169, %v3145
  %v3186 = vmax.f32 %v3170, %v3152
  %v3187 = vmax.f32 %v3171, %v3153
  %v3188 = vmax.f32 %v3172, %v3098
  %v3189 = vmax.f32 %v3173, %v3099
  %v3190 = vmax.f32 %v3174, %v3106
  %v3191 = vmax.f32 %v3175, %v3107
  %v3192 = vmax.f32 %v3176, %v3114
  %v3193 = vmax.f32 %v3177, %v3115
  %v3194 = vmax.f32 %v3178, %v3122
  %v3195 = vmax.f32 %v3179, %v3123
  %v3196 = vmax.f32 %v3180, %v3130
  %v3197 = vmax.f32 %v3181, %v3131
  %v3198 = vmax.f32 %v3182, %v3138
  %v3199 = vmax.f32 %v3183, %v3139
  %v3200 = vmax.f32 %v3184, %v3146
  %v3201 = vmax.f32 %v3185, %v3147
  %v3202 = vmax.f32 %v3186, %v3154
  %v3203 = vmax.f32 %v3187, %v3155
  %v3204 = vpack.c.bf16 %v3190, %v3188
  %v3205 = vpack.c.bf16 %v3191, %v3189
  %v3206 = vpack.c.bf16 %v3194, %v3192
  %v3207 = vpack.c.bf16 %v3195, %v3193
  %v3208 = vpack.c.bf16 %v3198, %v3196
  %v3209 = vpack.c.bf16 %v3199, %v3197
  %v3210 = vpack.c.bf16 %v3202, %v3200
  %v3211 = vpack.c.bf16 %v3203, %v3201
  %v3220 = vunpack.c.l.b16 %v3204
  %v3221 = vunpack.c.l.b16 %v3205
  %v3222 = vunpack.c.h.b16 %v3204
  %v3223 = vunpack.c.h.b16 %v3205
  %v3224 = vunpack.c.l.b16 %v3206
  %v3225 = vunpack.c.l.b16 %v3207
  %v3226 = vunpack.c.h.b16 %v3206
  %v3227 = vunpack.c.h.b16 %v3207
  %v3228 = vunpack.c.l.b16 %v3208
  %v3229 = vunpack.c.l.b16 %v3209
  %v3230 = vunpack.c.h.b16 %v3208
  %v3231 = vunpack.c.h.b16 %v3209
  %v3232 = vunpack.c.l.b16 %v3210
  %v3233 = vunpack.c.l.b16 %v3211
  %v3234 = vunpack.c.h.b16 %v3210
  %v3235 = vunpack.c.h.b16 %v3211
  %v3236 = vpack.c.b16 %v3221, %v3220
  %v3237 = vpack.c.b16 %v3223, %v3222
  %v3238 = vpack.c.b16 %v3225, %v3224
  %v3239 = vpack.c.b16 %v3227, %v3226
  %v3240 = vpack.c.b16 %v3229, %v3228
  %v3241 = vpack.c.b16 %v3231, %v3230
  %v3242 = vpack.c.b16 %v3233, %v3232
  %v3243 = vpack.c.b16 %v3235, %v3234
  %3252 = vst [vmem:[%s5] sm:$0xff] %v3236
  %3253 = vst [vmem:[%s5 + $0x8] sm:$0xff] %v3237
  %3254 = vst [vmem:[%s5 + $0x10] sm:$0xff] %v3238
  %3255 = vst [vmem:[%s5 + $0x18] sm:$0xff] %v3239
  %3256 = vst [vmem:[%s5 + $0x20] sm:$0xff] %v3240
  %3257 = vst [vmem:[%s5 + $0x28] sm:$0xff] %v3241
  %3258 = vst [vmem:[%s5 + $0x30] sm:$0xff] %v3242
  %3259 = vst [vmem:[%s5 + $0x38] sm:$0xff] %v3243
  // Predicated region
  $region22: #{crnn_forward.11} parent=0 // pred_check
    _
  $region23: #{crnn_forward.11} parent=0 // pred_check_branch
    %3261 = sbr.rel (0) target = $region25
  $region24: #{crnn_forward.11} parent=0 // pred_region
    _
  $region25: #{crnn_forward.11} parent=0 // pred_fallthru
    _
  // Predicated region
  $region26: #{crnn_forward.11} parent=0 // pred_check
    _
  $region27: #{crnn_forward.11} parent=0 // pred_check_branch
    %3263 = sbr.rel (0) target = $region29
  $region28: #{crnn_forward.11} parent=0 // pred_region
    _
  $region29: #{crnn_forward.11} parent=0 // pred_fallthru
    _

// kernel: crnn_forward.12
$region0: #{crnn_forward.12}
  #allocation0 [shape = 'u32[]', space=smem, size = 0x4, offset = 0x4, fixed_abs, tag = 'smem constant byte address 0x4 - core index']
  #allocation1 [shape = 'u32[144,128]{1,0:T(1,128)}', space=vmem, size = 0x12000, scoped, tag = 'internal scratch']
  %s0 = inlined_call_operand.vmem [shape: bf16[576,256], index: 0, kind: input, shape index: {}]
  %s1 = inlined_call_operand.vmem [shape: bf16[64,576], index: 1, kind: input, shape index: {}]
  %s2 = inlined_call_operand.vmem [shape: f32[64,1], index: 2, kind: input, shape index: {}]
  %s3 = inlined_call_operand.vmem [shape: f32[64,1], index: 3, kind: input, shape index: {}]
  %s4 = inlined_call_operand.vmem [shape: bf16[64,256], index: 4, kind: output, shape index: {}]
  %s5 = sld [smem:[#allocation0]]
  $region26: #{crnn_forward.12} parent=0
    _
  %s7 = ssub.s32 1, %s5
  %s8 = scalar_select 0, %s7, %s5
  // Predicated region
  $region2: #{crnn_forward.12} parent=0 // pred_check
    _
  $region3: #{crnn_forward.12} parent=0 // pred_check_branch
    %10 = sbr.rel (0) target = $region5
  $region4: #{crnn_forward.12} parent=0 // pred_region
    _
  $region5: #{crnn_forward.12} parent=0 // pred_fallthru
    _
  // Predicated region
  $region6: #{crnn_forward.12} parent=0 // pred_check
    _
  $region7: #{crnn_forward.12} parent=0 // pred_check_branch
    %12 = sbr.rel (0) target = $region9
  $region8: #{crnn_forward.12} parent=0 // pred_region
    _
  $region9: #{crnn_forward.12} parent=0 // pred_fallthru
    _
  // Predicated region
  $region10: #{crnn_forward.12} parent=0 // pred_check
    _
  $region11: #{crnn_forward.12} parent=0 // pred_check_branch
    %14 = sbr.rel (0) target = $region13
  $region12: #{crnn_forward.12} parent=0 // pred_region
    _
  $region13: #{crnn_forward.12} parent=0 // pred_fallthru
    _
  // Predicated region
  $region14: #{crnn_forward.12} parent=0 // pred_check
    _
  $region15: #{crnn_forward.12} parent=0 // pred_check_branch
    %16 = sbr.rel (0) target = $region17
  $region16: #{crnn_forward.12} parent=0 // pred_region
    _
  $region17: #{crnn_forward.12} parent=0 // pred_fallthru
    _
  %v18 = vld [vmem:[%s1] sm:$0xff]
  %v19 = vld [vmem:[%s1 + $0x8] sm:$0xff]
  %v20 = vld [vmem:[%s1 + $0x10] sm:$0xf]
  %v21 = vld [vmem:[%s1 + $0x14] sm:$0xff]
  %v22 = vld [vmem:[%s1 + $0x1c] sm:$0xff]
  %v23 = vld [vmem:[%s1 + $0x24] sm:$0xf]
  %v24 = vld [vmem:[%s1 + $0x28] sm:$0xff]
  %v25 = vld [vmem:[%s1 + $0x30] sm:$0xff]
  %v26 = vld [vmem:[%s1 + $0x38] sm:$0xf]
  %v27 = vld [vmem:[%s1 + $0x3c] sm:$0xff]
  %v28 = vld [vmem:[%s1 + $0x44] sm:$0xff]
  %v29 = vld [vmem:[%s1 + $0x4c] sm:$0xf]
  %v30 = vld [vmem:[%s1 + $0x50] sm:$0xff]
  %v31 = vld [vmem:[%s1 + $0x58] sm:$0xff]
  %v32 = vld [vmem:[%s1 + $0x60] sm:$0xf]
  %v33 = vld [vmem:[%s1 + $0x64] sm:$0xff]
  %v34 = vld [vmem:[%s1 + $0x6c] sm:$0xff]
  %v35 = vld [vmem:[%s1 + $0x74] sm:$0xf]
  %v36 = vld [vmem:[%s1 + $0x78] sm:$0xff]
  %v37 = vld [vmem:[%s1 + $0x80] sm:$0xff]
  %v38 = vld [vmem:[%s1 + $0x88] sm:$0xf]
  %v39 = vld [vmem:[%s1 + $0x8c] sm:$0xff]
  %v40 = vld [vmem:[%s1 + $0x94] sm:$0xff]
  %v41 = vld [vmem:[%s1 + $0x9c] sm:$0xf]
  %v42 = vld [vmem:[%s0] sm:$0xff]
  %v43 = vld [vmem:[%s0 + $0x8] sm:$0xff]
  %v44 = vld [vmem:[%s0 + $0x10] sm:$0xff]
  %v45 = vld [vmem:[%s0 + $0x18] sm:$0xff]
  %v46 = vld [vmem:[%s0 + $0x20] sm:$0xff]
  %v47 = vld [vmem:[%s0 + $0x28] sm:$0xff]
  %v48 = vld [vmem:[%s0 + $0x30] sm:$0xff]
  %v49 = vld [vmem:[%s0 + $0x38] sm:$0xff]
  %v50 = vld [vmem:[%s0 + $0x40] sm:$0xff]
  %v51 = vld [vmem:[%s0 + $0x48] sm:$0xff]
  %v52 = vld [vmem:[%s0 + $0x50] sm:$0xff]
  %v53 = vld [vmem:[%s0 + $0x58] sm:$0xff]
  %v54 = vld [vmem:[%s0 + $0x60] sm:$0xff]
  %v55 = vld [vmem:[%s0 + $0x68] sm:$0xff]
  %v56 = vld [vmem:[%s0 + $0x70] sm:$0xff]
  %v57 = vld [vmem:[%s0 + $0x78] sm:$0xff]
  %v58 = vld [vmem:[%s0 + $0x80] sm:$0xff]
  %v59 = vld [vmem:[%s0 + $0x88] sm:$0xff]
  %v60 = vld [vmem:[%s0 + $0x90] sm:$0xff]
  %v61 = vld [vmem:[%s0 + $0x98] sm:$0xff]
  %v62 = vld [vmem:[%s0 + $0xa0] sm:$0xff]
  %v63 = vld [vmem:[%s0 + $0xa8] sm:$0xff]
  %v64 = vld [vmem:[%s0 + $0xb0] sm:$0xff]
  %v65 = vld [vmem:[%s0 + $0xb8] sm:$0xff]
  %v66 = vld [vmem:[%s0 + $0xc0] sm:$0xff]
  %v67 = vld [vmem:[%s0 + $0xc8] sm:$0xff]
  %v68 = vld [vmem:[%s0 + $0xd0] sm:$0xff]
  %v69 = vld [vmem:[%s0 + $0xd8] sm:$0xff]
  %v70 = vld [vmem:[%s0 + $0xe0] sm:$0xff]
  %v71 = vld [vmem:[%s0 + $0xe8] sm:$0xff]
  %v72 = vld [vmem:[%s0 + $0xf0] sm:$0xff]
  %v73 = vld [vmem:[%s0 + $0xf8] sm:$0xff]
  %v74 = vld [vmem:[%s0 + $0x100] sm:$0xff]
  %v75 = vld [vmem:[%s0 + $0x108] sm:$0xff]
  %v76 = vld [vmem:[%s0 + $0x110] sm:$0xff]
  %v77 = vld [vmem:[%s0 + $0x118] sm:$0xff]
  %v78 = vld [vmem:[%s0 + $0x120] sm:$0xff]
  %v79 = vld [vmem:[%s0 + $0x128] sm:$0xff]
  %v80 = vld [vmem:[%s0 + $0x130] sm:$0xff]
  %v81 = vld [vmem:[%s0 + $0x138] sm:$0xff]
  %v82 = vld [vmem:[%s0 + $0x140] sm:$0xff]
  %v83 = vld [vmem:[%s0 + $0x148] sm:$0xff]
  %v84 = vld [vmem:[%s0 + $0x150] sm:$0xff]
  %v85 = vld [vmem:[%s0 + $0x158] sm:$0xff]
  %v86 = vld [vmem:[%s0 + $0x160] sm:$0xff]
  %v87 = vld [vmem:[%s0 + $0x168] sm:$0xff]
  %v88 = vld [vmem:[%s0 + $0x170] sm:$0xff]
  %v89 = vld [vmem:[%s0 + $0x178] sm:$0xff]
  %v90 = vld [vmem:[%s0 + $0x180] sm:$0xff]
  %v91 = vld [vmem:[%s0 + $0x188] sm:$0xff]
  %v92 = vld [vmem:[%s0 + $0x190] sm:$0xff]
  %v93 = vld [vmem:[%s0 + $0x198] sm:$0xff]
  %v94 = vld [vmem:[%s0 + $0x1a0] sm:$0xff]
  %v95 = vld [vmem:[%s0 + $0x1a8] sm:$0xff]
  %v96 = vld [vmem:[%s0 + $0x1b0] sm:$0xff]
  %v97 = vld [vmem:[%s0 + $0x1b8] sm:$0xff]
  %v98 = vld [vmem:[%s0 + $0x1c0] sm:$0xff]
  %v99 = vld [vmem:[%s0 + $0x1c8] sm:$0xff]
  %v100 = vld [vmem:[%s0 + $0x1d0] sm:$0xff]
  %v101 = vld [vmem:[%s0 + $0x1d8] sm:$0xff]
  %v102 = vld [vmem:[%s0 + $0x1e0] sm:$0xff]
  %v103 = vld [vmem:[%s0 + $0x1e8] sm:$0xff]
  %v104 = vld [vmem:[%s0 + $0x1f0] sm:$0xff]
  %v105 = vld [vmem:[%s0 + $0x1f8] sm:$0xff]
  %v106 = vld [vmem:[%s0 + $0x200] sm:$0xff]
  %v107 = vld [vmem:[%s0 + $0x208] sm:$0xff]
  %v108 = vld [vmem:[%s0 + $0x210] sm:$0xff]
  %v109 = vld [vmem:[%s0 + $0x218] sm:$0xff]
  %v110 = vld [vmem:[%s0 + $0x220] sm:$0xff]
  %v111 = vld [vmem:[%s0 + $0x228] sm:$0xff]
  %v112 = vld [vmem:[%s0 + $0x230] sm:$0xff]
  %v113 = vld [vmem:[%s0 + $0x238] sm:$0xff]
  %v138 = vunpack.c.l.b16 %v18
  %v139 = vunpack.c.h.b16 %v18
  %v140 = vunpack.c.l.b16 %v19
  %v141 = vunpack.c.h.b16 %v19
  %v142 = vunpack.c.l.b16 %v20
  %v143 = vunpack.c.l.b16 %v21
  %v144 = vunpack.c.h.b16 %v21
  %v145 = vunpack.c.l.b16 %v22
  %v146 = vunpack.c.h.b16 %v22
  %v147 = vunpack.c.l.b16 %v23
  %v148 = vunpack.c.l.b16 %v24
  %v149 = vunpack.c.h.b16 %v24
  %v150 = vunpack.c.l.b16 %v25
  %v151 = vunpack.c.h.b16 %v25
  %v152 = vunpack.c.l.b16 %v26
  %v153 = vunpack.c.l.b16 %v27
  %v154 = vunpack.c.h.b16 %v27
  %v155 = vunpack.c.l.b16 %v28
  %v156 = vunpack.c.h.b16 %v28
  %v157 = vunpack.c.l.b16 %v29
  %v158 = vunpack.c.l.b16 %v30
  %v159 = vunpack.c.h.b16 %v30
  %v160 = vunpack.c.l.b16 %v31
  %v161 = vunpack.c.h.b16 %v31
  %v162 = vunpack.c.l.b16 %v32
  %v163 = vunpack.c.l.b16 %v33
  %v164 = vunpack.c.h.b16 %v33
  %v165 = vunpack.c.l.b16 %v34
  %v166 = vunpack.c.h.b16 %v34
  %v167 = vunpack.c.l.b16 %v35
  %v168 = vunpack.c.l.b16 %v36
  %v169 = vunpack.c.h.b16 %v36
  %v170 = vunpack.c.l.b16 %v37
  %v171 = vunpack.c.h.b16 %v37
  %v172 = vunpack.c.l.b16 %v38
  %v173 = vunpack.c.l.b16 %v39
  %v174 = vunpack.c.h.b16 %v39
  %v175 = vunpack.c.l.b16 %v40
  %v176 = vunpack.c.h.b16 %v40
  %v177 = vunpack.c.l.b16 %v41
  %v178 = vpack.c.b16 %v143, %v138
  %v179 = vpack.c.b16 %v144, %v139
  %v180 = vpack.c.b16 %v145, %v140
  %v181 = vpack.c.b16 %v146, %v141
  %v182 = vpack.c.b16 %v147, %v142
  %v183 = vpack.c.b16 %v153, %v148
  %v184 = vpack.c.b16 %v154, %v149
  %v185 = vpack.c.b16 %v155, %v150
  %v186 = vpack.c.b16 %v156, %v151
  %v187 = vpack.c.b16 %v157, %v152
  %v188 = vpack.c.b16 %v163, %v158
  %v189 = vpack.c.b16 %v164, %v159
  %v190 = vpack.c.b16 %v165, %v160
  %v191 = vpack.c.b16 %v166, %v161
  %v192 = vpack.c.b16 %v167, %v162
  %v193 = vpack.c.b16 %v173, %v168
  %v194 = vpack.c.b16 %v174, %v169
  %v195 = vpack.c.b16 %v175, %v170
  %v196 = vpack.c.b16 %v176, %v171
  %v197 = vpack.c.b16 %v177, %v172
  %v286 = vunpack.c.l.b16 %v42
  %v287 = vunpack.c.h.b16 %v42
  %v288 = vunpack.c.l.b16 %v43
  %v289 = vunpack.c.h.b16 %v43
  %v290 = vunpack.c.l.b16 %v44
  %v291 = vunpack.c.h.b16 %v44
  %v292 = vunpack.c.l.b16 %v45
  %v293 = vunpack.c.h.b16 %v45
  %v294 = vunpack.c.l.b16 %v46
  %v295 = vunpack.c.h.b16 %v46
  %v296 = vunpack.c.l.b16 %v47
  %v297 = vunpack.c.h.b16 %v47
  %v298 = vunpack.c.l.b16 %v48
  %v299 = vunpack.c.h.b16 %v48
  %v300 = vunpack.c.l.b16 %v49
  %v301 = vunpack.c.h.b16 %v49
  %v302 = vunpack.c.l.b16 %v50
  %v303 = vunpack.c.h.b16 %v50
  %v304 = vunpack.c.l.b16 %v51
  %v305 = vunpack.c.h.b16 %v51
  %v306 = vunpack.c.l.b16 %v52
  %v307 = vunpack.c.h.b16 %v52
  %v308 = vunpack.c.l.b16 %v53
  %v309 = vunpack.c.h.b16 %v53
  %v310 = vunpack.c.l.b16 %v54
  %v311 = vunpack.c.h.b16 %v54
  %v312 = vunpack.c.l.b16 %v55
  %v313 = vunpack.c.h.b16 %v55
  %v314 = vunpack.c.l.b16 %v56
  %v315 = vunpack.c.h.b16 %v56
  %v316 = vunpack.c.l.b16 %v57
  %v317 = vunpack.c.h.b16 %v57
  %v318 = vunpack.c.l.b16 %v58
  %v319 = vunpack.c.h.b16 %v58
  %v320 = vunpack.c.l.b16 %v59
  %v321 = vunpack.c.h.b16 %v59
  %v322 = vunpack.c.l.b16 %v60
  %v323 = vunpack.c.h.b16 %v60
  %v324 = vunpack.c.l.b16 %v61
  %v325 = vunpack.c.h.b16 %v61
  %v326 = vunpack.c.l.b16 %v62
  %v327 = vunpack.c.h.b16 %v62
  %v328 = vunpack.c.l.b16 %v63
  %v329 = vunpack.c.h.b16 %v63
  %v330 = vunpack.c.l.b16 %v64
  %v331 = vunpack.c.h.b16 %v64
  %v332 = vunpack.c.l.b16 %v65
  %v333 = vunpack.c.h.b16 %v65
  %v334 = vunpack.c.l.b16 %v66
  %v335 = vunpack.c.h.b16 %v66
  %v336 = vunpack.c.l.b16 %v67
  %v337 = vunpack.c.h.b16 %v67
  %v338 = vunpack.c.l.b16 %v68
  %v339 = vunpack.c.h.b16 %v68
  %v340 = vunpack.c.l.b16 %v69
  %v341 = vunpack.c.h.b16 %v69
  %v342 = vunpack.c.l.b16 %v70
  %v343 = vunpack.c.h.b16 %v70
  %v344 = vunpack.c.l.b16 %v71
  %v345 = vunpack.c.h.b16 %v71
  %v346 = vunpack.c.l.b16 %v72
  %v347 = vunpack.c.h.b16 %v72
  %v348 = vunpack.c.l.b16 %v73
  %v349 = vunpack.c.h.b16 %v73
  %v350 = vunpack.c.l.b16 %v74
  %v351 = vunpack.c.h.b16 %v74
  %v352 = vunpack.c.l.b16 %v75
  %v353 = vunpack.c.h.b16 %v75
  %v354 = vunpack.c.l.b16 %v76
  %v355 = vunpack.c.h.b16 %v76
  %v356 = vunpack.c.l.b16 %v77
  %v357 = vunpack.c.h.b16 %v77
  %v358 = vunpack.c.l.b16 %v78
  %v359 = vunpack.c.h.b16 %v78
  %v360 = vunpack.c.l.b16 %v79
  %v361 = vunpack.c.h.b16 %v79
  %v362 = vunpack.c.l.b16 %v80
  %v363 = vunpack.c.h.b16 %v80
  %v364 = vunpack.c.l.b16 %v81
  %v365 = vunpack.c.h.b16 %v81
  %v366 = vunpack.c.l.b16 %v82
  %v367 = vunpack.c.h.b16 %v82
  %v368 = vunpack.c.l.b16 %v83
  %v369 = vunpack.c.h.b16 %v83
  %v370 = vunpack.c.l.b16 %v84
  %v371 = vunpack.c.h.b16 %v84
  %v372 = vunpack.c.l.b16 %v85
  %v373 = vunpack.c.h.b16 %v85
  %v374 = vunpack.c.l.b16 %v86
  %v375 = vunpack.c.h.b16 %v86
  %v376 = vunpack.c.l.b16 %v87
  %v377 = vunpack.c.h.b16 %v87
  %v378 = vunpack.c.l.b16 %v88
  %v379 = vunpack.c.h.b16 %v88
  %v380 = vunpack.c.l.b16 %v89
  %v381 = vunpack.c.h.b16 %v89
  %v382 = vunpack.c.l.b16 %v90
  %v383 = vunpack.c.h.b16 %v90
  %v384 = vunpack.c.l.b16 %v91
  %v385 = vunpack.c.h.b16 %v91
  %v386 = vunpack.c.l.b16 %v92
  %v387 = vunpack.c.h.b16 %v92
  %v388 = vunpack.c.l.b16 %v93
  %v389 = vunpack.c.h.b16 %v93
  %v390 = vunpack.c.l.b16 %v94
  %v391 = vunpack.c.h.b16 %v94
  %v392 = vunpack.c.l.b16 %v95
  %v393 = vunpack.c.h.b16 %v95
  %v394 = vunpack.c.l.b16 %v96
  %v395 = vunpack.c.h.b16 %v96
  %v396 = vunpack.c.l.b16 %v97
  %v397 = vunpack.c.h.b16 %v97
  %v398 = vunpack.c.l.b16 %v98
  %v399 = vunpack.c.h.b16 %v98
  %v400 = vunpack.c.l.b16 %v99
  %v401 = vunpack.c.h.b16 %v99
  %v402 = vunpack.c.l.b16 %v100
  %v403 = vunpack.c.h.b16 %v100
  %v404 = vunpack.c.l.b16 %v101
  %v405 = vunpack.c.h.b16 %v101
  %v406 = vunpack.c.l.b16 %v102
  %v407 = vunpack.c.h.b16 %v102
  %v408 = vunpack.c.l.b16 %v103
  %v409 = vunpack.c.h.b16 %v103
  %v410 = vunpack.c.l.b16 %v104
  %v411 = vunpack.c.h.b16 %v104
  %v412 = vunpack.c.l.b16 %v105
  %v413 = vunpack.c.h.b16 %v105
  %v414 = vunpack.c.l.b16 %v106
  %v415 = vunpack.c.h.b16 %v106
  %v416 = vunpack.c.l.b16 %v107
  %v417 = vunpack.c.h.b16 %v107
  %v418 = vunpack.c.l.b16 %v108
  %v419 = vunpack.c.h.b16 %v108
  %v420 = vunpack.c.l.b16 %v109
  %v421 = vunpack.c.h.b16 %v109
  %v422 = vunpack.c.l.b16 %v110
  %v423 = vunpack.c.h.b16 %v110
  %v424 = vunpack.c.l.b16 %v111
  %v425 = vunpack.c.h.b16 %v111
  %v426 = vunpack.c.l.b16 %v112
  %v427 = vunpack.c.h.b16 %v112
  %v428 = vunpack.c.l.b16 %v113
  %v429 = vunpack.c.h.b16 %v113
  %v430 = vpack.c.b16 %v288, %v286
  %v431 = vpack.c.b16 %v289, %v287
  %v432 = vpack.c.b16 %v292, %v290
  %v433 = vpack.c.b16 %v293, %v291
  %v434 = vpack.c.b16 %v296, %v294
  %v435 = vpack.c.b16 %v297, %v295
  %v436 = vpack.c.b16 %v300, %v298
  %v437 = vpack.c.b16 %v301, %v299
  %v438 = vpack.c.b16 %v304, %v302
  %v439 = vpack.c.b16 %v305, %v303
  %v440 = vpack.c.b16 %v308, %v306
  %v441 = vpack.c.b16 %v309, %v307
  %v442 = vpack.c.b16 %v312, %v310
  %v443 = vpack.c.b16 %v313, %v311
  %v444 = vpack.c.b16 %v316, %v314
  %v445 = vpack.c.b16 %v317, %v315
  %v446 = vpack.c.b16 %v320, %v318
  %v447 = vpack.c.b16 %v321, %v319
  %v448 = vpack.c.b16 %v324, %v322
  %v449 = vpack.c.b16 %v325, %v323
  %v450 = vpack.c.b16 %v328, %v326
  %v451 = vpack.c.b16 %v329, %v327
  %v452 = vpack.c.b16 %v332, %v330
  %v453 = vpack.c.b16 %v333, %v331
  %v454 = vpack.c.b16 %v336, %v334
  %v455 = vpack.c.b16 %v337, %v335
  %v456 = vpack.c.b16 %v340, %v338
  %v457 = vpack.c.b16 %v341, %v339
  %v458 = vpack.c.b16 %v344, %v342
  %v459 = vpack.c.b16 %v345, %v343
  %v460 = vpack.c.b16 %v348, %v346
  %v461 = vpack.c.b16 %v349, %v347
  %v462 = vpack.c.b16 %v352, %v350
  %v463 = vpack.c.b16 %v353, %v351
  %v464 = vpack.c.b16 %v356, %v354
  %v465 = vpack.c.b16 %v357, %v355
  %v466 = vpack.c.b16 %v360, %v358
  %v467 = vpack.c.b16 %v361, %v359
  %v468 = vpack.c.b16 %v364, %v362
  %v469 = vpack.c.b16 %v365, %v363
  %v470 = vpack.c.b16 %v368, %v366
  %v471 = vpack.c.b16 %v369, %v367
  %v472 = vpack.c.b16 %v372, %v370
  %v473 = vpack.c.b16 %v373, %v371
  %v474 = vpack.c.b16 %v376, %v374
  %v475 = vpack.c.b16 %v377, %v375
  %v476 = vpack.c.b16 %v380, %v378
  %v477 = vpack.c.b16 %v381, %v379
  %v478 = vpack.c.b16 %v384, %v382
  %v479 = vpack.c.b16 %v385, %v383
  %v480 = vpack.c.b16 %v388, %v386
  %v481 = vpack.c.b16 %v389, %v387
  %v482 = vpack.c.b16 %v392, %v390
  %v483 = vpack.c.b16 %v393, %v391
  %v484 = vpack.c.b16 %v396, %v394
  %v485 = vpack.c.b16 %v397, %v395
  %v486 = vpack.c.b16 %v400, %v398
  %v487 = vpack.c.b16 %v401, %v399
  %v488 = vpack.c.b16 %v404, %v402
  %v489 = vpack.c.b16 %v405, %v403
  %v490 = vpack.c.b16 %v408, %v406
  %v491 = vpack.c.b16 %v409, %v407
  %v492 = vpack.c.b16 %v412, %v410
  %v493 = vpack.c.b16 %v413, %v411
  %v494 = vpack.c.b16 %v416, %v414
  %v495 = vpack.c.b16 %v417, %v415
  %v496 = vpack.c.b16 %v420, %v418
  %v497 = vpack.c.b16 %v421, %v419
  %v498 = vpack.c.b16 %v424, %v422
  %v499 = vpack.c.b16 %v425, %v423
  %v500 = vpack.c.b16 %v428, %v426
  %v501 = vpack.c.b16 %v429, %v427
  %vm574 = vcmask 523264
  %v576 = vsel %vm574, %v182, 0
  %v579 = vsel %vm574, %v187, 0
  %v582 = vsel %vm574, %v192, 0
  %v585 = vsel %vm574, %v197, 0
  %587 = vmatprep.subr.bf16.mxu0 %v431
  %588 = vmatpush1.bf16.msra.mxu0 %v430
  %589 = vmatprep.subr.bf16.mxu0 %v433
  %590 = vmatpush1.bf16.msra.mxu0 %v432
  %591 = vmatprep.subr.bf16.mxu0 %v435
  %592 = vmatpush1.bf16.msra.mxu0 %v434
  %593 = vmatprep.subr.bf16.mxu0 %v437
  %594 = vmatpush1.bf16.msra.mxu0 %v436
  %595 = vmatprep.subr.bf16.mxu0 %v439
  %596 = vmatpush1.bf16.msra.mxu0 %v438
  %597 = vmatprep.subr.bf16.mxu0 %v441
  %598 = vmatpush1.bf16.msra.mxu0 %v440
  %599 = vmatprep.subr.bf16.mxu0 %v443
  %600 = vmatpush1.bf16.msra.mxu0 %v442
  %601 = vmatprep.subr.bf16.mxu0 %v445
  %602 = vmatpush1.bf16.msra.mxu0 %v444
  %603 = vmatprep.subr.bf16.mxu0 %v447
  %604 = vmatpush1.bf16.msra.mxu0 %v446
  %605 = vmatprep.subr.bf16.mxu0 %v449
  %606 = vmatpush1.bf16.msra.mxu0 %v448
  %607 = vmatprep.subr.bf16.mxu0 %v451
  %608 = vmatpush1.bf16.msra.mxu0 %v450
  %609 = vmatprep.subr.bf16.mxu0 %v453
  %610 = vmatpush1.bf16.msra.mxu0 %v452
  %611 = vmatprep.subr.bf16.mxu0 %v455
  %612 = vmatpush1.bf16.msra.mxu0 %v454
  %613 = vmatprep.subr.bf16.mxu0 %v457
  %614 = vmatpush1.bf16.msra.mxu0 %v456
  %615 = vmatprep.subr.bf16.mxu0 %v459
  %616 = vmatpush1.bf16.msra.mxu0 %v458
  %617 = vmatprep.subr.bf16.mxu0 %v461
  %618 = vmatpush1.bf16.msra.mxu0 %v460
  %619 = vmatprep.mubr.bf16.mxu0 %v179
  %620 = vmatmul.mubr.bf16.gmra.mrb[0].mxu0 %v178
  %v621 = vpop.f32.mrb[0].mxu0
  %v622 = vadd.f32 0.0, %v621
  %v623 = vpop.f32.mrb[0].mxu0
  %v624 = vadd.f32 0.0, %v623
  %v625 = vpop.f32.mrb[0].mxu0
  %v626 = vadd.f32 0.0, %v625
  %v627 = vpop.f32.mrb[0].mxu0
  %v628 = vadd.f32 0.0, %v627
  %629 = vmatprep.mubr.bf16.mxu0 %v184
  %630 = vmatmul.mubr.bf16.gmra.mrb[0].mxu0 %v183
  %v631 = vpop.f32.mrb[0].mxu0
  %v632 = vadd.f32 0.0, %v631
  %v633 = vpop.f32.mrb[0].mxu0
  %v634 = vadd.f32 0.0, %v633
  %v635 = vpop.f32.mrb[0].mxu0
  %v636 = vadd.f32 0.0, %v635
  %v637 = vpop.f32.mrb[0].mxu0
  %v638 = vadd.f32 0.0, %v637
  %639 = vmatprep.mubr.bf16.mxu0 %v189
  %640 = vmatmul.mubr.bf16.gmra.mrb[0].mxu0 %v188
  %v641 = vpop.f32.mrb[0].mxu0
  %v642 = vadd.f32 0.0, %v641
  %v643 = vpop.f32.mrb[0].mxu0
  %v644 = vadd.f32 0.0, %v643
  %v645 = vpop.f32.mrb[0].mxu0
  %v646 = vadd.f32 0.0, %v645
  %v647 = vpop.f32.mrb[0].mxu0
  %v648 = vadd.f32 0.0, %v647
  %649 = vmatprep.mubr.bf16.mxu0 %v194
  %650 = vmatmul.mubr.bf16.gmra.mrb[0].mxu0 %v193
  %v651 = vpop.f32.mrb[0].mxu0
  %v652 = vadd.f32 0.0, %v651
  %v653 = vpop.f32.mrb[0].mxu0
  %v654 = vadd.f32 0.0, %v653
  %v655 = vpop.f32.mrb[0].mxu0
  %v656 = vadd.f32 0.0, %v655
  %v657 = vpop.f32.mrb[0].mxu0
  %v658 = vadd.f32 0.0, %v657
  %659 = vdwg.mxu0
  %660 = vmatprep.subr.bf16.mxu0 %v463
  %661 = vmatpush1.bf16.msra.mxu0 %v462
  %662 = vmatprep.subr.bf16.mxu0 %v465
  %663 = vmatpush1.bf16.msra.mxu0 %v464
  %664 = vmatprep.subr.bf16.mxu0 %v467
  %665 = vmatpush1.bf16.msra.mxu0 %v466
  %666 = vmatprep.subr.bf16.mxu0 %v469
  %667 = vmatpush1.bf16.msra.mxu0 %v468
  %668 = vmatprep.subr.bf16.mxu0 %v471
  %669 = vmatpush1.bf16.msra.mxu0 %v470
  %670 = vmatprep.subr.bf16.mxu0 %v473
  %671 = vmatpush1.bf16.msra.mxu0 %v472
  %672 = vmatprep.subr.bf16.mxu0 %v475
  %673 = vmatpush1.bf16.msra.mxu0 %v474
  %674 = vmatprep.subr.bf16.mxu0 %v477
  %675 = vmatpush1.bf16.msra.mxu0 %v476
  %676 = vmatprep.subr.bf16.mxu0 %v479
  %677 = vmatpush1.bf16.msra.mxu0 %v478
  %678 = vmatprep.subr.bf16.mxu0 %v481
  %679 = vmatpush1.bf16.msra.mxu0 %v480
  %680 = vmatprep.subr.bf16.mxu0 %v483
  %681 = vmatpush1.bf16.msra.mxu0 %v482
  %682 = vmatprep.subr.bf16.mxu0 %v485
  %683 = vmatpush1.bf16.msra.mxu0 %v484
  %684 = vmatprep.subr.bf16.mxu0 %v487
  %685 = vmatpush1.bf16.msra.mxu0 %v486
  %686 = vmatprep.subr.bf16.mxu0 %v489
  %687 = vmatpush1.bf16.msra.mxu0 %v488
  %688 = vmatprep.subr.bf16.mxu0 %v491
  %689 = vmatpush1.bf16.msra.mxu0 %v490
  %690 = vmatprep.subr.bf16.mxu0 %v493
  %691 = vmatpush1.bf16.msra.mxu0 %v492
  %692 = vmatprep.mubr.bf16.mxu0 %v181
  %693 = vmatmul.mubr.bf16.gmra.mrb[0].mxu0 %v180
  %v694 = vpop.f32.mrb[0].mxu0
  %v695 = vadd.f32 %v622, %v694
  %v696 = vpop.f32.mrb[0].mxu0
  %v697 = vadd.f32 %v624, %v696
  %v698 = vpop.f32.mrb[0].mxu0
  %v699 = vadd.f32 %v626, %v698
  %v700 = vpop.f32.mrb[0].mxu0
  %v701 = vadd.f32 %v628, %v700
  %702 = vmatprep.mubr.bf16.mxu0 %v186
  %703 = vmatmul.mubr.bf16.gmra.mrb[0].mxu0 %v185
  %v704 = vpop.f32.mrb[0].mxu0
  %v705 = vadd.f32 %v632, %v704
  %v706 = vpop.f32.mrb[0].mxu0
  %v707 = vadd.f32 %v634, %v706
  %v708 = vpop.f32.mrb[0].mxu0
  %v709 = vadd.f32 %v636, %v708
  %v710 = vpop.f32.mrb[0].mxu0
  %v711 = vadd.f32 %v638, %v710
  %712 = vmatprep.mubr.bf16.mxu0 %v191
  %713 = vmatmul.mubr.bf16.gmra.mrb[0].mxu0 %v190
  %v714 = vpop.f32.mrb[0].mxu0
  %v715 = vadd.f32 %v642, %v714
  %v716 = vpop.f32.mrb[0].mxu0
  %v717 = vadd.f32 %v644, %v716
  %v718 = vpop.f32.mrb[0].mxu0
  %v719 = vadd.f32 %v646, %v718
  %v720 = vpop.f32.mrb[0].mxu0
  %v721 = vadd.f32 %v648, %v720
  %722 = vmatprep.mubr.bf16.mxu0 %v196
  %723 = vmatmul.mubr.bf16.gmra.mrb[0].mxu0 %v195
  %v724 = vpop.f32.mrb[0].mxu0
  %v725 = vadd.f32 %v652, %v724
  %v726 = vpop.f32.mrb[0].mxu0
  %v727 = vadd.f32 %v654, %v726
  %v728 = vpop.f32.mrb[0].mxu0
  %v729 = vadd.f32 %v656, %v728
  %v730 = vpop.f32.mrb[0].mxu0
  %v731 = vadd.f32 %v658, %v730
  %732 = vdwg.mxu0
  %733 = vmatprep.subr.bf16.mxu0 %v495
  %734 = vmatpush1.bf16.msra.mxu0 %v494
  %735 = vmatprep.subr.bf16.mxu0 %v497
  %736 = vmatpush1.bf16.msra.mxu0 %v496
  %737 = vmatprep.subr.bf16.mxu0 %v499
  %738 = vmatpush1.bf16.msra.mxu0 %v498
  %739 = vmatprep.subr.bf16.mxu0 %v501
  %740 = vmatpush1.bf16.msra.mxu0 %v500
  %741 = vmatprep.subr.bf16.mxu0 0
  %742 = vmatpush1.bf16.msra.mxu0 0
  %743 = vmatprep.subr.bf16.mxu0 0
  %744 = vmatpush1.bf16.msra.mxu0 0
  %745 = vmatprep.subr.bf16.mxu0 0
  %746 = vmatpush1.bf16.msra.mxu0 0
  %747 = vmatprep.subr.bf16.mxu0 0
  %748 = vmatpush1.bf16.msra.mxu0 0
  %749 = vmatprep.subr.bf16.mxu0 0
  %750 = vmatpush1.bf16.msra.mxu0 0
  %751 = vmatprep.subr.bf16.mxu0 0
  %752 = vmatpush1.bf16.msra.mxu0 0
  %753 = vmatprep.subr.bf16.mxu0 0
  %754 = vmatpush1.bf16.msra.mxu0 0
  %755 = vmatprep.subr.bf16.mxu0 0
  %756 = vmatpush1.bf16.msra.mxu0 0
  %757 = vmatprep.subr.bf16.mxu0 0
  %758 = vmatpush1.bf16.msra.mxu0 0
  %759 = vmatprep.subr.bf16.mxu0 0
  %760 = vmatpush1.bf16.msra.mxu0 0
  %761 = vmatprep.subr.bf16.mxu0 0
  %762 = vmatpush1.bf16.msra.mxu0 0
  %763 = vmatprep.subr.bf16.mxu0 0
  %764 = vmatpush1.bf16.msra.mxu0 0
  %765 = vmatprep.mubr.bf16.mxu0 0
  %766 = vmatmul.mubr.bf16.gmra.mrb[0].mxu0 %v576
  %v767 = vpop.f32.mrb[0].mxu0
  %v768 = vadd.f32 %v695, %v767
  %v769 = vpop.f32.mrb[0].mxu0
  %v770 = vadd.f32 %v697, %v769
  %v771 = vpop.f32.mrb[0].mxu0
  %v772 = vadd.f32 %v699, %v771
  %v773 = vpop.f32.mrb[0].mxu0
  %v774 = vadd.f32 %v701, %v773
  %775 = vmatprep.mubr.bf16.mxu0 0
  %776 = vmatmul.mubr.bf16.gmra.mrb[0].mxu0 %v579
  %v777 = vpop.f32.mrb[0].mxu0
  %v778 = vadd.f32 %v705, %v777
  %v779 = vpop.f32.mrb[0].mxu0
  %v780 = vadd.f32 %v707, %v779
  %v781 = vpop.f32.mrb[0].mxu0
  %v782 = vadd.f32 %v709, %v781
  %v783 = vpop.f32.mrb[0].mxu0
  %v784 = vadd.f32 %v711, %v783
  %785 = vmatprep.mubr.bf16.mxu0 0
  %786 = vmatmul.mubr.bf16.gmra.mrb[0].mxu0 %v582
  %v787 = vpop.f32.mrb[0].mxu0
  %v788 = vadd.f32 %v715, %v787
  %v789 = vpop.f32.mrb[0].mxu0
  %v790 = vadd.f32 %v717, %v789
  %v791 = vpop.f32.mrb[0].mxu0
  %v792 = vadd.f32 %v719, %v791
  %v793 = vpop.f32.mrb[0].mxu0
  %v794 = vadd.f32 %v721, %v793
  %795 = vmatprep.mubr.bf16.mxu0 0
  %796 = vmatmul.mubr.bf16.gmra.mrb[0].mxu0 %v585
  %v797 = vpop.f32.mrb[0].mxu0
  %v798 = vadd.f32 %v725, %v797
  %v799 = vpop.f32.mrb[0].mxu0
  %v800 = vadd.f32 %v727, %v799
  %v801 = vpop.f32.mrb[0].mxu0
  %v802 = vadd.f32 %v729, %v801
  %v803 = vpop.f32.mrb[0].mxu0
  %v804 = vadd.f32 %v731, %v803
  %805 = vdwg.mxu0
  %v806 = vld [vmem:[%s2] sm:$0xff]
  %v807 = vld [vmem:[%s2 + $0x8] sm:$0xff]
  %v808 = vld [vmem:[%s2 + $0x10] sm:$0xff]
  %v809 = vld [vmem:[%s2 + $0x18] sm:$0xff]
  %v810 = vld [vmem:[%s2 + $0x20] sm:$0xff]
  %v811 = vld [vmem:[%s2 + $0x28] sm:$0xff]
  %v812 = vld [vmem:[%s2 + $0x30] sm:$0xff]
  %v813 = vld [vmem:[%s2 + $0x38] sm:$0xff]
  %815 = vset.pattern.permute.xlu0 0
  %816 = vperm.xlu0 %815, %v806
  %v817 = vpop.permute.xlu0 %816
  %820 = vset.pattern.permute.xlu0 0
  %821 = vperm.xlu0 %820, %v807
  %v822 = vpop.permute.xlu0 %821
  %825 = vset.pattern.permute.xlu0 0
  %826 = vperm.xlu0 %825, %v808
  %v827 = vpop.permute.xlu0 %826
  %830 = vset.pattern.permute.xlu0 0
  %831 = vperm.xlu0 %830, %v809
  %v832 = vpop.permute.xlu0 %831
  %835 = vset.pattern.permute.xlu0 0
  %836 = vperm.xlu0 %835, %v810
  %v837 = vpop.permute.xlu0 %836
  %840 = vset.pattern.permute.xlu0 0
  %841 = vperm.xlu0 %840, %v811
  %v842 = vpop.permute.xlu0 %841
  %845 = vset.pattern.permute.xlu0 0
  %846 = vperm.xlu0 %845, %v812
  %v847 = vpop.permute.xlu0 %846
  %850 = vset.pattern.permute.xlu0 0
  %851 = vperm.xlu0 %850, %v813
  %v852 = vpop.permute.xlu0 %851
  %v854 = vmul.f32 %v768, %v817
  %v855 = vmul.f32 %v770, %v817
  %v856 = vmul.f32 %v772, %v822
  %v857 = vmul.f32 %v774, %v822
  %v858 = vmul.f32 %v778, %v827
  %v859 = vmul.f32 %v780, %v827
  %v860 = vmul.f32 %v782, %v832
  %v861 = vmul.f32 %v784, %v832
  %v862 = vmul.f32 %v788, %v837
  %v863 = vmul.f32 %v790, %v837
  %v864 = vmul.f32 %v792, %v842
  %v865 = vmul.f32 %v794, %v842
  %v866 = vmul.f32 %v798, %v847
  %v867 = vmul.f32 %v800, %v847
  %v868 = vmul.f32 %v802, %v852
  %v869 = vmul.f32 %v804, %v852
  %v870 = vld [vmem:[%s3] sm:$0xff]
  %v871 = vld [vmem:[%s3 + $0x8] sm:$0xff]
  %v872 = vld [vmem:[%s3 + $0x10] sm:$0xff]
  %v873 = vld [vmem:[%s3 + $0x18] sm:$0xff]
  %v874 = vld [vmem:[%s3 + $0x20] sm:$0xff]
  %v875 = vld [vmem:[%s3 + $0x28] sm:$0xff]
  %v876 = vld [vmem:[%s3 + $0x30] sm:$0xff]
  %v877 = vld [vmem:[%s3 + $0x38] sm:$0xff]
  %879 = vset.pattern.permute.xlu0 0
  %880 = vperm.xlu0 %879, %v870
  %v881 = vpop.permute.xlu0 %880
  %884 = vset.pattern.permute.xlu0 0
  %885 = vperm.xlu0 %884, %v871
  %v886 = vpop.permute.xlu0 %885
  %889 = vset.pattern.permute.xlu0 0
  %890 = vperm.xlu0 %889, %v872
  %v891 = vpop.permute.xlu0 %890
  %894 = vset.pattern.permute.xlu0 0
  %895 = vperm.xlu0 %894, %v873
  %v896 = vpop.permute.xlu0 %895
  %899 = vset.pattern.permute.xlu0 0
  %900 = vperm.xlu0 %899, %v874
  %v901 = vpop.permute.xlu0 %900
  %904 = vset.pattern.permute.xlu0 0
  %905 = vperm.xlu0 %904, %v875
  %v906 = vpop.permute.xlu0 %905
  %909 = vset.pattern.permute.xlu0 0
  %910 = vperm.xlu0 %909, %v876
  %v911 = vpop.permute.xlu0 %910
  %914 = vset.pattern.permute.xlu0 0
  %915 = vperm.xlu0 %914, %v877
  %v916 = vpop.permute.xlu0 %915
  %v918 = vadd.f32 %v854, %v881
  %v919 = vadd.f32 %v855, %v881
  %v920 = vadd.f32 %v856, %v886
  %v921 = vadd.f32 %v857, %v886
  %v922 = vadd.f32 %v858, %v891
  %v923 = vadd.f32 %v859, %v891
  %v924 = vadd.f32 %v860, %v896
  %v925 = vadd.f32 %v861, %v896
  %v926 = vadd.f32 %v862, %v901
  %v927 = vadd.f32 %v863, %v901
  %v928 = vadd.f32 %v864, %v906
  %v929 = vadd.f32 %v865, %v906
  %v930 = vadd.f32 %v866, %v911
  %v931 = vadd.f32 %v867, %v911
  %v932 = vadd.f32 %v868, %v916
  %v933 = vadd.f32 %v869, %v916
  %v934 = vmax.f32 %v918, 0.0
  %v935 = vmax.f32 %v919, 0.0
  %v936 = vmax.f32 %v920, 0.0
  %v937 = vmax.f32 %v921, 0.0
  %v938 = vmax.f32 %v922, 0.0
  %v939 = vmax.f32 %v923, 0.0
  %v940 = vmax.f32 %v924, 0.0
  %v941 = vmax.f32 %v925, 0.0
  %v942 = vmax.f32 %v926, 0.0
  %v943 = vmax.f32 %v927, 0.0
  %v944 = vmax.f32 %v928, 0.0
  %v945 = vmax.f32 %v929, 0.0
  %v946 = vmax.f32 %v930, 0.0
  %v947 = vmax.f32 %v931, 0.0
  %v948 = vmax.f32 %v932, 0.0
  %v949 = vmax.f32 %v933, 0.0
  %v950 = vpack.c.bf16 %v936, %v934
  %v951 = vpack.c.bf16 %v937, %v935
  %v952 = vpack.c.bf16 %v940, %v938
  %v953 = vpack.c.bf16 %v941, %v939
  %v954 = vpack.c.bf16 %v944, %v942
  %v955 = vpack.c.bf16 %v945, %v943
  %v956 = vpack.c.bf16 %v948, %v946
  %v957 = vpack.c.bf16 %v949, %v947
  %v966 = vunpack.c.l.b16 %v950
  %v967 = vunpack.c.l.b16 %v951
  %v968 = vunpack.c.h.b16 %v950
  %v969 = vunpack.c.h.b16 %v951
  %v970 = vunpack.c.l.b16 %v952
  %v971 = vunpack.c.l.b16 %v953
  %v972 = vunpack.c.h.b16 %v952
  %v973 = vunpack.c.h.b16 %v953
  %v974 = vunpack.c.l.b16 %v954
  %v975 = vunpack.c.l.b16 %v955
  %v976 = vunpack.c.h.b16 %v954
  %v977 = vunpack.c.h.b16 %v955
  %v978 = vunpack.c.l.b16 %v956
  %v979 = vunpack.c.l.b16 %v957
  %v980 = vunpack.c.h.b16 %v956
  %v981 = vunpack.c.h.b16 %v957
  %v982 = vpack.c.b16 %v967, %v966
  %v983 = vpack.c.b16 %v969, %v968
  %v984 = vpack.c.b16 %v971, %v970
  %v985 = vpack.c.b16 %v973, %v972
  %v986 = vpack.c.b16 %v975, %v974
  %v987 = vpack.c.b16 %v977, %v976
  %v988 = vpack.c.b16 %v979, %v978
  %v989 = vpack.c.b16 %v981, %v980
  %998 = vst [vmem:[%s4] sm:$0xff] %v982
  %999 = vst [vmem:[%s4 + $0x8] sm:$0xff] %v983
  %1000 = vst [vmem:[%s4 + $0x10] sm:$0xff] %v984
  %1001 = vst [vmem:[%s4 + $0x18] sm:$0xff] %v985
  %1002 = vst [vmem:[%s4 + $0x20] sm:$0xff] %v986
  %1003 = vst [vmem:[%s4 + $0x28] sm:$0xff] %v987
  %1004 = vst [vmem:[%s4 + $0x30] sm:$0xff] %v988
  %1005 = vst [vmem:[%s4 + $0x38] sm:$0xff] %v989
  // Predicated region
  $region18: #{crnn_forward.12} parent=0 // pred_check
    _
  $region19: #{crnn_forward.12} parent=0 // pred_check_branch
    %1007 = sbr.rel (0) target = $region21
  $region20: #{crnn_forward.12} parent=0 // pred_region
    _
  $region21: #{crnn_forward.12} parent=0 // pred_fallthru
    _
  // Predicated region
  $region22: #{crnn_forward.12} parent=0 // pred_check
    _
  $region23: #{crnn_forward.12} parent=0 // pred_check_branch
    %1009 = sbr.rel (0) target = $region25
  $region24: #{crnn_forward.12} parent=0 // pred_region
    _
  $region25: #{crnn_forward.12} parent=0 // pred_fallthru
    _

// kernel: crnn_forward.13
$region0: #{crnn_forward.13}
  #allocation0 [shape = 'u32[]', space=smem, size = 0x4, offset = 0x4, fixed_abs, tag = 'smem constant byte address 0x4 - core index']
  #allocation1 [shape = 'u32[144,128]{1,0:T(1,128)}', space=vmem, size = 0x12000, scoped, tag = 'internal scratch']
  %s0 = inlined_call_operand.vmem [shape: bf16[576,512], index: 0, kind: input, shape index: {}]
  %s1 = inlined_call_operand.vmem [shape: bf16[64,576], index: 1, kind: input, shape index: {}]
  %s2 = inlined_call_operand.vmem [shape: f32[64,1], index: 2, kind: input, shape index: {}]
  %s3 = inlined_call_operand.vmem [shape: f32[64,1], index: 3, kind: input, shape index: {}]
  %s4 = inlined_call_operand.vmem [shape: f32[1,512], index: 4, kind: input, shape index: {}]
  %s5 = inlined_call_operand.vmem [shape: bf16[64,128], index: 5, kind: output, shape index: {}]
  %s6 = sld [smem:[#allocation0]]
  $region30: #{crnn_forward.13} parent=0
    _
  %s8 = ssub.s32 1, %s6
  %s9 = scalar_select 0, %s8, %s6
  // Predicated region
  $region2: #{crnn_forward.13} parent=0 // pred_check
    _
  $region3: #{crnn_forward.13} parent=0 // pred_check_branch
    %11 = sbr.rel (0) target = $region5
  $region4: #{crnn_forward.13} parent=0 // pred_region
    _
  $region5: #{crnn_forward.13} parent=0 // pred_fallthru
    _
  // Predicated region
  $region6: #{crnn_forward.13} parent=0 // pred_check
    _
  $region7: #{crnn_forward.13} parent=0 // pred_check_branch
    %13 = sbr.rel (0) target = $region9
  $region8: #{crnn_forward.13} parent=0 // pred_region
    _
  $region9: #{crnn_forward.13} parent=0 // pred_fallthru
    _
  // Predicated region
  $region10: #{crnn_forward.13} parent=0 // pred_check
    _
  $region11: #{crnn_forward.13} parent=0 // pred_check_branch
    %15 = sbr.rel (0) target = $region13
  $region12: #{crnn_forward.13} parent=0 // pred_region
    _
  $region13: #{crnn_forward.13} parent=0 // pred_fallthru
    _
  // Predicated region
  $region14: #{crnn_forward.13} parent=0 // pred_check
    _
  $region15: #{crnn_forward.13} parent=0 // pred_check_branch
    %17 = sbr.rel (0) target = $region17
  $region16: #{crnn_forward.13} parent=0 // pred_region
    _
  $region17: #{crnn_forward.13} parent=0 // pred_fallthru
    _
  // Predicated region
  $region18: #{crnn_forward.13} parent=0 // pred_check
    _
  $region19: #{crnn_forward.13} parent=0 // pred_check_branch
    %19 = sbr.rel (0) target = $region21
  $region20: #{crnn_forward.13} parent=0 // pred_region
    _
  $region21: #{crnn_forward.13} parent=0 // pred_fallthru
    _
  %v21 = vld [vmem:[%s1] sm:$0xff]
  %v22 = vld [vmem:[%s1 + $0x8] sm:$0xff]
  %v23 = vld [vmem:[%s1 + $0x10] sm:$0xf]
  %v24 = vld [vmem:[%s1 + $0x14] sm:$0xff]
  %v25 = vld [vmem:[%s1 + $0x1c] sm:$0xff]
  %v26 = vld [vmem:[%s1 + $0x24] sm:$0xf]
  %v27 = vld [vmem:[%s1 + $0x28] sm:$0xff]
  %v28 = vld [vmem:[%s1 + $0x30] sm:$0xff]
  %v29 = vld [vmem:[%s1 + $0x38] sm:$0xf]
  %v30 = vld [vmem:[%s1 + $0x3c] sm:$0xff]
  %v31 = vld [vmem:[%s1 + $0x44] sm:$0xff]
  %v32 = vld [vmem:[%s1 + $0x4c] sm:$0xf]
  %v33 = vld [vmem:[%s1 + $0x50] sm:$0xff]
  %v34 = vld [vmem:[%s1 + $0x58] sm:$0xff]
  %v35 = vld [vmem:[%s1 + $0x60] sm:$0xf]
  %v36 = vld [vmem:[%s1 + $0x64] sm:$0xff]
  %v37 = vld [vmem:[%s1 + $0x6c] sm:$0xff]
  %v38 = vld [vmem:[%s1 + $0x74] sm:$0xf]
  %v39 = vld [vmem:[%s1 + $0x78] sm:$0xff]
  %v40 = vld [vmem:[%s1 + $0x80] sm:$0xff]
  %v41 = vld [vmem:[%s1 + $0x88] sm:$0xf]
  %v42 = vld [vmem:[%s1 + $0x8c] sm:$0xff]
  %v43 = vld [vmem:[%s1 + $0x94] sm:$0xff]
  %v44 = vld [vmem:[%s1 + $0x9c] sm:$0xf]
  %v45 = vld [vmem:[%s0] sm:$0xff]
  %v46 = vld [vmem:[%s0 + $0x8] sm:$0xff]
  %v47 = vld [vmem:[%s0 + $0x10] sm:$0xff]
  %v48 = vld [vmem:[%s0 + $0x18] sm:$0xff]
  %v49 = vld [vmem:[%s0 + $0x20] sm:$0xff]
  %v50 = vld [vmem:[%s0 + $0x28] sm:$0xff]
  %v51 = vld [vmem:[%s0 + $0x30] sm:$0xff]
  %v52 = vld [vmem:[%s0 + $0x38] sm:$0xff]
  %v53 = vld [vmem:[%s0 + $0x40] sm:$0xff]
  %v54 = vld [vmem:[%s0 + $0x48] sm:$0xff]
  %v55 = vld [vmem:[%s0 + $0x50] sm:$0xff]
  %v56 = vld [vmem:[%s0 + $0x58] sm:$0xff]
  %v57 = vld [vmem:[%s0 + $0x60] sm:$0xff]
  %v58 = vld [vmem:[%s0 + $0x68] sm:$0xff]
  %v59 = vld [vmem:[%s0 + $0x70] sm:$0xff]
  %v60 = vld [vmem:[%s0 + $0x78] sm:$0xff]
  %v61 = vld [vmem:[%s0 + $0x80] sm:$0xff]
  %v62 = vld [vmem:[%s0 + $0x88] sm:$0xff]
  %v63 = vld [vmem:[%s0 + $0x90] sm:$0xff]
  %v64 = vld [vmem:[%s0 + $0x98] sm:$0xff]
  %v65 = vld [vmem:[%s0 + $0xa0] sm:$0xff]
  %v66 = vld [vmem:[%s0 + $0xa8] sm:$0xff]
  %v67 = vld [vmem:[%s0 + $0xb0] sm:$0xff]
  %v68 = vld [vmem:[%s0 + $0xb8] sm:$0xff]
  %v69 = vld [vmem:[%s0 + $0xc0] sm:$0xff]
  %v70 = vld [vmem:[%s0 + $0xc8] sm:$0xff]
  %v71 = vld [vmem:[%s0 + $0xd0] sm:$0xff]
  %v72 = vld [vmem:[%s0 + $0xd8] sm:$0xff]
  %v73 = vld [vmem:[%s0 + $0xe0] sm:$0xff]
  %v74 = vld [vmem:[%s0 + $0xe8] sm:$0xff]
  %v75 = vld [vmem:[%s0 + $0xf0] sm:$0xff]
  %v76 = vld [vmem:[%s0 + $0xf8] sm:$0xff]
  %v77 = vld [vmem:[%s0 + $0x100] sm:$0xff]
  %v78 = vld [vmem:[%s0 + $0x108] sm:$0xff]
  %v79 = vld [vmem:[%s0 + $0x110] sm:$0xff]
  %v80 = vld [vmem:[%s0 + $0x118] sm:$0xff]
  %v81 = vld [vmem:[%s0 + $0x120] sm:$0xff]
  %v82 = vld [vmem:[%s0 + $0x128] sm:$0xff]
  %v83 = vld [vmem:[%s0 + $0x130] sm:$0xff]
  %v84 = vld [vmem:[%s0 + $0x138] sm:$0xff]
  %v85 = vld [vmem:[%s0 + $0x140] sm:$0xff]
  %v86 = vld [vmem:[%s0 + $0x148] sm:$0xff]
  %v87 = vld [vmem:[%s0 + $0x150] sm:$0xff]
  %v88 = vld [vmem:[%s0 + $0x158] sm:$0xff]
  %v89 = vld [vmem:[%s0 + $0x160] sm:$0xff]
  %v90 = vld [vmem:[%s0 + $0x168] sm:$0xff]
  %v91 = vld [vmem:[%s0 + $0x170] sm:$0xff]
  %v92 = vld [vmem:[%s0 + $0x178] sm:$0xff]
  %v93 = vld [vmem:[%s0 + $0x180] sm:$0xff]
  %v94 = vld [vmem:[%s0 + $0x188] sm:$0xff]
  %v95 = vld [vmem:[%s0 + $0x190] sm:$0xff]
  %v96 = vld [vmem:[%s0 + $0x198] sm:$0xff]
  %v97 = vld [vmem:[%s0 + $0x1a0] sm:$0xff]
  %v98 = vld [vmem:[%s0 + $0x1a8] sm:$0xff]
  %v99 = vld [vmem:[%s0 + $0x1b0] sm:$0xff]
  %v100 = vld [vmem:[%s0 + $0x1b8] sm:$0xff]
  %v101 = vld [vmem:[%s0 + $0x1c0] sm:$0xff]
  %v102 = vld [vmem:[%s0 + $0x1c8] sm:$0xff]
  %v103 = vld [vmem:[%s0 + $0x1d0] sm:$0xff]
  %v104 = vld [vmem:[%s0 + $0x1d8] sm:$0xff]
  %v105 = vld [vmem:[%s0 + $0x1e0] sm:$0xff]
  %v106 = vld [vmem:[%s0 + $0x1e8] sm:$0xff]
  %v107 = vld [vmem:[%s0 + $0x1f0] sm:$0xff]
  %v108 = vld [vmem:[%s0 + $0x1f8] sm:$0xff]
  %v109 = vld [vmem:[%s0 + $0x200] sm:$0xff]
  %v110 = vld [vmem:[%s0 + $0x208] sm:$0xff]
  %v111 = vld [vmem:[%s0 + $0x210] sm:$0xff]
  %v112 = vld [vmem:[%s0 + $0x218] sm:$0xff]
  %v113 = vld [vmem:[%s0 + $0x220] sm:$0xff]
  %v114 = vld [vmem:[%s0 + $0x228] sm:$0xff]
  %v115 = vld [vmem:[%s0 + $0x230] sm:$0xff]
  %v116 = vld [vmem:[%s0 + $0x238] sm:$0xff]
  %v117 = vld [vmem:[%s0 + $0x240] sm:$0xff]
  %v118 = vld [vmem:[%s0 + $0x248] sm:$0xff]
  %v119 = vld [vmem:[%s0 + $0x250] sm:$0xff]
  %v120 = vld [vmem:[%s0 + $0x258] sm:$0xff]
  %v121 = vld [vmem:[%s0 + $0x260] sm:$0xff]
  %v122 = vld [vmem:[%s0 + $0x268] sm:$0xff]
  %v123 = vld [vmem:[%s0 + $0x270] sm:$0xff]
  %v124 = vld [vmem:[%s0 + $0x278] sm:$0xff]
  %v125 = vld [vmem:[%s0 + $0x280] sm:$0xff]
  %v126 = vld [vmem:[%s0 + $0x288] sm:$0xff]
  %v127 = vld [vmem:[%s0 + $0x290] sm:$0xff]
  %v128 = vld [vmem:[%s0 + $0x298] sm:$0xff]
  %v129 = vld [vmem:[%s0 + $0x2a0] sm:$0xff]
  %v130 = vld [vmem:[%s0 + $0x2a8] sm:$0xff]
  %v131 = vld [vmem:[%s0 + $0x2b0] sm:$0xff]
  %v132 = vld [vmem:[%s0 + $0x2b8] sm:$0xff]
  %v133 = vld [vmem:[%s0 + $0x2c0] sm:$0xff]
  %v134 = vld [vmem:[%s0 + $0x2c8] sm:$0xff]
  %v135 = vld [vmem:[%s0 + $0x2d0] sm:$0xff]
  %v136 = vld [vmem:[%s0 + $0x2d8] sm:$0xff]
  %v137 = vld [vmem:[%s0 + $0x2e0] sm:$0xff]
  %v138 = vld [vmem:[%s0 + $0x2e8] sm:$0xff]
  %v139 = vld [vmem:[%s0 + $0x2f0] sm:$0xff]
  %v140 = vld [vmem:[%s0 + $0x2f8] sm:$0xff]
  %v141 = vld [vmem:[%s0 + $0x300] sm:$0xff]
  %v142 = vld [vmem:[%s0 + $0x308] sm:$0xff]
  %v143 = vld [vmem:[%s0 + $0x310] sm:$0xff]
  %v144 = vld [vmem:[%s0 + $0x318] sm:$0xff]
  %v145 = vld [vmem:[%s0 + $0x320] sm:$0xff]
  %v146 = vld [vmem:[%s0 + $0x328] sm:$0xff]
  %v147 = vld [vmem:[%s0 + $0x330] sm:$0xff]
  %v148 = vld [vmem:[%s0 + $0x338] sm:$0xff]
  %v149 = vld [vmem:[%s0 + $0x340] sm:$0xff]
  %v150 = vld [vmem:[%s0 + $0x348] sm:$0xff]
  %v151 = vld [vmem:[%s0 + $0x350] sm:$0xff]
  %v152 = vld [vmem:[%s0 + $0x358] sm:$0xff]
  %v153 = vld [vmem:[%s0 + $0x360] sm:$0xff]
  %v154 = vld [vmem:[%s0 + $0x368] sm:$0xff]
  %v155 = vld [vmem:[%s0 + $0x370] sm:$0xff]
  %v156 = vld [vmem:[%s0 + $0x378] sm:$0xff]
  %v157 = vld [vmem:[%s0 + $0x380] sm:$0xff]
  %v158 = vld [vmem:[%s0 + $0x388] sm:$0xff]
  %v159 = vld [vmem:[%s0 + $0x390] sm:$0xff]
  %v160 = vld [vmem:[%s0 + $0x398] sm:$0xff]
  %v161 = vld [vmem:[%s0 + $0x3a0] sm:$0xff]
  %v162 = vld [vmem:[%s0 + $0x3a8] sm:$0xff]
  %v163 = vld [vmem:[%s0 + $0x3b0] sm:$0xff]
  %v164 = vld [vmem:[%s0 + $0x3b8] sm:$0xff]
  %v165 = vld [vmem:[%s0 + $0x3c0] sm:$0xff]
  %v166 = vld [vmem:[%s0 + $0x3c8] sm:$0xff]
  %v167 = vld [vmem:[%s0 + $0x3d0] sm:$0xff]
  %v168 = vld [vmem:[%s0 + $0x3d8] sm:$0xff]
  %v169 = vld [vmem:[%s0 + $0x3e0] sm:$0xff]
  %v170 = vld [vmem:[%s0 + $0x3e8] sm:$0xff]
  %v171 = vld [vmem:[%s0 + $0x3f0] sm:$0xff]
  %v172 = vld [vmem:[%s0 + $0x3f8] sm:$0xff]
  %v173 = vld [vmem:[%s0 + $0x400] sm:$0xff]
  %v174 = vld [vmem:[%s0 + $0x408] sm:$0xff]
  %v175 = vld [vmem:[%s0 + $0x410] sm:$0xff]
  %v176 = vld [vmem:[%s0 + $0x418] sm:$0xff]
  %v177 = vld [vmem:[%s0 + $0x420] sm:$0xff]
  %v178 = vld [vmem:[%s0 + $0x428] sm:$0xff]
  %v179 = vld [vmem:[%s0 + $0x430] sm:$0xff]
  %v180 = vld [vmem:[%s0 + $0x438] sm:$0xff]
  %v181 = vld [vmem:[%s0 + $0x440] sm:$0xff]
  %v182 = vld [vmem:[%s0 + $0x448] sm:$0xff]
  %v183 = vld [vmem:[%s0 + $0x450] sm:$0xff]
  %v184 = vld [vmem:[%s0 + $0x458] sm:$0xff]
  %v185 = vld [vmem:[%s0 + $0x460] sm:$0xff]
  %v186 = vld [vmem:[%s0 + $0x468] sm:$0xff]
  %v187 = vld [vmem:[%s0 + $0x470] sm:$0xff]
  %v188 = vld [vmem:[%s0 + $0x478] sm:$0xff]
  %v213 = vunpack.c.l.b16 %v21
  %v214 = vunpack.c.h.b16 %v21
  %v215 = vunpack.c.l.b16 %v22
  %v216 = vunpack.c.h.b16 %v22
  %v217 = vunpack.c.l.b16 %v23
  %v218 = vunpack.c.l.b16 %v24
  %v219 = vunpack.c.h.b16 %v24
  %v220 = vunpack.c.l.b16 %v25
  %v221 = vunpack.c.h.b16 %v25
  %v222 = vunpack.c.l.b16 %v26
  %v223 = vunpack.c.l.b16 %v27
  %v224 = vunpack.c.h.b16 %v27
  %v225 = vunpack.c.l.b16 %v28
  %v226 = vunpack.c.h.b16 %v28
  %v227 = vunpack.c.l.b16 %v29
  %v228 = vunpack.c.l.b16 %v30
  %v229 = vunpack.c.h.b16 %v30
  %v230 = vunpack.c.l.b16 %v31
  %v231 = vunpack.c.h.b16 %v31
  %v232 = vunpack.c.l.b16 %v32
  %v233 = vunpack.c.l.b16 %v33
  %v234 = vunpack.c.h.b16 %v33
  %v235 = vunpack.c.l.b16 %v34
  %v236 = vunpack.c.h.b16 %v34
  %v237 = vunpack.c.l.b16 %v35
  %v238 = vunpack.c.l.b16 %v36
  %v239 = vunpack.c.h.b16 %v36
  %v240 = vunpack.c.l.b16 %v37
  %v241 = vunpack.c.h.b16 %v37
  %v242 = vunpack.c.l.b16 %v38
  %v243 = vunpack.c.l.b16 %v39
  %v244 = vunpack.c.h.b16 %v39
  %v245 = vunpack.c.l.b16 %v40
  %v246 = vunpack.c.h.b16 %v40
  %v247 = vunpack.c.l.b16 %v41
  %v248 = vunpack.c.l.b16 %v42
  %v249 = vunpack.c.h.b16 %v42
  %v250 = vunpack.c.l.b16 %v43
  %v251 = vunpack.c.h.b16 %v43
  %v252 = vunpack.c.l.b16 %v44
  %v253 = vpack.c.b16 %v218, %v213
  %v254 = vpack.c.b16 %v219, %v214
  %v255 = vpack.c.b16 %v220, %v215
  %v256 = vpack.c.b16 %v221, %v216
  %v257 = vpack.c.b16 %v222, %v217
  %v258 = vpack.c.b16 %v228, %v223
  %v259 = vpack.c.b16 %v229, %v224
  %v260 = vpack.c.b16 %v230, %v225
  %v261 = vpack.c.b16 %v231, %v226
  %v262 = vpack.c.b16 %v232, %v227
  %v263 = vpack.c.b16 %v238, %v233
  %v264 = vpack.c.b16 %v239, %v234
  %v265 = vpack.c.b16 %v240, %v235
  %v266 = vpack.c.b16 %v241, %v236
  %v267 = vpack.c.b16 %v242, %v237
  %v268 = vpack.c.b16 %v248, %v243
  %v269 = vpack.c.b16 %v249, %v244
  %v270 = vpack.c.b16 %v250, %v245
  %v271 = vpack.c.b16 %v251, %v246
  %v272 = vpack.c.b16 %v252, %v247
  %v433 = vunpack.c.l.b16 %v45
  %v434 = vunpack.c.h.b16 %v45
  %v435 = vunpack.c.l.b16 %v46
  %v436 = vunpack.c.h.b16 %v46
  %v437 = vunpack.c.l.b16 %v47
  %v438 = vunpack.c.h.b16 %v47
  %v439 = vunpack.c.l.b16 %v48
  %v440 = vunpack.c.h.b16 %v48
  %v441 = vunpack.c.l.b16 %v49
  %v442 = vunpack.c.h.b16 %v49
  %v443 = vunpack.c.l.b16 %v50
  %v444 = vunpack.c.h.b16 %v50
  %v445 = vunpack.c.l.b16 %v51
  %v446 = vunpack.c.h.b16 %v51
  %v447 = vunpack.c.l.b16 %v52
  %v448 = vunpack.c.h.b16 %v52
  %v449 = vunpack.c.l.b16 %v53
  %v450 = vunpack.c.h.b16 %v53
  %v451 = vunpack.c.l.b16 %v54
  %v452 = vunpack.c.h.b16 %v54
  %v453 = vunpack.c.l.b16 %v55
  %v454 = vunpack.c.h.b16 %v55
  %v455 = vunpack.c.l.b16 %v56
  %v456 = vunpack.c.h.b16 %v56
  %v457 = vunpack.c.l.b16 %v57
  %v458 = vunpack.c.h.b16 %v57
  %v459 = vunpack.c.l.b16 %v58
  %v460 = vunpack.c.h.b16 %v58
  %v461 = vunpack.c.l.b16 %v59
  %v462 = vunpack.c.h.b16 %v59
  %v463 = vunpack.c.l.b16 %v60
  %v464 = vunpack.c.h.b16 %v60
  %v465 = vunpack.c.l.b16 %v61
  %v466 = vunpack.c.h.b16 %v61
  %v467 = vunpack.c.l.b16 %v62
  %v468 = vunpack.c.h.b16 %v62
  %v469 = vunpack.c.l.b16 %v63
  %v470 = vunpack.c.h.b16 %v63
  %v471 = vunpack.c.l.b16 %v64
  %v472 = vunpack.c.h.b16 %v64
  %v473 = vunpack.c.l.b16 %v65
  %v474 = vunpack.c.h.b16 %v65
  %v475 = vunpack.c.l.b16 %v66
  %v476 = vunpack.c.h.b16 %v66
  %v477 = vunpack.c.l.b16 %v67
  %v478 = vunpack.c.h.b16 %v67
  %v479 = vunpack.c.l.b16 %v68
  %v480 = vunpack.c.h.b16 %v68
  %v481 = vunpack.c.l.b16 %v69
  %v482 = vunpack.c.h.b16 %v69
  %v483 = vunpack.c.l.b16 %v70
  %v484 = vunpack.c.h.b16 %v70
  %v485 = vunpack.c.l.b16 %v71
  %v486 = vunpack.c.h.b16 %v71
  %v487 = vunpack.c.l.b16 %v72
  %v488 = vunpack.c.h.b16 %v72
  %v489 = vunpack.c.l.b16 %v73
  %v490 = vunpack.c.h.b16 %v73
  %v491 = vunpack.c.l.b16 %v74
  %v492 = vunpack.c.h.b16 %v74
  %v493 = vunpack.c.l.b16 %v75
  %v494 = vunpack.c.h.b16 %v75
  %v495 = vunpack.c.l.b16 %v76
  %v496 = vunpack.c.h.b16 %v76
  %v497 = vunpack.c.l.b16 %v77
  %v498 = vunpack.c.h.b16 %v77
  %v499 = vunpack.c.l.b16 %v78
  %v500 = vunpack.c.h.b16 %v78
  %v501 = vunpack.c.l.b16 %v79
  %v502 = vunpack.c.h.b16 %v79
  %v503 = vunpack.c.l.b16 %v80
  %v504 = vunpack.c.h.b16 %v80
  %v505 = vunpack.c.l.b16 %v81
  %v506 = vunpack.c.h.b16 %v81
  %v507 = vunpack.c.l.b16 %v82
  %v508 = vunpack.c.h.b16 %v82
  %v509 = vunpack.c.l.b16 %v83
  %v510 = vunpack.c.h.b16 %v83
  %v511 = vunpack.c.l.b16 %v84
  %v512 = vunpack.c.h.b16 %v84
  %v513 = vunpack.c.l.b16 %v85
  %v514 = vunpack.c.h.b16 %v85
  %v515 = vunpack.c.l.b16 %v86
  %v516 = vunpack.c.h.b16 %v86
  %v517 = vunpack.c.l.b16 %v87
  %v518 = vunpack.c.h.b16 %v87
  %v519 = vunpack.c.l.b16 %v88
  %v520 = vunpack.c.h.b16 %v88
  %v521 = vunpack.c.l.b16 %v89
  %v522 = vunpack.c.h.b16 %v89
  %v523 = vunpack.c.l.b16 %v90
  %v524 = vunpack.c.h.b16 %v90
  %v525 = vunpack.c.l.b16 %v91
  %v526 = vunpack.c.h.b16 %v91
  %v527 = vunpack.c.l.b16 %v92
  %v528 = vunpack.c.h.b16 %v92
  %v529 = vunpack.c.l.b16 %v93
  %v530 = vunpack.c.h.b16 %v93
  %v531 = vunpack.c.l.b16 %v94
  %v532 = vunpack.c.h.b16 %v94
  %v533 = vunpack.c.l.b16 %v95
  %v534 = vunpack.c.h.b16 %v95
  %v535 = vunpack.c.l.b16 %v96
  %v536 = vunpack.c.h.b16 %v96
  %v537 = vunpack.c.l.b16 %v97
  %v538 = vunpack.c.h.b16 %v97
  %v539 = vunpack.c.l.b16 %v98
  %v540 = vunpack.c.h.b16 %v98
  %v541 = vunpack.c.l.b16 %v99
  %v542 = vunpack.c.h.b16 %v99
  %v543 = vunpack.c.l.b16 %v100
  %v544 = vunpack.c.h.b16 %v100
  %v545 = vunpack.c.l.b16 %v101
  %v546 = vunpack.c.h.b16 %v101
  %v547 = vunpack.c.l.b16 %v102
  %v548 = vunpack.c.h.b16 %v102
  %v549 = vunpack.c.l.b16 %v103
  %v550 = vunpack.c.h.b16 %v103
  %v551 = vunpack.c.l.b16 %v104
  %v552 = vunpack.c.h.b16 %v104
  %v553 = vunpack.c.l.b16 %v105
  %v554 = vunpack.c.h.b16 %v105
  %v555 = vunpack.c.l.b16 %v106
  %v556 = vunpack.c.h.b16 %v106
  %v557 = vunpack.c.l.b16 %v107
  %v558 = vunpack.c.h.b16 %v107
  %v559 = vunpack.c.l.b16 %v108
  %v560 = vunpack.c.h.b16 %v108
  %v561 = vunpack.c.l.b16 %v109
  %v562 = vunpack.c.h.b16 %v109
  %v563 = vunpack.c.l.b16 %v110
  %v564 = vunpack.c.h.b16 %v110
  %v565 = vunpack.c.l.b16 %v111
  %v566 = vunpack.c.h.b16 %v111
  %v567 = vunpack.c.l.b16 %v112
  %v568 = vunpack.c.h.b16 %v112
  %v569 = vunpack.c.l.b16 %v113
  %v570 = vunpack.c.h.b16 %v113
  %v571 = vunpack.c.l.b16 %v114
  %v572 = vunpack.c.h.b16 %v114
  %v573 = vunpack.c.l.b16 %v115
  %v574 = vunpack.c.h.b16 %v115
  %v575 = vunpack.c.l.b16 %v116
  %v576 = vunpack.c.h.b16 %v116
  %v577 = vunpack.c.l.b16 %v117
  %v578 = vunpack.c.h.b16 %v117
  %v579 = vunpack.c.l.b16 %v118
  %v580 = vunpack.c.h.b16 %v118
  %v581 = vunpack.c.l.b16 %v119
  %v582 = vunpack.c.h.b16 %v119
  %v583 = vunpack.c.l.b16 %v120
  %v584 = vunpack.c.h.b16 %v120
  %v585 = vunpack.c.l.b16 %v121
  %v586 = vunpack.c.h.b16 %v121
  %v587 = vunpack.c.l.b16 %v122
  %v588 = vunpack.c.h.b16 %v122
  %v589 = vunpack.c.l.b16 %v123
  %v590 = vunpack.c.h.b16 %v123
  %v591 = vunpack.c.l.b16 %v124
  %v592 = vunpack.c.h.b16 %v124
  %v593 = vunpack.c.l.b16 %v125
  %v594 = vunpack.c.h.b16 %v125
  %v595 = vunpack.c.l.b16 %v126
  %v596 = vunpack.c.h.b16 %v126
  %v597 = vunpack.c.l.b16 %v127
  %v598 = vunpack.c.h.b16 %v127
  %v599 = vunpack.c.l.b16 %v128
  %v600 = vunpack.c.h.b16 %v128
  %v601 = vunpack.c.l.b16 %v129
  %v602 = vunpack.c.h.b16 %v129
  %v603 = vunpack.c.l.b16 %v130
  %v604 = vunpack.c.h.b16 %v130
  %v605 = vunpack.c.l.b16 %v131
  %v606 = vunpack.c.h.b16 %v131
  %v607 = vunpack.c.l.b16 %v132
  %v608 = vunpack.c.h.b16 %v132
  %v609 = vunpack.c.l.b16 %v133
  %v610 = vunpack.c.h.b16 %v133
  %v611 = vunpack.c.l.b16 %v134
  %v612 = vunpack.c.h.b16 %v134
  %v613 = vunpack.c.l.b16 %v135
  %v614 = vunpack.c.h.b16 %v135
  %v615 = vunpack.c.l.b16 %v136
  %v616 = vunpack.c.h.b16 %v136
  %v617 = vunpack.c.l.b16 %v137
  %v618 = vunpack.c.h.b16 %v137
  %v619 = vunpack.c.l.b16 %v138
  %v620 = vunpack.c.h.b16 %v138
  %v621 = vunpack.c.l.b16 %v139
  %v622 = vunpack.c.h.b16 %v139
  %v623 = vunpack.c.l.b16 %v140
  %v624 = vunpack.c.h.b16 %v140
  %v625 = vunpack.c.l.b16 %v141
  %v626 = vunpack.c.h.b16 %v141
  %v627 = vunpack.c.l.b16 %v142
  %v628 = vunpack.c.h.b16 %v142
  %v629 = vunpack.c.l.b16 %v143
  %v630 = vunpack.c.h.b16 %v143
  %v631 = vunpack.c.l.b16 %v144
  %v632 = vunpack.c.h.b16 %v144
  %v633 = vunpack.c.l.b16 %v145
  %v634 = vunpack.c.h.b16 %v145
  %v635 = vunpack.c.l.b16 %v146
  %v636 = vunpack.c.h.b16 %v146
  %v637 = vunpack.c.l.b16 %v147
  %v638 = vunpack.c.h.b16 %v147
  %v639 = vunpack.c.l.b16 %v148
  %v640 = vunpack.c.h.b16 %v148
  %v641 = vunpack.c.l.b16 %v149
  %v642 = vunpack.c.h.b16 %v149
  %v643 = vunpack.c.l.b16 %v150
  %v644 = vunpack.c.h.b16 %v150
  %v645 = vunpack.c.l.b16 %v151
  %v646 = vunpack.c.h.b16 %v151
  %v647 = vunpack.c.l.b16 %v152
  %v648 = vunpack.c.h.b16 %v152
  %v649 = vunpack.c.l.b16 %v153
  %v650 = vunpack.c.h.b16 %v153
  %v651 = vunpack.c.l.b16 %v154
  %v652 = vunpack.c.h.b16 %v154
  %v653 = vunpack.c.l.b16 %v155
  %v654 = vunpack.c.h.b16 %v155
  %v655 = vunpack.c.l.b16 %v156
  %v656 = vunpack.c.h.b16 %v156
  %v657 = vunpack.c.l.b16 %v157
  %v658 = vunpack.c.h.b16 %v157
  %v659 = vunpack.c.l.b16 %v158
  %v660 = vunpack.c.h.b16 %v158
  %v661 = vunpack.c.l.b16 %v159
  %v662 = vunpack.c.h.b16 %v159
  %v663 = vunpack.c.l.b16 %v160
  %v664 = vunpack.c.h.b16 %v160
  %v665 = vunpack.c.l.b16 %v161
  %v666 = vunpack.c.h.b16 %v161
  %v667 = vunpack.c.l.b16 %v162
  %v668 = vunpack.c.h.b16 %v162
  %v669 = vunpack.c.l.b16 %v163
  %v670 = vunpack.c.h.b16 %v163
  %v671 = vunpack.c.l.b16 %v164
  %v672 = vunpack.c.h.b16 %v164
  %v673 = vunpack.c.l.b16 %v165
  %v674 = vunpack.c.h.b16 %v165
  %v675 = vunpack.c.l.b16 %v166
  %v676 = vunpack.c.h.b16 %v166
  %v677 = vunpack.c.l.b16 %v167
  %v678 = vunpack.c.h.b16 %v167
  %v679 = vunpack.c.l.b16 %v168
  %v680 = vunpack.c.h.b16 %v168
  %v681 = vunpack.c.l.b16 %v169
  %v682 = vunpack.c.h.b16 %v169
  %v683 = vunpack.c.l.b16 %v170
  %v684 = vunpack.c.h.b16 %v170
  %v685 = vunpack.c.l.b16 %v171
  %v686 = vunpack.c.h.b16 %v171
  %v687 = vunpack.c.l.b16 %v172
  %v688 = vunpack.c.h.b16 %v172
  %v689 = vunpack.c.l.b16 %v173
  %v690 = vunpack.c.h.b16 %v173
  %v691 = vunpack.c.l.b16 %v174
  %v692 = vunpack.c.h.b16 %v174
  %v693 = vunpack.c.l.b16 %v175
  %v694 = vunpack.c.h.b16 %v175
  %v695 = vunpack.c.l.b16 %v176
  %v696 = vunpack.c.h.b16 %v176
  %v697 = vunpack.c.l.b16 %v177
  %v698 = vunpack.c.h.b16 %v177
  %v699 = vunpack.c.l.b16 %v178
  %v700 = vunpack.c.h.b16 %v178
  %v701 = vunpack.c.l.b16 %v179
  %v702 = vunpack.c.h.b16 %v179
  %v703 = vunpack.c.l.b16 %v180
  %v704 = vunpack.c.h.b16 %v180
  %v705 = vunpack.c.l.b16 %v181
  %v706 = vunpack.c.h.b16 %v181
  %v707 = vunpack.c.l.b16 %v182
  %v708 = vunpack.c.h.b16 %v182
  %v709 = vunpack.c.l.b16 %v183
  %v710 = vunpack.c.h.b16 %v183
  %v711 = vunpack.c.l.b16 %v184
  %v712 = vunpack.c.h.b16 %v184
  %v713 = vunpack.c.l.b16 %v185
  %v714 = vunpack.c.h.b16 %v185
  %v715 = vunpack.c.l.b16 %v186
  %v716 = vunpack.c.h.b16 %v186
  %v717 = vunpack.c.l.b16 %v187
  %v718 = vunpack.c.h.b16 %v187
  %v719 = vunpack.c.l.b16 %v188
  %v720 = vunpack.c.h.b16 %v188
  %v721 = vpack.c.b16 %v437, %v433
  %v722 = vpack.c.b16 %v438, %v434
  %v723 = vpack.c.b16 %v439, %v435
  %v724 = vpack.c.b16 %v440, %v436
  %v725 = vpack.c.b16 %v445, %v441
  %v726 = vpack.c.b16 %v446, %v442
  %v727 = vpack.c.b16 %v447, %v443
  %v728 = vpack.c.b16 %v448, %v444
  %v729 = vpack.c.b16 %v453, %v449
  %v730 = vpack.c.b16 %v454, %v450
  %v731 = vpack.c.b16 %v455, %v451
  %v732 = vpack.c.b16 %v456, %v452
  %v733 = vpack.c.b16 %v461, %v457
  %v734 = vpack.c.b16 %v462, %v458
  %v735 = vpack.c.b16 %v463, %v459
  %v736 = vpack.c.b16 %v464, %v460
  %v737 = vpack.c.b16 %v469, %v465
  %v738 = vpack.c.b16 %v470, %v466
  %v739 = vpack.c.b16 %v471, %v467
  %v740 = vpack.c.b16 %v472, %v468
  %v741 = vpack.c.b16 %v477, %v473
  %v742 = vpack.c.b16 %v478, %v474
  %v743 = vpack.c.b16 %v479, %v475
  %v744 = vpack.c.b16 %v480, %v476
  %v745 = vpack.c.b16 %v485, %v481
  %v746 = vpack.c.b16 %v486, %v482
  %v747 = vpack.c.b16 %v487, %v483
  %v748 = vpack.c.b16 %v488, %v484
  %v749 = vpack.c.b16 %v493, %v489
  %v750 = vpack.c.b16 %v494, %v490
  %v751 = vpack.c.b16 %v495, %v491
  %v752 = vpack.c.b16 %v496, %v492
  %v753 = vpack.c.b16 %v501, %v497
  %v754 = vpack.c.b16 %v502, %v498
  %v755 = vpack.c.b16 %v503, %v499
  %v756 = vpack.c.b16 %v504, %v500
  %v757 = vpack.c.b16 %v509, %v505
  %v758 = vpack.c.b16 %v510, %v506
  %v759 = vpack.c.b16 %v511, %v507
  %v760 = vpack.c.b16 %v512, %v508
  %v761 = vpack.c.b16 %v517, %v513
  %v762 = vpack.c.b16 %v518, %v514
  %v763 = vpack.c.b16 %v519, %v515
  %v764 = vpack.c.b16 %v520, %v516
  %v765 = vpack.c.b16 %v525, %v521
  %v766 = vpack.c.b16 %v526, %v522
  %v767 = vpack.c.b16 %v527, %v523
  %v768 = vpack.c.b16 %v528, %v524
  %v769 = vpack.c.b16 %v533, %v529
  %v770 = vpack.c.b16 %v534, %v530
  %v771 = vpack.c.b16 %v535, %v531
  %v772 = vpack.c.b16 %v536, %v532
  %v773 = vpack.c.b16 %v541, %v537
  %v774 = vpack.c.b16 %v542, %v538
  %v775 = vpack.c.b16 %v543, %v539
  %v776 = vpack.c.b16 %v544, %v540
  %v777 = vpack.c.b16 %v549, %v545
  %v778 = vpack.c.b16 %v550, %v546
  %v779 = vpack.c.b16 %v551, %v547
  %v780 = vpack.c.b16 %v552, %v548
  %v781 = vpack.c.b16 %v557, %v553
  %v782 = vpack.c.b16 %v558, %v554
  %v783 = vpack.c.b16 %v559, %v555
  %v784 = vpack.c.b16 %v560, %v556
  %v785 = vpack.c.b16 %v565, %v561
  %v786 = vpack.c.b16 %v566, %v562
  %v787 = vpack.c.b16 %v567, %v563
  %v788 = vpack.c.b16 %v568, %v564
  %v789 = vpack.c.b16 %v573, %v569
  %v790 = vpack.c.b16 %v574, %v570
  %v791 = vpack.c.b16 %v575, %v571
  %v792 = vpack.c.b16 %v576, %v572
  %v793 = vpack.c.b16 %v581, %v577
  %v794 = vpack.c.b16 %v582, %v578
  %v795 = vpack.c.b16 %v583, %v579
  %v796 = vpack.c.b16 %v584, %v580
  %v797 = vpack.c.b16 %v589, %v585
  %v798 = vpack.c.b16 %v590, %v586
  %v799 = vpack.c.b16 %v591, %v587
  %v800 = vpack.c.b16 %v592, %v588
  %v801 = vpack.c.b16 %v597, %v593
  %v802 = vpack.c.b16 %v598, %v594
  %v803 = vpack.c.b16 %v599, %v595
  %v804 = vpack.c.b16 %v600, %v596
  %v805 = vpack.c.b16 %v605, %v601
  %v806 = vpack.c.b16 %v606, %v602
  %v807 = vpack.c.b16 %v607, %v603
  %v808 = vpack.c.b16 %v608, %v604
  %v809 = vpack.c.b16 %v613, %v609
  %v810 = vpack.c.b16 %v614, %v610
  %v811 = vpack.c.b16 %v615, %v611
  %v812 = vpack.c.b16 %v616, %v612
  %v813 = vpack.c.b16 %v621, %v617
  %v814 = vpack.c.b16 %v622, %v618
  %v815 = vpack.c.b16 %v623, %v619
  %v816 = vpack.c.b16 %v624, %v620
  %v817 = vpack.c.b16 %v629, %v625
  %v818 = vpack.c.b16 %v630, %v626
  %v819 = vpack.c.b16 %v631, %v627
  %v820 = vpack.c.b16 %v632, %v628
  %v821 = vpack.c.b16 %v637, %v633
  %v822 = vpack.c.b16 %v638, %v634
  %v823 = vpack.c.b16 %v639, %v635
  %v824 = vpack.c.b16 %v640, %v636
  %v825 = vpack.c.b16 %v645, %v641
  %v826 = vpack.c.b16 %v646, %v642
  %v827 = vpack.c.b16 %v647, %v643
  %v828 = vpack.c.b16 %v648, %v644
  %v829 = vpack.c.b16 %v653, %v649
  %v830 = vpack.c.b16 %v654, %v650
  %v831 = vpack.c.b16 %v655, %v651
  %v832 = vpack.c.b16 %v656, %v652
  %v833 = vpack.c.b16 %v661, %v657
  %v834 = vpack.c.b16 %v662, %v658
  %v835 = vpack.c.b16 %v663, %v659
  %v836 = vpack.c.b16 %v664, %v660
  %v837 = vpack.c.b16 %v669, %v665
  %v838 = vpack.c.b16 %v670, %v666
  %v839 = vpack.c.b16 %v671, %v667
  %v840 = vpack.c.b16 %v672, %v668
  %v841 = vpack.c.b16 %v677, %v673
  %v842 = vpack.c.b16 %v678, %v674
  %v843 = vpack.c.b16 %v679, %v675
  %v844 = vpack.c.b16 %v680, %v676
  %v845 = vpack.c.b16 %v685, %v681
  %v846 = vpack.c.b16 %v686, %v682
  %v847 = vpack.c.b16 %v687, %v683
  %v848 = vpack.c.b16 %v688, %v684
  %v849 = vpack.c.b16 %v693, %v689
  %v850 = vpack.c.b16 %v694, %v690
  %v851 = vpack.c.b16 %v695, %v691
  %v852 = vpack.c.b16 %v696, %v692
  %v853 = vpack.c.b16 %v701, %v697
  %v854 = vpack.c.b16 %v702, %v698
  %v855 = vpack.c.b16 %v703, %v699
  %v856 = vpack.c.b16 %v704, %v700
  %v857 = vpack.c.b16 %v709, %v705
  %v858 = vpack.c.b16 %v710, %v706
  %v859 = vpack.c.b16 %v711, %v707
  %v860 = vpack.c.b16 %v712, %v708
  %v861 = vpack.c.b16 %v717, %v713
  %v862 = vpack.c.b16 %v718, %v714
  %v863 = vpack.c.b16 %v719, %v715
  %v864 = vpack.c.b16 %v720, %v716
  %vm1009 = vcmask 523264
  %v1011 = vsel %vm1009, %v257, 0
  %v1014 = vsel %vm1009, %v262, 0
  %v1017 = vsel %vm1009, %v267, 0
  %v1020 = vsel %vm1009, %v272, 0
  %1022 = vmatprep.subr.bf16.mxu0 %v722
  %1023 = vmatpush1.bf16.msra.mxu0 %v721
  %1024 = vmatprep.subr.bf16.mxu0 %v726
  %1025 = vmatpush1.bf16.msra.mxu0 %v725
  %1026 = vmatprep.subr.bf16.mxu0 %v730
  %1027 = vmatpush1.bf16.msra.mxu0 %v729
  %1028 = vmatprep.subr.bf16.mxu0 %v734
  %1029 = vmatpush1.bf16.msra.mxu0 %v733
  %1030 = vmatprep.subr.bf16.mxu0 %v738
  %1031 = vmatpush1.bf16.msra.mxu0 %v737
  %1032 = vmatprep.subr.bf16.mxu0 %v742
  %1033 = vmatpush1.bf16.msra.mxu0 %v741
  %1034 = vmatprep.subr.bf16.mxu0 %v746
  %1035 = vmatpush1.bf16.msra.mxu0 %v745
  %1036 = vmatprep.subr.bf16.mxu0 %v750
  %1037 = vmatpush1.bf16.msra.mxu0 %v749
  %1038 = vmatprep.subr.bf16.mxu0 %v754
  %1039 = vmatpush1.bf16.msra.mxu0 %v753
  %1040 = vmatprep.subr.bf16.mxu0 %v758
  %1041 = vmatpush1.bf16.msra.mxu0 %v757
  %1042 = vmatprep.subr.bf16.mxu0 %v762
  %1043 = vmatpush1.bf16.msra.mxu0 %v761
  %1044 = vmatprep.subr.bf16.mxu0 %v766
  %1045 = vmatpush1.bf16.msra.mxu0 %v765
  %1046 = vmatprep.subr.bf16.mxu0 %v770
  %1047 = vmatpush1.bf16.msra.mxu0 %v769
  %1048 = vmatprep.subr.bf16.mxu0 %v774
  %1049 = vmatpush1.bf16.msra.mxu0 %v773
  %1050 = vmatprep.subr.bf16.mxu0 %v778
  %1051 = vmatpush1.bf16.msra.mxu0 %v777
  %1052 = vmatprep.subr.bf16.mxu0 %v782
  %1053 = vmatpush1.bf16.msra.mxu0 %v781
  %1054 = vmatprep.mubr.bf16.mxu0 %v254
  %1055 = vmatmul.mubr.bf16.gmra.mrb[0].mxu0 %v253
  %v1056 = vpop.f32.mrb[0].mxu0
  %v1057 = vadd.f32 0.0, %v1056
  %v1058 = vpop.f32.mrb[0].mxu0
  %v1059 = vadd.f32 0.0, %v1058
  %v1060 = vpop.f32.mrb[0].mxu0
  %v1061 = vadd.f32 0.0, %v1060
  %v1062 = vpop.f32.mrb[0].mxu0
  %v1063 = vadd.f32 0.0, %v1062
  %1064 = vmatprep.mubr.bf16.mxu0 %v259
  %1065 = vmatmul.mubr.bf16.gmra.mrb[0].mxu0 %v258
  %v1066 = vpop.f32.mrb[0].mxu0
  %v1067 = vadd.f32 0.0, %v1066
  %v1068 = vpop.f32.mrb[0].mxu0
  %v1069 = vadd.f32 0.0, %v1068
  %v1070 = vpop.f32.mrb[0].mxu0
  %v1071 = vadd.f32 0.0, %v1070
  %v1072 = vpop.f32.mrb[0].mxu0
  %v1073 = vadd.f32 0.0, %v1072
  %1074 = vmatprep.mubr.bf16.mxu0 %v264
  %1075 = vmatmul.mubr.bf16.gmra.mrb[0].mxu0 %v263
  %v1076 = vpop.f32.mrb[0].mxu0
  %v1077 = vadd.f32 0.0, %v1076
  %v1078 = vpop.f32.mrb[0].mxu0
  %v1079 = vadd.f32 0.0, %v1078
  %v1080 = vpop.f32.mrb[0].mxu0
  %v1081 = vadd.f32 0.0, %v1080
  %v1082 = vpop.f32.mrb[0].mxu0
  %v1083 = vadd.f32 0.0, %v1082
  %1084 = vmatprep.mubr.bf16.mxu0 %v269
  %1085 = vmatmul.mubr.bf16.gmra.mrb[0].mxu0 %v268
  %v1086 = vpop.f32.mrb[0].mxu0
  %v1087 = vadd.f32 0.0, %v1086
  %v1088 = vpop.f32.mrb[0].mxu0
  %v1089 = vadd.f32 0.0, %v1088
  %v1090 = vpop.f32.mrb[0].mxu0
  %v1091 = vadd.f32 0.0, %v1090
  %v1092 = vpop.f32.mrb[0].mxu0
  %v1093 = vadd.f32 0.0, %v1092
  %1094 = vdwg.mxu0
  %1095 = vmatprep.subr.bf16.mxu0 %v786
  %1096 = vmatpush1.bf16.msra.mxu0 %v785
  %1097 = vmatprep.subr.bf16.mxu0 %v790
  %1098 = vmatpush1.bf16.msra.mxu0 %v789
  %1099 = vmatprep.subr.bf16.mxu0 %v794
  %1100 = vmatpush1.bf16.msra.mxu0 %v793
  %1101 = vmatprep.subr.bf16.mxu0 %v798
  %1102 = vmatpush1.bf16.msra.mxu0 %v797
  %1103 = vmatprep.subr.bf16.mxu0 %v802
  %1104 = vmatpush1.bf16.msra.mxu0 %v801
  %1105 = vmatprep.subr.bf16.mxu0 %v806
  %1106 = vmatpush1.bf16.msra.mxu0 %v805
  %1107 = vmatprep.subr.bf16.mxu0 %v810
  %1108 = vmatpush1.bf16.msra.mxu0 %v809
  %1109 = vmatprep.subr.bf16.mxu0 %v814
  %1110 = vmatpush1.bf16.msra.mxu0 %v813
  %1111 = vmatprep.subr.bf16.mxu0 %v818
  %1112 = vmatpush1.bf16.msra.mxu0 %v817
  %1113 = vmatprep.subr.bf16.mxu0 %v822
  %1114 = vmatpush1.bf16.msra.mxu0 %v821
  %1115 = vmatprep.subr.bf16.mxu0 %v826
  %1116 = vmatpush1.bf16.msra.mxu0 %v825
  %1117 = vmatprep.subr.bf16.mxu0 %v830
  %1118 = vmatpush1.bf16.msra.mxu0 %v829
  %1119 = vmatprep.subr.bf16.mxu0 %v834
  %1120 = vmatpush1.bf16.msra.mxu0 %v833
  %1121 = vmatprep.subr.bf16.mxu0 %v838
  %1122 = vmatpush1.bf16.msra.mxu0 %v837
  %1123 = vmatprep.subr.bf16.mxu0 %v842
  %1124 = vmatpush1.bf16.msra.mxu0 %v841
  %1125 = vmatprep.subr.bf16.mxu0 %v846
  %1126 = vmatpush1.bf16.msra.mxu0 %v845
  %1127 = vmatprep.mubr.bf16.mxu0 %v256
  %1128 = vmatmul.mubr.bf16.gmra.mrb[0].mxu0 %v255
  %v1129 = vpop.f32.mrb[0].mxu0
  %v1130 = vadd.f32 %v1057, %v1129
  %v1131 = vpop.f32.mrb[0].mxu0
  %v1132 = vadd.f32 %v1059, %v1131
  %v1133 = vpop.f32.mrb[0].mxu0
  %v1134 = vadd.f32 %v1061, %v1133
  %v1135 = vpop.f32.mrb[0].mxu0
  %v1136 = vadd.f32 %v1063, %v1135
  %1137 = vmatprep.mubr.bf16.mxu0 %v261
  %1138 = vmatmul.mubr.bf16.gmra.mrb[0].mxu0 %v260
  %v1139 = vpop.f32.mrb[0].mxu0
  %v1140 = vadd.f32 %v1067, %v1139
  %v1141 = vpop.f32.mrb[0].mxu0
  %v1142 = vadd.f32 %v1069, %v1141
  %v1143 = vpop.f32.mrb[0].mxu0
  %v1144 = vadd.f32 %v1071, %v1143
  %v1145 = vpop.f32.mrb[0].mxu0
  %v1146 = vadd.f32 %v1073, %v1145
  %1147 = vmatprep.mubr.bf16.mxu0 %v266
  %1148 = vmatmul.mubr.bf16.gmra.mrb[0].mxu0 %v265
  %v1149 = vpop.f32.mrb[0].mxu0
  %v1150 = vadd.f32 %v1077, %v1149
  %v1151 = vpop.f32.mrb[0].mxu0
  %v1152 = vadd.f32 %v1079, %v1151
  %v1153 = vpop.f32.mrb[0].mxu0
  %v1154 = vadd.f32 %v1081, %v1153
  %v1155 = vpop.f32.mrb[0].mxu0
  %v1156 = vadd.f32 %v1083, %v1155
  %1157 = vmatprep.mubr.bf16.mxu0 %v271
  %1158 = vmatmul.mubr.bf16.gmra.mrb[0].mxu0 %v270
  %v1159 = vpop.f32.mrb[0].mxu0
  %v1160 = vadd.f32 %v1087, %v1159
  %v1161 = vpop.f32.mrb[0].mxu0
  %v1162 = vadd.f32 %v1089, %v1161
  %v1163 = vpop.f32.mrb[0].mxu0
  %v1164 = vadd.f32 %v1091, %v1163
  %v1165 = vpop.f32.mrb[0].mxu0
  %v1166 = vadd.f32 %v1093, %v1165
  %1167 = vdwg.mxu0
  %1168 = vmatprep.subr.bf16.mxu0 %v850
  %1169 = vmatpush1.bf16.msra.mxu0 %v849
  %1170 = vmatprep.subr.bf16.mxu0 %v854
  %1171 = vmatpush1.bf16.msra.mxu0 %v853
  %1172 = vmatprep.subr.bf16.mxu0 %v858
  %1173 = vmatpush1.bf16.msra.mxu0 %v857
  %1174 = vmatprep.subr.bf16.mxu0 %v862
  %1175 = vmatpush1.bf16.msra.mxu0 %v861
  %1176 = vmatprep.subr.bf16.mxu0 0
  %1177 = vmatpush1.bf16.msra.mxu0 0
  %1178 = vmatprep.subr.bf16.mxu0 0
  %1179 = vmatpush1.bf16.msra.mxu0 0
  %1180 = vmatprep.subr.bf16.mxu0 0
  %1181 = vmatpush1.bf16.msra.mxu0 0
  %1182 = vmatprep.subr.bf16.mxu0 0
  %1183 = vmatpush1.bf16.msra.mxu0 0
  %1184 = vmatprep.subr.bf16.mxu0 0
  %1185 = vmatpush1.bf16.msra.mxu0 0
  %1186 = vmatprep.subr.bf16.mxu0 0
  %1187 = vmatpush1.bf16.msra.mxu0 0
  %1188 = vmatprep.subr.bf16.mxu0 0
  %1189 = vmatpush1.bf16.msra.mxu0 0
  %1190 = vmatprep.subr.bf16.mxu0 0
  %1191 = vmatpush1.bf16.msra.mxu0 0
  %1192 = vmatprep.subr.bf16.mxu0 0
  %1193 = vmatpush1.bf16.msra.mxu0 0
  %1194 = vmatprep.subr.bf16.mxu0 0
  %1195 = vmatpush1.bf16.msra.mxu0 0
  %1196 = vmatprep.subr.bf16.mxu0 0
  %1197 = vmatpush1.bf16.msra.mxu0 0
  %1198 = vmatprep.subr.bf16.mxu0 0
  %1199 = vmatpush1.bf16.msra.mxu0 0
  %1200 = vmatprep.mubr.bf16.mxu0 0
  %1201 = vmatmul.mubr.bf16.gmra.mrb[0].mxu0 %v1011
  %v1202 = vpop.f32.mrb[0].mxu0
  %v1203 = vadd.f32 %v1130, %v1202
  %v1204 = vpop.f32.mrb[0].mxu0
  %v1205 = vadd.f32 %v1132, %v1204
  %v1206 = vpop.f32.mrb[0].mxu0
  %v1207 = vadd.f32 %v1134, %v1206
  %v1208 = vpop.f32.mrb[0].mxu0
  %v1209 = vadd.f32 %v1136, %v1208
  %1210 = vmatprep.mubr.bf16.mxu0 0
  %1211 = vmatmul.mubr.bf16.gmra.mrb[0].mxu0 %v1014
  %v1212 = vpop.f32.mrb[0].mxu0
  %v1213 = vadd.f32 %v1140, %v1212
  %v1214 = vpop.f32.mrb[0].mxu0
  %v1215 = vadd.f32 %v1142, %v1214
  %v1216 = vpop.f32.mrb[0].mxu0
  %v1217 = vadd.f32 %v1144, %v1216
  %v1218 = vpop.f32.mrb[0].mxu0
  %v1219 = vadd.f32 %v1146, %v1218
  %1220 = vmatprep.mubr.bf16.mxu0 0
  %1221 = vmatmul.mubr.bf16.gmra.mrb[0].mxu0 %v1017
  %v1222 = vpop.f32.mrb[0].mxu0
  %v1223 = vadd.f32 %v1150, %v1222
  %v1224 = vpop.f32.mrb[0].mxu0
  %v1225 = vadd.f32 %v1152, %v1224
  %v1226 = vpop.f32.mrb[0].mxu0
  %v1227 = vadd.f32 %v1154, %v1226
  %v1228 = vpop.f32.mrb[0].mxu0
  %v1229 = vadd.f32 %v1156, %v1228
  %1230 = vmatprep.mubr.bf16.mxu0 0
  %1231 = vmatmul.mubr.bf16.gmra.mrb[0].mxu0 %v1020
  %v1232 = vpop.f32.mrb[0].mxu0
  %v1233 = vadd.f32 %v1160, %v1232
  %v1234 = vpop.f32.mrb[0].mxu0
  %v1235 = vadd.f32 %v1162, %v1234
  %v1236 = vpop.f32.mrb[0].mxu0
  %v1237 = vadd.f32 %v1164, %v1236
  %v1238 = vpop.f32.mrb[0].mxu0
  %v1239 = vadd.f32 %v1166, %v1238
  %1240 = vdwg.mxu0
  %1241 = vmatprep.subr.bf16.mxu0 %v724
  %1242 = vmatpush1.bf16.msra.mxu0 %v723
  %1243 = vmatprep.subr.bf16.mxu0 %v728
  %1244 = vmatpush1.bf16.msra.mxu0 %v727
  %1245 = vmatprep.subr.bf16.mxu0 %v732
  %1246 = vmatpush1.bf16.msra.mxu0 %v731
  %1247 = vmatprep.subr.bf16.mxu0 %v736
  %1248 = vmatpush1.bf16.msra.mxu0 %v735
  %1249 = vmatprep.subr.bf16.mxu0 %v740
  %1250 = vmatpush1.bf16.msra.mxu0 %v739
  %1251 = vmatprep.subr.bf16.mxu0 %v744
  %1252 = vmatpush1.bf16.msra.mxu0 %v743
  %1253 = vmatprep.subr.bf16.mxu0 %v748
  %1254 = vmatpush1.bf16.msra.mxu0 %v747
  %1255 = vmatprep.subr.bf16.mxu0 %v752
  %1256 = vmatpush1.bf16.msra.mxu0 %v751
  %1257 = vmatprep.subr.bf16.mxu0 %v756
  %1258 = vmatpush1.bf16.msra.mxu0 %v755
  %1259 = vmatprep.subr.bf16.mxu0 %v760
  %1260 = vmatpush1.bf16.msra.mxu0 %v759
  %1261 = vmatprep.subr.bf16.mxu0 %v764
  %1262 = vmatpush1.bf16.msra.mxu0 %v763
  %1263 = vmatprep.subr.bf16.mxu0 %v768
  %1264 = vmatpush1.bf16.msra.mxu0 %v767
  %1265 = vmatprep.subr.bf16.mxu0 %v772
  %1266 = vmatpush1.bf16.msra.mxu0 %v771
  %1267 = vmatprep.subr.bf16.mxu0 %v776
  %1268 = vmatpush1.bf16.msra.mxu0 %v775
  %1269 = vmatprep.subr.bf16.mxu0 %v780
  %1270 = vmatpush1.bf16.msra.mxu0 %v779
  %1271 = vmatprep.subr.bf16.mxu0 %v784
  %1272 = vmatpush1.bf16.msra.mxu0 %v783
  %1273 = vmatprep.mubr.bf16.mxu0 %v254
  %1274 = vmatmul.mubr.bf16.gmra.mrb[0].mxu0 %v253
  %v1275 = vpop.f32.mrb[0].mxu0
  %v1276 = vadd.f32 0.0, %v1275
  %v1277 = vpop.f32.mrb[0].mxu0
  %v1278 = vadd.f32 0.0, %v1277
  %v1279 = vpop.f32.mrb[0].mxu0
  %v1280 = vadd.f32 0.0, %v1279
  %v1281 = vpop.f32.mrb[0].mxu0
  %v1282 = vadd.f32 0.0, %v1281
  %1283 = vmatprep.mubr.bf16.mxu0 %v259
  %1284 = vmatmul.mubr.bf16.gmra.mrb[0].mxu0 %v258
  %v1285 = vpop.f32.mrb[0].mxu0
  %v1286 = vadd.f32 0.0, %v1285
  %v1287 = vpop.f32.mrb[0].mxu0
  %v1288 = vadd.f32 0.0, %v1287
  %v1289 = vpop.f32.mrb[0].mxu0
  %v1290 = vadd.f32 0.0, %v1289
  %v1291 = vpop.f32.mrb[0].mxu0
  %v1292 = vadd.f32 0.0, %v1291
  %1293 = vmatprep.mubr.bf16.mxu0 %v264
  %1294 = vmatmul.mubr.bf16.gmra.mrb[0].mxu0 %v263
  %v1295 = vpop.f32.mrb[0].mxu0
  %v1296 = vadd.f32 0.0, %v1295
  %v1297 = vpop.f32.mrb[0].mxu0
  %v1298 = vadd.f32 0.0, %v1297
  %v1299 = vpop.f32.mrb[0].mxu0
  %v1300 = vadd.f32 0.0, %v1299
  %v1301 = vpop.f32.mrb[0].mxu0
  %v1302 = vadd.f32 0.0, %v1301
  %1303 = vmatprep.mubr.bf16.mxu0 %v269
  %1304 = vmatmul.mubr.bf16.gmra.mrb[0].mxu0 %v268
  %v1305 = vpop.f32.mrb[0].mxu0
  %v1306 = vadd.f32 0.0, %v1305
  %v1307 = vpop.f32.mrb[0].mxu0
  %v1308 = vadd.f32 0.0, %v1307
  %v1309 = vpop.f32.mrb[0].mxu0
  %v1310 = vadd.f32 0.0, %v1309
  %v1311 = vpop.f32.mrb[0].mxu0
  %v1312 = vadd.f32 0.0, %v1311
  %1313 = vdwg.mxu0
  %1314 = vmatprep.subr.bf16.mxu0 %v788
  %1315 = vmatpush1.bf16.msra.mxu0 %v787
  %1316 = vmatprep.subr.bf16.mxu0 %v792
  %1317 = vmatpush1.bf16.msra.mxu0 %v791
  %1318 = vmatprep.subr.bf16.mxu0 %v796
  %1319 = vmatpush1.bf16.msra.mxu0 %v795
  %1320 = vmatprep.subr.bf16.mxu0 %v800
  %1321 = vmatpush1.bf16.msra.mxu0 %v799
  %1322 = vmatprep.subr.bf16.mxu0 %v804
  %1323 = vmatpush1.bf16.msra.mxu0 %v803
  %1324 = vmatprep.subr.bf16.mxu0 %v808
  %1325 = vmatpush1.bf16.msra.mxu0 %v807
  %1326 = vmatprep.subr.bf16.mxu0 %v812
  %1327 = vmatpush1.bf16.msra.mxu0 %v811
  %1328 = vmatprep.subr.bf16.mxu0 %v816
  %1329 = vmatpush1.bf16.msra.mxu0 %v815
  %1330 = vmatprep.subr.bf16.mxu0 %v820
  %1331 = vmatpush1.bf16.msra.mxu0 %v819
  %1332 = vmatprep.subr.bf16.mxu0 %v824
  %1333 = vmatpush1.bf16.msra.mxu0 %v823
  %1334 = vmatprep.subr.bf16.mxu0 %v828
  %1335 = vmatpush1.bf16.msra.mxu0 %v827
  %1336 = vmatprep.subr.bf16.mxu0 %v832
  %1337 = vmatpush1.bf16.msra.mxu0 %v831
  %1338 = vmatprep.subr.bf16.mxu0 %v836
  %1339 = vmatpush1.bf16.msra.mxu0 %v835
  %1340 = vmatprep.subr.bf16.mxu0 %v840
  %1341 = vmatpush1.bf16.msra.mxu0 %v839
  %1342 = vmatprep.subr.bf16.mxu0 %v844
  %1343 = vmatpush1.bf16.msra.mxu0 %v843
  %1344 = vmatprep.subr.bf16.mxu0 %v848
  %1345 = vmatpush1.bf16.msra.mxu0 %v847
  %1346 = vmatprep.mubr.bf16.mxu0 %v256
  %1347 = vmatmul.mubr.bf16.gmra.mrb[0].mxu0 %v255
  %v1348 = vpop.f32.mrb[0].mxu0
  %v1349 = vadd.f32 %v1276, %v1348
  %v1350 = vpop.f32.mrb[0].mxu0
  %v1351 = vadd.f32 %v1278, %v1350
  %v1352 = vpop.f32.mrb[0].mxu0
  %v1353 = vadd.f32 %v1280, %v1352
  %v1354 = vpop.f32.mrb[0].mxu0
  %v1355 = vadd.f32 %v1282, %v1354
  %1356 = vmatprep.mubr.bf16.mxu0 %v261
  %1357 = vmatmul.mubr.bf16.gmra.mrb[0].mxu0 %v260
  %v1358 = vpop.f32.mrb[0].mxu0
  %v1359 = vadd.f32 %v1286, %v1358
  %v1360 = vpop.f32.mrb[0].mxu0
  %v1361 = vadd.f32 %v1288, %v1360
  %v1362 = vpop.f32.mrb[0].mxu0
  %v1363 = vadd.f32 %v1290, %v1362
  %v1364 = vpop.f32.mrb[0].mxu0
  %v1365 = vadd.f32 %v1292, %v1364
  %1366 = vmatprep.mubr.bf16.mxu0 %v266
  %1367 = vmatmul.mubr.bf16.gmra.mrb[0].mxu0 %v265
  %v1368 = vpop.f32.mrb[0].mxu0
  %v1369 = vadd.f32 %v1296, %v1368
  %v1370 = vpop.f32.mrb[0].mxu0
  %v1371 = vadd.f32 %v1298, %v1370
  %v1372 = vpop.f32.mrb[0].mxu0
  %v1373 = vadd.f32 %v1300, %v1372
  %v1374 = vpop.f32.mrb[0].mxu0
  %v1375 = vadd.f32 %v1302, %v1374
  %1376 = vmatprep.mubr.bf16.mxu0 %v271
  %1377 = vmatmul.mubr.bf16.gmra.mrb[0].mxu0 %v270
  %v1378 = vpop.f32.mrb[0].mxu0
  %v1379 = vadd.f32 %v1306, %v1378
  %v1380 = vpop.f32.mrb[0].mxu0
  %v1381 = vadd.f32 %v1308, %v1380
  %v1382 = vpop.f32.mrb[0].mxu0
  %v1383 = vadd.f32 %v1310, %v1382
  %v1384 = vpop.f32.mrb[0].mxu0
  %v1385 = vadd.f32 %v1312, %v1384
  %1386 = vdwg.mxu0
  %1387 = vmatprep.subr.bf16.mxu0 %v852
  %1388 = vmatpush1.bf16.msra.mxu0 %v851
  %1389 = vmatprep.subr.bf16.mxu0 %v856
  %1390 = vmatpush1.bf16.msra.mxu0 %v855
  %1391 = vmatprep.subr.bf16.mxu0 %v860
  %1392 = vmatpush1.bf16.msra.mxu0 %v859
  %1393 = vmatprep.subr.bf16.mxu0 %v864
  %1394 = vmatpush1.bf16.msra.mxu0 %v863
  %1395 = vmatprep.subr.bf16.mxu0 0
  %1396 = vmatpush1.bf16.msra.mxu0 0
  %1397 = vmatprep.subr.bf16.mxu0 0
  %1398 = vmatpush1.bf16.msra.mxu0 0
  %1399 = vmatprep.subr.bf16.mxu0 0
  %1400 = vmatpush1.bf16.msra.mxu0 0
  %1401 = vmatprep.subr.bf16.mxu0 0
  %1402 = vmatpush1.bf16.msra.mxu0 0
  %1403 = vmatprep.subr.bf16.mxu0 0
  %1404 = vmatpush1.bf16.msra.mxu0 0
  %1405 = vmatprep.subr.bf16.mxu0 0
  %1406 = vmatpush1.bf16.msra.mxu0 0
  %1407 = vmatprep.subr.bf16.mxu0 0
  %1408 = vmatpush1.bf16.msra.mxu0 0
  %1409 = vmatprep.subr.bf16.mxu0 0
  %1410 = vmatpush1.bf16.msra.mxu0 0
  %1411 = vmatprep.subr.bf16.mxu0 0
  %1412 = vmatpush1.bf16.msra.mxu0 0
  %1413 = vmatprep.subr.bf16.mxu0 0
  %1414 = vmatpush1.bf16.msra.mxu0 0
  %1415 = vmatprep.subr.bf16.mxu0 0
  %1416 = vmatpush1.bf16.msra.mxu0 0
  %1417 = vmatprep.subr.bf16.mxu0 0
  %1418 = vmatpush1.bf16.msra.mxu0 0
  %1419 = vmatprep.mubr.bf16.mxu0 0
  %1420 = vmatmul.mubr.bf16.gmra.mrb[0].mxu0 %v1011
  %v1421 = vpop.f32.mrb[0].mxu0
  %v1422 = vadd.f32 %v1349, %v1421
  %v1423 = vpop.f32.mrb[0].mxu0
  %v1424 = vadd.f32 %v1351, %v1423
  %v1425 = vpop.f32.mrb[0].mxu0
  %v1426 = vadd.f32 %v1353, %v1425
  %v1427 = vpop.f32.mrb[0].mxu0
  %v1428 = vadd.f32 %v1355, %v1427
  %1429 = vmatprep.mubr.bf16.mxu0 0
  %1430 = vmatmul.mubr.bf16.gmra.mrb[0].mxu0 %v1014
  %v1431 = vpop.f32.mrb[0].mxu0
  %v1432 = vadd.f32 %v1359, %v1431
  %v1433 = vpop.f32.mrb[0].mxu0
  %v1434 = vadd.f32 %v1361, %v1433
  %v1435 = vpop.f32.mrb[0].mxu0
  %v1436 = vadd.f32 %v1363, %v1435
  %v1437 = vpop.f32.mrb[0].mxu0
  %v1438 = vadd.f32 %v1365, %v1437
  %1439 = vmatprep.mubr.bf16.mxu0 0
  %1440 = vmatmul.mubr.bf16.gmra.mrb[0].mxu0 %v1017
  %v1441 = vpop.f32.mrb[0].mxu0
  %v1442 = vadd.f32 %v1369, %v1441
  %v1443 = vpop.f32.mrb[0].mxu0
  %v1444 = vadd.f32 %v1371, %v1443
  %v1445 = vpop.f32.mrb[0].mxu0
  %v1446 = vadd.f32 %v1373, %v1445
  %v1447 = vpop.f32.mrb[0].mxu0
  %v1448 = vadd.f32 %v1375, %v1447
  %1449 = vmatprep.mubr.bf16.mxu0 0
  %1450 = vmatmul.mubr.bf16.gmra.mrb[0].mxu0 %v1020
  %v1451 = vpop.f32.mrb[0].mxu0
  %v1452 = vadd.f32 %v1379, %v1451
  %v1453 = vpop.f32.mrb[0].mxu0
  %v1454 = vadd.f32 %v1381, %v1453
  %v1455 = vpop.f32.mrb[0].mxu0
  %v1456 = vadd.f32 %v1383, %v1455
  %v1457 = vpop.f32.mrb[0].mxu0
  %v1458 = vadd.f32 %v1385, %v1457
  %1459 = vdwg.mxu0
  %v1460 = vld [vmem:[%s2] sm:$0xff]
  %v1461 = vld [vmem:[%s2 + $0x8] sm:$0xff]
  %v1462 = vld [vmem:[%s2 + $0x10] sm:$0xff]
  %v1463 = vld [vmem:[%s2 + $0x18] sm:$0xff]
  %v1464 = vld [vmem:[%s2 + $0x20] sm:$0xff]
  %v1465 = vld [vmem:[%s2 + $0x28] sm:$0xff]
  %v1466 = vld [vmem:[%s2 + $0x30] sm:$0xff]
  %v1467 = vld [vmem:[%s2 + $0x38] sm:$0xff]
  %1469 = vset.pattern.permute.xlu0 0
  %1470 = vperm.xlu0 %1469, %v1460
  %v1471 = vpop.permute.xlu0 %1470
  %1474 = vset.pattern.permute.xlu0 0
  %1475 = vperm.xlu0 %1474, %v1461
  %v1476 = vpop.permute.xlu0 %1475
  %1479 = vset.pattern.permute.xlu0 0
  %1480 = vperm.xlu0 %1479, %v1462
  %v1481 = vpop.permute.xlu0 %1480
  %1484 = vset.pattern.permute.xlu0 0
  %1485 = vperm.xlu0 %1484, %v1463
  %v1486 = vpop.permute.xlu0 %1485
  %1489 = vset.pattern.permute.xlu0 0
  %1490 = vperm.xlu0 %1489, %v1464
  %v1491 = vpop.permute.xlu0 %1490
  %1494 = vset.pattern.permute.xlu0 0
  %1495 = vperm.xlu0 %1494, %v1465
  %v1496 = vpop.permute.xlu0 %1495
  %1499 = vset.pattern.permute.xlu0 0
  %1500 = vperm.xlu0 %1499, %v1466
  %v1501 = vpop.permute.xlu0 %1500
  %1504 = vset.pattern.permute.xlu0 0
  %1505 = vperm.xlu0 %1504, %v1467
  %v1506 = vpop.permute.xlu0 %1505
  %v1508 = vmul.f32 %v1203, %v1471
  %v1509 = vmul.f32 %v1205, %v1471
  %v1510 = vmul.f32 %v1422, %v1471
  %v1511 = vmul.f32 %v1424, %v1471
  %v1512 = vmul.f32 %v1207, %v1476
  %v1513 = vmul.f32 %v1209, %v1476
  %v1514 = vmul.f32 %v1426, %v1476
  %v1515 = vmul.f32 %v1428, %v1476
  %v1516 = vmul.f32 %v1213, %v1481
  %v1517 = vmul.f32 %v1215, %v1481
  %v1518 = vmul.f32 %v1432, %v1481
  %v1519 = vmul.f32 %v1434, %v1481
  %v1520 = vmul.f32 %v1217, %v1486
  %v1521 = vmul.f32 %v1219, %v1486
  %v1522 = vmul.f32 %v1436, %v1486
  %v1523 = vmul.f32 %v1438, %v1486
  %v1524 = vmul.f32 %v1223, %v1491
  %v1525 = vmul.f32 %v1225, %v1491
  %v1526 = vmul.f32 %v1442, %v1491
  %v1527 = vmul.f32 %v1444, %v1491
  %v1528 = vmul.f32 %v1227, %v1496
  %v1529 = vmul.f32 %v1229, %v1496
  %v1530 = vmul.f32 %v1446, %v1496
  %v1531 = vmul.f32 %v1448, %v1496
  %v1532 = vmul.f32 %v1233, %v1501
  %v1533 = vmul.f32 %v1235, %v1501
  %v1534 = vmul.f32 %v1452, %v1501
  %v1535 = vmul.f32 %v1454, %v1501
  %v1536 = vmul.f32 %v1237, %v1506
  %v1537 = vmul.f32 %v1239, %v1506
  %v1538 = vmul.f32 %v1456, %v1506
  %v1539 = vmul.f32 %v1458, %v1506
  %v1540 = vld [vmem:[%s3] sm:$0xff]
  %v1541 = vld [vmem:[%s3 + $0x8] sm:$0xff]
  %v1542 = vld [vmem:[%s3 + $0x10] sm:$0xff]
  %v1543 = vld [vmem:[%s3 + $0x18] sm:$0xff]
  %v1544 = vld [vmem:[%s3 + $0x20] sm:$0xff]
  %v1545 = vld [vmem:[%s3 + $0x28] sm:$0xff]
  %v1546 = vld [vmem:[%s3 + $0x30] sm:$0xff]
  %v1547 = vld [vmem:[%s3 + $0x38] sm:$0xff]
  %1549 = vset.pattern.permute.xlu0 0
  %1550 = vperm.xlu0 %1549, %v1540
  %v1551 = vpop.permute.xlu0 %1550
  %1554 = vset.pattern.permute.xlu0 0
  %1555 = vperm.xlu0 %1554, %v1541
  %v1556 = vpop.permute.xlu0 %1555
  %1559 = vset.pattern.permute.xlu0 0
  %1560 = vperm.xlu0 %1559, %v1542
  %v1561 = vpop.permute.xlu0 %1560
  %1564 = vset.pattern.permute.xlu0 0
  %1565 = vperm.xlu0 %1564, %v1543
  %v1566 = vpop.permute.xlu0 %1565
  %1569 = vset.pattern.permute.xlu0 0
  %1570 = vperm.xlu0 %1569, %v1544
  %v1571 = vpop.permute.xlu0 %1570
  %1574 = vset.pattern.permute.xlu0 0
  %1575 = vperm.xlu0 %1574, %v1545
  %v1576 = vpop.permute.xlu0 %1575
  %1579 = vset.pattern.permute.xlu0 0
  %1580 = vperm.xlu0 %1579, %v1546
  %v1581 = vpop.permute.xlu0 %1580
  %1584 = vset.pattern.permute.xlu0 0
  %1585 = vperm.xlu0 %1584, %v1547
  %v1586 = vpop.permute.xlu0 %1585
  %v1588 = vadd.f32 %v1508, %v1551
  %v1589 = vadd.f32 %v1509, %v1551
  %v1590 = vadd.f32 %v1510, %v1551
  %v1591 = vadd.f32 %v1511, %v1551
  %v1592 = vadd.f32 %v1512, %v1556
  %v1593 = vadd.f32 %v1513, %v1556
  %v1594 = vadd.f32 %v1514, %v1556
  %v1595 = vadd.f32 %v1515, %v1556
  %v1596 = vadd.f32 %v1516, %v1561
  %v1597 = vadd.f32 %v1517, %v1561
  %v1598 = vadd.f32 %v1518, %v1561
  %v1599 = vadd.f32 %v1519, %v1561
  %v1600 = vadd.f32 %v1520, %v1566
  %v1601 = vadd.f32 %v1521, %v1566
  %v1602 = vadd.f32 %v1522, %v1566
  %v1603 = vadd.f32 %v1523, %v1566
  %v1604 = vadd.f32 %v1524, %v1571
  %v1605 = vadd.f32 %v1525, %v1571
  %v1606 = vadd.f32 %v1526, %v1571
  %v1607 = vadd.f32 %v1527, %v1571
  %v1608 = vadd.f32 %v1528, %v1576
  %v1609 = vadd.f32 %v1529, %v1576
  %v1610 = vadd.f32 %v1530, %v1576
  %v1611 = vadd.f32 %v1531, %v1576
  %v1612 = vadd.f32 %v1532, %v1581
  %v1613 = vadd.f32 %v1533, %v1581
  %v1614 = vadd.f32 %v1534, %v1581
  %v1615 = vadd.f32 %v1535, %v1581
  %v1616 = vadd.f32 %v1536, %v1586
  %v1617 = vadd.f32 %v1537, %v1586
  %v1618 = vadd.f32 %v1538, %v1586
  %v1619 = vadd.f32 %v1539, %v1586
  %v1620 = vmax.f32 %v1588, 0.0
  %v1621 = vmax.f32 %v1589, 0.0
  %v1622 = vmax.f32 %v1590, 0.0
  %v1623 = vmax.f32 %v1591, 0.0
  %v1624 = vmax.f32 %v1592, 0.0
  %v1625 = vmax.f32 %v1593, 0.0
  %v1626 = vmax.f32 %v1594, 0.0
  %v1627 = vmax.f32 %v1595, 0.0
  %v1628 = vmax.f32 %v1596, 0.0
  %v1629 = vmax.f32 %v1597, 0.0
  %v1630 = vmax.f32 %v1598, 0.0
  %v1631 = vmax.f32 %v1599, 0.0
  %v1632 = vmax.f32 %v1600, 0.0
  %v1633 = vmax.f32 %v1601, 0.0
  %v1634 = vmax.f32 %v1602, 0.0
  %v1635 = vmax.f32 %v1603, 0.0
  %v1636 = vmax.f32 %v1604, 0.0
  %v1637 = vmax.f32 %v1605, 0.0
  %v1638 = vmax.f32 %v1606, 0.0
  %v1639 = vmax.f32 %v1607, 0.0
  %v1640 = vmax.f32 %v1608, 0.0
  %v1641 = vmax.f32 %v1609, 0.0
  %v1642 = vmax.f32 %v1610, 0.0
  %v1643 = vmax.f32 %v1611, 0.0
  %v1644 = vmax.f32 %v1612, 0.0
  %v1645 = vmax.f32 %v1613, 0.0
  %v1646 = vmax.f32 %v1614, 0.0
  %v1647 = vmax.f32 %v1615, 0.0
  %v1648 = vmax.f32 %v1616, 0.0
  %v1649 = vmax.f32 %v1617, 0.0
  %v1650 = vmax.f32 %v1618, 0.0
  %v1651 = vmax.f32 %v1619, 0.0
  %v1652 = vld [vmem:[%s4] sm:$0xf]
  %v1654 = vlaneseq
  %v1655 = vshrl.u32 %v1654, 7
  %v1656 = vsub.s32 0, %v1655
  %v1657 = vrot.slane %v1652, %v1656
  %v1658 = vlaneseq
  %v1659 = vshrl.u32 %v1658, 7
  %v1660 = vsub.s32 1, %v1659
  %v1661 = vrot.slane %v1652, %v1660
  %v1662 = vlaneseq
  %v1663 = vshrl.u32 %v1662, 7
  %v1664 = vsub.s32 2, %v1663
  %v1665 = vrot.slane %v1652, %v1664
  %v1666 = vlaneseq
  %v1667 = vshrl.u32 %v1666, 7
  %v1668 = vsub.s32 3, %v1667
  %v1669 = vrot.slane %v1652, %v1668
  %v1674 = vmul.f32 %v1620, %v1657
  %v1675 = vmul.f32 %v1621, %v1661
  %v1676 = vmul.f32 %v1622, %v1665
  %v1677 = vmul.f32 %v1623, %v1669
  %v1678 = vmul.f32 %v1624, %v1657
  %v1679 = vmul.f32 %v1625, %v1661
  %v1680 = vmul.f32 %v1626, %v1665
  %v1681 = vmul.f32 %v1627, %v1669
  %v1682 = vmul.f32 %v1628, %v1657
  %v1683 = vmul.f32 %v1629, %v1661
  %v1684 = vmul.f32 %v1630, %v1665
  %v1685 = vmul.f32 %v1631, %v1669
  %v1686 = vmul.f32 %v1632, %v1657
  %v1687 = vmul.f32 %v1633, %v1661
  %v1688 = vmul.f32 %v1634, %v1665
  %v1689 = vmul.f32 %v1635, %v1669
  %v1690 = vmul.f32 %v1636, %v1657
  %v1691 = vmul.f32 %v1637, %v1661
  %v1692 = vmul.f32 %v1638, %v1665
  %v1693 = vmul.f32 %v1639, %v1669
  %v1694 = vmul.f32 %v1640, %v1657
  %v1695 = vmul.f32 %v1641, %v1661
  %v1696 = vmul.f32 %v1642, %v1665
  %v1697 = vmul.f32 %v1643, %v1669
  %v1698 = vmul.f32 %v1644, %v1657
  %v1699 = vmul.f32 %v1645, %v1661
  %v1700 = vmul.f32 %v1646, %v1665
  %v1701 = vmul.f32 %v1647, %v1669
  %v1702 = vmul.f32 %v1648, %v1657
  %v1703 = vmul.f32 %v1649, %v1661
  %v1704 = vmul.f32 %v1650, %v1665
  %v1705 = vmul.f32 %v1651, %v1669
  %v1706 = vmax.f32 %v1674, %v1675
  %v1707 = vmax.f32 %v1678, %v1679
  %v1708 = vmax.f32 %v1682, %v1683
  %v1709 = vmax.f32 %v1686, %v1687
  %v1710 = vmax.f32 %v1690, %v1691
  %v1711 = vmax.f32 %v1694, %v1695
  %v1712 = vmax.f32 %v1698, %v1699
  %v1713 = vmax.f32 %v1702, %v1703
  %v1714 = vmax.f32 %v1706, %v1676
  %v1715 = vmax.f32 %v1707, %v1680
  %v1716 = vmax.f32 %v1708, %v1684
  %v1717 = vmax.f32 %v1709, %v1688
  %v1718 = vmax.f32 %v1710, %v1692
  %v1719 = vmax.f32 %v1711, %v1696
  %v1720 = vmax.f32 %v1712, %v1700
  %v1721 = vmax.f32 %v1713, %v1704
  %v1722 = vmax.f32 %v1714, %v1677
  %v1723 = vmax.f32 %v1715, %v1681
  %v1724 = vmax.f32 %v1716, %v1685
  %v1725 = vmax.f32 %v1717, %v1689
  %v1726 = vmax.f32 %v1718, %v1693
  %v1727 = vmax.f32 %v1719, %v1697
  %v1728 = vmax.f32 %v1720, %v1701
  %v1729 = vmax.f32 %v1721, %v1705
  %v1730 = vpack.c.bf16 %v1723, %v1722
  %v1731 = vpack.c.bf16 %v1725, %v1724
  %v1732 = vpack.c.bf16 %v1727, %v1726
  %v1733 = vpack.c.bf16 %v1729, %v1728
  %v1738 = vunpack.c.l.b16 %v1730
  %v1739 = vunpack.c.h.b16 %v1730
  %v1740 = vunpack.c.l.b16 %v1731
  %v1741 = vunpack.c.h.b16 %v1731
  %v1742 = vunpack.c.l.b16 %v1732
  %v1743 = vunpack.c.h.b16 %v1732
  %v1744 = vunpack.c.l.b16 %v1733
  %v1745 = vunpack.c.h.b16 %v1733
  %v1746 = vpack.c.b16 %v1738, %v1738
  %v1747 = vpack.c.b16 %v1739, %v1739
  %v1748 = vpack.c.b16 %v1740, %v1740
  %v1749 = vpack.c.b16 %v1741, %v1741
  %v1750 = vpack.c.b16 %v1742, %v1742
  %v1751 = vpack.c.b16 %v1743, %v1743
  %v1752 = vpack.c.b16 %v1744, %v1744
  %v1753 = vpack.c.b16 %v1745, %v1745
  %1762 = vst [vmem:[%s5] sm:$0xf] %v1746
  %1763 = vst [vmem:[%s5 + $0x4] sm:$0xf] %v1747
  %1764 = vst [vmem:[%s5 + $0x8] sm:$0xf] %v1748
  %1765 = vst [vmem:[%s5 + $0xc] sm:$0xf] %v1749
  %1766 = vst [vmem:[%s5 + $0x10] sm:$0xf] %v1750
  %1767 = vst [vmem:[%s5 + $0x14] sm:$0xf] %v1751
  %1768 = vst [vmem:[%s5 + $0x18] sm:$0xf] %v1752
  %1769 = vst [vmem:[%s5 + $0x1c] sm:$0xf] %v1753
  // Predicated region
  $region22: #{crnn_forward.13} parent=0 // pred_check
    _
  $region23: #{crnn_forward.13} parent=0 // pred_check_branch
    %1771 = sbr.rel (0) target = $region25
  $region24: #{crnn_forward.13} parent=0 // pred_region
    _
  $region25: #{crnn_forward.13} parent=0 // pred_fallthru
    _
  // Predicated region
  $region26: #{crnn_forward.13} parent=0 // pred_check
    _
  $region27: #{crnn_forward.13} parent=0 // pred_check_branch
    %1773 = sbr.rel (0) target = $region29
  $region28: #{crnn_forward.13} parent=0 // pred_region
    _
  $region29: #{crnn_forward.13} parent=0 // pred_fallthru
    _

// kernel: crnn_forward.14
$region0: #{crnn_forward.14}
  #allocation0 [shape = 'u32[]', space=smem, size = 0x4, offset = 0x4, fixed_abs, tag = 'smem constant byte address 0x4 - core index']
  #allocation1 [shape = 'u32[144,128]{1,0:T(1,128)}', space=vmem, size = 0x12000, scoped, tag = 'internal scratch']
  %s0 = inlined_call_operand.vmem [shape: bf16[256,128], index: 0, kind: input, shape index: {}]
  %s1 = inlined_call_operand.vmem [shape: bf16[64,256], index: 1, kind: input, shape index: {}]
  %s2 = inlined_call_operand.vmem [shape: f32[64,1], index: 2, kind: input, shape index: {}]
  %s3 = inlined_call_operand.vmem [shape: f32[64,1], index: 3, kind: input, shape index: {}]
  %s4 = inlined_call_operand.vmem [shape: bf16[64,128], index: 4, kind: output, shape index: {}]
  %s5 = sld [smem:[#allocation0]]
  $region26: #{crnn_forward.14} parent=0
    _
  %s7 = ssub.s32 1, %s5
  %s8 = scalar_select 0, %s7, %s5
  // Predicated region
  $region2: #{crnn_forward.14} parent=0 // pred_check
    _
  $region3: #{crnn_forward.14} parent=0 // pred_check_branch
    %10 = sbr.rel (0) target = $region5
  $region4: #{crnn_forward.14} parent=0 // pred_region
    _
  $region5: #{crnn_forward.14} parent=0 // pred_fallthru
    _
  // Predicated region
  $region6: #{crnn_forward.14} parent=0 // pred_check
    _
  $region7: #{crnn_forward.14} parent=0 // pred_check_branch
    %12 = sbr.rel (0) target = $region9
  $region8: #{crnn_forward.14} parent=0 // pred_region
    _
  $region9: #{crnn_forward.14} parent=0 // pred_fallthru
    _
  // Predicated region
  $region10: #{crnn_forward.14} parent=0 // pred_check
    _
  $region11: #{crnn_forward.14} parent=0 // pred_check_branch
    %14 = sbr.rel (0) target = $region13
  $region12: #{crnn_forward.14} parent=0 // pred_region
    _
  $region13: #{crnn_forward.14} parent=0 // pred_fallthru
    _
  // Predicated region
  $region14: #{crnn_forward.14} parent=0 // pred_check
    _
  $region15: #{crnn_forward.14} parent=0 // pred_check_branch
    %16 = sbr.rel (0) target = $region17
  $region16: #{crnn_forward.14} parent=0 // pred_region
    _
  $region17: #{crnn_forward.14} parent=0 // pred_fallthru
    _
  %v18 = vld [vmem:[%s1] sm:$0xff]
  %v19 = vld [vmem:[%s1 + $0x8] sm:$0xff]
  %v20 = vld [vmem:[%s1 + $0x10] sm:$0xff]
  %v21 = vld [vmem:[%s1 + $0x18] sm:$0xff]
  %v22 = vld [vmem:[%s1 + $0x20] sm:$0xff]
  %v23 = vld [vmem:[%s1 + $0x28] sm:$0xff]
  %v24 = vld [vmem:[%s1 + $0x30] sm:$0xff]
  %v25 = vld [vmem:[%s1 + $0x38] sm:$0xff]
  %v26 = vld [vmem:[%s0] sm:$0xf]
  %v27 = vld [vmem:[%s0 + $0x4] sm:$0xf]
  %v28 = vld [vmem:[%s0 + $0x8] sm:$0xf]
  %v29 = vld [vmem:[%s0 + $0xc] sm:$0xf]
  %v30 = vld [vmem:[%s0 + $0x10] sm:$0xf]
  %v31 = vld [vmem:[%s0 + $0x14] sm:$0xf]
  %v32 = vld [vmem:[%s0 + $0x18] sm:$0xf]
  %v33 = vld [vmem:[%s0 + $0x1c] sm:$0xf]
  %v34 = vld [vmem:[%s0 + $0x20] sm:$0xf]
  %v35 = vld [vmem:[%s0 + $0x24] sm:$0xf]
  %v36 = vld [vmem:[%s0 + $0x28] sm:$0xf]
  %v37 = vld [vmem:[%s0 + $0x2c] sm:$0xf]
  %v38 = vld [vmem:[%s0 + $0x30] sm:$0xf]
  %v39 = vld [vmem:[%s0 + $0x34] sm:$0xf]
  %v40 = vld [vmem:[%s0 + $0x38] sm:$0xf]
  %v41 = vld [vmem:[%s0 + $0x3c] sm:$0xf]
  %v42 = vld [vmem:[%s0 + $0x40] sm:$0xf]
  %v43 = vld [vmem:[%s0 + $0x44] sm:$0xf]
  %v44 = vld [vmem:[%s0 + $0x48] sm:$0xf]
  %v45 = vld [vmem:[%s0 + $0x4c] sm:$0xf]
  %v46 = vld [vmem:[%s0 + $0x50] sm:$0xf]
  %v47 = vld [vmem:[%s0 + $0x54] sm:$0xf]
  %v48 = vld [vmem:[%s0 + $0x58] sm:$0xf]
  %v49 = vld [vmem:[%s0 + $0x5c] sm:$0xf]
  %v50 = vld [vmem:[%s0 + $0x60] sm:$0xf]
  %v51 = vld [vmem:[%s0 + $0x64] sm:$0xf]
  %v52 = vld [vmem:[%s0 + $0x68] sm:$0xf]
  %v53 = vld [vmem:[%s0 + $0x6c] sm:$0xf]
  %v54 = vld [vmem:[%s0 + $0x70] sm:$0xf]
  %v55 = vld [vmem:[%s0 + $0x74] sm:$0xf]
  %v56 = vld [vmem:[%s0 + $0x78] sm:$0xf]
  %v57 = vld [vmem:[%s0 + $0x7c] sm:$0xf]
  %v66 = vunpack.c.l.b16 %v18
  %v67 = vunpack.c.h.b16 %v18
  %v68 = vunpack.c.l.b16 %v19
  %v69 = vunpack.c.h.b16 %v19
  %v70 = vunpack.c.l.b16 %v20
  %v71 = vunpack.c.h.b16 %v20
  %v72 = vunpack.c.l.b16 %v21
  %v73 = vunpack.c.h.b16 %v21
  %v74 = vunpack.c.l.b16 %v22
  %v75 = vunpack.c.h.b16 %v22
  %v76 = vunpack.c.l.b16 %v23
  %v77 = vunpack.c.h.b16 %v23
  %v78 = vunpack.c.l.b16 %v24
  %v79 = vunpack.c.h.b16 %v24
  %v80 = vunpack.c.l.b16 %v25
  %v81 = vunpack.c.h.b16 %v25
  %v82 = vpack.c.b16 %v68, %v66
  %v83 = vpack.c.b16 %v69, %v67
  %v84 = vpack.c.b16 %v72, %v70
  %v85 = vpack.c.b16 %v73, %v71
  %v86 = vpack.c.b16 %v76, %v74
  %v87 = vpack.c.b16 %v77, %v75
  %v88 = vpack.c.b16 %v80, %v78
  %v89 = vpack.c.b16 %v81, %v79
  %v130 = vunpack.c.l.b16 %v26
  %v131 = vunpack.c.l.b16 %v27
  %v132 = vunpack.c.l.b16 %v28
  %v133 = vunpack.c.l.b16 %v29
  %v134 = vunpack.c.l.b16 %v30
  %v135 = vunpack.c.l.b16 %v31
  %v136 = vunpack.c.l.b16 %v32
  %v137 = vunpack.c.l.b16 %v33
  %v138 = vunpack.c.l.b16 %v34
  %v139 = vunpack.c.l.b16 %v35
  %v140 = vunpack.c.l.b16 %v36
  %v141 = vunpack.c.l.b16 %v37
  %v142 = vunpack.c.l.b16 %v38
  %v143 = vunpack.c.l.b16 %v39
  %v144 = vunpack.c.l.b16 %v40
  %v145 = vunpack.c.l.b16 %v41
  %v146 = vunpack.c.l.b16 %v42
  %v147 = vunpack.c.l.b16 %v43
  %v148 = vunpack.c.l.b16 %v44
  %v149 = vunpack.c.l.b16 %v45
  %v150 = vunpack.c.l.b16 %v46
  %v151 = vunpack.c.l.b16 %v47
  %v152 = vunpack.c.l.b16 %v48
  %v153 = vunpack.c.l.b16 %v49
  %v154 = vunpack.c.l.b16 %v50
  %v155 = vunpack.c.l.b16 %v51
  %v156 = vunpack.c.l.b16 %v52
  %v157 = vunpack.c.l.b16 %v53
  %v158 = vunpack.c.l.b16 %v54
  %v159 = vunpack.c.l.b16 %v55
  %v160 = vunpack.c.l.b16 %v56
  %v161 = vunpack.c.l.b16 %v57
  %v162 = vpack.c.b16 %v131, %v130
  %v163 = vpack.c.b16 %v133, %v132
  %v164 = vpack.c.b16 %v135, %v134
  %v165 = vpack.c.b16 %v137, %v136
  %v166 = vpack.c.b16 %v139, %v138
  %v167 = vpack.c.b16 %v141, %v140
  %v168 = vpack.c.b16 %v143, %v142
  %v169 = vpack.c.b16 %v145, %v144
  %v170 = vpack.c.b16 %v147, %v146
  %v171 = vpack.c.b16 %v149, %v148
  %v172 = vpack.c.b16 %v151, %v150
  %v173 = vpack.c.b16 %v153, %v152
  %v174 = vpack.c.b16 %v155, %v154
  %v175 = vpack.c.b16 %v157, %v156
  %v176 = vpack.c.b16 %v159, %v158
  %v177 = vpack.c.b16 %v161, %v160
  %194 = vmatprep.subr.bf16.mxu0 0
  %195 = vmatpush1.bf16.msra.mxu0 %v162
  %196 = vmatprep.subr.bf16.mxu0 0
  %197 = vmatpush1.bf16.msra.mxu0 %v163
  %198 = vmatprep.subr.bf16.mxu0 0
  %199 = vmatpush1.bf16.msra.mxu0 %v164
  %200 = vmatprep.subr.bf16.mxu0 0
  %201 = vmatpush1.bf16.msra.mxu0 %v165
  %202 = vmatprep.subr.bf16.mxu0 0
  %203 = vmatpush1.bf16.msra.mxu0 %v166
  %204 = vmatprep.subr.bf16.mxu0 0
  %205 = vmatpush1.bf16.msra.mxu0 %v167
  %206 = vmatprep.subr.bf16.mxu0 0
  %207 = vmatpush1.bf16.msra.mxu0 %v168
  %208 = vmatprep.subr.bf16.mxu0 0
  %209 = vmatpush1.bf16.msra.mxu0 %v169
  %210 = vmatprep.subr.bf16.mxu0 0
  %211 = vmatpush1.bf16.msra.mxu0 %v170
  %212 = vmatprep.subr.bf16.mxu0 0
  %213 = vmatpush1.bf16.msra.mxu0 %v171
  %214 = vmatprep.subr.bf16.mxu0 0
  %215 = vmatpush1.bf16.msra.mxu0 %v172
  %216 = vmatprep.subr.bf16.mxu0 0
  %217 = vmatpush1.bf16.msra.mxu0 %v173
  %218 = vmatprep.subr.bf16.mxu0 0
  %219 = vmatpush1.bf16.msra.mxu0 %v174
  %220 = vmatprep.subr.bf16.mxu0 0
  %221 = vmatpush1.bf16.msra.mxu0 %v175
  %222 = vmatprep.subr.bf16.mxu0 0
  %223 = vmatpush1.bf16.msra.mxu0 %v176
  %224 = vmatprep.subr.bf16.mxu0 0
  %225 = vmatpush1.bf16.msra.mxu0 %v177
  %226 = vmatprep.mubr.bf16.mxu0 %v83
  %227 = vmatmul.mubr.bf16.gmra.mrb[0].mxu0 %v82
  %v228 = vpop.f32.mrb[0].mxu0
  %v229 = vadd.f32 0.0, %v228
  %v230 = vpop.f32.mrb[0].mxu0
  %v231 = vpop.f32.mrb[0].mxu0
  %v232 = vadd.f32 0.0, %v231
  %v233 = vpop.f32.mrb[0].mxu0
  %234 = vmatprep.mubr.bf16.mxu0 %v85
  %235 = vmatmul.mubr.bf16.gmra.mrb[0].mxu0 %v84
  %v236 = vpop.f32.mrb[0].mxu0
  %v237 = vadd.f32 0.0, %v236
  %v238 = vpop.f32.mrb[0].mxu0
  %v239 = vpop.f32.mrb[0].mxu0
  %v240 = vadd.f32 0.0, %v239
  %v241 = vpop.f32.mrb[0].mxu0
  %242 = vmatprep.mubr.bf16.mxu0 %v87
  %243 = vmatmul.mubr.bf16.gmra.mrb[0].mxu0 %v86
  %v244 = vpop.f32.mrb[0].mxu0
  %v245 = vadd.f32 0.0, %v244
  %v246 = vpop.f32.mrb[0].mxu0
  %v247 = vpop.f32.mrb[0].mxu0
  %v248 = vadd.f32 0.0, %v247
  %v249 = vpop.f32.mrb[0].mxu0
  %250 = vmatprep.mubr.bf16.mxu0 %v89
  %251 = vmatmul.mubr.bf16.gmra.mrb[0].mxu0 %v88
  %v252 = vpop.f32.mrb[0].mxu0
  %v253 = vadd.f32 0.0, %v252
  %v254 = vpop.f32.mrb[0].mxu0
  %v255 = vpop.f32.mrb[0].mxu0
  %v256 = vadd.f32 0.0, %v255
  %v257 = vpop.f32.mrb[0].mxu0
  %258 = vdwg.mxu0
  %v259 = vld [vmem:[%s2] sm:$0xff]
  %v260 = vld [vmem:[%s2 + $0x8] sm:$0xff]
  %v261 = vld [vmem:[%s2 + $0x10] sm:$0xff]
  %v262 = vld [vmem:[%s2 + $0x18] sm:$0xff]
  %v263 = vld [vmem:[%s2 + $0x20] sm:$0xff]
  %v264 = vld [vmem:[%s2 + $0x28] sm:$0xff]
  %v265 = vld [vmem:[%s2 + $0x30] sm:$0xff]
  %v266 = vld [vmem:[%s2 + $0x38] sm:$0xff]
  %268 = vset.pattern.permute.xlu0 0
  %269 = vperm.xlu0 %268, %v259
  %v270 = vpop.permute.xlu0 %269
  %273 = vset.pattern.permute.xlu0 0
  %274 = vperm.xlu0 %273, %v260
  %v275 = vpop.permute.xlu0 %274
  %278 = vset.pattern.permute.xlu0 0
  %279 = vperm.xlu0 %278, %v261
  %v280 = vpop.permute.xlu0 %279
  %283 = vset.pattern.permute.xlu0 0
  %284 = vperm.xlu0 %283, %v262
  %v285 = vpop.permute.xlu0 %284
  %288 = vset.pattern.permute.xlu0 0
  %289 = vperm.xlu0 %288, %v263
  %v290 = vpop.permute.xlu0 %289
  %293 = vset.pattern.permute.xlu0 0
  %294 = vperm.xlu0 %293, %v264
  %v295 = vpop.permute.xlu0 %294
  %298 = vset.pattern.permute.xlu0 0
  %299 = vperm.xlu0 %298, %v265
  %v300 = vpop.permute.xlu0 %299
  %303 = vset.pattern.permute.xlu0 0
  %304 = vperm.xlu0 %303, %v266
  %v305 = vpop.permute.xlu0 %304
  %v307 = vmul.f32 %v229, %v270
  %v308 = vmul.f32 %v232, %v275
  %v309 = vmul.f32 %v237, %v280
  %v310 = vmul.f32 %v240, %v285
  %v311 = vmul.f32 %v245, %v290
  %v312 = vmul.f32 %v248, %v295
  %v313 = vmul.f32 %v253, %v300
  %v314 = vmul.f32 %v256, %v305
  %v315 = vld [vmem:[%s3] sm:$0xff]
  %v316 = vld [vmem:[%s3 + $0x8] sm:$0xff]
  %v317 = vld [vmem:[%s3 + $0x10] sm:$0xff]
  %v318 = vld [vmem:[%s3 + $0x18] sm:$0xff]
  %v319 = vld [vmem:[%s3 + $0x20] sm:$0xff]
  %v320 = vld [vmem:[%s3 + $0x28] sm:$0xff]
  %v321 = vld [vmem:[%s3 + $0x30] sm:$0xff]
  %v322 = vld [vmem:[%s3 + $0x38] sm:$0xff]
  %324 = vset.pattern.permute.xlu0 0
  %325 = vperm.xlu0 %324, %v315
  %v326 = vpop.permute.xlu0 %325
  %329 = vset.pattern.permute.xlu0 0
  %330 = vperm.xlu0 %329, %v316
  %v331 = vpop.permute.xlu0 %330
  %334 = vset.pattern.permute.xlu0 0
  %335 = vperm.xlu0 %334, %v317
  %v336 = vpop.permute.xlu0 %335
  %339 = vset.pattern.permute.xlu0 0
  %340 = vperm.xlu0 %339, %v318
  %v341 = vpop.permute.xlu0 %340
  %344 = vset.pattern.permute.xlu0 0
  %345 = vperm.xlu0 %344, %v319
  %v346 = vpop.permute.xlu0 %345
  %349 = vset.pattern.permute.xlu0 0
  %350 = vperm.xlu0 %349, %v320
  %v351 = vpop.permute.xlu0 %350
  %354 = vset.pattern.permute.xlu0 0
  %355 = vperm.xlu0 %354, %v321
  %v356 = vpop.permute.xlu0 %355
  %359 = vset.pattern.permute.xlu0 0
  %360 = vperm.xlu0 %359, %v322
  %v361 = vpop.permute.xlu0 %360
  %v363 = vadd.f32 %v307, %v326
  %v364 = vadd.f32 %v308, %v331
  %v365 = vadd.f32 %v309, %v336
  %v366 = vadd.f32 %v310, %v341
  %v367 = vadd.f32 %v311, %v346
  %v368 = vadd.f32 %v312, %v351
  %v369 = vadd.f32 %v313, %v356
  %v370 = vadd.f32 %v314, %v361
  %v371 = vmax.f32 %v363, 0.0
  %v372 = vmax.f32 %v364, 0.0
  %v373 = vmax.f32 %v365, 0.0
  %v374 = vmax.f32 %v366, 0.0
  %v375 = vmax.f32 %v367, 0.0
  %v376 = vmax.f32 %v368, 0.0
  %v377 = vmax.f32 %v369, 0.0
  %v378 = vmax.f32 %v370, 0.0
  %v379 = vpack.c.bf16 %v372, %v371
  %v380 = vpack.c.bf16 %v374, %v373
  %v381 = vpack.c.bf16 %v376, %v375
  %v382 = vpack.c.bf16 %v378, %v377
  %v387 = vunpack.c.l.b16 %v379
  %v388 = vunpack.c.h.b16 %v379
  %v389 = vunpack.c.l.b16 %v380
  %v390 = vunpack.c.h.b16 %v380
  %v391 = vunpack.c.l.b16 %v381
  %v392 = vunpack.c.h.b16 %v381
  %v393 = vunpack.c.l.b16 %v382
  %v394 = vunpack.c.h.b16 %v382
  %v395 = vpack.c.b16 %v387, %v387
  %v396 = vpack.c.b16 %v388, %v388
  %v397 = vpack.c.b16 %v389, %v389
  %v398 = vpack.c.b16 %v390, %v390
  %v399 = vpack.c.b16 %v391, %v391
  %v400 = vpack.c.b16 %v392, %v392
  %v401 = vpack.c.b16 %v393, %v393
  %v402 = vpack.c.b16 %v394, %v394
  %411 = vst [vmem:[%s4] sm:$0xf] %v395
  %412 = vst [vmem:[%s4 + $0x4] sm:$0xf] %v396
  %413 = vst [vmem:[%s4 + $0x8] sm:$0xf] %v397
  %414 = vst [vmem:[%s4 + $0xc] sm:$0xf] %v398
  %415 = vst [vmem:[%s4 + $0x10] sm:$0xf] %v399
  %416 = vst [vmem:[%s4 + $0x14] sm:$0xf] %v400
  %417 = vst [vmem:[%s4 + $0x18] sm:$0xf] %v401
  %418 = vst [vmem:[%s4 + $0x1c] sm:$0xf] %v402
  // Predicated region
  $region18: #{crnn_forward.14} parent=0 // pred_check
    _
  $region19: #{crnn_forward.14} parent=0 // pred_check_branch
    %420 = sbr.rel (0) target = $region21
  $region20: #{crnn_forward.14} parent=0 // pred_region
    _
  $region21: #{crnn_forward.14} parent=0 // pred_fallthru
    _
  // Predicated region
  $region22: #{crnn_forward.14} parent=0 // pred_check
    _
  $region23: #{crnn_forward.14} parent=0 // pred_check_branch
    %422 = sbr.rel (0) target = $region25
  $region24: #{crnn_forward.14} parent=0 // pred_region
    _
  $region25: #{crnn_forward.14} parent=0 // pred_fallthru
    _

// kernel: crnn_forward.15
$region0: #{crnn_forward.15}
  #allocation0 [shape = 'u32[]', space=smem, size = 0x4, offset = 0x4, fixed_abs, tag = 'smem constant byte address 0x4 - core index']
  #allocation1 [shape = 'u32[144,128]{1,0:T(1,128)}', space=vmem, size = 0x12000, scoped, tag = 'internal scratch']
  %s0 = inlined_call_operand.vmem [shape: bf16[10,576], index: 0, kind: input, shape index: {}]
  %s1 = inlined_call_operand.vmem [shape: bf16[576,256], index: 1, kind: input, shape index: {}]
  %s2 = inlined_call_operand.vmem [shape: bf16[64,256], index: 2, kind: input, shape index: {}]
  %s3 = inlined_call_operand.vmem [shape: f32[1,256], index: 3, kind: input, shape index: {}]
  %s4 = inlined_call_operand.vmem [shape: bf16[64,32], index: 4, kind: input, shape index: {}]
  %s5 = inlined_call_operand.vmem [shape: f32[1,32], index: 5, kind: input, shape index: {}]
  %s6 = inlined_call_operand.vmem [shape: bf16[32,256], index: 6, kind: input, shape index: {}]
  %s7 = inlined_call_operand.vmem [shape: bf16[64,256], index: 7, kind: input, shape index: {}]
  %s8 = inlined_call_operand.vmem [shape: f32[1,256], index: 8, kind: input, shape index: {}]
  %s9 = inlined_call_operand.vmem [shape: bf16[64,11], index: 9, kind: input, shape index: {}]
  %s10 = inlined_call_operand.vmem [shape: f32[1,11], index: 10, kind: input, shape index: {}]
  %s11 = inlined_call_operand.vmem [shape: f32[10,11], index: 11, kind: output, shape index: {}]
  %s12 = sld [smem:[#allocation0]]
  $region54: #{crnn_forward.15} parent=0
    _
  %s14 = ssub.s32 1, %s12
  %s15 = scalar_select 0, %s14, %s12
  // Predicated region
  $region2: #{crnn_forward.15} parent=0 // pred_check
    _
  $region3: #{crnn_forward.15} parent=0 // pred_check_branch
    %17 = sbr.rel (0) target = $region5
  $region4: #{crnn_forward.15} parent=0 // pred_region
    _
  $region5: #{crnn_forward.15} parent=0 // pred_fallthru
    _
  // Predicated region
  $region6: #{crnn_forward.15} parent=0 // pred_check
    _
  $region7: #{crnn_forward.15} parent=0 // pred_check_branch
    %19 = sbr.rel (0) target = $region9
  $region8: #{crnn_forward.15} parent=0 // pred_region
    _
  $region9: #{crnn_forward.15} parent=0 // pred_fallthru
    _
  // Predicated region
  $region10: #{crnn_forward.15} parent=0 // pred_check
    _
  $region11: #{crnn_forward.15} parent=0 // pred_check_branch
    %21 = sbr.rel (0) target = $region13
  $region12: #{crnn_forward.15} parent=0 // pred_region
    _
  $region13: #{crnn_forward.15} parent=0 // pred_fallthru
    _
  // Predicated region
  $region14: #{crnn_forward.15} parent=0 // pred_check
    _
  $region15: #{crnn_forward.15} parent=0 // pred_check_branch
    %23 = sbr.rel (0) target = $region17
  $region16: #{crnn_forward.15} parent=0 // pred_region
    _
  $region17: #{crnn_forward.15} parent=0 // pred_fallthru
    _
  // Predicated region
  $region18: #{crnn_forward.15} parent=0 // pred_check
    _
  $region19: #{crnn_forward.15} parent=0 // pred_check_branch
    %25 = sbr.rel (0) target = $region21
  $region20: #{crnn_forward.15} parent=0 // pred_region
    _
  $region21: #{crnn_forward.15} parent=0 // pred_fallthru
    _
  // Predicated region
  $region22: #{crnn_forward.15} parent=0 // pred_check
    _
  $region23: #{crnn_forward.15} parent=0 // pred_check_branch
    %27 = sbr.rel (0) target = $region25
  $region24: #{crnn_forward.15} parent=0 // pred_region
    _
  $region25: #{crnn_forward.15} parent=0 // pred_fallthru
    _
  // Predicated region
  $region26: #{crnn_forward.15} parent=0 // pred_check
    _
  $region27: #{crnn_forward.15} parent=0 // pred_check_branch
    %29 = sbr.rel (0) target = $region29
  $region28: #{crnn_forward.15} parent=0 // pred_region
    _
  $region29: #{crnn_forward.15} parent=0 // pred_fallthru
    _
  // Predicated region
  $region30: #{crnn_forward.15} parent=0 // pred_check
    _
  $region31: #{crnn_forward.15} parent=0 // pred_check_branch
    %31 = sbr.rel (0) target = $region33
  $region32: #{crnn_forward.15} parent=0 // pred_region
    _
  $region33: #{crnn_forward.15} parent=0 // pred_fallthru
    _
  // Predicated region
  $region34: #{crnn_forward.15} parent=0 // pred_check
    _
  $region35: #{crnn_forward.15} parent=0 // pred_check_branch
    %33 = sbr.rel (0) target = $region37
  $region36: #{crnn_forward.15} parent=0 // pred_region
    _
  $region37: #{crnn_forward.15} parent=0 // pred_fallthru
    _
  // Predicated region
  $region38: #{crnn_forward.15} parent=0 // pred_check
    _
  $region39: #{crnn_forward.15} parent=0 // pred_check_branch
    %35 = sbr.rel (0) target = $region41
  $region40: #{crnn_forward.15} parent=0 // pred_region
    _
  $region41: #{crnn_forward.15} parent=0 // pred_fallthru
    _
  // Predicated region
  $region42: #{crnn_forward.15} parent=0 // pred_check
    _
  $region43: #{crnn_forward.15} parent=0 // pred_check_branch
    %37 = sbr.rel (0) target = $region45
  $region44: #{crnn_forward.15} parent=0 // pred_region
    _
  $region45: #{crnn_forward.15} parent=0 // pred_fallthru
    _
  %v39 = vld [vmem:[%s0] sm:$0xff]
  %v40 = vld [vmem:[%s0 + $0x8] sm:$0xff]
  %v41 = vld [vmem:[%s0 + $0x10] sm:$0xf]
  %v42 = vld [vmem:[%s0 + $0x14] sm:$0x11]
  %v43 = vld [vmem:[%s0 + $0x1c] sm:$0x11]
  %v44 = vld [vmem:[%s0 + $0x24] sm:$0x1]
  %v45 = vld [vmem:[%s1] sm:$0xff]
  %v46 = vld [vmem:[%s1 + $0x8] sm:$0xff]
  %v47 = vld [vmem:[%s1 + $0x10] sm:$0xff]
  %v48 = vld [vmem:[%s1 + $0x18] sm:$0xff]
  %v49 = vld [vmem:[%s1 + $0x20] sm:$0xff]
  %v50 = vld [vmem:[%s1 + $0x28] sm:$0xff]
  %v51 = vld [vmem:[%s1 + $0x30] sm:$0xff]
  %v52 = vld [vmem:[%s1 + $0x38] sm:$0xff]
  %v53 = vld [vmem:[%s1 + $0x40] sm:$0xff]
  %v54 = vld [vmem:[%s1 + $0x48] sm:$0xff]
  %v55 = vld [vmem:[%s1 + $0x50] sm:$0xff]
  %v56 = vld [vmem:[%s1 + $0x58] sm:$0xff]
  %v57 = vld [vmem:[%s1 + $0x60] sm:$0xff]
  %v58 = vld [vmem:[%s1 + $0x68] sm:$0xff]
  %v59 = vld [vmem:[%s1 + $0x70] sm:$0xff]
  %v60 = vld [vmem:[%s1 + $0x78] sm:$0xff]
  %v61 = vld [vmem:[%s1 + $0x80] sm:$0xff]
  %v62 = vld [vmem:[%s1 + $0x88] sm:$0xff]
  %v63 = vld [vmem:[%s1 + $0x90] sm:$0xff]
  %v64 = vld [vmem:[%s1 + $0x98] sm:$0xff]
  %v65 = vld [vmem:[%s1 + $0xa0] sm:$0xff]
  %v66 = vld [vmem:[%s1 + $0xa8] sm:$0xff]
  %v67 = vld [vmem:[%s1 + $0xb0] sm:$0xff]
  %v68 = vld [vmem:[%s1 + $0xb8] sm:$0xff]
  %v69 = vld [vmem:[%s1 + $0xc0] sm:$0xff]
  %v70 = vld [vmem:[%s1 + $0xc8] sm:$0xff]
  %v71 = vld [vmem:[%s1 + $0xd0] sm:$0xff]
  %v72 = vld [vmem:[%s1 + $0xd8] sm:$0xff]
  %v73 = vld [vmem:[%s1 + $0xe0] sm:$0xff]
  %v74 = vld [vmem:[%s1 + $0xe8] sm:$0xff]
  %v75 = vld [vmem:[%s1 + $0xf0] sm:$0xff]
  %v76 = vld [vmem:[%s1 + $0xf8] sm:$0xff]
  %v77 = vld [vmem:[%s1 + $0x100] sm:$0xff]
  %v78 = vld [vmem:[%s1 + $0x108] sm:$0xff]
  %v79 = vld [vmem:[%s1 + $0x110] sm:$0xff]
  %v80 = vld [vmem:[%s1 + $0x118] sm:$0xff]
  %v81 = vld [vmem:[%s1 + $0x120] sm:$0xff]
  %v82 = vld [vmem:[%s1 + $0x128] sm:$0xff]
  %v83 = vld [vmem:[%s1 + $0x130] sm:$0xff]
  %v84 = vld [vmem:[%s1 + $0x138] sm:$0xff]
  %v85 = vld [vmem:[%s1 + $0x140] sm:$0xff]
  %v86 = vld [vmem:[%s1 + $0x148] sm:$0xff]
  %v87 = vld [vmem:[%s1 + $0x150] sm:$0xff]
  %v88 = vld [vmem:[%s1 + $0x158] sm:$0xff]
  %v89 = vld [vmem:[%s1 + $0x160] sm:$0xff]
  %v90 = vld [vmem:[%s1 + $0x168] sm:$0xff]
  %v91 = vld [vmem:[%s1 + $0x170] sm:$0xff]
  %v92 = vld [vmem:[%s1 + $0x178] sm:$0xff]
  %v93 = vld [vmem:[%s1 + $0x180] sm:$0xff]
  %v94 = vld [vmem:[%s1 + $0x188] sm:$0xff]
  %v95 = vld [vmem:[%s1 + $0x190] sm:$0xff]
  %v96 = vld [vmem:[%s1 + $0x198] sm:$0xff]
  %v97 = vld [vmem:[%s1 + $0x1a0] sm:$0xff]
  %v98 = vld [vmem:[%s1 + $0x1a8] sm:$0xff]
  %v99 = vld [vmem:[%s1 + $0x1b0] sm:$0xff]
  %v100 = vld [vmem:[%s1 + $0x1b8] sm:$0xff]
  %v101 = vld [vmem:[%s1 + $0x1c0] sm:$0xff]
  %v102 = vld [vmem:[%s1 + $0x1c8] sm:$0xff]
  %v103 = vld [vmem:[%s1 + $0x1d0] sm:$0xff]
  %v104 = vld [vmem:[%s1 + $0x1d8] sm:$0xff]
  %v105 = vld [vmem:[%s1 + $0x1e0] sm:$0xff]
  %v106 = vld [vmem:[%s1 + $0x1e8] sm:$0xff]
  %v107 = vld [vmem:[%s1 + $0x1f0] sm:$0xff]
  %v108 = vld [vmem:[%s1 + $0x1f8] sm:$0xff]
  %v109 = vld [vmem:[%s1 + $0x200] sm:$0xff]
  %v110 = vld [vmem:[%s1 + $0x208] sm:$0xff]
  %v111 = vld [vmem:[%s1 + $0x210] sm:$0xff]
  %v112 = vld [vmem:[%s1 + $0x218] sm:$0xff]
  %v113 = vld [vmem:[%s1 + $0x220] sm:$0xff]
  %v114 = vld [vmem:[%s1 + $0x228] sm:$0xff]
  %v115 = vld [vmem:[%s1 + $0x230] sm:$0xff]
  %v116 = vld [vmem:[%s1 + $0x238] sm:$0xff]
  %v117 = vld [vmem:[%s2] sm:$0xff]
  %v118 = vld [vmem:[%s2 + $0x8] sm:$0xff]
  %v119 = vld [vmem:[%s2 + $0x10] sm:$0xff]
  %v120 = vld [vmem:[%s2 + $0x18] sm:$0xff]
  %v121 = vld [vmem:[%s2 + $0x20] sm:$0xff]
  %v122 = vld [vmem:[%s2 + $0x28] sm:$0xff]
  %v123 = vld [vmem:[%s2 + $0x30] sm:$0xff]
  %v124 = vld [vmem:[%s2 + $0x38] sm:$0xff]
  %v125 = vld [vmem:[%s3] sm:$0x3]
  %v127 = vlaneseq
  %v128 = vshrl.u32 %v127, 7
  %v129 = vsub.s32 0, %v128
  %v130 = vrot.slane %v125, %v129
  %v131 = vlaneseq
  %v132 = vshrl.u32 %v131, 7
  %v133 = vsub.s32 1, %v132
  %v134 = vrot.slane %v125, %v133
  %v143 = vunpack.c.l.b16 %v39
  %v144 = vunpack.c.h.b16 %v39
  %v145 = vunpack.c.l.b16 %v40
  %v146 = vunpack.c.h.b16 %v40
  %v147 = vunpack.c.l.b16 %v41
  %v148 = vunpack.c.l.b16 %v42
  %v149 = vunpack.c.h.b16 %v42
  %v150 = vunpack.c.l.b16 %v43
  %v151 = vunpack.c.h.b16 %v43
  %v152 = vunpack.c.l.b16 %v44
  %v153 = vpack.c.b16 %v148, %v143
  %v154 = vpack.c.b16 %v149, %v144
  %v155 = vpack.c.b16 %v150, %v145
  %v156 = vpack.c.b16 %v151, %v146
  %v157 = vpack.c.b16 %v152, %v147
  %v234 = vunpack.c.l.b16 %v45
  %v235 = vunpack.c.h.b16 %v45
  %v236 = vunpack.c.l.b16 %v46
  %v237 = vunpack.c.h.b16 %v46
  %v238 = vunpack.c.l.b16 %v47
  %v239 = vunpack.c.h.b16 %v47
  %v240 = vunpack.c.l.b16 %v48
  %v241 = vunpack.c.h.b16 %v48
  %v242 = vunpack.c.l.b16 %v49
  %v243 = vunpack.c.h.b16 %v49
  %v244 = vunpack.c.l.b16 %v50
  %v245 = vunpack.c.h.b16 %v50
  %v246 = vunpack.c.l.b16 %v51
  %v247 = vunpack.c.h.b16 %v51
  %v248 = vunpack.c.l.b16 %v52
  %v249 = vunpack.c.h.b16 %v52
  %v250 = vunpack.c.l.b16 %v53
  %v251 = vunpack.c.h.b16 %v53
  %v252 = vunpack.c.l.b16 %v54
  %v253 = vunpack.c.h.b16 %v54
  %v254 = vunpack.c.l.b16 %v55
  %v255 = vunpack.c.h.b16 %v55
  %v256 = vunpack.c.l.b16 %v56
  %v257 = vunpack.c.h.b16 %v56
  %v258 = vunpack.c.l.b16 %v57
  %v259 = vunpack.c.h.b16 %v57
  %v260 = vunpack.c.l.b16 %v58
  %v261 = vunpack.c.h.b16 %v58
  %v262 = vunpack.c.l.b16 %v59
  %v263 = vunpack.c.h.b16 %v59
  %v264 = vunpack.c.l.b16 %v60
  %v265 = vunpack.c.h.b16 %v60
  %v266 = vunpack.c.l.b16 %v61
  %v267 = vunpack.c.h.b16 %v61
  %v268 = vunpack.c.l.b16 %v62
  %v269 = vunpack.c.h.b16 %v62
  %v270 = vunpack.c.l.b16 %v63
  %v271 = vunpack.c.h.b16 %v63
  %v272 = vunpack.c.l.b16 %v64
  %v273 = vunpack.c.h.b16 %v64
  %v274 = vunpack.c.l.b16 %v65
  %v275 = vunpack.c.h.b16 %v65
  %v276 = vunpack.c.l.b16 %v66
  %v277 = vunpack.c.h.b16 %v66
  %v278 = vunpack.c.l.b16 %v67
  %v279 = vunpack.c.h.b16 %v67
  %v280 = vunpack.c.l.b16 %v68
  %v281 = vunpack.c.h.b16 %v68
  %v282 = vunpack.c.l.b16 %v69
  %v283 = vunpack.c.h.b16 %v69
  %v284 = vunpack.c.l.b16 %v70
  %v285 = vunpack.c.h.b16 %v70
  %v286 = vunpack.c.l.b16 %v71
  %v287 = vunpack.c.h.b16 %v71
  %v288 = vunpack.c.l.b16 %v72
  %v289 = vunpack.c.h.b16 %v72
  %v290 = vunpack.c.l.b16 %v73
  %v291 = vunpack.c.h.b16 %v73
  %v292 = vunpack.c.l.b16 %v74
  %v293 = vunpack.c.h.b16 %v74
  %v294 = vunpack.c.l.b16 %v75
  %v295 = vunpack.c.h.b16 %v75
  %v296 = vunpack.c.l.b16 %v76
  %v297 = vunpack.c.h.b16 %v76
  %v298 = vunpack.c.l.b16 %v77
  %v299 = vunpack.c.h.b16 %v77
  %v300 = vunpack.c.l.b16 %v78
  %v301 = vunpack.c.h.b16 %v78
  %v302 = vunpack.c.l.b16 %v79
  %v303 = vunpack.c.h.b16 %v79
  %v304 = vunpack.c.l.b16 %v80
  %v305 = vunpack.c.h.b16 %v80
  %v306 = vunpack.c.l.b16 %v81
  %v307 = vunpack.c.h.b16 %v81
  %v308 = vunpack.c.l.b16 %v82
  %v309 = vunpack.c.h.b16 %v82
  %v310 = vunpack.c.l.b16 %v83
  %v311 = vunpack.c.h.b16 %v83
  %v312 = vunpack.c.l.b16 %v84
  %v313 = vunpack.c.h.b16 %v84
  %v314 = vunpack.c.l.b16 %v85
  %v315 = vunpack.c.h.b16 %v85
  %v316 = vunpack.c.l.b16 %v86
  %v317 = vunpack.c.h.b16 %v86
  %v318 = vunpack.c.l.b16 %v87
  %v319 = vunpack.c.h.b16 %v87
  %v320 = vunpack.c.l.b16 %v88
  %v321 = vunpack.c.h.b16 %v88
  %v322 = vunpack.c.l.b16 %v89
  %v323 = vunpack.c.h.b16 %v89
  %v324 = vunpack.c.l.b16 %v90
  %v325 = vunpack.c.h.b16 %v90
  %v326 = vunpack.c.l.b16 %v91
  %v327 = vunpack.c.h.b16 %v91
  %v328 = vunpack.c.l.b16 %v92
  %v329 = vunpack.c.h.b16 %v92
  %v330 = vunpack.c.l.b16 %v93
  %v331 = vunpack.c.h.b16 %v93
  %v332 = vunpack.c.l.b16 %v94
  %v333 = vunpack.c.h.b16 %v94
  %v334 = vunpack.c.l.b16 %v95
  %v335 = vunpack.c.h.b16 %v95
  %v336 = vunpack.c.l.b16 %v96
  %v337 = vunpack.c.h.b16 %v96
  %v338 = vunpack.c.l.b16 %v97
  %v339 = vunpack.c.h.b16 %v97
  %v340 = vunpack.c.l.b16 %v98
  %v341 = vunpack.c.h.b16 %v98
  %v342 = vunpack.c.l.b16 %v99
  %v343 = vunpack.c.h.b16 %v99
  %v344 = vunpack.c.l.b16 %v100
  %v345 = vunpack.c.h.b16 %v100
  %v346 = vunpack.c.l.b16 %v101
  %v347 = vunpack.c.h.b16 %v101
  %v348 = vunpack.c.l.b16 %v102
  %v349 = vunpack.c.h.b16 %v102
  %v350 = vunpack.c.l.b16 %v103
  %v351 = vunpack.c.h.b16 %v103
  %v352 = vunpack.c.l.b16 %v104
  %v353 = vunpack.c.h.b16 %v104
  %v354 = vunpack.c.l.b16 %v105
  %v355 = vunpack.c.h.b16 %v105
  %v356 = vunpack.c.l.b16 %v106
  %v357 = vunpack.c.h.b16 %v106
  %v358 = vunpack.c.l.b16 %v107
  %v359 = vunpack.c.h.b16 %v107
  %v360 = vunpack.c.l.b16 %v108
  %v361 = vunpack.c.h.b16 %v108
  %v362 = vunpack.c.l.b16 %v109
  %v363 = vunpack.c.h.b16 %v109
  %v364 = vunpack.c.l.b16 %v110
  %v365 = vunpack.c.h.b16 %v110
  %v366 = vunpack.c.l.b16 %v111
  %v367 = vunpack.c.h.b16 %v111
  %v368 = vunpack.c.l.b16 %v112
  %v369 = vunpack.c.h.b16 %v112
  %v370 = vunpack.c.l.b16 %v113
  %v371 = vunpack.c.h.b16 %v113
  %v372 = vunpack.c.l.b16 %v114
  %v373 = vunpack.c.h.b16 %v114
  %v374 = vunpack.c.l.b16 %v115
  %v375 = vunpack.c.h.b16 %v115
  %v376 = vunpack.c.l.b16 %v116
  %v377 = vunpack.c.h.b16 %v116
  %v378 = vpack.c.b16 %v236, %v234
  %v379 = vpack.c.b16 %v237, %v235
  %v380 = vpack.c.b16 %v240, %v238
  %v381 = vpack.c.b16 %v241, %v239
  %v382 = vpack.c.b16 %v244, %v242
  %v383 = vpack.c.b16 %v245, %v243
  %v384 = vpack.c.b16 %v248, %v246
  %v385 = vpack.c.b16 %v249, %v247
  %v386 = vpack.c.b16 %v252, %v250
  %v387 = vpack.c.b16 %v253, %v251
  %v388 = vpack.c.b16 %v256, %v254
  %v389 = vpack.c.b16 %v257, %v255
  %v390 = vpack.c.b16 %v260, %v258
  %v391 = vpack.c.b16 %v261, %v259
  %v392 = vpack.c.b16 %v264, %v262
  %v393 = vpack.c.b16 %v265, %v263
  %v394 = vpack.c.b16 %v268, %v266
  %v395 = vpack.c.b16 %v269, %v267
  %v396 = vpack.c.b16 %v272, %v270
  %v397 = vpack.c.b16 %v273, %v271
  %v398 = vpack.c.b16 %v276, %v274
  %v399 = vpack.c.b16 %v277, %v275
  %v400 = vpack.c.b16 %v280, %v278
  %v401 = vpack.c.b16 %v281, %v279
  %v402 = vpack.c.b16 %v284, %v282
  %v403 = vpack.c.b16 %v285, %v283
  %v404 = vpack.c.b16 %v288, %v286
  %v405 = vpack.c.b16 %v289, %v287
  %v406 = vpack.c.b16 %v292, %v290
  %v407 = vpack.c.b16 %v293, %v291
  %v408 = vpack.c.b16 %v296, %v294
  %v409 = vpack.c.b16 %v297, %v295
  %v410 = vpack.c.b16 %v300, %v298
  %v411 = vpack.c.b16 %v301, %v299
  %v412 = vpack.c.b16 %v304, %v302
  %v413 = vpack.c.b16 %v305, %v303
  %v414 = vpack.c.b16 %v308, %v306
  %v415 = vpack.c.b16 %v309, %v307
  %v416 = vpack.c.b16 %v312, %v310
  %v417 = vpack.c.b16 %v313, %v311
  %v418 = vpack.c.b16 %v316, %v314
  %v419 = vpack.c.b16 %v317, %v315
  %v420 = vpack.c.b16 %v320, %v318
  %v421 = vpack.c.b16 %v321, %v319
  %v422 = vpack.c.b16 %v324, %v322
  %v423 = vpack.c.b16 %v325, %v323
  %v424 = vpack.c.b16 %v328, %v326
  %v425 = vpack.c.b16 %v329, %v327
  %v426 = vpack.c.b16 %v332, %v330
  %v427 = vpack.c.b16 %v333, %v331
  %v428 = vpack.c.b16 %v336, %v334
  %v429 = vpack.c.b16 %v337, %v335
  %v430 = vpack.c.b16 %v340, %v338
  %v431 = vpack.c.b16 %v341, %v339
  %v432 = vpack.c.b16 %v344, %v342
  %v433 = vpack.c.b16 %v345, %v343
  %v434 = vpack.c.b16 %v348, %v346
  %v435 = vpack.c.b16 %v349, %v347
  %v436 = vpack.c.b16 %v352, %v350
  %v437 = vpack.c.b16 %v353, %v351
  %v438 = vpack.c.b16 %v356, %v354
  %v439 = vpack.c.b16 %v357, %v355
  %v440 = vpack.c.b16 %v360, %v358
  %v441 = vpack.c.b16 %v361, %v359
  %v442 = vpack.c.b16 %v364, %v362
  %v443 = vpack.c.b16 %v365, %v363
  %v444 = vpack.c.b16 %v368, %v366
  %v445 = vpack.c.b16 %v369, %v367
  %v446 = vpack.c.b16 %v372, %v370
  %v447 = vpack.c.b16 %v373, %v371
  %v448 = vpack.c.b16 %v376, %v374
  %v449 = vpack.c.b16 %v377, %v375
  %vm522 = vcmask 523264
  %v524 = vsel %vm522, %v157, 0
  %526 = vmatprep.subr.bf16.mxu0 %v379
  %527 = vmatpush1.bf16.msra.mxu0 %v378
  %528 = vmatprep.subr.bf16.mxu0 %v381
  %529 = vmatpush1.bf16.msra.mxu0 %v380
  %530 = vmatprep.subr.bf16.mxu0 %v383
  %531 = vmatpush1.bf16.msra.mxu0 %v382
  %532 = vmatprep.subr.bf16.mxu0 %v385
  %533 = vmatpush1.bf16.msra.mxu0 %v384
  %534 = vmatprep.subr.bf16.mxu0 %v387
  %535 = vmatpush1.bf16.msra.mxu0 %v386
  %536 = vmatprep.subr.bf16.mxu0 %v389
  %537 = vmatpush1.bf16.msra.mxu0 %v388
  %538 = vmatprep.subr.bf16.mxu0 %v391
  %539 = vmatpush1.bf16.msra.mxu0 %v390
  %540 = vmatprep.subr.bf16.mxu0 %v393
  %541 = vmatpush1.bf16.msra.mxu0 %v392
  %542 = vmatprep.subr.bf16.mxu0 %v395
  %543 = vmatpush1.bf16.msra.mxu0 %v394
  %544 = vmatprep.subr.bf16.mxu0 %v397
  %545 = vmatpush1.bf16.msra.mxu0 %v396
  %546 = vmatprep.subr.bf16.mxu0 %v399
  %547 = vmatpush1.bf16.msra.mxu0 %v398
  %548 = vmatprep.subr.bf16.mxu0 %v401
  %549 = vmatpush1.bf16.msra.mxu0 %v400
  %550 = vmatprep.subr.bf16.mxu0 %v403
  %551 = vmatpush1.bf16.msra.mxu0 %v402
  %552 = vmatprep.subr.bf16.mxu0 %v405
  %553 = vmatpush1.bf16.msra.mxu0 %v404
  %554 = vmatprep.subr.bf16.mxu0 %v407
  %555 = vmatpush1.bf16.msra.mxu0 %v406
  %556 = vmatprep.subr.bf16.mxu0 %v409
  %557 = vmatpush1.bf16.msra.mxu0 %v408
  %558 = vmatprep.mubr.bf16.mxu0 %v154
  %559 = vmatmul.mubr.bf16.gmra.mrb[0].mxu0 %v153
  %v560 = vpop.f32.mrb[0].mxu0
  %v561 = vadd.f32 %v130, %v560
  %v562 = vpop.f32.mrb[0].mxu0
  %v563 = vadd.f32 %v134, %v562
  %v564 = vpop.f32.mrb[0].mxu0
  %v565 = vadd.f32 %v130, %v564
  %v566 = vpop.f32.mrb[0].mxu0
  %v567 = vadd.f32 %v134, %v566
  %568 = vdwg.mxu0
  %569 = vmatprep.subr.bf16.mxu0 %v411
  %570 = vmatpush1.bf16.msra.mxu0 %v410
  %571 = vmatprep.subr.bf16.mxu0 %v413
  %572 = vmatpush1.bf16.msra.mxu0 %v412
  %573 = vmatprep.subr.bf16.mxu0 %v415
  %574 = vmatpush1.bf16.msra.mxu0 %v414
  %575 = vmatprep.subr.bf16.mxu0 %v417
  %576 = vmatpush1.bf16.msra.mxu0 %v416
  %577 = vmatprep.subr.bf16.mxu0 %v419
  %578 = vmatpush1.bf16.msra.mxu0 %v418
  %579 = vmatprep.subr.bf16.mxu0 %v421
  %580 = vmatpush1.bf16.msra.mxu0 %v420
  %581 = vmatprep.subr.bf16.mxu0 %v423
  %582 = vmatpush1.bf16.msra.mxu0 %v422
  %583 = vmatprep.subr.bf16.mxu0 %v425
  %584 = vmatpush1.bf16.msra.mxu0 %v424
  %585 = vmatprep.subr.bf16.mxu0 %v427
  %586 = vmatpush1.bf16.msra.mxu0 %v426
  %587 = vmatprep.subr.bf16.mxu0 %v429
  %588 = vmatpush1.bf16.msra.mxu0 %v428
  %589 = vmatprep.subr.bf16.mxu0 %v431
  %590 = vmatpush1.bf16.msra.mxu0 %v430
  %591 = vmatprep.subr.bf16.mxu0 %v433
  %592 = vmatpush1.bf16.msra.mxu0 %v432
  %593 = vmatprep.subr.bf16.mxu0 %v435
  %594 = vmatpush1.bf16.msra.mxu0 %v434
  %595 = vmatprep.subr.bf16.mxu0 %v437
  %596 = vmatpush1.bf16.msra.mxu0 %v436
  %597 = vmatprep.subr.bf16.mxu0 %v439
  %598 = vmatpush1.bf16.msra.mxu0 %v438
  %599 = vmatprep.subr.bf16.mxu0 %v441
  %600 = vmatpush1.bf16.msra.mxu0 %v440
  %601 = vmatprep.mubr.bf16.mxu0 %v156
  %602 = vmatmul.mubr.bf16.gmra.mrb[0].mxu0 %v155
  %v603 = vpop.f32.mrb[0].mxu0
  %v604 = vadd.f32 %v561, %v603
  %v605 = vpop.f32.mrb[0].mxu0
  %v606 = vadd.f32 %v563, %v605
  %v607 = vpop.f32.mrb[0].mxu0
  %v608 = vadd.f32 %v565, %v607
  %v609 = vpop.f32.mrb[0].mxu0
  %v610 = vadd.f32 %v567, %v609
  %611 = vdwg.mxu0
  %612 = vmatprep.subr.bf16.mxu0 %v443
  %613 = vmatpush1.bf16.msra.mxu0 %v442
  %614 = vmatprep.subr.bf16.mxu0 %v445
  %615 = vmatpush1.bf16.msra.mxu0 %v444
  %616 = vmatprep.subr.bf16.mxu0 %v447
  %617 = vmatpush1.bf16.msra.mxu0 %v446
  %618 = vmatprep.subr.bf16.mxu0 %v449
  %619 = vmatpush1.bf16.msra.mxu0 %v448
  %620 = vmatprep.subr.bf16.mxu0 0
  %621 = vmatpush1.bf16.msra.mxu0 0
  %622 = vmatprep.subr.bf16.mxu0 0
  %623 = vmatpush1.bf16.msra.mxu0 0
  %624 = vmatprep.subr.bf16.mxu0 0
  %625 = vmatpush1.bf16.msra.mxu0 0
  %626 = vmatprep.subr.bf16.mxu0 0
  %627 = vmatpush1.bf16.msra.mxu0 0
  %628 = vmatprep.subr.bf16.mxu0 0
  %629 = vmatpush1.bf16.msra.mxu0 0
  %630 = vmatprep.subr.bf16.mxu0 0
  %631 = vmatpush1.bf16.msra.mxu0 0
  %632 = vmatprep.subr.bf16.mxu0 0
  %633 = vmatpush1.bf16.msra.mxu0 0
  %634 = vmatprep.subr.bf16.mxu0 0
  %635 = vmatpush1.bf16.msra.mxu0 0
  %636 = vmatprep.subr.bf16.mxu0 0
  %637 = vmatpush1.bf16.msra.mxu0 0
  %638 = vmatprep.subr.bf16.mxu0 0
  %639 = vmatpush1.bf16.msra.mxu0 0
  %640 = vmatprep.subr.bf16.mxu0 0
  %641 = vmatpush1.bf16.msra.mxu0 0
  %642 = vmatprep.subr.bf16.mxu0 0
  %643 = vmatpush1.bf16.msra.mxu0 0
  %644 = vmatprep.mubr.bf16.mxu0 0
  %645 = vmatmul.mubr.bf16.gmra.mrb[0].mxu0 %v524
  %v646 = vpop.f32.mrb[0].mxu0
  %v647 = vadd.f32 %v604, %v646
  %v648 = vpop.f32.mrb[0].mxu0
  %v649 = vadd.f32 %v606, %v648
  %v650 = vpop.f32.mrb[0].mxu0
  %v651 = vadd.f32 %v608, %v650
  %v652 = vpop.f32.mrb[0].mxu0
  %v653 = vadd.f32 %v610, %v652
  %654 = vdwg.mxu0
  %v655 = vlaneseq
  %v656 = vand.u32 %v655, 127
  %v657 = vadd.s32 %v656, 128
  %vm658 = vcmp.lt.s32.totalorder %v656, 0
  %v659 = vsub.s32 0, %v656
  %v660 = vsel %vm658, %v659, %v656
  %v661 = vshrl.u32 %v660, 6
  %v662 = vand.u32 %v660, 63
  %v663 = vsub.s32 0, %v662
  %v664 = vsel %vm658, %v663, %v662
  %vm665 = vcmp.lt.s32.totalorder %v657, 0
  %v666 = vsub.s32 0, %v657
  %v667 = vsel %vm665, %v666, %v657
  %v668 = vshrl.u32 %v667, 6
  %v669 = vand.u32 %v667, 63
  %v670 = vsub.s32 0, %v669
  %v671 = vsel %vm665, %v670, %v669
  %vm672 = vcmp.ne.s32.totalorder %v664, 0
  %vm673 = vcmp.ne.s32.totalorder %v671, 0
  %vm674 = vcmp.lt.s32.totalorder %v664, 0
  %vm675 = vcmp.lt.s32.totalorder %v671, 0
  %vm676 = vmand %vm674, %vm672
  %vm677 = vmand %vm675, %vm673
  %v678 = vadd.s32 %v664, 64
  %v679 = vadd.s32 %v671, 64
  %v680 = vsel %vm676, %v678, %v664
  %v681 = vsel %vm677, %v679, %v671
  %vm682 = vcmp.lt.s32.totalorder %v680, 32
  %vm683 = vcmp.lt.s32.totalorder %v681, 32
  %vm684 = vcmp.ge.s32.totalorder %v656, 128
  %vm685 = vcmp.ge.s32.totalorder %v657, 128
  %vm686 = vcmp.lt.s32.totalorder %v656, 192
  %vm687 = vcmp.lt.s32.totalorder %v657, 192
  %vm688 = vmand %vm684, %vm686
  %vm689 = vmand %vm685, %vm687
  %v690 = vsel %vm688, 1.0, 0.5
  %v691 = vsel %vm689, 1.0, 0.5
  %v692 = vsel %vm682, %v647, %v651
  %v693 = vsel %vm683, %v649, %v653
  %v696 = vrot.slane %v647, 4
  %v697 = vrot.slane %v649, 4
  %v700 = vsel %vm682, %v647, %v696
  %v701 = vsel %vm683, %v649, %v697
  %v702 = vsel %vm682, %v651, %v647
  %v703 = vsel %vm683, %v653, %v649
  %v712 = vunpack.c.l.b16 %v117
  %v713 = vunpack.c.h.b16 %v117
  %v714 = vunpack.c.l.b16 %v118
  %v715 = vunpack.c.h.b16 %v118
  %v716 = vunpack.c.l.b16 %v119
  %v717 = vunpack.c.h.b16 %v119
  %v718 = vunpack.c.l.b16 %v120
  %v719 = vunpack.c.h.b16 %v120
  %v720 = vunpack.c.l.b16 %v121
  %v721 = vunpack.c.h.b16 %v121
  %v722 = vunpack.c.l.b16 %v122
  %v723 = vunpack.c.h.b16 %v122
  %v724 = vunpack.c.l.b16 %v123
  %v725 = vunpack.c.h.b16 %v123
  %v726 = vunpack.c.l.b16 %v124
  %v727 = vunpack.c.h.b16 %v124
  %v728 = vpack.c.b16 %v714, %v712
  %v729 = vpack.c.b16 %v715, %v713
  %v730 = vpack.c.b16 %v718, %v716
  %v731 = vpack.c.b16 %v719, %v717
  %v732 = vpack.c.b16 %v722, %v720
  %v733 = vpack.c.b16 %v723, %v721
  %v734 = vpack.c.b16 %v726, %v724
  %v735 = vpack.c.b16 %v727, %v725
  %v745 = vsel %vm522, 0, 0
  %747 = vmatprep.subr.bf16.mxu0 %v729
  %748 = vmatpush1.bf16.msra.mxu0 %v728
  %749 = vmatprep.subr.bf16.mxu0 %v731
  %750 = vmatpush1.bf16.msra.mxu0 %v730
  %751 = vmatprep.subr.bf16.mxu0 %v733
  %752 = vmatpush1.bf16.msra.mxu0 %v732
  %753 = vmatprep.subr.bf16.mxu0 %v735
  %754 = vmatpush1.bf16.msra.mxu0 %v734
  %755 = vmatprep.subr.bf16.mxu0 0
  %756 = vmatpush1.bf16.msra.mxu0 0
  %757 = vmatprep.subr.bf16.mxu0 0
  %758 = vmatpush1.bf16.msra.mxu0 0
  %759 = vmatprep.subr.bf16.mxu0 0
  %760 = vmatpush1.bf16.msra.mxu0 0
  %761 = vmatprep.subr.bf16.mxu0 0
  %762 = vmatpush1.bf16.msra.mxu0 0
  %763 = vmatprep.subr.bf16.mxu0 0
  %764 = vmatpush1.bf16.msra.mxu0 0
  %765 = vmatprep.subr.bf16.mxu0 0
  %766 = vmatpush1.bf16.msra.mxu0 0
  %767 = vmatprep.subr.bf16.mxu0 0
  %768 = vmatpush1.bf16.msra.mxu0 0
  %769 = vmatprep.subr.bf16.mxu0 0
  %770 = vmatpush1.bf16.msra.mxu0 0
  %771 = vmatprep.subr.bf16.mxu0 0
  %772 = vmatpush1.bf16.msra.mxu0 0
  %773 = vmatprep.subr.bf16.mxu0 0
  %774 = vmatpush1.bf16.msra.mxu0 0
  %775 = vmatprep.subr.bf16.mxu0 0
  %776 = vmatpush1.bf16.msra.mxu0 0
  %777 = vmatprep.subr.bf16.mxu0 0
  %778 = vmatpush1.bf16.msra.mxu0 0
  %779 = vmatprep.mubr.bf16.mxu0 0
  %780 = vmatmul.mubr.bf16.gmra.mrb[0].mxu0 %v745
  %v781 = vpop.f32.mrb[0].mxu0
  %v782 = vadd.f32 0.0, %v781
  %v783 = vpop.f32.mrb[0].mxu0
  %v784 = vadd.f32 0.0, %v783
  %v785 = vpop.f32.mrb[0].mxu0
  %v786 = vpop.f32.mrb[0].mxu0
  %787 = vdwg.mxu0
  %v788 = vadd.f32 %v692, %v782
  %v789 = vadd.f32 %v693, %v784
  %v790 = vmul.f32 %v788, %v690
  %v791 = vmul.f32 %v789, %v691
  %v792 = vtanh.pop %v790
  %v793 = vtanh.pop %v791
  %v794 = vmul.f32 %v792, 0.5
  %v795 = vmul.f32 %v793, 0.5
  %v796 = vadd.f32 %v794, 0.5
  %v797 = vadd.f32 %v795, 0.5
  %v798 = vsel %vm688, %v792, %v796
  %v799 = vsel %vm689, %v793, %v797
  %v800 = vmul.f32 %v798, 0.0
  %v801 = vmul.f32 %v798, %v799
  %803 = vrot.lane.b32.xlu0 %v801, 64
  %v804 = vpop.permute.xlu0 %803
  %v806 = vadd.f32 %v800, %v804
  %v807 = vtanh.pop %v806
  %v808 = vmul.f32 %v799, %v807
  %v809 = vpack.c.bf16 %v808, %v808
  %811 = vrot.lane.b32.xlu0 %v809, 64
  %v812 = vpop.permute.xlu0 %811
  %v814 = vsel %vm522, %v812, 0
  %816 = vmatprep.subr.bf16.mxu0 %v729
  %817 = vmatpush1.bf16.msra.mxu0 %v728
  %818 = vmatprep.subr.bf16.mxu0 %v731
  %819 = vmatpush1.bf16.msra.mxu0 %v730
  %820 = vmatprep.subr.bf16.mxu0 %v733
  %821 = vmatpush1.bf16.msra.mxu0 %v732
  %822 = vmatprep.subr.bf16.mxu0 %v735
  %823 = vmatpush1.bf16.msra.mxu0 %v734
  %824 = vmatprep.subr.bf16.mxu0 0
  %825 = vmatpush1.bf16.msra.mxu0 0
  %826 = vmatprep.subr.bf16.mxu0 0
  %827 = vmatpush1.bf16.msra.mxu0 0
  %828 = vmatprep.subr.bf16.mxu0 0
  %829 = vmatpush1.bf16.msra.mxu0 0
  %830 = vmatprep.subr.bf16.mxu0 0
  %831 = vmatpush1.bf16.msra.mxu0 0
  %832 = vmatprep.subr.bf16.mxu0 0
  %833 = vmatpush1.bf16.msra.mxu0 0
  %834 = vmatprep.subr.bf16.mxu0 0
  %835 = vmatpush1.bf16.msra.mxu0 0
  %836 = vmatprep.subr.bf16.mxu0 0
  %837 = vmatpush1.bf16.msra.mxu0 0
  %838 = vmatprep.subr.bf16.mxu0 0
  %839 = vmatpush1.bf16.msra.mxu0 0
  %840 = vmatprep.subr.bf16.mxu0 0
  %841 = vmatpush1.bf16.msra.mxu0 0
  %842 = vmatprep.subr.bf16.mxu0 0
  %843 = vmatpush1.bf16.msra.mxu0 0
  %844 = vmatprep.subr.bf16.mxu0 0
  %845 = vmatpush1.bf16.msra.mxu0 0
  %846 = vmatprep.subr.bf16.mxu0 0
  %847 = vmatpush1.bf16.msra.mxu0 0
  %848 = vmatprep.mubr.bf16.mxu0 0
  %849 = vmatmul.mubr.bf16.gmra.mrb[0].mxu0 %v814
  %v850 = vpop.f32.mrb[0].mxu0
  %v851 = vadd.f32 0.0, %v850
  %v852 = vpop.f32.mrb[0].mxu0
  %v853 = vadd.f32 0.0, %v852
  %v854 = vpop.f32.mrb[0].mxu0
  %v855 = vpop.f32.mrb[0].mxu0
  %856 = vdwg.mxu0
  %v859 = vrot.slane %v851, 6
  %v860 = vrot.slane %v853, 6
  %v863 = vadd.f32 %v700, %v859
  %v864 = vadd.f32 %v701, %v860
  %v865 = vmul.f32 %v863, %v690
  %v866 = vmul.f32 %v864, %v691
  %v867 = vtanh.pop %v865
  %v868 = vtanh.pop %v866
  %v869 = vmul.f32 %v867, 0.5
  %v870 = vmul.f32 %v868, 0.5
  %v871 = vadd.f32 %v869, 0.5
  %v872 = vadd.f32 %v870, 0.5
  %v873 = vsel %vm688, %v867, %v871
  %v874 = vsel %vm689, %v868, %v872
  %v876 = vrot.slane %v806, 6
  %v878 = vmul.f32 %v873, %v876
  %v879 = vmul.f32 %v873, %v874
  %881 = vrot.lane.b32.xlu0 %v879, 64
  %v882 = vpop.permute.xlu0 %881
  %v884 = vadd.f32 %v878, %v882
  %v885 = vtanh.pop %v884
  %v886 = vmul.f32 %v874, %v885
  %v887 = vpack.c.bf16 %v886, %v886
  %v889 = vrot.slane %v887, 1
  %890 = vrot.lane.b32.xlu0 %v889, 64
  %v891 = vpop.permute.xlu0 %890
  %v893 = vsel %vm522, %v891, 0
  %895 = vmatprep.subr.bf16.mxu0 %v729
  %896 = vmatpush1.bf16.msra.mxu0 %v728
  %897 = vmatprep.subr.bf16.mxu0 %v731
  %898 = vmatpush1.bf16.msra.mxu0 %v730
  %899 = vmatprep.subr.bf16.mxu0 %v733
  %900 = vmatpush1.bf16.msra.mxu0 %v732
  %901 = vmatprep.subr.bf16.mxu0 %v735
  %902 = vmatpush1.bf16.msra.mxu0 %v734
  %903 = vmatprep.subr.bf16.mxu0 0
  %904 = vmatpush1.bf16.msra.mxu0 0
  %905 = vmatprep.subr.bf16.mxu0 0
  %906 = vmatpush1.bf16.msra.mxu0 0
  %907 = vmatprep.subr.bf16.mxu0 0
  %908 = vmatpush1.bf16.msra.mxu0 0
  %909 = vmatprep.subr.bf16.mxu0 0
  %910 = vmatpush1.bf16.msra.mxu0 0
  %911 = vmatprep.subr.bf16.mxu0 0
  %912 = vmatpush1.bf16.msra.mxu0 0
  %913 = vmatprep.subr.bf16.mxu0 0
  %914 = vmatpush1.bf16.msra.mxu0 0
  %915 = vmatprep.subr.bf16.mxu0 0
  %916 = vmatpush1.bf16.msra.mxu0 0
  %917 = vmatprep.subr.bf16.mxu0 0
  %918 = vmatpush1.bf16.msra.mxu0 0
  %919 = vmatprep.subr.bf16.mxu0 0
  %920 = vmatpush1.bf16.msra.mxu0 0
  %921 = vmatprep.subr.bf16.mxu0 0
  %922 = vmatpush1.bf16.msra.mxu0 0
  %923 = vmatprep.subr.bf16.mxu0 0
  %924 = vmatpush1.bf16.msra.mxu0 0
  %925 = vmatprep.subr.bf16.mxu0 0
  %926 = vmatpush1.bf16.msra.mxu0 0
  %927 = vmatprep.mubr.bf16.mxu0 0
  %928 = vmatmul.mubr.bf16.gmra.mrb[0].mxu0 %v893
  %v929 = vpop.f32.mrb[0].mxu0
  %v930 = vadd.f32 0.0, %v929
  %v931 = vpop.f32.mrb[0].mxu0
  %v932 = vadd.f32 0.0, %v931
  %v933 = vpop.f32.mrb[0].mxu0
  %v934 = vpop.f32.mrb[0].mxu0
  %935 = vdwg.mxu0
  %v938 = vrot.slane %v930, 4
  %v939 = vrot.slane %v932, 4
  %v942 = vadd.f32 %v647, %v938
  %v943 = vadd.f32 %v649, %v939
  %v944 = vmul.f32 %v942, %v690
  %v945 = vmul.f32 %v943, %v691
  %v946 = vtanh.pop %v944
  %v947 = vtanh.pop %v945
  %v948 = vmul.f32 %v946, 0.5
  %v949 = vmul.f32 %v947, 0.5
  %v950 = vadd.f32 %v948, 0.5
  %v951 = vadd.f32 %v949, 0.5
  %v952 = vsel %vm688, %v946, %v950
  %v953 = vsel %vm689, %v947, %v951
  %v955 = vrot.slane %v884, 6
  %v957 = vmul.f32 %v952, %v955
  %v958 = vmul.f32 %v952, %v953
  %960 = vrot.lane.b32.xlu0 %v958, 64
  %v961 = vpop.permute.xlu0 %960
  %v963 = vadd.f32 %v957, %v961
  %v964 = vtanh.pop %v963
  %v965 = vmul.f32 %v953, %v964
  %v966 = vpack.c.bf16 %v965, %v965
  %v968 = vrot.slane %v966, 2
  %969 = vrot.lane.b32.xlu0 %v968, 64
  %v970 = vpop.permute.xlu0 %969
  %v972 = vsel %vm522, %v970, 0
  %974 = vmatprep.subr.bf16.mxu0 %v729
  %975 = vmatpush1.bf16.msra.mxu0 %v728
  %976 = vmatprep.subr.bf16.mxu0 %v731
  %977 = vmatpush1.bf16.msra.mxu0 %v730
  %978 = vmatprep.subr.bf16.mxu0 %v733
  %979 = vmatpush1.bf16.msra.mxu0 %v732
  %980 = vmatprep.subr.bf16.mxu0 %v735
  %981 = vmatpush1.bf16.msra.mxu0 %v734
  %982 = vmatprep.subr.bf16.mxu0 0
  %983 = vmatpush1.bf16.msra.mxu0 0
  %984 = vmatprep.subr.bf16.mxu0 0
  %985 = vmatpush1.bf16.msra.mxu0 0
  %986 = vmatprep.subr.bf16.mxu0 0
  %987 = vmatpush1.bf16.msra.mxu0 0
  %988 = vmatprep.subr.bf16.mxu0 0
  %989 = vmatpush1.bf16.msra.mxu0 0
  %990 = vmatprep.subr.bf16.mxu0 0
  %991 = vmatpush1.bf16.msra.mxu0 0
  %992 = vmatprep.subr.bf16.mxu0 0
  %993 = vmatpush1.bf16.msra.mxu0 0
  %994 = vmatprep.subr.bf16.mxu0 0
  %995 = vmatpush1.bf16.msra.mxu0 0
  %996 = vmatprep.subr.bf16.mxu0 0
  %997 = vmatpush1.bf16.msra.mxu0 0
  %998 = vmatprep.subr.bf16.mxu0 0
  %999 = vmatpush1.bf16.msra.mxu0 0
  %1000 = vmatprep.subr.bf16.mxu0 0
  %1001 = vmatpush1.bf16.msra.mxu0 0
  %1002 = vmatprep.subr.bf16.mxu0 0
  %1003 = vmatpush1.bf16.msra.mxu0 0
  %1004 = vmatprep.subr.bf16.mxu0 0
  %1005 = vmatpush1.bf16.msra.mxu0 0
  %1006 = vmatprep.mubr.bf16.mxu0 0
  %1007 = vmatmul.mubr.bf16.gmra.mrb[0].mxu0 %v972
  %v1008 = vpop.f32.mrb[0].mxu0
  %v1009 = vadd.f32 0.0, %v1008
  %v1010 = vpop.f32.mrb[0].mxu0
  %v1011 = vadd.f32 0.0, %v1010
  %v1012 = vpop.f32.mrb[0].mxu0
  %v1013 = vpop.f32.mrb[0].mxu0
  %1014 = vdwg.mxu0
  %v1017 = vrot.slane %v1009, 2
  %v1018 = vrot.slane %v1011, 2
  %v1021 = vadd.f32 %v700, %v1017
  %v1022 = vadd.f32 %v701, %v1018
  %v1023 = vmul.f32 %v1021, %v690
  %v1024 = vmul.f32 %v1022, %v691
  %v1025 = vtanh.pop %v1023
  %v1026 = vtanh.pop %v1024
  %v1027 = vmul.f32 %v1025, 0.5
  %v1028 = vmul.f32 %v1026, 0.5
  %v1029 = vadd.f32 %v1027, 0.5
  %v1030 = vadd.f32 %v1028, 0.5
  %v1031 = vsel %vm688, %v1025, %v1029
  %v1032 = vsel %vm689, %v1026, %v1030
  %v1034 = vrot.slane %v963, 6
  %v1036 = vmul.f32 %v1031, %v1034
  %v1037 = vmul.f32 %v1031, %v1032
  %1039 = vrot.lane.b32.xlu0 %v1037, 64
  %v1040 = vpop.permute.xlu0 %1039
  %v1042 = vadd.f32 %v1036, %v1040
  %v1043 = vtanh.pop %v1042
  %v1044 = vmul.f32 %v1032, %v1043
  %v1045 = vpack.c.bf16 %v1044, %v1044
  %v1047 = vrot.slane %v1045, 3
  %1048 = vrot.lane.b32.xlu0 %v1047, 64
  %v1049 = vpop.permute.xlu0 %1048
  %v1051 = vsel %vm522, %v1049, 0
  %1053 = vmatprep.subr.bf16.mxu0 %v729
  %1054 = vmatpush1.bf16.msra.mxu0 %v728
  %1055 = vmatprep.subr.bf16.mxu0 %v731
  %1056 = vmatpush1.bf16.msra.mxu0 %v730
  %1057 = vmatprep.subr.bf16.mxu0 %v733
  %1058 = vmatpush1.bf16.msra.mxu0 %v732
  %1059 = vmatprep.subr.bf16.mxu0 %v735
  %1060 = vmatpush1.bf16.msra.mxu0 %v734
  %1061 = vmatprep.subr.bf16.mxu0 0
  %1062 = vmatpush1.bf16.msra.mxu0 0
  %1063 = vmatprep.subr.bf16.mxu0 0
  %1064 = vmatpush1.bf16.msra.mxu0 0
  %1065 = vmatprep.subr.bf16.mxu0 0
  %1066 = vmatpush1.bf16.msra.mxu0 0
  %1067 = vmatprep.subr.bf16.mxu0 0
  %1068 = vmatpush1.bf16.msra.mxu0 0
  %1069 = vmatprep.subr.bf16.mxu0 0
  %1070 = vmatpush1.bf16.msra.mxu0 0
  %1071 = vmatprep.subr.bf16.mxu0 0
  %1072 = vmatpush1.bf16.msra.mxu0 0
  %1073 = vmatprep.subr.bf16.mxu0 0
  %1074 = vmatpush1.bf16.msra.mxu0 0
  %1075 = vmatprep.subr.bf16.mxu0 0
  %1076 = vmatpush1.bf16.msra.mxu0 0
  %1077 = vmatprep.subr.bf16.mxu0 0
  %1078 = vmatpush1.bf16.msra.mxu0 0
  %1079 = vmatprep.subr.bf16.mxu0 0
  %1080 = vmatpush1.bf16.msra.mxu0 0
  %1081 = vmatprep.subr.bf16.mxu0 0
  %1082 = vmatpush1.bf16.msra.mxu0 0
  %1083 = vmatprep.subr.bf16.mxu0 0
  %1084 = vmatpush1.bf16.msra.mxu0 0
  %1085 = vmatprep.mubr.bf16.mxu0 0
  %1086 = vmatmul.mubr.bf16.gmra.mrb[0].mxu0 %v1051
  %v1087 = vpop.f32.mrb[0].mxu0
  %v1088 = vadd.f32 0.0, %v1087
  %v1089 = vpop.f32.mrb[0].mxu0
  %v1090 = vadd.f32 0.0, %v1089
  %v1091 = vpop.f32.mrb[0].mxu0
  %v1092 = vpop.f32.mrb[0].mxu0
  %1093 = vdwg.mxu0
  %v1094 = vadd.f32 %v702, %v1088
  %v1095 = vadd.f32 %v703, %v1090
  %v1096 = vmul.f32 %v1094, %v690
  %v1097 = vmul.f32 %v1095, %v691
  %v1098 = vtanh.pop %v1096
  %v1099 = vtanh.pop %v1097
  %v1100 = vmul.f32 %v1098, 0.5
  %v1101 = vmul.f32 %v1099, 0.5
  %v1102 = vadd.f32 %v1100, 0.5
  %v1103 = vadd.f32 %v1101, 0.5
  %v1104 = vsel %vm688, %v1098, %v1102
  %v1105 = vsel %vm689, %v1099, %v1103
  %v1107 = vrot.slane %v1042, 6
  %v1109 = vmul.f32 %v1104, %v1107
  %v1110 = vmul.f32 %v1104, %v1105
  %1112 = vrot.lane.b32.xlu0 %v1110, 64
  %v1113 = vpop.permute.xlu0 %1112
  %v1115 = vadd.f32 %v1109, %v1113
  %v1116 = vtanh.pop %v1115
  %v1117 = vmul.f32 %v1105, %v1116
  %vm1118 = vcmask 1041408
  %v1119 = vsel %vm1118, %v808, %v886
  %vm1120 = vcmask 1043456
  %v1121 = vsel %vm1120, %v1119, %v965
  %vm1122 = vcmask 1045504
  %v1123 = vsel %vm1122, %v1121, %v1044
  %v1125 = vrot.slane %v1044, 4
  %v1128 = vrot.slane %v886, 4
  %v1130 = vsel %vm1118, %v1117, %v1125
  %v1131 = vsel %vm1120, %v1130, %v965
  %v1132 = vsel %vm1122, %v1131, %v1128
  %1135 = vrot.lane.b32.xlu0 %v1123, 64
  %v1136 = vpop.permute.xlu0 %1135
  %1137 = vrot.lane.b32.xlu0 %v1117, 64
  %v1138 = vpop.permute.xlu0 %1137
  %1143 = vrot.lane.b32.xlu0 %v1132, 64
  %v1144 = vpop.permute.xlu0 %1143
  %1145 = vrot.lane.b32.xlu0 %v808, 64
  %v1146 = vpop.permute.xlu0 %1145
  %vm1149 = vcmask 261120
  %v1150 = vsel %vm1149, %v1136, %v1144
  %v1151 = vsel %vm1149, %v1138, %v1146
  %v1152 = vpack.c.bf16 %v1151, %v1150
  %v1153 = vld [vmem:[%s4] sm:$0xf]
  %v1154 = vld [vmem:[%s4 + $0x4] sm:$0xf]
  %v1155 = vld [vmem:[%s4 + $0x8] sm:$0xf]
  %v1156 = vld [vmem:[%s4 + $0xc] sm:$0xf]
  %v1157 = vld [vmem:[%s4 + $0x10] sm:$0xf]
  %v1158 = vld [vmem:[%s4 + $0x14] sm:$0xf]
  %v1159 = vld [vmem:[%s4 + $0x18] sm:$0xf]
  %v1160 = vld [vmem:[%s4 + $0x1c] sm:$0xf]
  %v1161 = vld [vmem:[%s5] sm:$0x1]
  %v1163 = vlaneseq
  %v1164 = vshrl.u32 %v1163, 7
  %v1165 = vsub.s32 0, %v1164
  %v1166 = vrot.slane %v1161, %v1165
  %v1176 = vunpack.c.l.b16 %v1153
  %v1177 = vunpack.c.l.b16 %v1154
  %v1178 = vunpack.c.l.b16 %v1155
  %v1179 = vunpack.c.l.b16 %v1156
  %v1180 = vunpack.c.l.b16 %v1157
  %v1181 = vunpack.c.l.b16 %v1158
  %v1182 = vunpack.c.l.b16 %v1159
  %v1183 = vunpack.c.l.b16 %v1160
  %v1184 = vpack.c.b16 %v1177, %v1176
  %v1185 = vpack.c.b16 %v1179, %v1178
  %v1186 = vpack.c.b16 %v1181, %v1180
  %v1187 = vpack.c.b16 %v1183, %v1182
  %v1193 = vsel %vm522, %v1152, 0
  %1195 = vmatprep.subr.bf16.mxu0 0
  %1196 = vmatpush1.bf16.msra.mxu0 %v1184
  %1197 = vmatprep.subr.bf16.mxu0 0
  %1198 = vmatpush1.bf16.msra.mxu0 %v1185
  %1199 = vmatprep.subr.bf16.mxu0 0
  %1200 = vmatpush1.bf16.msra.mxu0 %v1186
  %1201 = vmatprep.subr.bf16.mxu0 0
  %1202 = vmatpush1.bf16.msra.mxu0 %v1187
  %1203 = vmatprep.subr.bf16.mxu0 0
  %1204 = vmatpush1.bf16.msra.mxu0 0
  %1205 = vmatprep.subr.bf16.mxu0 0
  %1206 = vmatpush1.bf16.msra.mxu0 0
  %1207 = vmatprep.subr.bf16.mxu0 0
  %1208 = vmatpush1.bf16.msra.mxu0 0
  %1209 = vmatprep.subr.bf16.mxu0 0
  %1210 = vmatpush1.bf16.msra.mxu0 0
  %1211 = vmatprep.subr.bf16.mxu0 0
  %1212 = vmatpush1.bf16.msra.mxu0 0
  %1213 = vmatprep.subr.bf16.mxu0 0
  %1214 = vmatpush1.bf16.msra.mxu0 0
  %1215 = vmatprep.subr.bf16.mxu0 0
  %1216 = vmatpush1.bf16.msra.mxu0 0
  %1217 = vmatprep.subr.bf16.mxu0 0
  %1218 = vmatpush1.bf16.msra.mxu0 0
  %1219 = vmatprep.subr.bf16.mxu0 0
  %1220 = vmatpush1.bf16.msra.mxu0 0
  %1221 = vmatprep.subr.bf16.mxu0 0
  %1222 = vmatpush1.bf16.msra.mxu0 0
  %1223 = vmatprep.subr.bf16.mxu0 0
  %1224 = vmatpush1.bf16.msra.mxu0 0
  %1225 = vmatprep.subr.bf16.mxu0 0
  %1226 = vmatpush1.bf16.msra.mxu0 0
  %1227 = vmatprep.mubr.bf16.mxu0 0
  %1228 = vmatmul.mubr.bf16.gmra.mrb[0].mxu0 %v1193
  %v1229 = vpop.f32.mrb[0].mxu0
  %v1230 = vadd.f32 %v1166, %v1229
  %v1231 = vpop.f32.mrb[0].mxu0
  %v1232 = vpop.f32.mrb[0].mxu0
  %v1233 = vadd.f32 %v1166, %v1232
  %v1234 = vpop.f32.mrb[0].mxu0
  %1235 = vdwg.mxu0
  %v1236 = vpack.c.bf16 %v1233, %v1230
  %v1237 = vld [vmem:[%s6] sm:$0xff]
  %v1238 = vld [vmem:[%s6 + $0x8] sm:$0xff]
  %v1239 = vld [vmem:[%s6 + $0x10] sm:$0xff]
  %v1240 = vld [vmem:[%s6 + $0x18] sm:$0xff]
  %v1241 = vld [vmem:[%s7] sm:$0xff]
  %v1242 = vld [vmem:[%s7 + $0x8] sm:$0xff]
  %v1243 = vld [vmem:[%s7 + $0x10] sm:$0xff]
  %v1244 = vld [vmem:[%s7 + $0x18] sm:$0xff]
  %v1245 = vld [vmem:[%s7 + $0x20] sm:$0xff]
  %v1246 = vld [vmem:[%s7 + $0x28] sm:$0xff]
  %v1247 = vld [vmem:[%s7 + $0x30] sm:$0xff]
  %v1248 = vld [vmem:[%s7 + $0x38] sm:$0xff]
  %v1249 = vld [vmem:[%s8] sm:$0x3]
  %v1251 = vlaneseq
  %v1252 = vshrl.u32 %v1251, 7
  %v1253 = vsub.s32 0, %v1252
  %v1254 = vrot.slane %v1249, %v1253
  %v1255 = vlaneseq
  %v1256 = vshrl.u32 %v1255, 7
  %v1257 = vsub.s32 1, %v1256
  %v1258 = vrot.slane %v1249, %v1257
  %v1265 = vunpack.c.l.b16 %v1237
  %v1266 = vunpack.c.h.b16 %v1237
  %v1267 = vunpack.c.l.b16 %v1238
  %v1268 = vunpack.c.h.b16 %v1238
  %v1269 = vunpack.c.l.b16 %v1239
  %v1270 = vunpack.c.h.b16 %v1239
  %v1271 = vunpack.c.l.b16 %v1240
  %v1272 = vunpack.c.h.b16 %v1240
  %v1273 = vpack.c.b16 %v1267, %v1265
  %v1274 = vpack.c.b16 %v1268, %v1266
  %v1275 = vpack.c.b16 %v1271, %v1269
  %v1276 = vpack.c.b16 %v1272, %v1270
  %v1282 = vsel %vm1149, %v1236, 0
  %1284 = vmatprep.subr.bf16.mxu0 %v1274
  %1285 = vmatpush1.bf16.msra.mxu0 %v1273
  %1286 = vmatprep.subr.bf16.mxu0 %v1276
  %1287 = vmatpush1.bf16.msra.mxu0 %v1275
  %1288 = vmatprep.subr.bf16.mxu0 0
  %1289 = vmatpush1.bf16.msra.mxu0 0
  %1290 = vmatprep.subr.bf16.mxu0 0
  %1291 = vmatpush1.bf16.msra.mxu0 0
  %1292 = vmatprep.subr.bf16.mxu0 0
  %1293 = vmatpush1.bf16.msra.mxu0 0
  %1294 = vmatprep.subr.bf16.mxu0 0
  %1295 = vmatpush1.bf16.msra.mxu0 0
  %1296 = vmatprep.subr.bf16.mxu0 0
  %1297 = vmatpush1.bf16.msra.mxu0 0
  %1298 = vmatprep.subr.bf16.mxu0 0
  %1299 = vmatpush1.bf16.msra.mxu0 0
  %1300 = vmatprep.subr.bf16.mxu0 0
  %1301 = vmatpush1.bf16.msra.mxu0 0
  %1302 = vmatprep.subr.bf16.mxu0 0
  %1303 = vmatpush1.bf16.msra.mxu0 0
  %1304 = vmatprep.subr.bf16.mxu0 0
  %1305 = vmatpush1.bf16.msra.mxu0 0
  %1306 = vmatprep.subr.bf16.mxu0 0
  %1307 = vmatpush1.bf16.msra.mxu0 0
  %1308 = vmatprep.subr.bf16.mxu0 0
  %1309 = vmatpush1.bf16.msra.mxu0 0
  %1310 = vmatprep.subr.bf16.mxu0 0
  %1311 = vmatpush1.bf16.msra.mxu0 0
  %1312 = vmatprep.subr.bf16.mxu0 0
  %1313 = vmatpush1.bf16.msra.mxu0 0
  %1314 = vmatprep.subr.bf16.mxu0 0
  %1315 = vmatpush1.bf16.msra.mxu0 0
  %1316 = vmatprep.mubr.bf16.mxu0 0
  %1317 = vmatmul.mubr.bf16.gmra.mrb[0].mxu0 %v1282
  %v1318 = vpop.f32.mrb[0].mxu0
  %v1319 = vadd.f32 %v1254, %v1318
  %v1320 = vpop.f32.mrb[0].mxu0
  %v1321 = vadd.f32 %v1258, %v1320
  %v1322 = vpop.f32.mrb[0].mxu0
  %v1323 = vadd.f32 %v1254, %v1322
  %v1324 = vpop.f32.mrb[0].mxu0
  %v1325 = vadd.f32 %v1258, %v1324
  %1326 = vdwg.mxu0
  %v1327 = vsel %vm682, %v1319, %v1323
  %v1328 = vsel %vm683, %v1321, %v1325
  %v1331 = vrot.slane %v1319, 4
  %v1332 = vrot.slane %v1321, 4
  %v1335 = vsel %vm682, %v1319, %v1331
  %v1336 = vsel %vm683, %v1321, %v1332
  %v1337 = vsel %vm682, %v1323, %v1319
  %v1338 = vsel %vm683, %v1325, %v1321
  %v1347 = vunpack.c.l.b16 %v1241
  %v1348 = vunpack.c.h.b16 %v1241
  %v1349 = vunpack.c.l.b16 %v1242
  %v1350 = vunpack.c.h.b16 %v1242
  %v1351 = vunpack.c.l.b16 %v1243
  %v1352 = vunpack.c.h.b16 %v1243
  %v1353 = vunpack.c.l.b16 %v1244
  %v1354 = vunpack.c.h.b16 %v1244
  %v1355 = vunpack.c.l.b16 %v1245
  %v1356 = vunpack.c.h.b16 %v1245
  %v1357 = vunpack.c.l.b16 %v1246
  %v1358 = vunpack.c.h.b16 %v1246
  %v1359 = vunpack.c.l.b16 %v1247
  %v1360 = vunpack.c.h.b16 %v1247
  %v1361 = vunpack.c.l.b16 %v1248
  %v1362 = vunpack.c.h.b16 %v1248
  %v1363 = vpack.c.b16 %v1349, %v1347
  %v1364 = vpack.c.b16 %v1350, %v1348
  %v1365 = vpack.c.b16 %v1353, %v1351
  %v1366 = vpack.c.b16 %v1354, %v1352
  %v1367 = vpack.c.b16 %v1357, %v1355
  %v1368 = vpack.c.b16 %v1358, %v1356
  %v1369 = vpack.c.b16 %v1361, %v1359
  %v1370 = vpack.c.b16 %v1362, %v1360
  %1379 = vmatprep.subr.bf16.mxu0 %v1364
  %1380 = vmatpush1.bf16.msra.mxu0 %v1363
  %1381 = vmatprep.subr.bf16.mxu0 %v1366
  %1382 = vmatpush1.bf16.msra.mxu0 %v1365
  %1383 = vmatprep.subr.bf16.mxu0 %v1368
  %1384 = vmatpush1.bf16.msra.mxu0 %v1367
  %1385 = vmatprep.subr.bf16.mxu0 %v1370
  %1386 = vmatpush1.bf16.msra.mxu0 %v1369
  %1387 = vmatprep.subr.bf16.mxu0 0
  %1388 = vmatpush1.bf16.msra.mxu0 0
  %1389 = vmatprep.subr.bf16.mxu0 0
  %1390 = vmatpush1.bf16.msra.mxu0 0
  %1391 = vmatprep.subr.bf16.mxu0 0
  %1392 = vmatpush1.bf16.msra.mxu0 0
  %1393 = vmatprep.subr.bf16.mxu0 0
  %1394 = vmatpush1.bf16.msra.mxu0 0
  %1395 = vmatprep.subr.bf16.mxu0 0
  %1396 = vmatpush1.bf16.msra.mxu0 0
  %1397 = vmatprep.subr.bf16.mxu0 0
  %1398 = vmatpush1.bf16.msra.mxu0 0
  %1399 = vmatprep.subr.bf16.mxu0 0
  %1400 = vmatpush1.bf16.msra.mxu0 0
  %1401 = vmatprep.subr.bf16.mxu0 0
  %1402 = vmatpush1.bf16.msra.mxu0 0
  %1403 = vmatprep.subr.bf16.mxu0 0
  %1404 = vmatpush1.bf16.msra.mxu0 0
  %1405 = vmatprep.subr.bf16.mxu0 0
  %1406 = vmatpush1.bf16.msra.mxu0 0
  %1407 = vmatprep.subr.bf16.mxu0 0
  %1408 = vmatpush1.bf16.msra.mxu0 0
  %1409 = vmatprep.subr.bf16.mxu0 0
  %1410 = vmatpush1.bf16.msra.mxu0 0
  %1411 = vmatprep.mubr.bf16.mxu0 0
  %1412 = vmatmul.mubr.bf16.gmra.mrb[0].mxu0 %v745
  %v1413 = vpop.f32.mrb[0].mxu0
  %v1414 = vadd.f32 0.0, %v1413
  %v1415 = vpop.f32.mrb[0].mxu0
  %v1416 = vadd.f32 0.0, %v1415
  %v1417 = vpop.f32.mrb[0].mxu0
  %v1418 = vpop.f32.mrb[0].mxu0
  %1419 = vdwg.mxu0
  %v1420 = vadd.f32 %v1327, %v1414
  %v1421 = vadd.f32 %v1328, %v1416
  %v1422 = vmul.f32 %v1420, %v690
  %v1423 = vmul.f32 %v1421, %v691
  %v1424 = vtanh.pop %v1422
  %v1425 = vtanh.pop %v1423
  %v1426 = vmul.f32 %v1424, 0.5
  %v1427 = vmul.f32 %v1425, 0.5
  %v1428 = vadd.f32 %v1426, 0.5
  %v1429 = vadd.f32 %v1427, 0.5
  %v1430 = vsel %vm688, %v1424, %v1428
  %v1431 = vsel %vm689, %v1425, %v1429
  %v1432 = vmul.f32 %v1430, 0.0
  %v1433 = vmul.f32 %v1430, %v1431
  %1435 = vrot.lane.b32.xlu0 %v1433, 64
  %v1436 = vpop.permute.xlu0 %1435
  %v1438 = vadd.f32 %v1432, %v1436
  %v1439 = vtanh.pop %v1438
  %v1440 = vmul.f32 %v1431, %v1439
  %v1441 = vpack.c.bf16 %v1440, %v1440
  %1443 = vrot.lane.b32.xlu0 %v1441, 64
  %v1444 = vpop.permute.xlu0 %1443
  %v1446 = vsel %vm522, %v1444, 0
  %1448 = vmatprep.subr.bf16.mxu0 %v1364
  %1449 = vmatpush1.bf16.msra.mxu0 %v1363
  %1450 = vmatprep.subr.bf16.mxu0 %v1366
  %1451 = vmatpush1.bf16.msra.mxu0 %v1365
  %1452 = vmatprep.subr.bf16.mxu0 %v1368
  %1453 = vmatpush1.bf16.msra.mxu0 %v1367
  %1454 = vmatprep.subr.bf16.mxu0 %v1370
  %1455 = vmatpush1.bf16.msra.mxu0 %v1369
  %1456 = vmatprep.subr.bf16.mxu0 0
  %1457 = vmatpush1.bf16.msra.mxu0 0
  %1458 = vmatprep.subr.bf16.mxu0 0
  %1459 = vmatpush1.bf16.msra.mxu0 0
  %1460 = vmatprep.subr.bf16.mxu0 0
  %1461 = vmatpush1.bf16.msra.mxu0 0
  %1462 = vmatprep.subr.bf16.mxu0 0
  %1463 = vmatpush1.bf16.msra.mxu0 0
  %1464 = vmatprep.subr.bf16.mxu0 0
  %1465 = vmatpush1.bf16.msra.mxu0 0
  %1466 = vmatprep.subr.bf16.mxu0 0
  %1467 = vmatpush1.bf16.msra.mxu0 0
  %1468 = vmatprep.subr.bf16.mxu0 0
  %1469 = vmatpush1.bf16.msra.mxu0 0
  %1470 = vmatprep.subr.bf16.mxu0 0
  %1471 = vmatpush1.bf16.msra.mxu0 0
  %1472 = vmatprep.subr.bf16.mxu0 0
  %1473 = vmatpush1.bf16.msra.mxu0 0
  %1474 = vmatprep.subr.bf16.mxu0 0
  %1475 = vmatpush1.bf16.msra.mxu0 0
  %1476 = vmatprep.subr.bf16.mxu0 0
  %1477 = vmatpush1.bf16.msra.mxu0 0
  %1478 = vmatprep.subr.bf16.mxu0 0
  %1479 = vmatpush1.bf16.msra.mxu0 0
  %1480 = vmatprep.mubr.bf16.mxu0 0
  %1481 = vmatmul.mubr.bf16.gmra.mrb[0].mxu0 %v1446
  %v1482 = vpop.f32.mrb[0].mxu0
  %v1483 = vadd.f32 0.0, %v1482
  %v1484 = vpop.f32.mrb[0].mxu0
  %v1485 = vadd.f32 0.0, %v1484
  %v1486 = vpop.f32.mrb[0].mxu0
  %v1487 = vpop.f32.mrb[0].mxu0
  %1488 = vdwg.mxu0
  %v1491 = vrot.slane %v1483, 6
  %v1492 = vrot.slane %v1485, 6
  %v1495 = vadd.f32 %v1335, %v1491
  %v1496 = vadd.f32 %v1336, %v1492
  %v1497 = vmul.f32 %v1495, %v690
  %v1498 = vmul.f32 %v1496, %v691
  %v1499 = vtanh.pop %v1497
  %v1500 = vtanh.pop %v1498
  %v1501 = vmul.f32 %v1499, 0.5
  %v1502 = vmul.f32 %v1500, 0.5
  %v1503 = vadd.f32 %v1501, 0.5
  %v1504 = vadd.f32 %v1502, 0.5
  %v1505 = vsel %vm688, %v1499, %v1503
  %v1506 = vsel %vm689, %v1500, %v1504
  %v1508 = vrot.slane %v1438, 6
  %v1510 = vmul.f32 %v1505, %v1508
  %v1511 = vmul.f32 %v1505, %v1506
  %1513 = vrot.lane.b32.xlu0 %v1511, 64
  %v1514 = vpop.permute.xlu0 %1513
  %v1516 = vadd.f32 %v1510, %v1514
  %v1517 = vtanh.pop %v1516
  %v1518 = vmul.f32 %v1506, %v1517
  %v1519 = vpack.c.bf16 %v1518, %v1518
  %v1521 = vrot.slane %v1519, 1
  %1522 = vrot.lane.b32.xlu0 %v1521, 64
  %v1523 = vpop.permute.xlu0 %1522
  %v1525 = vsel %vm522, %v1523, 0
  %1527 = vmatprep.subr.bf16.mxu0 %v1364
  %1528 = vmatpush1.bf16.msra.mxu0 %v1363
  %1529 = vmatprep.subr.bf16.mxu0 %v1366
  %1530 = vmatpush1.bf16.msra.mxu0 %v1365
  %1531 = vmatprep.subr.bf16.mxu0 %v1368
  %1532 = vmatpush1.bf16.msra.mxu0 %v1367
  %1533 = vmatprep.subr.bf16.mxu0 %v1370
  %1534 = vmatpush1.bf16.msra.mxu0 %v1369
  %1535 = vmatprep.subr.bf16.mxu0 0
  %1536 = vmatpush1.bf16.msra.mxu0 0
  %1537 = vmatprep.subr.bf16.mxu0 0
  %1538 = vmatpush1.bf16.msra.mxu0 0
  %1539 = vmatprep.subr.bf16.mxu0 0
  %1540 = vmatpush1.bf16.msra.mxu0 0
  %1541 = vmatprep.subr.bf16.mxu0 0
  %1542 = vmatpush1.bf16.msra.mxu0 0
  %1543 = vmatprep.subr.bf16.mxu0 0
  %1544 = vmatpush1.bf16.msra.mxu0 0
  %1545 = vmatprep.subr.bf16.mxu0 0
  %1546 = vmatpush1.bf16.msra.mxu0 0
  %1547 = vmatprep.subr.bf16.mxu0 0
  %1548 = vmatpush1.bf16.msra.mxu0 0
  %1549 = vmatprep.subr.bf16.mxu0 0
  %1550 = vmatpush1.bf16.msra.mxu0 0
  %1551 = vmatprep.subr.bf16.mxu0 0
  %1552 = vmatpush1.bf16.msra.mxu0 0
  %1553 = vmatprep.subr.bf16.mxu0 0
  %1554 = vmatpush1.bf16.msra.mxu0 0
  %1555 = vmatprep.subr.bf16.mxu0 0
  %1556 = vmatpush1.bf16.msra.mxu0 0
  %1557 = vmatprep.subr.bf16.mxu0 0
  %1558 = vmatpush1.bf16.msra.mxu0 0
  %1559 = vmatprep.mubr.bf16.mxu0 0
  %1560 = vmatmul.mubr.bf16.gmra.mrb[0].mxu0 %v1525
  %v1561 = vpop.f32.mrb[0].mxu0
  %v1562 = vadd.f32 0.0, %v1561
  %v1563 = vpop.f32.mrb[0].mxu0
  %v1564 = vadd.f32 0.0, %v1563
  %v1565 = vpop.f32.mrb[0].mxu0
  %v1566 = vpop.f32.mrb[0].mxu0
  %1567 = vdwg.mxu0
  %v1570 = vrot.slane %v1562, 4
  %v1571 = vrot.slane %v1564, 4
  %v1574 = vadd.f32 %v1319, %v1570
  %v1575 = vadd.f32 %v1321, %v1571
  %v1576 = vmul.f32 %v1574, %v690
  %v1577 = vmul.f32 %v1575, %v691
  %v1578 = vtanh.pop %v1576
  %v1579 = vtanh.pop %v1577
  %v1580 = vmul.f32 %v1578, 0.5
  %v1581 = vmul.f32 %v1579, 0.5
  %v1582 = vadd.f32 %v1580, 0.5
  %v1583 = vadd.f32 %v1581, 0.5
  %v1584 = vsel %vm688, %v1578, %v1582
  %v1585 = vsel %vm689, %v1579, %v1583
  %v1587 = vrot.slane %v1516, 6
  %v1589 = vmul.f32 %v1584, %v1587
  %v1590 = vmul.f32 %v1584, %v1585
  %1592 = vrot.lane.b32.xlu0 %v1590, 64
  %v1593 = vpop.permute.xlu0 %1592
  %v1595 = vadd.f32 %v1589, %v1593
  %v1596 = vtanh.pop %v1595
  %v1597 = vmul.f32 %v1585, %v1596
  %v1598 = vpack.c.bf16 %v1597, %v1597
  %v1600 = vrot.slane %v1598, 2
  %1601 = vrot.lane.b32.xlu0 %v1600, 64
  %v1602 = vpop.permute.xlu0 %1601
  %v1604 = vsel %vm522, %v1602, 0
  %1606 = vmatprep.subr.bf16.mxu0 %v1364
  %1607 = vmatpush1.bf16.msra.mxu0 %v1363
  %1608 = vmatprep.subr.bf16.mxu0 %v1366
  %1609 = vmatpush1.bf16.msra.mxu0 %v1365
  %1610 = vmatprep.subr.bf16.mxu0 %v1368
  %1611 = vmatpush1.bf16.msra.mxu0 %v1367
  %1612 = vmatprep.subr.bf16.mxu0 %v1370
  %1613 = vmatpush1.bf16.msra.mxu0 %v1369
  %1614 = vmatprep.subr.bf16.mxu0 0
  %1615 = vmatpush1.bf16.msra.mxu0 0
  %1616 = vmatprep.subr.bf16.mxu0 0
  %1617 = vmatpush1.bf16.msra.mxu0 0
  %1618 = vmatprep.subr.bf16.mxu0 0
  %1619 = vmatpush1.bf16.msra.mxu0 0
  %1620 = vmatprep.subr.bf16.mxu0 0
  %1621 = vmatpush1.bf16.msra.mxu0 0
  %1622 = vmatprep.subr.bf16.mxu0 0
  %1623 = vmatpush1.bf16.msra.mxu0 0
  %1624 = vmatprep.subr.bf16.mxu0 0
  %1625 = vmatpush1.bf16.msra.mxu0 0
  %1626 = vmatprep.subr.bf16.mxu0 0
  %1627 = vmatpush1.bf16.msra.mxu0 0
  %1628 = vmatprep.subr.bf16.mxu0 0
  %1629 = vmatpush1.bf16.msra.mxu0 0
  %1630 = vmatprep.subr.bf16.mxu0 0
  %1631 = vmatpush1.bf16.msra.mxu0 0
  %1632 = vmatprep.subr.bf16.mxu0 0
  %1633 = vmatpush1.bf16.msra.mxu0 0
  %1634 = vmatprep.subr.bf16.mxu0 0
  %1635 = vmatpush1.bf16.msra.mxu0 0
  %1636 = vmatprep.subr.bf16.mxu0 0
  %1637 = vmatpush1.bf16.msra.mxu0 0
  %1638 = vmatprep.mubr.bf16.mxu0 0
  %1639 = vmatmul.mubr.bf16.gmra.mrb[0].mxu0 %v1604
  %v1640 = vpop.f32.mrb[0].mxu0
  %v1641 = vadd.f32 0.0, %v1640
  %v1642 = vpop.f32.mrb[0].mxu0
  %v1643 = vadd.f32 0.0, %v1642
  %v1644 = vpop.f32.mrb[0].mxu0
  %v1645 = vpop.f32.mrb[0].mxu0
  %1646 = vdwg.mxu0
  %v1649 = vrot.slane %v1641, 2
  %v1650 = vrot.slane %v1643, 2
  %v1653 = vadd.f32 %v1335, %v1649
  %v1654 = vadd.f32 %v1336, %v1650
  %v1655 = vmul.f32 %v1653, %v690
  %v1656 = vmul.f32 %v1654, %v691
  %v1657 = vtanh.pop %v1655
  %v1658 = vtanh.pop %v1656
  %v1659 = vmul.f32 %v1657, 0.5
  %v1660 = vmul.f32 %v1658, 0.5
  %v1661 = vadd.f32 %v1659, 0.5
  %v1662 = vadd.f32 %v1660, 0.5
  %v1663 = vsel %vm688, %v1657, %v1661
  %v1664 = vsel %vm689, %v1658, %v1662
  %v1666 = vrot.slane %v1595, 6
  %v1668 = vmul.f32 %v1663, %v1666
  %v1669 = vmul.f32 %v1663, %v1664
  %1671 = vrot.lane.b32.xlu0 %v1669, 64
  %v1672 = vpop.permute.xlu0 %1671
  %v1674 = vadd.f32 %v1668, %v1672
  %v1675 = vtanh.pop %v1674
  %v1676 = vmul.f32 %v1664, %v1675
  %v1677 = vpack.c.bf16 %v1676, %v1676
  %v1679 = vrot.slane %v1677, 3
  %1680 = vrot.lane.b32.xlu0 %v1679, 64
  %v1681 = vpop.permute.xlu0 %1680
  %v1683 = vsel %vm522, %v1681, 0
  %1685 = vmatprep.subr.bf16.mxu0 %v1364
  %1686 = vmatpush1.bf16.msra.mxu0 %v1363
  %1687 = vmatprep.subr.bf16.mxu0 %v1366
  %1688 = vmatpush1.bf16.msra.mxu0 %v1365
  %1689 = vmatprep.subr.bf16.mxu0 %v1368
  %1690 = vmatpush1.bf16.msra.mxu0 %v1367
  %1691 = vmatprep.subr.bf16.mxu0 %v1370
  %1692 = vmatpush1.bf16.msra.mxu0 %v1369
  %1693 = vmatprep.subr.bf16.mxu0 0
  %1694 = vmatpush1.bf16.msra.mxu0 0
  %1695 = vmatprep.subr.bf16.mxu0 0
  %1696 = vmatpush1.bf16.msra.mxu0 0
  %1697 = vmatprep.subr.bf16.mxu0 0
  %1698 = vmatpush1.bf16.msra.mxu0 0
  %1699 = vmatprep.subr.bf16.mxu0 0
  %1700 = vmatpush1.bf16.msra.mxu0 0
  %1701 = vmatprep.subr.bf16.mxu0 0
  %1702 = vmatpush1.bf16.msra.mxu0 0
  %1703 = vmatprep.subr.bf16.mxu0 0
  %1704 = vmatpush1.bf16.msra.mxu0 0
  %1705 = vmatprep.subr.bf16.mxu0 0
  %1706 = vmatpush1.bf16.msra.mxu0 0
  %1707 = vmatprep.subr.bf16.mxu0 0
  %1708 = vmatpush1.bf16.msra.mxu0 0
  %1709 = vmatprep.subr.bf16.mxu0 0
  %1710 = vmatpush1.bf16.msra.mxu0 0
  %1711 = vmatprep.subr.bf16.mxu0 0
  %1712 = vmatpush1.bf16.msra.mxu0 0
  %1713 = vmatprep.subr.bf16.mxu0 0
  %1714 = vmatpush1.bf16.msra.mxu0 0
  %1715 = vmatprep.subr.bf16.mxu0 0
  %1716 = vmatpush1.bf16.msra.mxu0 0
  %1717 = vmatprep.mubr.bf16.mxu0 0
  %1718 = vmatmul.mubr.bf16.gmra.mrb[0].mxu0 %v1683
  %v1719 = vpop.f32.mrb[0].mxu0
  %v1720 = vadd.f32 0.0, %v1719
  %v1721 = vpop.f32.mrb[0].mxu0
  %v1722 = vadd.f32 0.0, %v1721
  %v1723 = vpop.f32.mrb[0].mxu0
  %v1724 = vpop.f32.mrb[0].mxu0
  %1725 = vdwg.mxu0
  %v1726 = vadd.f32 %v1337, %v1720
  %v1727 = vadd.f32 %v1338, %v1722
  %v1728 = vmul.f32 %v1726, %v690
  %v1729 = vmul.f32 %v1727, %v691
  %v1730 = vtanh.pop %v1728
  %v1731 = vtanh.pop %v1729
  %v1732 = vmul.f32 %v1730, 0.5
  %v1733 = vmul.f32 %v1731, 0.5
  %v1734 = vadd.f32 %v1732, 0.5
  %v1735 = vadd.f32 %v1733, 0.5
  %v1736 = vsel %vm688, %v1730, %v1734
  %v1737 = vsel %vm689, %v1731, %v1735
  %v1739 = vrot.slane %v1674, 6
  %v1741 = vmul.f32 %v1736, %v1739
  %v1742 = vmul.f32 %v1736, %v1737
  %1744 = vrot.lane.b32.xlu0 %v1742, 64
  %v1745 = vpop.permute.xlu0 %1744
  %v1747 = vadd.f32 %v1741, %v1745
  %v1748 = vtanh.pop %v1747
  %v1749 = vmul.f32 %v1737, %v1748
  %v1750 = vsel %vm1118, %v1440, %v1518
  %v1751 = vsel %vm1120, %v1750, %v1597
  %v1752 = vsel %vm1122, %v1751, %v1676
  %v1754 = vrot.slane %v1676, 4
  %v1757 = vrot.slane %v1518, 4
  %v1759 = vsel %vm1118, %v1749, %v1754
  %v1760 = vsel %vm1120, %v1759, %v1597
  %v1761 = vsel %vm1122, %v1760, %v1757
  %1764 = vrot.lane.b32.xlu0 %v1752, 64
  %v1765 = vpop.permute.xlu0 %1764
  %1766 = vrot.lane.b32.xlu0 %v1749, 64
  %v1767 = vpop.permute.xlu0 %1766
  %1772 = vrot.lane.b32.xlu0 %v1761, 64
  %v1773 = vpop.permute.xlu0 %1772
  %1774 = vrot.lane.b32.xlu0 %v1440, 64
  %v1775 = vpop.permute.xlu0 %1774
  %v1778 = vsel %vm1149, %v1765, %v1773
  %v1779 = vsel %vm1149, %v1767, %v1775
  %v1780 = vpack.c.bf16 %v1779, %v1778
  %v1781 = vld [vmem:[%s9] sm:$0xf]
  %v1782 = vld [vmem:[%s9 + $0x4] sm:$0xf]
  %v1783 = vld [vmem:[%s9 + $0x8] sm:$0xf]
  %v1784 = vld [vmem:[%s9 + $0xc] sm:$0xf]
  %v1785 = vld [vmem:[%s9 + $0x10] sm:$0xf]
  %v1786 = vld [vmem:[%s9 + $0x14] sm:$0xf]
  %v1787 = vld [vmem:[%s9 + $0x18] sm:$0xf]
  %v1788 = vld [vmem:[%s9 + $0x1c] sm:$0xf]
  %v1789 = vld [vmem:[%s10] sm:$0x1]
  %v1791 = vlaneseq
  %v1792 = vshrl.u32 %v1791, 7
  %v1793 = vsub.s32 0, %v1792
  %v1794 = vrot.slane %v1789, %v1793
  %v1804 = vunpack.c.l.b16 %v1781
  %v1805 = vunpack.c.l.b16 %v1782
  %v1806 = vunpack.c.l.b16 %v1783
  %v1807 = vunpack.c.l.b16 %v1784
  %v1808 = vunpack.c.l.b16 %v1785
  %v1809 = vunpack.c.l.b16 %v1786
  %v1810 = vunpack.c.l.b16 %v1787
  %v1811 = vunpack.c.l.b16 %v1788
  %v1812 = vpack.c.b16 %v1805, %v1804
  %v1813 = vpack.c.b16 %v1807, %v1806
  %v1814 = vpack.c.b16 %v1809, %v1808
  %v1815 = vpack.c.b16 %v1811, %v1810
  %v1821 = vsel %vm522, %v1780, 0
  %1823 = vmatprep.subr.bf16.mxu0 0
  %1824 = vmatpush1.bf16.msra.mxu0 %v1812
  %1825 = vmatprep.subr.bf16.mxu0 0
  %1826 = vmatpush1.bf16.msra.mxu0 %v1813
  %1827 = vmatprep.subr.bf16.mxu0 0
  %1828 = vmatpush1.bf16.msra.mxu0 %v1814
  %1829 = vmatprep.subr.bf16.mxu0 0
  %1830 = vmatpush1.bf16.msra.mxu0 %v1815
  %1831 = vmatprep.subr.bf16.mxu0 0
  %1832 = vmatpush1.bf16.msra.mxu0 0
  %1833 = vmatprep.subr.bf16.mxu0 0
  %1834 = vmatpush1.bf16.msra.mxu0 0
  %1835 = vmatprep.subr.bf16.mxu0 0
  %1836 = vmatpush1.bf16.msra.mxu0 0
  %1837 = vmatprep.subr.bf16.mxu0 0
  %1838 = vmatpush1.bf16.msra.mxu0 0
  %1839 = vmatprep.subr.bf16.mxu0 0
  %1840 = vmatpush1.bf16.msra.mxu0 0
  %1841 = vmatprep.subr.bf16.mxu0 0
  %1842 = vmatpush1.bf16.msra.mxu0 0
  %1843 = vmatprep.subr.bf16.mxu0 0
  %1844 = vmatpush1.bf16.msra.mxu0 0
  %1845 = vmatprep.subr.bf16.mxu0 0
  %1846 = vmatpush1.bf16.msra.mxu0 0
  %1847 = vmatprep.subr.bf16.mxu0 0
  %1848 = vmatpush1.bf16.msra.mxu0 0
  %1849 = vmatprep.subr.bf16.mxu0 0
  %1850 = vmatpush1.bf16.msra.mxu0 0
  %1851 = vmatprep.subr.bf16.mxu0 0
  %1852 = vmatpush1.bf16.msra.mxu0 0
  %1853 = vmatprep.subr.bf16.mxu0 0
  %1854 = vmatpush1.bf16.msra.mxu0 0
  %1855 = vmatprep.mubr.bf16.mxu0 0
  %1856 = vmatmul.mubr.bf16.gmra.mrb[0].mxu0 %v1821
  %v1857 = vpop.f32.mrb[0].mxu0
  %v1858 = vadd.f32 %v1794, %v1857
  %v1859 = vpop.f32.mrb[0].mxu0
  %v1860 = vpop.f32.mrb[0].mxu0
  %v1861 = vadd.f32 %v1794, %v1860
  %v1862 = vpop.f32.mrb[0].mxu0
  %1863 = vdwg.mxu0
  %vm1864 = vcmask 89088
  %v1865 = vsel %vm1864, %v1858, -inf
  %1866 = vmax.xlane.f32.xlu0 %v1865
  %v1867 = vpop.xlane.xlu0 %1866
  %vm1868 = vcmask 82944
  %v1869 = vsel %vm1868, %v1861, -inf
  %1870 = vmax.xlane.f32.xlu0 %v1869
  %v1871 = vpop.xlane.xlu0 %1870
  %v1872 = vsub.f32 %v1858, %v1867
  %v1873 = vsub.f32 %v1861, %v1871
  %v1874 = vmul.f32 %v1872, 1.442695
  %v1875 = vpow.pop %v1874
  %v1876 = vmul.f32 %v1873, 1.442695
  %v1877 = vpow.pop %v1876
  %v1878 = vsel %vm1864, %v1875, 0.0
  %1879 = vadd.xlane.f32.xlu0 %v1878
  %v1880 = vpop.xlane.xlu0 %1879
  %v1881 = vsel %vm1868, %v1877, 0.0
  %1882 = vadd.xlane.f32.xlu0 %v1881
  %v1883 = vpop.xlane.xlu0 %1882
  %v1884 = vlog2.pop %v1880
  %v1885 = vmul.f32 %v1884, 0.6931472
  %v1886 = vlog2.pop %v1883
  %v1887 = vmul.f32 %v1886, 0.6931472
  %v1888 = vsub.f32 %v1872, %v1885
  %v1889 = vsub.f32 %v1873, %v1887
  %1890 = vst.msk [vmem:[%s11] sm:$0xff] %vm1864, %v1888
  %1891 = vst.msk [vmem:[%s11 + $0x8] sm:$0x3] %vm1868, %v1889
  // Predicated region
  $region46: #{crnn_forward.15} parent=0 // pred_check
    _
  $region47: #{crnn_forward.15} parent=0 // pred_check_branch
    %1893 = sbr.rel (0) target = $region49
  $region48: #{crnn_forward.15} parent=0 // pred_region
    _
  $region49: #{crnn_forward.15} parent=0 // pred_fallthru
    _
  // Predicated region
  $region50: #{crnn_forward.15} parent=0 // pred_check
    _
  $region51: #{crnn_forward.15} parent=0 // pred_check_branch
    %1895 = sbr.rel (0) target = $region53
  $region52: #{crnn_forward.15} parent=0 // pred_region
    _
  $region53: #{crnn_forward.15} parent=0 // pred_fallthru
    _

</llo_original>
